<compile_context>
chip_gen: v7x
topology: tpu7x:2x2x1
jax: 0.10.0
libtpu: 0.0.40
codegen_flags: <defaults>
</compile_context>

<pallas_src>
import functools

import jax
import jax.numpy as jnp
from jax.experimental import pallas as pl
from jax.experimental.pallas import tpu as pltpu


def _round_up(x, m):
    return -(-x // m) * m


def _inception_kernel(x_ref, w_ref, b_ref, o_ref, col_ref, acc_ref, *,
                      batch_block, cin_pad, kmax, dilation, wp, l_out_pad, slab_len):
    """One grid step = `batch_block` images.

    x_ref   : (batch_block, cin_pad, l_in)          flat one-side-padded input, rows
                                                    flattened row-major with stride wp
    w_ref   : (kmax, cout, kmax*cin_pad)            folded weight, K-tiled per tap row
    b_ref   : (cout, 1)                             folded bias (f32, already /num_kernels)
    o_ref   : (batch_block, cout, l_out_pad)        flattened output
    col_ref : (kmax*cin_pad, batch_block*l_out_pad) per-jh im2col K tile (operand dtype)
    acc_ref : (cout, batch_block*l_out_pad)         f32 accumulator
    """
    acc_ref[...] = jnp.zeros_like(acc_ref)

    # K-tiled contraction: one tap row (jh) at a time.  Per (b, jh) we load ONE wide
    # row slab and derive the kmax jw-shifted taps as register slices (XLU shifts)
    # instead of kmax separately issued misaligned VMEM loads.  All col_ref store
    # offsets are sublane- (multiples of cin_pad) and lane- (multiples of l_out_pad,
    # itself a multiple of 128) aligned -> unmasked stores.
    # (kmax is small and bounded (11 for num_kernels=6); offsets stay static.)
    for jh in range(kmax):
        base = jh * wp * dilation
        for b in range(batch_block):
            slab = x_ref[b, :, base:base + slab_len]          # (cin_pad, slab_len)
            for jw in range(kmax):
                col_ref[jw * cin_pad:(jw + 1) * cin_pad,
                        b * l_out_pad:(b + 1) * l_out_pad] = (
                    slab[:, jw * dilation:jw * dilation + l_out_pad])
        # Partial MXU GEMM for this tap row; f32 accumulation in VMEM.
        acc_ref[...] += jnp.dot(w_ref[jh], col_ref[...],
                                preferred_element_type=jnp.float32)

    # Epilogue: one fused bias add, cast, per-image lane-aligned wide stores.
    bias = b_ref[...]
    for b in range(batch_block):
        o_ref[b] = (acc_ref[:, b * l_out_pad:(b + 1) * l_out_pad]
                    + bias).astype(o_ref.dtype)


def temporal_inception_block(x_nchw, weights, biases, *, dilation=1, causal=True,
                             operand_dtype=jnp.float32, batch_block=1, out_dtype=None):
    """weights[i]: (Cout, Cin, 2i+1, 2i+1) effective (weight-normed) conv weight.
    biases[i]: (Cout,).  x_nchw: (N, Cin, H, W).  Returns (N, Cout, H, W) in out_dtype.

    operand_dtype: MXU operand dtype.  bfloat16 is recommended on ALL TPU generations
    (v5e included: the im2col copy phase is pure data movement, so v5e's lack of bf16
    VPU does not matter); accumulation / bias math stays float32.
    batch_block: images folded into the GEMM N dimension; keep N // batch_block >= 2
    on v7x so both TensorCores get grid work.
    out_dtype: output dtype (defaults to the input dtype; use bf16 to halve writeback).
    """
    num_kernels = len(weights)
    kmax = 2 * (num_kernels - 1) + 1
    pmax = (kmax - 1) * dilation
    n, cin, h, w = x_nchw.shape
    cout = weights[0].shape[0]
    if out_dtype is None:
        out_dtype = x_nchw.dtype

    # Sublane tile of the operand dtype (8 rows for 4-byte, 16 for 2-byte types).
    sublane = 16 if jnp.dtype(operand_dtype).itemsize == 2 else 8
    cin_pad = _round_up(cin, sublane)

    wp = w + pmax                              # padded row width (= output row stride)
    hrows = h + pmax + 1                       # padded image rows
    l_out = h * wp                             # real flat output length per image
    l_out_pad = _round_up(l_out, 128)          # 128-lane-aligned per-image column stride
    slab_len = l_out_pad + pmax                # row slab covers all kmax jw shifts
    l_in = _round_up(max(hrows * wp, pmax * wp + slab_len), 128)
    k_tile = kmax * cin_pad                    # contraction size per tap row (per jh)

    # ---- fold the num_kernels convs + Chomp2d + mean into ONE kmax x kmax conv ----
    w_full = jnp.zeros((kmax, kmax, cin_pad, cout), jnp.float32)
    for i, wt in enumerate(weights):
        k = 2 * i + 1
        w_hwio = jnp.transpose(wt.astype(jnp.float32), (2, 3, 1, 0))      # (k,k,Cin,Cout)
        if causal:
            w_full = w_full.at[:k, :k, :cin, :].add(w_hwio)               # top-left
        else:
            w_full = w_full.at[kmax - k:, kmax - k:, :cin, :].add(w_hwio)  # bottom-right
    w_full = w_full / num_kernels
    # (kmax, cout, kmax*cin_pad): row jh of the K-tiled weight matches col_ref layout.
    w_op = jnp.transpose(w_full.reshape(kmax, k_tile, cout), (0, 2, 1)).astype(operand_dtype)
    b_eff = (jnp.stack([b.astype(jnp.float32) for b in biases]).sum(axis=0)
             / num_kernels).reshape(cout, 1)

    # ---- one-sided spatial zero pad, channel pad, flatten rows (stride wp) ----
    if causal:
        pads = ((0, 0), (0, 0), (0, pmax + 1), (0, pmax))
    else:
        pads = ((0, 0), (0, 0), (pmax, 1), (pmax, 0))
    x_pad = jnp.pad(x_nchw.astype(jnp.float32), pads)        # (n, cin, hrows, wp)

    n_pad = _round_up(n, batch_block)
    x_pad = jnp.pad(x_pad, ((0, n_pad - n), (0, cin_pad - cin), (0, 0), (0, 0)))
    x_flat = x_pad.reshape(n_pad, cin_pad, hrows * wp)
    x_flat = jnp.pad(x_flat, ((0, 0), (0, 0), (0, l_in - hrows * wp)))
    x_flat = x_flat.astype(operand_dtype)

    kernel = functools.partial(
        _inception_kernel, batch_block=batch_block, cin_pad=cin_pad, kmax=kmax,
        dilation=dilation, wp=wp, l_out_pad=l_out_pad, slab_len=slab_len)

    bpe = jnp.dtype(operand_dtype).itemsize
    out_bpe = jnp.dtype(out_dtype).itemsize
    ncols = batch_block * l_out_pad
    vmem_est = (2 * batch_block * cin_pad * l_in * bpe        # double-buffered input
                + 2 * batch_block * cout * l_out_pad * out_bpe  # double-buffered output
                + kmax * cout * k_tile * bpe + cout * 4         # weights + bias
                + k_tile * ncols * bpe                          # per-jh im2col scratch
                + cout * ncols * 4)                             # f32 accumulator
    # Cap well below v7x's 64 MiB physical VMEM (leaves headroom for compiler scratch);
    # on v5e/v6e (128 MiB) this is still comfortably under the physical budget.
    vmem_limit = int(min(48 * 2**20, max(16 * 2**20, 2 * vmem_est)))

    out_flat = pl.pallas_call(
        kernel,
        out_shape=jax.ShapeDtypeStruct((n_pad, cout, l_out_pad), out_dtype),
        grid_spec=pltpu.PrefetchScalarGridSpec(
            num_scalar_prefetch=0,
            grid=(n_pad // batch_block,),
            in_specs=[
                pl.BlockSpec((batch_block, cin_pad, l_in), lambda i: (i, 0, 0)),
                pl.BlockSpec((kmax, cout, k_tile), lambda i: (0, 0, 0)),
                pl.BlockSpec((cout, 1), lambda i: (0, 0)),
            ],
            out_specs=pl.BlockSpec((batch_block, cout, l_out_pad), lambda i: (i, 0, 0)),
            scratch_shapes=[
                pltpu.VMEM((k_tile, ncols), operand_dtype),     # per-jh im2col tile
                pltpu.VMEM((cout, ncols), jnp.float32),         # f32 accumulator
            ],
        ),
        compiler_params=pltpu.CompilerParams(
            dimension_semantics=("parallel",),
            vmem_limit_bytes=vmem_limit),
    )(x_flat, w_op, b_eff)

    # Drop lane padding, per-row junk columns (wp -> w) and batch padding; back to NCHW.
    # TODO(synk): the trailing slice is an extra XLA copy of the output; fuse into the
    # consumer if this block feeds another fused kernel.
    return out_flat[:n, :, :l_out].reshape(n, cout, h, wp)[:, :, :, :w]


def _reference_nchw(x_nchw, weights, biases, *, dilation=1, causal=True):
    """Plain-JAX reference mirroring the PyTorch forward (per-kernel conv + Chomp2d + mean)."""
    outs = []
    for i, (w, b) in enumerate(zip(weights, biases)):
        k = 2 * i + 1
        p = (k - 1) * dilation
        conv = jax.lax.conv_general_dilated(
            x_nchw, w, window_strides=(1, 1), padding=((p, p), (p, p)),
            rhs_dilation=(dilation, dilation),
            dimension_numbers=("NCHW", "OIHW", "NCHW"))
        conv = conv + b[None, :, None, None]
        if p > 0:
            # PyTorch Chomp2d: causal drops the FIRST p rows/cols, else the last p.
            conv = conv[:, :, p:, p:] if causal else conv[:, :, :-p, :-p]
        outs.append(conv)
    return jnp.mean(jnp.stack(outs, axis=-1), axis=-1)


if __name__ == "__main__":
    N, Cin, Cout, H, W = 2, 4, 8, 16, 16
    num_kernels = 6

    key = jax.random.PRNGKey(0)
    key, kx = jax.random.split(key)
    x = jax.random.normal(kx, (N, Cin, H, W), jnp.float32)

    # Deterministic synthetic parameters with the weight_norm reparameterization.
    weights, biases = [], []
    for i in range(num_kernels):
        k = 2 * i + 1
        key, kv, kg = jax.random.split(key, 3)
        v = jax.random.normal(kv, (Cout, Cin, k, k), jnp.float32)
        g = jax.random.uniform(kg, (Cout, 1, 1, 1), jnp.float32, minval=0.5, maxval=1.5)
        v_norm = jnp.sqrt(jnp.sum(v * v, axis=(1, 2, 3), keepdims=True))
        weights.append(g * v / v_norm)                  # weight_norm: w = g * v / ||v||
        biases.append(jnp.zeros((Cout,), jnp.float32))  # _initialize_weights zeroes bias

    # f32 operands: exact check against the per-kernel reference, both chomp modes.
    # batch_block=1 keeps the grid at 2 so both v7x TensorCores get work.
    for causal in (True, False):
        out = temporal_inception_block(x, weights, biases, dilation=1, causal=causal,
                                       operand_dtype=jnp.float32, batch_block=1)
        out = jax.block_until_ready(out)
        ref = _reference_nchw(x, weights, biases, dilation=1, causal=causal)
        assert out.shape == (N, Cout, H, W), out.shape
        max_err = float(jnp.max(jnp.abs(out - ref)))
        assert jnp.allclose(out, ref, atol=1e-3, rtol=1e-3), (causal, max_err)

    # f32, dilation=2 (exercises the dilated tap offsets / larger pad geometry).
    out_d2 = temporal_inception_block(x, weights, biases, dilation=2, causal=True,
                                      operand_dtype=jnp.float32, batch_block=1)
    out_d2 = jax.block_until_ready(out_d2)
    ref_d2 = _reference_nchw(x, weights, biases, dilation=2, causal=True)
    max_err = float(jnp.max(jnp.abs(out_d2 - ref_d2)))
    assert jnp.allclose(out_d2, ref_d2, atol=1e-3, rtol=1e-3), max_err

    # bf16 MXU operands (recommended on v5e/v6e/v7x), f32 accumulation, bf16 output,
    # two images folded into the GEMM N dimension (exercises batch_block > 1; for
    # production on v7x keep N // batch_block >= 2 so both cores are fed).
    out_bf16 = temporal_inception_block(x, weights, biases, dilation=1, causal=True,
                                        operand_dtype=jnp.bfloat16, batch_block=2,
                                        out_dtype=jnp.bfloat16)
    out_bf16 = jax.block_until_ready(out_bf16)
    ref = _reference_nchw(x, weights, biases, dilation=1, causal=True)
    max_err = float(jnp.max(jnp.abs(out_bf16.astype(jnp.float32) - ref)))
    assert jnp.allclose(out_bf16.astype(jnp.float32), ref, atol=5e-2, rtol=5e-2), max_err

    print("KERNEL_OK")
</pallas_src>

<mosaic_0001>
module attributes {stable_mosaic.version = 11 : i64} {
  func.func @_inception_kernel(%arg0: i32, %arg1: memref<1x8x896xf32, #tpu.memory_space<vmem>>, %arg2: memref<11x8x88xf32, #tpu.memory_space<vmem>>, %arg3: memref<8x1xf32, #tpu.memory_space<vmem>>, %arg4: memref<1x8x512xf32, #tpu.memory_space<vmem>>, %arg5: memref<88x512xf32, #tpu.memory_space<vmem>>, %arg6: memref<8x512xf32, #tpu.memory_space<vmem>>) attributes {dimension_semantics = [#tpu.dimension_semantics<parallel>], iteration_bounds = array<i64: 2>, scalar_prefetch = 0 : i64, scratch_operands = 2 : i64, tpu.core_type = #tpu.core_type<tc>, window_params = [{transform_indices = @transform_0, window_bounds = array<i64: 1, 8, 896>}, {pipeline_mode = #tpu.pipeline_mode<synchronous>, transform_indices = @transform_1, window_bounds = array<i64: 11, 8, 88>}, {pipeline_mode = #tpu.pipeline_mode<synchronous>, transform_indices = @transform_2, window_bounds = array<i64: 8, 1>}, {transform_indices = @transform_3, window_bounds = array<i64: 1, 8, 512>}]} {
    %cst = arith.constant 0.000000e+00 : f32
    %0 = vector.broadcast %cst : f32 to vector<8x512xf32>
    %c0 = arith.constant 0 : index
    %c0_0 = arith.constant 0 : index
    %1 = vector.load %arg6[%c0, %c0_0] : memref<8x512xf32, #tpu.memory_space<vmem>>, vector<8x512xf32>
    tpu.vector_store %arg6[%c0, %c0_0], %0 {strides = array<i32>} : memref<8x512xf32, #tpu.memory_space<vmem>>, vector<8x512xf32>,
    %c0_1 = arith.constant 0 : index
    %c0_2 = arith.constant 0 : index
    %c0_3 = arith.constant 0 : index
    %2 = vector.load %arg1[%c0_1, %c0_2, %c0_3] : memref<1x8x896xf32, #tpu.memory_space<vmem>>, vector<1x8x522xf32>
    %3 = vector.shape_cast %2 : vector<1x8x522xf32> to vector<8x522xf32>
    %4 = vector.extract_strided_slice %3 {offsets = [0, 0], sizes = [8, 512], strides = [1, 1]} : vector<8x522xf32> to vector<8x512xf32>
    %c0_4 = arith.constant 0 : index
    %c0_5 = arith.constant 0 : index
    %5 = vector.load %arg5[%c0_4, %c0_5] : memref<88x512xf32, #tpu.memory_space<vmem>>, vector<8x512xf32>
    tpu.vector_store %arg5[%c0_4, %c0_5], %4 {strides = array<i32>} : memref<88x512xf32, #tpu.memory_space<vmem>>, vector<8x512xf32>,
    %6 = vector.extract_strided_slice %3 {offsets = [0, 1], sizes = [8, 512], strides = [1, 1]} : vector<8x522xf32> to vector<8x512xf32>
    %c8 = arith.constant 8 : index
    %c0_6 = arith.constant 0 : index
    %7 = vector.load %arg5[%c8, %c0_6] : memref<88x512xf32, #tpu.memory_space<vmem>>, vector<8x512xf32>
    tpu.vector_store %arg5[%c8, %c0_6], %6 {strides = array<i32>} : memref<88x512xf32, #tpu.memory_space<vmem>>, vector<8x512xf32>,
    %8 = vector.extract_strided_slice %3 {offsets = [0, 2], sizes = [8, 512], strides = [1, 1]} : vector<8x522xf32> to vector<8x512xf32>
    %c16 = arith.constant 16 : index
    %c0_7 = arith.constant 0 : index
    %9 = vector.load %arg5[%c16, %c0_7] : memref<88x512xf32, #tpu.memory_space<vmem>>, vector<8x512xf32>
    tpu.vector_store %arg5[%c16, %c0_7], %8 {strides = array<i32>} : memref<88x512xf32, #tpu.memory_space<vmem>>, vector<8x512xf32>,
    %10 = vector.extract_strided_slice %3 {offsets = [0, 3], sizes = [8, 512], strides = [1, 1]} : vector<8x522xf32> to vector<8x512xf32>
    %c24 = arith.constant 24 : index
    %c0_8 = arith.constant 0 : index
    %11 = vector.load %arg5[%c24, %c0_8] : memref<88x512xf32, #tpu.memory_space<vmem>>, vector<8x512xf32>
    tpu.vector_store %arg5[%c24, %c0_8], %10 {strides = array<i32>} : memref<88x512xf32, #tpu.memory_space<vmem>>, vector<8x512xf32>,
    %12 = vector.extract_strided_slice %3 {offsets = [0, 4], sizes = [8, 512], strides = [1, 1]} : vector<8x522xf32> to vector<8x512xf32>
    %c32 = arith.constant 32 : index
    %c0_9 = arith.constant 0 : index
    %13 = vector.load %arg5[%c32, %c0_9] : memref<88x512xf32, #tpu.memory_space<vmem>>, vector<8x512xf32>
    tpu.vector_store %arg5[%c32, %c0_9], %12 {strides = array<i32>} : memref<88x512xf32, #tpu.memory_space<vmem>>, vector<8x512xf32>,
    %14 = vector.extract_strided_slice %3 {offsets = [0, 5], sizes = [8, 512], strides = [1, 1]} : vector<8x522xf32> to vector<8x512xf32>
    %c40 = arith.constant 40 : index
    %c0_10 = arith.constant 0 : index
    %15 = vector.load %arg5[%c40, %c0_10] : memref<88x512xf32, #tpu.memory_space<vmem>>, vector<8x512xf32>
    tpu.vector_store %arg5[%c40, %c0_10], %14 {strides = array<i32>} : memref<88x512xf32, #tpu.memory_space<vmem>>, vector<8x512xf32>,
    %16 = vector.extract_strided_slice %3 {offsets = [0, 6], sizes = [8, 512], strides = [1, 1]} : vector<8x522xf32> to vector<8x512xf32>
    %c48 = arith.constant 48 : index
    %c0_11 = arith.constant 0 : index
    %17 = vector.load %arg5[%c48, %c0_11] : memref<88x512xf32, #tpu.memory_space<vmem>>, vector<8x512xf32>
    tpu.vector_store %arg5[%c48, %c0_11], %16 {strides = array<i32>} : memref<88x512xf32, #tpu.memory_space<vmem>>, vector<8x512xf32>,
    %18 = vector.extract_strided_slice %3 {offsets = [0, 7], sizes = [8, 512], strides = [1, 1]} : vector<8x522xf32> to vector<8x512xf32>
    %c56 = arith.constant 56 : index
    %c0_12 = arith.constant 0 : index
    %19 = vector.load %arg5[%c56, %c0_12] : memref<88x512xf32, #tpu.memory_space<vmem>>, vector<8x512xf32>
    tpu.vector_store %arg5[%c56, %c0_12], %18 {strides = array<i32>} : memref<88x512xf32, #tpu.memory_space<vmem>>, vector<8x512xf32>,
    %20 = vector.extract_strided_slice %3 {offsets = [0, 8], sizes = [8, 512], strides = [1, 1]} : vector<8x522xf32> to vector<8x512xf32>
    %c64 = arith.constant 64 : index
    %c0_13 = arith.constant 0 : index
    %21 = vector.load %arg5[%c64, %c0_13] : memref<88x512xf32, #tpu.memory_space<vmem>>, vector<8x512xf32>
    tpu.vector_store %arg5[%c64, %c0_13], %20 {strides = array<i32>} : memref<88x512xf32, #tpu.memory_space<vmem>>, vector<8x512xf32>,
    %22 = vector.extract_strided_slice %3 {offsets = [0, 9], sizes = [8, 512], strides = [1, 1]} : vector<8x522xf32> to vector<8x512xf32>
    %c72 = arith.constant 72 : index
    %c0_14 = arith.constant 0 : index
    %23 = vector.load %arg5[%c72, %c0_14] : memref<88x512xf32, #tpu.memory_space<vmem>>, vector<8x512xf32>
    tpu.vector_store %arg5[%c72, %c0_14], %22 {strides = array<i32>} : memref<88x512xf32, #tpu.memory_space<vmem>>, vector<8x512xf32>,
    %24 = vector.extract_strided_slice %3 {offsets = [0, 10], sizes = [8, 512], strides = [1, 1]} : vector<8x522xf32> to vector<8x512xf32>
    %c80 = arith.constant 80 : index
    %c0_15 = arith.constant 0 : index
    %25 = vector.load %arg5[%c80, %c0_15] : memref<88x512xf32, #tpu.memory_space<vmem>>, vector<8x512xf32>
    tpu.vector_store %arg5[%c80, %c0_15], %24 {strides = array<i32>} : memref<88x512xf32, #tpu.memory_space<vmem>>, vector<8x512xf32>,
    %c0_16 = arith.constant 0 : index
    %c0_17 = arith.constant 0 : index
    %26 = vector.load %arg6[%c0_16, %c0_17] : memref<8x512xf32, #tpu.memory_space<vmem>>, vector<8x512xf32>
    %c0_18 = arith.constant 0 : index
    %c0_19 = arith.constant 0 : index
    %c0_20 = arith.constant 0 : index
    %27 = vector.load %arg2[%c0_18, %c0_19, %c0_20] : memref<11x8x88xf32, #tpu.memory_space<vmem>>, vector<1x8x88xf32>
    %28 = vector.shape_cast %27 : vector<1x8x88xf32> to vector<8x88xf32>
    %c0_21 = arith.constant 0 : index
    %c0_22 = arith.constant 0 : index
    %29 = vector.load %arg5[%c0_21, %c0_22] : memref<88x512xf32, #tpu.memory_space<vmem>>, vector<88x512xf32>
    %cst_23 = arith.constant dense<0.000000e+00> : vector<8x512xf32>
    %30 = tpu.matmul %28, %29, %cst_23 {dimension_numbers = #tpu.dot_dimension_numbers<[1], [0], [0], [1], [0, 0, 1, 1], [], []>} : vector<8x88xf32>, vector<88x512xf32>, vector<8x512xf32> -> vector<8x512xf32>
    %31 = arith.addf %26, %30 : vector<8x512xf32>
    %c0_24 = arith.constant 0 : index
    %c0_25 = arith.constant 0 : index
    %32 = vector.load %arg6[%c0_24, %c0_25] : memref<8x512xf32, #tpu.memory_space<vmem>>, vector<8x512xf32>
    tpu.vector_store %arg6[%c0_24, %c0_25], %31 {strides = array<i32>} : memref<8x512xf32, #tpu.memory_space<vmem>>, vector<8x512xf32>,
    %c0_26 = arith.constant 0 : index
    %c0_27 = arith.constant 0 : index
    %c26 = arith.constant 26 : index
    %33 = vector.load %arg1[%c0_26, %c0_27, %c26] : memref<1x8x896xf32, #tpu.memory_space<vmem>>, vector<1x8x522xf32>
    %34 = vector.shape_cast %33 : vector<1x8x522xf32> to vector<8x522xf32>
    %35 = vector.extract_strided_slice %34 {offsets = [0, 0], sizes = [8, 512], strides = [1, 1]} : vector<8x522xf32> to vector<8x512xf32>
    %c0_28 = arith.constant 0 : index
    %c0_29 = arith.constant 0 : index
    %36 = vector.load %arg5[%c0_28, %c0_29] : memref<88x512xf32, #tpu.memory_space<vmem>>, vector<8x512xf32>
    tpu.vector_store %arg5[%c0_28, %c0_29], %35 {strides = array<i32>} : memref<88x512xf32, #tpu.memory_space<vmem>>, vector<8x512xf32>,
    %37 = vector.extract_strided_slice %34 {offsets = [0, 1], sizes = [8, 512], strides = [1, 1]} : vector<8x522xf32> to vector<8x512xf32>
    %c8_30 = arith.constant 8 : index
    %c0_31 = arith.constant 0 : index
    %38 = vector.load %arg5[%c8_30, %c0_31] : memref<88x512xf32, #tpu.memory_space<vmem>>, vector<8x512xf32>
    tpu.vector_store %arg5[%c8_30, %c0_31], %37 {strides = array<i32>} : memref<88x512xf32, #tpu.memory_space<vmem>>, vector<8x512xf32>,
    %39 = vector.extract_strided_slice %34 {offsets = [0, 2], sizes = [8, 512], strides = [1, 1]} : vector<8x522xf32> to vector<8x512xf32>
    %c16_32 = arith.constant 16 : index
    %c0_33 = arith.constant 0 : index
    %40 = vector.load %arg5[%c16_32, %c0_33] : memref<88x512xf32, #tpu.memory_space<vmem>>, vector<8x512xf32>
    tpu.vector_store %arg5[%c16_32, %c0_33], %39 {strides = array<i32>} : memref<88x512xf32, #tpu.memory_space<vmem>>, vector<8x512xf32>,
    %41 = vector.extract_strided_slice %34 {offsets = [0, 3], sizes = [8, 512], strides = [1, 1]} : vector<8x522xf32> to vector<8x512xf32>
    %c24_34 = arith.constant 24 : index
    %c0_35 = arith.constant 0 : index
    %42 = vector.load %arg5[%c24_34, %c0_35] : memref<88x512xf32, #tpu.memory_space<vmem>>, vector<8x512xf32>
    tpu.vector_store %arg5[%c24_34, %c0_35], %41 {strides = array<i32>} : memref<88x512xf32, #tpu.memory_space<vmem>>, vector<8x512xf32>,
    %43 = vector.extract_strided_slice %34 {offsets = [0, 4], sizes = [8, 512], strides = [1, 1]} : vector<8x522xf32> to vector<8x512xf32>
    %c32_36 = arith.constant 32 : index
    %c0_37 = arith.constant 0 : index
    %44 = vector.load %arg5[%c32_36, %c0_37] : memref<88x512xf32, #tpu.memory_space<vmem>>, vector<8x512xf32>
    tpu.vector_store %arg5[%c32_36, %c0_37], %43 {strides = array<i32>} : memref<88x512xf32, #tpu.memory_space<vmem>>, vector<8x512xf32>,
    %45 = vector.extract_strided_slice %34 {offsets = [0, 5], sizes = [8, 512], strides = [1, 1]} : vector<8x522xf32> to vector<8x512xf32>
    %c40_38 = arith.constant 40 : index
    %c0_39 = arith.constant 0 : index
    %46 = vector.load %arg5[%c40_38, %c0_39] : memref<88x512xf32, #tpu.memory_space<vmem>>, vector<8x512xf32>
    tpu.vector_store %arg5[%c40_38, %c0_39], %45 {strides = array<i32>} : memref<88x512xf32, #tpu.memory_space<vmem>>, vector<8x512xf32>,
    %47 = vector.extract_strided_slice %34 {offsets = [0, 6], sizes = [8, 512], strides = [1, 1]} : vector<8x522xf32> to vector<8x512xf32>
    %c48_40 = arith.constant 48 : index
    %c0_41 = arith.constant 0 : index
    %48 = vector.load %arg5[%c48_40, %c0_41] : memref<88x512xf32, #tpu.memory_space<vmem>>, vector<8x512xf32>
    tpu.vector_store %arg5[%c48_40, %c0_41], %47 {strides = array<i32>} : memref<88x512xf32, #tpu.memory_space<vmem>>, vector<8x512xf32>,
    %49 = vector.extract_strided_slice %34 {offsets = [0, 7], sizes = [8, 512], strides = [1, 1]} : vector<8x522xf32> to vector<8x512xf32>
    %c56_42 = arith.constant 56 : index
    %c0_43 = arith.constant 0 : index
    %50 = vector.load %arg5[%c56_42, %c0_43] : memref<88x512xf32, #tpu.memory_space<vmem>>, vector<8x512xf32>
    tpu.vector_store %arg5[%c56_42, %c0_43], %49 {strides = array<i32>} : memref<88x512xf32, #tpu.memory_space<vmem>>, vector<8x512xf32>,
    %51 = vector.extract_strided_slice %34 {offsets = [0, 8], sizes = [8, 512], strides = [1, 1]} : vector<8x522xf32> to vector<8x512xf32>
    %c64_44 = arith.constant 64 : index
    %c0_45 = arith.constant 0 : index
    %52 = vector.load %arg5[%c64_44, %c0_45] : memref<88x512xf32, #tpu.memory_space<vmem>>, vector<8x512xf32>
    tpu.vector_store %arg5[%c64_44, %c0_45], %51 {strides = array<i32>} : memref<88x512xf32, #tpu.memory_space<vmem>>, vector<8x512xf32>,
    %53 = vector.extract_strided_slice %34 {offsets = [0, 9], sizes = [8, 512], strides = [1, 1]} : vector<8x522xf32> to vector<8x512xf32>
    %c72_46 = arith.constant 72 : index
    %c0_47 = arith.constant 0 : index
    %54 = vector.load %arg5[%c72_46, %c0_47] : memref<88x512xf32, #tpu.memory_space<vmem>>, vector<8x512xf32>
    tpu.vector_store %arg5[%c72_46, %c0_47], %53 {strides = array<i32>} : memref<88x512xf32, #tpu.memory_space<vmem>>, vector<8x512xf32>,
    %55 = vector.extract_strided_slice %34 {offsets = [0, 10], sizes = [8, 512], strides = [1, 1]} : vector<8x522xf32> to vector<8x512xf32>
    %c80_48 = arith.constant 80 : index
    %c0_49 = arith.constant 0 : index
    %56 = vector.load %arg5[%c80_48, %c0_49] : memref<88x512xf32, #tpu.memory_space<vmem>>, vector<8x512xf32>
    tpu.vector_store %arg5[%c80_48, %c0_49], %55 {strides = array<i32>} : memref<88x512xf32, #tpu.memory_space<vmem>>, vector<8x512xf32>,
    %c0_50 = arith.constant 0 : index
    %c0_51 = arith.constant 0 : index
    %57 = vector.load %arg6[%c0_50, %c0_51] : memref<8x512xf32, #tpu.memory_space<vmem>>, vector<8x512xf32>
    %c1 = arith.constant 1 : index
    %c0_52 = arith.constant 0 : index
    %c0_53 = arith.constant 0 : index
    %58 = vector.load %arg2[%c1, %c0_52, %c0_53] : memref<11x8x88xf32, #tpu.memory_space<vmem>>, vector<1x8x88xf32>
    %59 = vector.shape_cast %58 : vector<1x8x88xf32> to vector<8x88xf32>
    %c0_54 = arith.constant 0 : index
    %c0_55 = arith.constant 0 : index
    %60 = vector.load %arg5[%c0_54, %c0_55] : memref<88x512xf32, #tpu.memory_space<vmem>>, vector<88x512xf32>
    %cst_56 = arith.constant dense<0.000000e+00> : vector<8x512xf32>
    %61 = tpu.matmul %59, %60, %cst_56 {dimension_numbers = #tpu.dot_dimension_numbers<[1], [0], [0], [1], [0, 0, 1, 1], [], []>} : vector<8x88xf32>, vector<88x512xf32>, vector<8x512xf32> -> vector<8x512xf32>
    %62 = arith.addf %57, %61 : vector<8x512xf32>
    %c0_57 = arith.constant 0 : index
    %c0_58 = arith.constant 0 : index
    %63 = vector.load %arg6[%c0_57, %c0_58] : memref<8x512xf32, #tpu.memory_space<vmem>>, vector<8x512xf32>
    tpu.vector_store %arg6[%c0_57, %c0_58], %62 {strides = array<i32>} : memref<8x512xf32, #tpu.memory_space<vmem>>, vector<8x512xf32>,
    %c0_59 = arith.constant 0 : index
    %c0_60 = arith.constant 0 : index
    %c52 = arith.constant 52 : index
    %64 = vector.load %arg1[%c0_59, %c0_60, %c52] : memref<1x8x896xf32, #tpu.memory_space<vmem>>, vector<1x8x522xf32>
    %65 = vector.shape_cast %64 : vector<1x8x522xf32> to vector<8x522xf32>
    %66 = vector.extract_strided_slice %65 {offsets = [0, 0], sizes = [8, 512], strides = [1, 1]} : vector<8x522xf32> to vector<8x512xf32>
    %c0_61 = arith.constant 0 : index
    %c0_62 = arith.constant 0 : index
    %67 = vector.load %arg5[%c0_61, %c0_62] : memref<88x512xf32, #tpu.memory_space<vmem>>, vector<8x512xf32>
    tpu.vector_store %arg5[%c0_61, %c0_62], %66 {strides = array<i32>} : memref<88x512xf32, #tpu.memory_space<vmem>>, vector<8x512xf32>,
    %68 = vector.extract_strided_slice %65 {offsets = [0, 1], sizes = [8, 512], strides = [1, 1]} : vector<8x522xf32> to vector<8x512xf32>
    %c8_63 = arith.constant 8 : index
    %c0_64 = arith.constant 0 : index
    %69 = vector.load %arg5[%c8_63, %c0_64] : memref<88x512xf32, #tpu.memory_space<vmem>>, vector<8x512xf32>
    tpu.vector_store %arg5[%c8_63, %c0_64], %68 {strides = array<i32>} : memref<88x512xf32, #tpu.memory_space<vmem>>, vector<8x512xf32>,
    %70 = vector.extract_strided_slice %65 {offsets = [0, 2], sizes = [8, 512], strides = [1, 1]} : vector<8x522xf32> to vector<8x512xf32>
    %c16_65 = arith.constant 16 : index
    %c0_66 = arith.constant 0 : index
    %71 = vector.load %arg5[%c16_65, %c0_66] : memref<88x512xf32, #tpu.memory_space<vmem>>, vector<8x512xf32>
    tpu.vector_store %arg5[%c16_65, %c0_66], %70 {strides = array<i32>} : memref<88x512xf32, #tpu.memory_space<vmem>>, vector<8x512xf32>,
    %72 = vector.extract_strided_slice %65 {offsets = [0, 3], sizes = [8, 512], strides = [1, 1]} : vector<8x522xf32> to vector<8x512xf32>
    %c24_67 = arith.constant 24 : index
    %c0_68 = arith.constant 0 : index
    %73 = vector.load %arg5[%c24_67, %c0_68] : memref<88x512xf32, #tpu.memory_space<vmem>>, vector<8x512xf32>
    tpu.vector_store %arg5[%c24_67, %c0_68], %72 {strides = array<i32>} : memref<88x512xf32, #tpu.memory_space<vmem>>, vector<8x512xf32>,
    %74 = vector.extract_strided_slice %65 {offsets = [0, 4], sizes = [8, 512], strides = [1, 1]} : vector<8x522xf32> to vector<8x512xf32>
    %c32_69 = arith.constant 32 : index
    %c0_70 = arith.constant 0 : index
    %75 = vector.load %arg5[%c32_69, %c0_70] : memref<88x512xf32, #tpu.memory_space<vmem>>, vector<8x512xf32>
    tpu.vector_store %arg5[%c32_69, %c0_70], %74 {strides = array<i32>} : memref<88x512xf32, #tpu.memory_space<vmem>>, vector<8x512xf32>,
    %76 = vector.extract_strided_slice %65 {offsets = [0, 5], sizes = [8, 512], strides = [1, 1]} : vector<8x522xf32> to vector<8x512xf32>
    %c40_71 = arith.constant 40 : index
    %c0_72 = arith.constant 0 : index
    %77 = vector.load %arg5[%c40_71, %c0_72] : memref<88x512xf32, #tpu.memory_space<vmem>>, vector<8x512xf32>
    tpu.vector_store %arg5[%c40_71, %c0_72], %76 {strides = array<i32>} : memref<88x512xf32, #tpu.memory_space<vmem>>, vector<8x512xf32>,
    %78 = vector.extract_strided_slice %65 {offsets = [0, 6], sizes = [8, 512], strides = [1, 1]} : vector<8x522xf32> to vector<8x512xf32>
    %c48_73 = arith.constant 48 : index
    %c0_74 = arith.constant 0 : index
    %79 = vector.load %arg5[%c48_73, %c0_74] : memref<88x512xf32, #tpu.memory_space<vmem>>, vector<8x512xf32>
    tpu.vector_store %arg5[%c48_73, %c0_74], %78 {strides = array<i32>} : memref<88x512xf32, #tpu.memory_space<vmem>>, vector<8x512xf32>,
    %80 = vector.extract_strided_slice %65 {offsets = [0, 7], sizes = [8, 512], strides = [1, 1]} : vector<8x522xf32> to vector<8x512xf32>
    %c56_75 = arith.constant 56 : index
    %c0_76 = arith.constant 0 : index
    %81 = vector.load %arg5[%c56_75, %c0_76] : memref<88x512xf32, #tpu.memory_space<vmem>>, vector<8x512xf32>
    tpu.vector_store %arg5[%c56_75, %c0_76], %80 {strides = array<i32>} : memref<88x512xf32, #tpu.memory_space<vmem>>, vector<8x512xf32>,
    %82 = vector.extract_strided_slice %65 {offsets = [0, 8], sizes = [8, 512], strides = [1, 1]} : vector<8x522xf32> to vector<8x512xf32>
    %c64_77 = arith.constant 64 : index
    %c0_78 = arith.constant 0 : index
    %83 = vector.load %arg5[%c64_77, %c0_78] : memref<88x512xf32, #tpu.memory_space<vmem>>, vector<8x512xf32>
    tpu.vector_store %arg5[%c64_77, %c0_78], %82 {strides = array<i32>} : memref<88x512xf32, #tpu.memory_space<vmem>>, vector<8x512xf32>,
    %84 = vector.extract_strided_slice %65 {offsets = [0, 9], sizes = [8, 512], strides = [1, 1]} : vector<8x522xf32> to vector<8x512xf32>
    %c72_79 = arith.constant 72 : index
    %c0_80 = arith.constant 0 : index
    %85 = vector.load %arg5[%c72_79, %c0_80] : memref<88x512xf32, #tpu.memory_space<vmem>>, vector<8x512xf32>
    tpu.vector_store %arg5[%c72_79, %c0_80], %84 {strides = array<i32>} : memref<88x512xf32, #tpu.memory_space<vmem>>, vector<8x512xf32>,
    %86 = vector.extract_strided_slice %65 {offsets = [0, 10], sizes = [8, 512], strides = [1, 1]} : vector<8x522xf32> to vector<8x512xf32>
    %c80_81 = arith.constant 80 : index
    %c0_82 = arith.constant 0 : index
    %87 = vector.load %arg5[%c80_81, %c0_82] : memref<88x512xf32, #tpu.memory_space<vmem>>, vector<8x512xf32>
    tpu.vector_store %arg5[%c80_81, %c0_82], %86 {strides = array<i32>} : memref<88x512xf32, #tpu.memory_space<vmem>>, vector<8x512xf32>,
    %c0_83 = arith.constant 0 : index
    %c0_84 = arith.constant 0 : index
    %88 = vector.load %arg6[%c0_83, %c0_84] : memref<8x512xf32, #tpu.memory_space<vmem>>, vector<8x512xf32>
    %c2 = arith.constant 2 : index
    %c0_85 = arith.constant 0 : index
    %c0_86 = arith.constant 0 : index
    %89 = vector.load %arg2[%c2, %c0_85, %c0_86] : memref<11x8x88xf32, #tpu.memory_space<vmem>>, vector<1x8x88xf32>
    %90 = vector.shape_cast %89 : vector<1x8x88xf32> to vector<8x88xf32>
    %c0_87 = arith.constant 0 : index
    %c0_88 = arith.constant 0 : index
    %91 = vector.load %arg5[%c0_87, %c0_88] : memref<88x512xf32, #tpu.memory_space<vmem>>, vector<88x512xf32>
    %cst_89 = arith.constant dense<0.000000e+00> : vector<8x512xf32>
    %92 = tpu.matmul %90, %91, %cst_89 {dimension_numbers = #tpu.dot_dimension_numbers<[1], [0], [0], [1], [0, 0, 1, 1], [], []>} : vector<8x88xf32>, vector<88x512xf32>, vector<8x512xf32> -> vector<8x512xf32>
    %93 = arith.addf %88, %92 : vector<8x512xf32>
    %c0_90 = arith.constant 0 : index
    %c0_91 = arith.constant 0 : index
    %94 = vector.load %arg6[%c0_90, %c0_91] : memref<8x512xf32, #tpu.memory_space<vmem>>, vector<8x512xf32>
    tpu.vector_store %arg6[%c0_90, %c0_91], %93 {strides = array<i32>} : memref<8x512xf32, #tpu.memory_space<vmem>>, vector<8x512xf32>,
    %c0_92 = arith.constant 0 : index
    %c0_93 = arith.constant 0 : index
    %c78 = arith.constant 78 : index
    %95 = vector.load %arg1[%c0_92, %c0_93, %c78] : memref<1x8x896xf32, #tpu.memory_space<vmem>>, vector<1x8x522xf32>
    %96 = vector.shape_cast %95 : vector<1x8x522xf32> to vector<8x522xf32>
    %97 = vector.extract_strided_slice %96 {offsets = [0, 0], sizes = [8, 512], strides = [1, 1]} : vector<8x522xf32> to vector<8x512xf32>
    %c0_94 = arith.constant 0 : index
    %c0_95 = arith.constant 0 : index
    %98 = vector.load %arg5[%c0_94, %c0_95] : memref<88x512xf32, #tpu.memory_space<vmem>>, vector<8x512xf32>
    tpu.vector_store %arg5[%c0_94, %c0_95], %97 {strides = array<i32>} : memref<88x512xf32, #tpu.memory_space<vmem>>, vector<8x512xf32>,
    %99 = vector.extract_strided_slice %96 {offsets = [0, 1], sizes = [8, 512], strides = [1, 1]} : vector<8x522xf32> to vector<8x512xf32>
    %c8_96 = arith.constant 8 : index
    %c0_97 = arith.constant 0 : index
    %100 = vector.load %arg5[%c8_96, %c0_97] : memref<88x512xf32, #tpu.memory_space<vmem>>, vector<8x512xf32>
    tpu.vector_store %arg5[%c8_96, %c0_97], %99 {strides = array<i32>} : memref<88x512xf32, #tpu.memory_space<vmem>>, vector<8x512xf32>,
    %101 = vector.extract_strided_slice %96 {offsets = [0, 2], sizes = [8, 512], strides = [1, 1]} : vector<8x522xf32> to vector<8x512xf32>
    %c16_98 = arith.constant 16 : index
    %c0_99 = arith.constant 0 : index
    %102 = vector.load %arg5[%c16_98, %c0_99] : memref<88x512xf32, #tpu.memory_space<vmem>>, vector<8x512xf32>
    tpu.vector_store %arg5[%c16_98, %c0_99], %101 {strides = array<i32>} : memref<88x512xf32, #tpu.memory_space<vmem>>, vector<8x512xf32>,
    %103 = vector.extract_strided_slice %96 {offsets = [0, 3], sizes = [8, 512], strides = [1, 1]} : vector<8x522xf32> to vector<8x512xf32>
    %c24_100 = arith.constant 24 : index
    %c0_101 = arith.constant 0 : index
    %104 = vector.load %arg5[%c24_100, %c0_101] : memref<88x512xf32, #tpu.memory_space<vmem>>, vector<8x512xf32>
    tpu.vector_store %arg5[%c24_100, %c0_101], %103 {strides = array<i32>} : memref<88x512xf32, #tpu.memory_space<vmem>>, vector<8x512xf32>,
    %105 = vector.extract_strided_slice %96 {offsets = [0, 4], sizes = [8, 512], strides = [1, 1]} : vector<8x522xf32> to vector<8x512xf32>
    %c32_102 = arith.constant 32 : index
    %c0_103 = arith.constant 0 : index
    %106 = vector.load %arg5[%c32_102, %c0_103] : memref<88x512xf32, #tpu.memory_space<vmem>>, vector<8x512xf32>
    tpu.vector_store %arg5[%c32_102, %c0_103], %105 {strides = array<i32>} : memref<88x512xf32, #tpu.memory_space<vmem>>, vector<8x512xf32>,
    %107 = vector.extract_strided_slice %96 {offsets = [0, 5], sizes = [8, 512], strides = [1, 1]} : vector<8x522xf32> to vector<8x512xf32>
    %c40_104 = arith.constant 40 : index
    %c0_105 = arith.constant 0 : index
    %108 = vector.load %arg5[%c40_104, %c0_105] : memref<88x512xf32, #tpu.memory_space<vmem>>, vector<8x512xf32>
    tpu.vector_store %arg5[%c40_104, %c0_105], %107 {strides = array<i32>} : memref<88x512xf32, #tpu.memory_space<vmem>>, vector<8x512xf32>,
    %109 = vector.extract_strided_slice %96 {offsets = [0, 6], sizes = [8, 512], strides = [1, 1]} : vector<8x522xf32> to vector<8x512xf32>
    %c48_106 = arith.constant 48 : index
    %c0_107 = arith.constant 0 : index
    %110 = vector.load %arg5[%c48_106, %c0_107] : memref<88x512xf32, #tpu.memory_space<vmem>>, vector<8x512xf32>
    tpu.vector_store %arg5[%c48_106, %c0_107], %109 {strides = array<i32>} : memref<88x512xf32, #tpu.memory_space<vmem>>, vector<8x512xf32>,
    %111 = vector.extract_strided_slice %96 {offsets = [0, 7], sizes = [8, 512], strides = [1, 1]} : vector<8x522xf32> to vector<8x512xf32>
    %c56_108 = arith.constant 56 : index
    %c0_109 = arith.constant 0 : index
    %112 = vector.load %arg5[%c56_108, %c0_109] : memref<88x512xf32, #tpu.memory_space<vmem>>, vector<8x512xf32>
    tpu.vector_store %arg5[%c56_108, %c0_109], %111 {strides = array<i32>} : memref<88x512xf32, #tpu.memory_space<vmem>>, vector<8x512xf32>,
    %113 = vector.extract_strided_slice %96 {offsets = [0, 8], sizes = [8, 512], strides = [1, 1]} : vector<8x522xf32> to vector<8x512xf32>
    %c64_110 = arith.constant 64 : index
    %c0_111 = arith.constant 0 : index
    %114 = vector.load %arg5[%c64_110, %c0_111] : memref<88x512xf32, #tpu.memory_space<vmem>>, vector<8x512xf32>
    tpu.vector_store %arg5[%c64_110, %c0_111], %113 {strides = array<i32>} : memref<88x512xf32, #tpu.memory_space<vmem>>, vector<8x512xf32>,
    %115 = vector.extract_strided_slice %96 {offsets = [0, 9], sizes = [8, 512], strides = [1, 1]} : vector<8x522xf32> to vector<8x512xf32>
    %c72_112 = arith.constant 72 : index
    %c0_113 = arith.constant 0 : index
    %116 = vector.load %arg5[%c72_112, %c0_113] : memref<88x512xf32, #tpu.memory_space<vmem>>, vector<8x512xf32>
    tpu.vector_store %arg5[%c72_112, %c0_113], %115 {strides = array<i32>} : memref<88x512xf32, #tpu.memory_space<vmem>>, vector<8x512xf32>,
    %117 = vector.extract_strided_slice %96 {offsets = [0, 10], sizes = [8, 512], strides = [1, 1]} : vector<8x522xf32> to vector<8x512xf32>
    %c80_114 = arith.constant 80 : index
    %c0_115 = arith.constant 0 : index
    %118 = vector.load %arg5[%c80_114, %c0_115] : memref<88x512xf32, #tpu.memory_space<vmem>>, vector<8x512xf32>
    tpu.vector_store %arg5[%c80_114, %c0_115], %117 {strides = array<i32>} : memref<88x512xf32, #tpu.memory_space<vmem>>, vector<8x512xf32>,
    %c0_116 = arith.constant 0 : index
    %c0_117 = arith.constant 0 : index
    %119 = vector.load %arg6[%c0_116, %c0_117] : memref<8x512xf32, #tpu.memory_space<vmem>>, vector<8x512xf32>
    %c3 = arith.constant 3 : index
    %c0_118 = arith.constant 0 : index
    %c0_119 = arith.constant 0 : index
    %120 = vector.load %arg2[%c3, %c0_118, %c0_119] : memref<11x8x88xf32, #tpu.memory_space<vmem>>, vector<1x8x88xf32>
    %121 = vector.shape_cast %120 : vector<1x8x88xf32> to vector<8x88xf32>
    %c0_120 = arith.constant 0 : index
    %c0_121 = arith.constant 0 : index
    %122 = vector.load %arg5[%c0_120, %c0_121] : memref<88x512xf32, #tpu.memory_space<vmem>>, vector<88x512xf32>
    %cst_122 = arith.constant dense<0.000000e+00> : vector<8x512xf32>
    %123 = tpu.matmul %121, %122, %cst_122 {dimension_numbers = #tpu.dot_dimension_numbers<[1], [0], [0], [1], [0, 0, 1, 1], [], []>} : vector<8x88xf32>, vector<88x512xf32>, vector<8x512xf32> -> vector<8x512xf32>
    %124 = arith.addf %119, %123 : vector<8x512xf32>
    %c0_123 = arith.constant 0 : index
    %c0_124 = arith.constant 0 : index
    %125 = vector.load %arg6[%c0_123, %c0_124] : memref<8x512xf32, #tpu.memory_space<vmem>>, vector<8x512xf32>
    tpu.vector_store %arg6[%c0_123, %c0_124], %124 {strides = array<i32>} : memref<8x512xf32, #tpu.memory_space<vmem>>, vector<8x512xf32>,
    %c0_125 = arith.constant 0 : index
    %c0_126 = arith.constant 0 : index
    %c104 = arith.constant 104 : index
    %126 = vector.load %arg1[%c0_125, %c0_126, %c104] : memref<1x8x896xf32, #tpu.memory_space<vmem>>, vector<1x8x522xf32>
    %127 = vector.shape_cast %126 : vector<1x8x522xf32> to vector<8x522xf32>
    %128 = vector.extract_strided_slice %127 {offsets = [0, 0], sizes = [8, 512], strides = [1, 1]} : vector<8x522xf32> to vector<8x512xf32>
    %c0_127 = arith.constant 0 : index
    %c0_128 = arith.constant 0 : index
    %129 = vector.load %arg5[%c0_127, %c0_128] : memref<88x512xf32, #tpu.memory_space<vmem>>, vector<8x512xf32>
    tpu.vector_store %arg5[%c0_127, %c0_128], %128 {strides = array<i32>} : memref<88x512xf32, #tpu.memory_space<vmem>>, vector<8x512xf32>,
    %130 = vector.extract_strided_slice %127 {offsets = [0, 1], sizes = [8, 512], strides = [1, 1]} : vector<8x522xf32> to vector<8x512xf32>
    %c8_129 = arith.constant 8 : index
    %c0_130 = arith.constant 0 : index
    %131 = vector.load %arg5[%c8_129, %c0_130] : memref<88x512xf32, #tpu.memory_space<vmem>>, vector<8x512xf32>
    tpu.vector_store %arg5[%c8_129, %c0_130], %130 {strides = array<i32>} : memref<88x512xf32, #tpu.memory_space<vmem>>, vector<8x512xf32>,
    %132 = vector.extract_strided_slice %127 {offsets = [0, 2], sizes = [8, 512], strides = [1, 1]} : vector<8x522xf32> to vector<8x512xf32>
    %c16_131 = arith.constant 16 : index
    %c0_132 = arith.constant 0 : index
    %133 = vector.load %arg5[%c16_131, %c0_132] : memref<88x512xf32, #tpu.memory_space<vmem>>, vector<8x512xf32>
    tpu.vector_store %arg5[%c16_131, %c0_132], %132 {strides = array<i32>} : memref<88x512xf32, #tpu.memory_space<vmem>>, vector<8x512xf32>,
    %134 = vector.extract_strided_slice %127 {offsets = [0, 3], sizes = [8, 512], strides = [1, 1]} : vector<8x522xf32> to vector<8x512xf32>
    %c24_133 = arith.constant 24 : index
    %c0_134 = arith.constant 0 : index
    %135 = vector.load %arg5[%c24_133, %c0_134] : memref<88x512xf32, #tpu.memory_space<vmem>>, vector<8x512xf32>
    tpu.vector_store %arg5[%c24_133, %c0_134], %134 {strides = array<i32>} : memref<88x512xf32, #tpu.memory_space<vmem>>, vector<8x512xf32>,
    %136 = vector.extract_strided_slice %127 {offsets = [0, 4], sizes = [8, 512], strides = [1, 1]} : vector<8x522xf32> to vector<8x512xf32>
    %c32_135 = arith.constant 32 : index
    %c0_136 = arith.constant 0 : index
    %137 = vector.load %arg5[%c32_135, %c0_136] : memref<88x512xf32, #tpu.memory_space<vmem>>, vector<8x512xf32>
    tpu.vector_store %arg5[%c32_135, %c0_136], %136 {strides = array<i32>} : memref<88x512xf32, #tpu.memory_space<vmem>>, vector<8x512xf32>,
    %138 = vector.extract_strided_slice %127 {offsets = [0, 5], sizes = [8, 512], strides = [1, 1]} : vector<8x522xf32> to vector<8x512xf32>
    %c40_137 = arith.constant 40 : index
    %c0_138 = arith.constant 0 : index
    %139 = vector.load %arg5[%c40_137, %c0_138] : memref<88x512xf32, #tpu.memory_space<vmem>>, vector<8x512xf32>
    tpu.vector_store %arg5[%c40_137, %c0_138], %138 {strides = array<i32>} : memref<88x512xf32, #tpu.memory_space<vmem>>, vector<8x512xf32>,
    %140 = vector.extract_strided_slice %127 {offsets = [0, 6], sizes = [8, 512], strides = [1, 1]} : vector<8x522xf32> to vector<8x512xf32>
    %c48_139 = arith.constant 48 : index
    %c0_140 = arith.constant 0 : index
    %141 = vector.load %arg5[%c48_139, %c0_140] : memref<88x512xf32, #tpu.memory_space<vmem>>, vector<8x512xf32>
    tpu.vector_store %arg5[%c48_139, %c0_140], %140 {strides = array<i32>} : memref<88x512xf32, #tpu.memory_space<vmem>>, vector<8x512xf32>,
    %142 = vector.extract_strided_slice %127 {offsets = [0, 7], sizes = [8, 512], strides = [1, 1]} : vector<8x522xf32> to vector<8x512xf32>
    %c56_141 = arith.constant 56 : index
    %c0_142 = arith.constant 0 : index
    %143 = vector.load %arg5[%c56_141, %c0_142] : memref<88x512xf32, #tpu.memory_space<vmem>>, vector<8x512xf32>
    tpu.vector_store %arg5[%c56_141, %c0_142], %142 {strides = array<i32>} : memref<88x512xf32, #tpu.memory_space<vmem>>, vector<8x512xf32>,
    %144 = vector.extract_strided_slice %127 {offsets = [0, 8], sizes = [8, 512], strides = [1, 1]} : vector<8x522xf32> to vector<8x512xf32>
    %c64_143 = arith.constant 64 : index
    %c0_144 = arith.constant 0 : index
    %145 = vector.load %arg5[%c64_143, %c0_144] : memref<88x512xf32, #tpu.memory_space<vmem>>, vector<8x512xf32>
    tpu.vector_store %arg5[%c64_143, %c0_144], %144 {strides = array<i32>} : memref<88x512xf32, #tpu.memory_space<vmem>>, vector<8x512xf32>,
    %146 = vector.extract_strided_slice %127 {offsets = [0, 9], sizes = [8, 512], strides = [1, 1]} : vector<8x522xf32> to vector<8x512xf32>
    %c72_145 = arith.constant 72 : index
    %c0_146 = arith.constant 0 : index
    %147 = vector.load %arg5[%c72_145, %c0_146] : memref<88x512xf32, #tpu.memory_space<vmem>>, vector<8x512xf32>
    tpu.vector_store %arg5[%c72_145, %c0_146], %146 {strides = array<i32>} : memref<88x512xf32, #tpu.memory_space<vmem>>, vector<8x512xf32>,
    %148 = vector.extract_strided_slice %127 {offsets = [0, 10], sizes = [8, 512], strides = [1, 1]} : vector<8x522xf32> to vector<8x512xf32>
    %c80_147 = arith.constant 80 : index
    %c0_148 = arith.constant 0 : index
    %149 = vector.load %arg5[%c80_147, %c0_148] : memref<88x512xf32, #tpu.memory_space<vmem>>, vector<8x512xf32>
    tpu.vector_store %arg5[%c80_147, %c0_148], %148 {strides = array<i32>} : memref<88x512xf32, #tpu.memory_space<vmem>>, vector<8x512xf32>,
    %c0_149 = arith.constant 0 : index
    %c0_150 = arith.constant 0 : index
    %150 = vector.load %arg6[%c0_149, %c0_150] : memref<8x512xf32, #tpu.memory_space<vmem>>, vector<8x512xf32>
    %c4 = arith.constant 4 : index
    %c0_151 = arith.constant 0 : index
    %c0_152 = arith.constant 0 : index
    %151 = vector.load %arg2[%c4, %c0_151, %c0_152] : memref<11x8x88xf32, #tpu.memory_space<vmem>>, vector<1x8x88xf32>
    %152 = vector.shape_cast %151 : vector<1x8x88xf32> to vector<8x88xf32>
    %c0_153 = arith.constant 0 : index
    %c0_154 = arith.constant 0 : index
    %153 = vector.load %arg5[%c0_153, %c0_154] : memref<88x512xf32, #tpu.memory_space<vmem>>, vector<88x512xf32>
    %cst_155 = arith.constant dense<0.000000e+00> : vector<8x512xf32>
    %154 = tpu.matmul %152, %153, %cst_155 {dimension_numbers = #tpu.dot_dimension_numbers<[1], [0], [0], [1], [0, 0, 1, 1], [], []>} : vector<8x88xf32>, vector<88x512xf32>, vector<8x512xf32> -> vector<8x512xf32>
    %155 = arith.addf %150, %154 : vector<8x512xf32>
    %c0_156 = arith.constant 0 : index
    %c0_157 = arith.constant 0 : index
    %156 = vector.load %arg6[%c0_156, %c0_157] : memref<8x512xf32, #tpu.memory_space<vmem>>, vector<8x512xf32>
    tpu.vector_store %arg6[%c0_156, %c0_157], %155 {strides = array<i32>} : memref<8x512xf32, #tpu.memory_space<vmem>>, vector<8x512xf32>,
    %c0_158 = arith.constant 0 : index
    %c0_159 = arith.constant 0 : index
    %c130 = arith.constant 130 : index
    %157 = vector.load %arg1[%c0_158, %c0_159, %c130] : memref<1x8x896xf32, #tpu.memory_space<vmem>>, vector<1x8x522xf32>
    %158 = vector.shape_cast %157 : vector<1x8x522xf32> to vector<8x522xf32>
    %159 = vector.extract_strided_slice %158 {offsets = [0, 0], sizes = [8, 512], strides = [1, 1]} : vector<8x522xf32> to vector<8x512xf32>
    %c0_160 = arith.constant 0 : index
    %c0_161 = arith.constant 0 : index
    %160 = vector.load %arg5[%c0_160, %c0_161] : memref<88x512xf32, #tpu.memory_space<vmem>>, vector<8x512xf32>
    tpu.vector_store %arg5[%c0_160, %c0_161], %159 {strides = array<i32>} : memref<88x512xf32, #tpu.memory_space<vmem>>, vector<8x512xf32>,
    %161 = vector.extract_strided_slice %158 {offsets = [0, 1], sizes = [8, 512], strides = [1, 1]} : vector<8x522xf32> to vector<8x512xf32>
    %c8_162 = arith.constant 8 : index
    %c0_163 = arith.constant 0 : index
    %162 = vector.load %arg5[%c8_162, %c0_163] : memref<88x512xf32, #tpu.memory_space<vmem>>, vector<8x512xf32>
    tpu.vector_store %arg5[%c8_162, %c0_163], %161 {strides = array<i32>} : memref<88x512xf32, #tpu.memory_space<vmem>>, vector<8x512xf32>,
    %163 = vector.extract_strided_slice %158 {offsets = [0, 2], sizes = [8, 512], strides = [1, 1]} : vector<8x522xf32> to vector<8x512xf32>
    %c16_164 = arith.constant 16 : index
    %c0_165 = arith.constant 0 : index
    %164 = vector.load %arg5[%c16_164, %c0_165] : memref<88x512xf32, #tpu.memory_space<vmem>>, vector<8x512xf32>
    tpu.vector_store %arg5[%c16_164, %c0_165], %163 {strides = array<i32>} : memref<88x512xf32, #tpu.memory_space<vmem>>, vector<8x512xf32>,
    %165 = vector.extract_strided_slice %158 {offsets = [0, 3], sizes = [8, 512], strides = [1, 1]} : vector<8x522xf32> to vector<8x512xf32>
    %c24_166 = arith.constant 24 : index
    %c0_167 = arith.constant 0 : index
    %166 = vector.load %arg5[%c24_166, %c0_167] : memref<88x512xf32, #tpu.memory_space<vmem>>, vector<8x512xf32>
    tpu.vector_store %arg5[%c24_166, %c0_167], %165 {strides = array<i32>} : memref<88x512xf32, #tpu.memory_space<vmem>>, vector<8x512xf32>,
    %167 = vector.extract_strided_slice %158 {offsets = [0, 4], sizes = [8, 512], strides = [1, 1]} : vector<8x522xf32> to vector<8x512xf32>
    %c32_168 = arith.constant 32 : index
    %c0_169 = arith.constant 0 : index
    %168 = vector.load %arg5[%c32_168, %c0_169] : memref<88x512xf32, #tpu.memory_space<vmem>>, vector<8x512xf32>
    tpu.vector_store %arg5[%c32_168, %c0_169], %167 {strides = array<i32>} : memref<88x512xf32, #tpu.memory_space<vmem>>, vector<8x512xf32>,
    %169 = vector.extract_strided_slice %158 {offsets = [0, 5], sizes = [8, 512], strides = [1, 1]} : vector<8x522xf32> to vector<8x512xf32>
    %c40_170 = arith.constant 40 : index
    %c0_171 = arith.constant 0 : index
    %170 = vector.load %arg5[%c40_170, %c0_171] : memref<88x512xf32, #tpu.memory_space<vmem>>, vector<8x512xf32>
    tpu.vector_store %arg5[%c40_170, %c0_171], %169 {strides = array<i32>} : memref<88x512xf32, #tpu.memory_space<vmem>>, vector<8x512xf32>,
    %171 = vector.extract_strided_slice %158 {offsets = [0, 6], sizes = [8, 512], strides = [1, 1]} : vector<8x522xf32> to vector<8x512xf32>
    %c48_172 = arith.constant 48 : index
    %c0_173 = arith.constant 0 : index
    %172 = vector.load %arg5[%c48_172, %c0_173] : memref<88x512xf32, #tpu.memory_space<vmem>>, vector<8x512xf32>
    tpu.vector_store %arg5[%c48_172, %c0_173], %171 {strides = array<i32>} : memref<88x512xf32, #tpu.memory_space<vmem>>, vector<8x512xf32>,
    %173 = vector.extract_strided_slice %158 {offsets = [0, 7], sizes = [8, 512], strides = [1, 1]} : vector<8x522xf32> to vector<8x512xf32>
    %c56_174 = arith.constant 56 : index
    %c0_175 = arith.constant 0 : index
    %174 = vector.load %arg5[%c56_174, %c0_175] : memref<88x512xf32, #tpu.memory_space<vmem>>, vector<8x512xf32>
    tpu.vector_store %arg5[%c56_174, %c0_175], %173 {strides = array<i32>} : memref<88x512xf32, #tpu.memory_space<vmem>>, vector<8x512xf32>,
    %175 = vector.extract_strided_slice %158 {offsets = [0, 8], sizes = [8, 512], strides = [1, 1]} : vector<8x522xf32> to vector<8x512xf32>
    %c64_176 = arith.constant 64 : index
    %c0_177 = arith.constant 0 : index
    %176 = vector.load %arg5[%c64_176, %c0_177] : memref<88x512xf32, #tpu.memory_space<vmem>>, vector<8x512xf32>
    tpu.vector_store %arg5[%c64_176, %c0_177], %175 {strides = array<i32>} : memref<88x512xf32, #tpu.memory_space<vmem>>, vector<8x512xf32>,
    %177 = vector.extract_strided_slice %158 {offsets = [0, 9], sizes = [8, 512], strides = [1, 1]} : vector<8x522xf32> to vector<8x512xf32>
    %c72_178 = arith.constant 72 : index
    %c0_179 = arith.constant 0 : index
    %178 = vector.load %arg5[%c72_178, %c0_179] : memref<88x512xf32, #tpu.memory_space<vmem>>, vector<8x512xf32>
    tpu.vector_store %arg5[%c72_178, %c0_179], %177 {strides = array<i32>} : memref<88x512xf32, #tpu.memory_space<vmem>>, vector<8x512xf32>,
    %179 = vector.extract_strided_slice %158 {offsets = [0, 10], sizes = [8, 512], strides = [1, 1]} : vector<8x522xf32> to vector<8x512xf32>
    %c80_180 = arith.constant 80 : index
    %c0_181 = arith.constant 0 : index
    %180 = vector.load %arg5[%c80_180, %c0_181] : memref<88x512xf32, #tpu.memory_space<vmem>>, vector<8x512xf32>
    tpu.vector_store %arg5[%c80_180, %c0_181], %179 {strides = array<i32>} : memref<88x512xf32, #tpu.memory_space<vmem>>, vector<8x512xf32>,
    %c0_182 = arith.constant 0 : index
    %c0_183 = arith.constant 0 : index
    %181 = vector.load %arg6[%c0_182, %c0_183] : memref<8x512xf32, #tpu.memory_space<vmem>>, vector<8x512xf32>
    %c5 = arith.constant 5 : index
    %c0_184 = arith.constant 0 : index
    %c0_185 = arith.constant 0 : index
    %182 = vector.load %arg2[%c5, %c0_184, %c0_185] : memref<11x8x88xf32, #tpu.memory_space<vmem>>, vector<1x8x88xf32>
    %183 = vector.shape_cast %182 : vector<1x8x88xf32> to vector<8x88xf32>
    %c0_186 = arith.constant 0 : index
    %c0_187 = arith.constant 0 : index
    %184 = vector.load %arg5[%c0_186, %c0_187] : memref<88x512xf32, #tpu.memory_space<vmem>>, vector<88x512xf32>
    %cst_188 = arith.constant dense<0.000000e+00> : vector<8x512xf32>
    %185 = tpu.matmul %183, %184, %cst_188 {dimension_numbers = #tpu.dot_dimension_numbers<[1], [0], [0], [1], [0, 0, 1, 1], [], []>} : vector<8x88xf32>, vector<88x512xf32>, vector<8x512xf32> -> vector<8x512xf32>
    %186 = arith.addf %181, %185 : vector<8x512xf32>
    %c0_189 = arith.constant 0 : index
    %c0_190 = arith.constant 0 : index
    %187 = vector.load %arg6[%c0_189, %c0_190] : memref<8x512xf32, #tpu.memory_space<vmem>>, vector<8x512xf32>
    tpu.vector_store %arg6[%c0_189, %c0_190], %186 {strides = array<i32>} : memref<8x512xf32, #tpu.memory_space<vmem>>, vector<8x512xf32>,
    %c0_191 = arith.constant 0 : index
    %c0_192 = arith.constant 0 : index
    %c156 = arith.constant 156 : index
    %188 = vector.load %arg1[%c0_191, %c0_192, %c156] : memref<1x8x896xf32, #tpu.memory_space<vmem>>, vector<1x8x522xf32>
    %189 = vector.shape_cast %188 : vector<1x8x522xf32> to vector<8x522xf32>
    %190 = vector.extract_strided_slice %189 {offsets = [0, 0], sizes = [8, 512], strides = [1, 1]} : vector<8x522xf32> to vector<8x512xf32>
    %c0_193 = arith.constant 0 : index
    %c0_194 = arith.constant 0 : index
    %191 = vector.load %arg5[%c0_193, %c0_194] : memref<88x512xf32, #tpu.memory_space<vmem>>, vector<8x512xf32>
    tpu.vector_store %arg5[%c0_193, %c0_194], %190 {strides = array<i32>} : memref<88x512xf32, #tpu.memory_space<vmem>>, vector<8x512xf32>,
    %192 = vector.extract_strided_slice %189 {offsets = [0, 1], sizes = [8, 512], strides = [1, 1]} : vector<8x522xf32> to vector<8x512xf32>
    %c8_195 = arith.constant 8 : index
    %c0_196 = arith.constant 0 : index
    %193 = vector.load %arg5[%c8_195, %c0_196] : memref<88x512xf32, #tpu.memory_space<vmem>>, vector<8x512xf32>
    tpu.vector_store %arg5[%c8_195, %c0_196], %192 {strides = array<i32>} : memref<88x512xf32, #tpu.memory_space<vmem>>, vector<8x512xf32>,
    %194 = vector.extract_strided_slice %189 {offsets = [0, 2], sizes = [8, 512], strides = [1, 1]} : vector<8x522xf32> to vector<8x512xf32>
    %c16_197 = arith.constant 16 : index
    %c0_198 = arith.constant 0 : index
    %195 = vector.load %arg5[%c16_197, %c0_198] : memref<88x512xf32, #tpu.memory_space<vmem>>, vector<8x512xf32>
    tpu.vector_store %arg5[%c16_197, %c0_198], %194 {strides = array<i32>} : memref<88x512xf32, #tpu.memory_space<vmem>>, vector<8x512xf32>,
    %196 = vector.extract_strided_slice %189 {offsets = [0, 3], sizes = [8, 512], strides = [1, 1]} : vector<8x522xf32> to vector<8x512xf32>
    %c24_199 = arith.constant 24 : index
    %c0_200 = arith.constant 0 : index
    %197 = vector.load %arg5[%c24_199, %c0_200] : memref<88x512xf32, #tpu.memory_space<vmem>>, vector<8x512xf32>
    tpu.vector_store %arg5[%c24_199, %c0_200], %196 {strides = array<i32>} : memref<88x512xf32, #tpu.memory_space<vmem>>, vector<8x512xf32>,
    %198 = vector.extract_strided_slice %189 {offsets = [0, 4], sizes = [8, 512], strides = [1, 1]} : vector<8x522xf32> to vector<8x512xf32>
    %c32_201 = arith.constant 32 : index
    %c0_202 = arith.constant 0 : index
    %199 = vector.load %arg5[%c32_201, %c0_202] : memref<88x512xf32, #tpu.memory_space<vmem>>, vector<8x512xf32>
    tpu.vector_store %arg5[%c32_201, %c0_202], %198 {strides = array<i32>} : memref<88x512xf32, #tpu.memory_space<vmem>>, vector<8x512xf32>,
    %200 = vector.extract_strided_slice %189 {offsets = [0, 5], sizes = [8, 512], strides = [1, 1]} : vector<8x522xf32> to vector<8x512xf32>
    %c40_203 = arith.constant 40 : index
    %c0_204 = arith.constant 0 : index
    %201 = vector.load %arg5[%c40_203, %c0_204] : memref<88x512xf32, #tpu.memory_space<vmem>>, vector<8x512xf32>
    tpu.vector_store %arg5[%c40_203, %c0_204], %200 {strides = array<i32>} : memref<88x512xf32, #tpu.memory_space<vmem>>, vector<8x512xf32>,
    %202 = vector.extract_strided_slice %189 {offsets = [0, 6], sizes = [8, 512], strides = [1, 1]} : vector<8x522xf32> to vector<8x512xf32>
    %c48_205 = arith.constant 48 : index
    %c0_206 = arith.constant 0 : index
    %203 = vector.load %arg5[%c48_205, %c0_206] : memref<88x512xf32, #tpu.memory_space<vmem>>, vector<8x512xf32>
    tpu.vector_store %arg5[%c48_205, %c0_206], %202 {strides = array<i32>} : memref<88x512xf32, #tpu.memory_space<vmem>>, vector<8x512xf32>,
    %204 = vector.extract_strided_slice %189 {offsets = [0, 7], sizes = [8, 512], strides = [1, 1]} : vector<8x522xf32> to vector<8x512xf32>
    %c56_207 = arith.constant 56 : index
    %c0_208 = arith.constant 0 : index
    %205 = vector.load %arg5[%c56_207, %c0_208] : memref<88x512xf32, #tpu.memory_space<vmem>>, vector<8x512xf32>
    tpu.vector_store %arg5[%c56_207, %c0_208], %204 {strides = array<i32>} : memref<88x512xf32, #tpu.memory_space<vmem>>, vector<8x512xf32>,
    %206 = vector.extract_strided_slice %189 {offsets = [0, 8], sizes = [8, 512], strides = [1, 1]} : vector<8x522xf32> to vector<8x512xf32>
    %c64_209 = arith.constant 64 : index
    %c0_210 = arith.constant 0 : index
    %207 = vector.load %arg5[%c64_209, %c0_210] : memref<88x512xf32, #tpu.memory_space<vmem>>, vector<8x512xf32>
    tpu.vector_store %arg5[%c64_209, %c0_210], %206 {strides = array<i32>} : memref<88x512xf32, #tpu.memory_space<vmem>>, vector<8x512xf32>,
    %208 = vector.extract_strided_slice %189 {offsets = [0, 9], sizes = [8, 512], strides = [1, 1]} : vector<8x522xf32> to vector<8x512xf32>
    %c72_211 = arith.constant 72 : index
    %c0_212 = arith.constant 0 : index
    %209 = vector.load %arg5[%c72_211, %c0_212] : memref<88x512xf32, #tpu.memory_space<vmem>>, vector<8x512xf32>
    tpu.vector_store %arg5[%c72_211, %c0_212], %208 {strides = array<i32>} : memref<88x512xf32, #tpu.memory_space<vmem>>, vector<8x512xf32>,
    %210 = vector.extract_strided_slice %189 {offsets = [0, 10], sizes = [8, 512], strides = [1, 1]} : vector<8x522xf32> to vector<8x512xf32>
    %c80_213 = arith.constant 80 : index
    %c0_214 = arith.constant 0 : index
    %211 = vector.load %arg5[%c80_213, %c0_214] : memref<88x512xf32, #tpu.memory_space<vmem>>, vector<8x512xf32>
    tpu.vector_store %arg5[%c80_213, %c0_214], %210 {strides = array<i32>} : memref<88x512xf32, #tpu.memory_space<vmem>>, vector<8x512xf32>,
    %c0_215 = arith.constant 0 : index
    %c0_216 = arith.constant 0 : index
    %212 = vector.load %arg6[%c0_215, %c0_216] : memref<8x512xf32, #tpu.memory_space<vmem>>, vector<8x512xf32>
    %c6 = arith.constant 6 : index
    %c0_217 = arith.constant 0 : index
    %c0_218 = arith.constant 0 : index
    %213 = vector.load %arg2[%c6, %c0_217, %c0_218] : memref<11x8x88xf32, #tpu.memory_space<vmem>>, vector<1x8x88xf32>
    %214 = vector.shape_cast %213 : vector<1x8x88xf32> to vector<8x88xf32>
    %c0_219 = arith.constant 0 : index
    %c0_220 = arith.constant 0 : index
    %215 = vector.load %arg5[%c0_219, %c0_220] : memref<88x512xf32, #tpu.memory_space<vmem>>, vector<88x512xf32>
    %cst_221 = arith.constant dense<0.000000e+00> : vector<8x512xf32>
    %216 = tpu.matmul %214, %215, %cst_221 {dimension_numbers = #tpu.dot_dimension_numbers<[1], [0], [0], [1], [0, 0, 1, 1], [], []>} : vector<8x88xf32>, vector<88x512xf32>, vector<8x512xf32> -> vector<8x512xf32>
    %217 = arith.addf %212, %216 : vector<8x512xf32>
    %c0_222 = arith.constant 0 : index
    %c0_223 = arith.constant 0 : index
    %218 = vector.load %arg6[%c0_222, %c0_223] : memref<8x512xf32, #tpu.memory_space<vmem>>, vector<8x512xf32>
    tpu.vector_store %arg6[%c0_222, %c0_223], %217 {strides = array<i32>} : memref<8x512xf32, #tpu.memory_space<vmem>>, vector<8x512xf32>,
    %c0_224 = arith.constant 0 : index
    %c0_225 = arith.constant 0 : index
    %c182 = arith.constant 182 : index
    %219 = vector.load %arg1[%c0_224, %c0_225, %c182] : memref<1x8x896xf32, #tpu.memory_space<vmem>>, vector<1x8x522xf32>
    %220 = vector.shape_cast %219 : vector<1x8x522xf32> to vector<8x522xf32>
    %221 = vector.extract_strided_slice %220 {offsets = [0, 0], sizes = [8, 512], strides = [1, 1]} : vector<8x522xf32> to vector<8x512xf32>
    %c0_226 = arith.constant 0 : index
    %c0_227 = arith.constant 0 : index
    %222 = vector.load %arg5[%c0_226, %c0_227] : memref<88x512xf32, #tpu.memory_space<vmem>>, vector<8x512xf32>
    tpu.vector_store %arg5[%c0_226, %c0_227], %221 {strides = array<i32>} : memref<88x512xf32, #tpu.memory_space<vmem>>, vector<8x512xf32>,
    %223 = vector.extract_strided_slice %220 {offsets = [0, 1], sizes = [8, 512], strides = [1, 1]} : vector<8x522xf32> to vector<8x512xf32>
    %c8_228 = arith.constant 8 : index
    %c0_229 = arith.constant 0 : index
    %224 = vector.load %arg5[%c8_228, %c0_229] : memref<88x512xf32, #tpu.memory_space<vmem>>, vector<8x512xf32>
    tpu.vector_store %arg5[%c8_228, %c0_229], %223 {strides = array<i32>} : memref<88x512xf32, #tpu.memory_space<vmem>>, vector<8x512xf32>,
    %225 = vector.extract_strided_slice %220 {offsets = [0, 2], sizes = [8, 512], strides = [1, 1]} : vector<8x522xf32> to vector<8x512xf32>
    %c16_230 = arith.constant 16 : index
    %c0_231 = arith.constant 0 : index
    %226 = vector.load %arg5[%c16_230, %c0_231] : memref<88x512xf32, #tpu.memory_space<vmem>>, vector<8x512xf32>
    tpu.vector_store %arg5[%c16_230, %c0_231], %225 {strides = array<i32>} : memref<88x512xf32, #tpu.memory_space<vmem>>, vector<8x512xf32>,
    %227 = vector.extract_strided_slice %220 {offsets = [0, 3], sizes = [8, 512], strides = [1, 1]} : vector<8x522xf32> to vector<8x512xf32>
    %c24_232 = arith.constant 24 : index
    %c0_233 = arith.constant 0 : index
    %228 = vector.load %arg5[%c24_232, %c0_233] : memref<88x512xf32, #tpu.memory_space<vmem>>, vector<8x512xf32>
    tpu.vector_store %arg5[%c24_232, %c0_233], %227 {strides = array<i32>} : memref<88x512xf32, #tpu.memory_space<vmem>>, vector<8x512xf32>,
    %229 = vector.extract_strided_slice %220 {offsets = [0, 4], sizes = [8, 512], strides = [1, 1]} : vector<8x522xf32> to vector<8x512xf32>
    %c32_234 = arith.constant 32 : index
    %c0_235 = arith.constant 0 : index
    %230 = vector.load %arg5[%c32_234, %c0_235] : memref<88x512xf32, #tpu.memory_space<vmem>>, vector<8x512xf32>
    tpu.vector_store %arg5[%c32_234, %c0_235], %229 {strides = array<i32>} : memref<88x512xf32, #tpu.memory_space<vmem>>, vector<8x512xf32>,
    %231 = vector.extract_strided_slice %220 {offsets = [0, 5], sizes = [8, 512], strides = [1, 1]} : vector<8x522xf32> to vector<8x512xf32>
    %c40_236 = arith.constant 40 : index
    %c0_237 = arith.constant 0 : index
    %232 = vector.load %arg5[%c40_236, %c0_237] : memref<88x512xf32, #tpu.memory_space<vmem>>, vector<8x512xf32>
    tpu.vector_store %arg5[%c40_236, %c0_237], %231 {strides = array<i32>} : memref<88x512xf32, #tpu.memory_space<vmem>>, vector<8x512xf32>,
    %233 = vector.extract_strided_slice %220 {offsets = [0, 6], sizes = [8, 512], strides = [1, 1]} : vector<8x522xf32> to vector<8x512xf32>
    %c48_238 = arith.constant 48 : index
    %c0_239 = arith.constant 0 : index
    %234 = vector.load %arg5[%c48_238, %c0_239] : memref<88x512xf32, #tpu.memory_space<vmem>>, vector<8x512xf32>
    tpu.vector_store %arg5[%c48_238, %c0_239], %233 {strides = array<i32>} : memref<88x512xf32, #tpu.memory_space<vmem>>, vector<8x512xf32>,
    %235 = vector.extract_strided_slice %220 {offsets = [0, 7], sizes = [8, 512], strides = [1, 1]} : vector<8x522xf32> to vector<8x512xf32>
    %c56_240 = arith.constant 56 : index
    %c0_241 = arith.constant 0 : index
    %236 = vector.load %arg5[%c56_240, %c0_241] : memref<88x512xf32, #tpu.memory_space<vmem>>, vector<8x512xf32>
    tpu.vector_store %arg5[%c56_240, %c0_241], %235 {strides = array<i32>} : memref<88x512xf32, #tpu.memory_space<vmem>>, vector<8x512xf32>,
    %237 = vector.extract_strided_slice %220 {offsets = [0, 8], sizes = [8, 512], strides = [1, 1]} : vector<8x522xf32> to vector<8x512xf32>
    %c64_242 = arith.constant 64 : index
    %c0_243 = arith.constant 0 : index
    %238 = vector.load %arg5[%c64_242, %c0_243] : memref<88x512xf32, #tpu.memory_space<vmem>>, vector<8x512xf32>
    tpu.vector_store %arg5[%c64_242, %c0_243], %237 {strides = array<i32>} : memref<88x512xf32, #tpu.memory_space<vmem>>, vector<8x512xf32>,
    %239 = vector.extract_strided_slice %220 {offsets = [0, 9], sizes = [8, 512], strides = [1, 1]} : vector<8x522xf32> to vector<8x512xf32>
    %c72_244 = arith.constant 72 : index
    %c0_245 = arith.constant 0 : index
    %240 = vector.load %arg5[%c72_244, %c0_245] : memref<88x512xf32, #tpu.memory_space<vmem>>, vector<8x512xf32>
    tpu.vector_store %arg5[%c72_244, %c0_245], %239 {strides = array<i32>} : memref<88x512xf32, #tpu.memory_space<vmem>>, vector<8x512xf32>,
    %241 = vector.extract_strided_slice %220 {offsets = [0, 10], sizes = [8, 512], strides = [1, 1]} : vector<8x522xf32> to vector<8x512xf32>
    %c80_246 = arith.constant 80 : index
    %c0_247 = arith.constant 0 : index
    %242 = vector.load %arg5[%c80_246, %c0_247] : memref<88x512xf32, #tpu.memory_space<vmem>>, vector<8x512xf32>
    tpu.vector_store %arg5[%c80_246, %c0_247], %241 {strides = array<i32>} : memref<88x512xf32, #tpu.memory_space<vmem>>, vector<8x512xf32>,
    %c0_248 = arith.constant 0 : index
    %c0_249 = arith.constant 0 : index
    %243 = vector.load %arg6[%c0_248, %c0_249] : memref<8x512xf32, #tpu.memory_space<vmem>>, vector<8x512xf32>
    %c7 = arith.constant 7 : index
    %c0_250 = arith.constant 0 : index
    %c0_251 = arith.constant 0 : index
    %244 = vector.load %arg2[%c7, %c0_250, %c0_251] : memref<11x8x88xf32, #tpu.memory_space<vmem>>, vector<1x8x88xf32>
    %245 = vector.shape_cast %244 : vector<1x8x88xf32> to vector<8x88xf32>
    %c0_252 = arith.constant 0 : index
    %c0_253 = arith.constant 0 : index
    %246 = vector.load %arg5[%c0_252, %c0_253] : memref<88x512xf32, #tpu.memory_space<vmem>>, vector<88x512xf32>
    %cst_254 = arith.constant dense<0.000000e+00> : vector<8x512xf32>
    %247 = tpu.matmul %245, %246, %cst_254 {dimension_numbers = #tpu.dot_dimension_numbers<[1], [0], [0], [1], [0, 0, 1, 1], [], []>} : vector<8x88xf32>, vector<88x512xf32>, vector<8x512xf32> -> vector<8x512xf32>
    %248 = arith.addf %243, %247 : vector<8x512xf32>
    %c0_255 = arith.constant 0 : index
    %c0_256 = arith.constant 0 : index
    %249 = vector.load %arg6[%c0_255, %c0_256] : memref<8x512xf32, #tpu.memory_space<vmem>>, vector<8x512xf32>
    tpu.vector_store %arg6[%c0_255, %c0_256], %248 {strides = array<i32>} : memref<8x512xf32, #tpu.memory_space<vmem>>, vector<8x512xf32>,
    %c0_257 = arith.constant 0 : index
    %c0_258 = arith.constant 0 : index
    %c208 = arith.constant 208 : index
    %250 = vector.load %arg1[%c0_257, %c0_258, %c208] : memref<1x8x896xf32, #tpu.memory_space<vmem>>, vector<1x8x522xf32>
    %251 = vector.shape_cast %250 : vector<1x8x522xf32> to vector<8x522xf32>
    %252 = vector.extract_strided_slice %251 {offsets = [0, 0], sizes = [8, 512], strides = [1, 1]} : vector<8x522xf32> to vector<8x512xf32>
    %c0_259 = arith.constant 0 : index
    %c0_260 = arith.constant 0 : index
    %253 = vector.load %arg5[%c0_259, %c0_260] : memref<88x512xf32, #tpu.memory_space<vmem>>, vector<8x512xf32>
    tpu.vector_store %arg5[%c0_259, %c0_260], %252 {strides = array<i32>} : memref<88x512xf32, #tpu.memory_space<vmem>>, vector<8x512xf32>,
    %254 = vector.extract_strided_slice %251 {offsets = [0, 1], sizes = [8, 512], strides = [1, 1]} : vector<8x522xf32> to vector<8x512xf32>
    %c8_261 = arith.constant 8 : index
    %c0_262 = arith.constant 0 : index
    %255 = vector.load %arg5[%c8_261, %c0_262] : memref<88x512xf32, #tpu.memory_space<vmem>>, vector<8x512xf32>
    tpu.vector_store %arg5[%c8_261, %c0_262], %254 {strides = array<i32>} : memref<88x512xf32, #tpu.memory_space<vmem>>, vector<8x512xf32>,
    %256 = vector.extract_strided_slice %251 {offsets = [0, 2], sizes = [8, 512], strides = [1, 1]} : vector<8x522xf32> to vector<8x512xf32>
    %c16_263 = arith.constant 16 : index
    %c0_264 = arith.constant 0 : index
    %257 = vector.load %arg5[%c16_263, %c0_264] : memref<88x512xf32, #tpu.memory_space<vmem>>, vector<8x512xf32>
    tpu.vector_store %arg5[%c16_263, %c0_264], %256 {strides = array<i32>} : memref<88x512xf32, #tpu.memory_space<vmem>>, vector<8x512xf32>,
    %258 = vector.extract_strided_slice %251 {offsets = [0, 3], sizes = [8, 512], strides = [1, 1]} : vector<8x522xf32> to vector<8x512xf32>
    %c24_265 = arith.constant 24 : index
    %c0_266 = arith.constant 0 : index
    %259 = vector.load %arg5[%c24_265, %c0_266] : memref<88x512xf32, #tpu.memory_space<vmem>>, vector<8x512xf32>
    tpu.vector_store %arg5[%c24_265, %c0_266], %258 {strides = array<i32>} : memref<88x512xf32, #tpu.memory_space<vmem>>, vector<8x512xf32>,
    %260 = vector.extract_strided_slice %251 {offsets = [0, 4], sizes = [8, 512], strides = [1, 1]} : vector<8x522xf32> to vector<8x512xf32>
    %c32_267 = arith.constant 32 : index
    %c0_268 = arith.constant 0 : index
    %261 = vector.load %arg5[%c32_267, %c0_268] : memref<88x512xf32, #tpu.memory_space<vmem>>, vector<8x512xf32>
    tpu.vector_store %arg5[%c32_267, %c0_268], %260 {strides = array<i32>} : memref<88x512xf32, #tpu.memory_space<vmem>>, vector<8x512xf32>,
    %262 = vector.extract_strided_slice %251 {offsets = [0, 5], sizes = [8, 512], strides = [1, 1]} : vector<8x522xf32> to vector<8x512xf32>
    %c40_269 = arith.constant 40 : index
    %c0_270 = arith.constant 0 : index
    %263 = vector.load %arg5[%c40_269, %c0_270] : memref<88x512xf32, #tpu.memory_space<vmem>>, vector<8x512xf32>
    tpu.vector_store %arg5[%c40_269, %c0_270], %262 {strides = array<i32>} : memref<88x512xf32, #tpu.memory_space<vmem>>, vector<8x512xf32>,
    %264 = vector.extract_strided_slice %251 {offsets = [0, 6], sizes = [8, 512], strides = [1, 1]} : vector<8x522xf32> to vector<8x512xf32>
    %c48_271 = arith.constant 48 : index
    %c0_272 = arith.constant 0 : index
    %265 = vector.load %arg5[%c48_271, %c0_272] : memref<88x512xf32, #tpu.memory_space<vmem>>, vector<8x512xf32>
    tpu.vector_store %arg5[%c48_271, %c0_272], %264 {strides = array<i32>} : memref<88x512xf32, #tpu.memory_space<vmem>>, vector<8x512xf32>,
    %266 = vector.extract_strided_slice %251 {offsets = [0, 7], sizes = [8, 512], strides = [1, 1]} : vector<8x522xf32> to vector<8x512xf32>
    %c56_273 = arith.constant 56 : index
    %c0_274 = arith.constant 0 : index
    %267 = vector.load %arg5[%c56_273, %c0_274] : memref<88x512xf32, #tpu.memory_space<vmem>>, vector<8x512xf32>
    tpu.vector_store %arg5[%c56_273, %c0_274], %266 {strides = array<i32>} : memref<88x512xf32, #tpu.memory_space<vmem>>, vector<8x512xf32>,
    %268 = vector.extract_strided_slice %251 {offsets = [0, 8], sizes = [8, 512], strides = [1, 1]} : vector<8x522xf32> to vector<8x512xf32>
    %c64_275 = arith.constant 64 : index
    %c0_276 = arith.constant 0 : index
    %269 = vector.load %arg5[%c64_275, %c0_276] : memref<88x512xf32, #tpu.memory_space<vmem>>, vector<8x512xf32>
    tpu.vector_store %arg5[%c64_275, %c0_276], %268 {strides = array<i32>} : memref<88x512xf32, #tpu.memory_space<vmem>>, vector<8x512xf32>,
    %270 = vector.extract_strided_slice %251 {offsets = [0, 9], sizes = [8, 512], strides = [1, 1]} : vector<8x522xf32> to vector<8x512xf32>
    %c72_277 = arith.constant 72 : index
    %c0_278 = arith.constant 0 : index
    %271 = vector.load %arg5[%c72_277, %c0_278] : memref<88x512xf32, #tpu.memory_space<vmem>>, vector<8x512xf32>
    tpu.vector_store %arg5[%c72_277, %c0_278], %270 {strides = array<i32>} : memref<88x512xf32, #tpu.memory_space<vmem>>, vector<8x512xf32>,
    %272 = vector.extract_strided_slice %251 {offsets = [0, 10], sizes = [8, 512], strides = [1, 1]} : vector<8x522xf32> to vector<8x512xf32>
    %c80_279 = arith.constant 80 : index
    %c0_280 = arith.constant 0 : index
    %273 = vector.load %arg5[%c80_279, %c0_280] : memref<88x512xf32, #tpu.memory_space<vmem>>, vector<8x512xf32>
    tpu.vector_store %arg5[%c80_279, %c0_280], %272 {strides = array<i32>} : memref<88x512xf32, #tpu.memory_space<vmem>>, vector<8x512xf32>,
    %c0_281 = arith.constant 0 : index
    %c0_282 = arith.constant 0 : index
    %274 = vector.load %arg6[%c0_281, %c0_282] : memref<8x512xf32, #tpu.memory_space<vmem>>, vector<8x512xf32>
    %c8_283 = arith.constant 8 : index
    %c0_284 = arith.constant 0 : index
    %c0_285 = arith.constant 0 : index
    %275 = vector.load %arg2[%c8_283, %c0_284, %c0_285] : memref<11x8x88xf32, #tpu.memory_space<vmem>>, vector<1x8x88xf32>
    %276 = vector.shape_cast %275 : vector<1x8x88xf32> to vector<8x88xf32>
    %c0_286 = arith.constant 0 : index
    %c0_287 = arith.constant 0 : index
    %277 = vector.load %arg5[%c0_286, %c0_287] : memref<88x512xf32, #tpu.memory_space<vmem>>, vector<88x512xf32>
    %cst_288 = arith.constant dense<0.000000e+00> : vector<8x512xf32>
    %278 = tpu.matmul %276, %277, %cst_288 {dimension_numbers = #tpu.dot_dimension_numbers<[1], [0], [0], [1], [0, 0, 1, 1], [], []>} : vector<8x88xf32>, vector<88x512xf32>, vector<8x512xf32> -> vector<8x512xf32>
    %279 = arith.addf %274, %278 : vector<8x512xf32>
    %c0_289 = arith.constant 0 : index
    %c0_290 = arith.constant 0 : index
    %280 = vector.load %arg6[%c0_289, %c0_290] : memref<8x512xf32, #tpu.memory_space<vmem>>, vector<8x512xf32>
    tpu.vector_store %arg6[%c0_289, %c0_290], %279 {strides = array<i32>} : memref<8x512xf32, #tpu.memory_space<vmem>>, vector<8x512xf32>,
    %c0_291 = arith.constant 0 : index
    %c0_292 = arith.constant 0 : index
    %c234 = arith.constant 234 : index
    %281 = vector.load %arg1[%c0_291, %c0_292, %c234] : memref<1x8x896xf32, #tpu.memory_space<vmem>>, vector<1x8x522xf32>
    %282 = vector.shape_cast %281 : vector<1x8x522xf32> to vector<8x522xf32>
    %283 = vector.extract_strided_slice %282 {offsets = [0, 0], sizes = [8, 512], strides = [1, 1]} : vector<8x522xf32> to vector<8x512xf32>
    %c0_293 = arith.constant 0 : index
    %c0_294 = arith.constant 0 : index
    %284 = vector.load %arg5[%c0_293, %c0_294] : memref<88x512xf32, #tpu.memory_space<vmem>>, vector<8x512xf32>
    tpu.vector_store %arg5[%c0_293, %c0_294], %283 {strides = array<i32>} : memref<88x512xf32, #tpu.memory_space<vmem>>, vector<8x512xf32>,
    %285 = vector.extract_strided_slice %282 {offsets = [0, 1], sizes = [8, 512], strides = [1, 1]} : vector<8x522xf32> to vector<8x512xf32>
    %c8_295 = arith.constant 8 : index
    %c0_296 = arith.constant 0 : index
    %286 = vector.load %arg5[%c8_295, %c0_296] : memref<88x512xf32, #tpu.memory_space<vmem>>, vector<8x512xf32>
    tpu.vector_store %arg5[%c8_295, %c0_296], %285 {strides = array<i32>} : memref<88x512xf32, #tpu.memory_space<vmem>>, vector<8x512xf32>,
    %287 = vector.extract_strided_slice %282 {offsets = [0, 2], sizes = [8, 512], strides = [1, 1]} : vector<8x522xf32> to vector<8x512xf32>
    %c16_297 = arith.constant 16 : index
    %c0_298 = arith.constant 0 : index
    %288 = vector.load %arg5[%c16_297, %c0_298] : memref<88x512xf32, #tpu.memory_space<vmem>>, vector<8x512xf32>
    tpu.vector_store %arg5[%c16_297, %c0_298], %287 {strides = array<i32>} : memref<88x512xf32, #tpu.memory_space<vmem>>, vector<8x512xf32>,
    %289 = vector.extract_strided_slice %282 {offsets = [0, 3], sizes = [8, 512], strides = [1, 1]} : vector<8x522xf32> to vector<8x512xf32>
    %c24_299 = arith.constant 24 : index
    %c0_300 = arith.constant 0 : index
    %290 = vector.load %arg5[%c24_299, %c0_300] : memref<88x512xf32, #tpu.memory_space<vmem>>, vector<8x512xf32>
    tpu.vector_store %arg5[%c24_299, %c0_300], %289 {strides = array<i32>} : memref<88x512xf32, #tpu.memory_space<vmem>>, vector<8x512xf32>,
    %291 = vector.extract_strided_slice %282 {offsets = [0, 4], sizes = [8, 512], strides = [1, 1]} : vector<8x522xf32> to vector<8x512xf32>
    %c32_301 = arith.constant 32 : index
    %c0_302 = arith.constant 0 : index
    %292 = vector.load %arg5[%c32_301, %c0_302] : memref<88x512xf32, #tpu.memory_space<vmem>>, vector<8x512xf32>
    tpu.vector_store %arg5[%c32_301, %c0_302], %291 {strides = array<i32>} : memref<88x512xf32, #tpu.memory_space<vmem>>, vector<8x512xf32>,
    %293 = vector.extract_strided_slice %282 {offsets = [0, 5], sizes = [8, 512], strides = [1, 1]} : vector<8x522xf32> to vector<8x512xf32>
    %c40_303 = arith.constant 40 : index
    %c0_304 = arith.constant 0 : index
    %294 = vector.load %arg5[%c40_303, %c0_304] : memref<88x512xf32, #tpu.memory_space<vmem>>, vector<8x512xf32>
    tpu.vector_store %arg5[%c40_303, %c0_304], %293 {strides = array<i32>} : memref<88x512xf32, #tpu.memory_space<vmem>>, vector<8x512xf32>,
    %295 = vector.extract_strided_slice %282 {offsets = [0, 6], sizes = [8, 512], strides = [1, 1]} : vector<8x522xf32> to vector<8x512xf32>
    %c48_305 = arith.constant 48 : index
    %c0_306 = arith.constant 0 : index
    %296 = vector.load %arg5[%c48_305, %c0_306] : memref<88x512xf32, #tpu.memory_space<vmem>>, vector<8x512xf32>
    tpu.vector_store %arg5[%c48_305, %c0_306], %295 {strides = array<i32>} : memref<88x512xf32, #tpu.memory_space<vmem>>, vector<8x512xf32>,
    %297 = vector.extract_strided_slice %282 {offsets = [0, 7], sizes = [8, 512], strides = [1, 1]} : vector<8x522xf32> to vector<8x512xf32>
    %c56_307 = arith.constant 56 : index
    %c0_308 = arith.constant 0 : index
    %298 = vector.load %arg5[%c56_307, %c0_308] : memref<88x512xf32, #tpu.memory_space<vmem>>, vector<8x512xf32>
    tpu.vector_store %arg5[%c56_307, %c0_308], %297 {strides = array<i32>} : memref<88x512xf32, #tpu.memory_space<vmem>>, vector<8x512xf32>,
    %299 = vector.extract_strided_slice %282 {offsets = [0, 8], sizes = [8, 512], strides = [1, 1]} : vector<8x522xf32> to vector<8x512xf32>
    %c64_309 = arith.constant 64 : index
    %c0_310 = arith.constant 0 : index
    %300 = vector.load %arg5[%c64_309, %c0_310] : memref<88x512xf32, #tpu.memory_space<vmem>>, vector<8x512xf32>
    tpu.vector_store %arg5[%c64_309, %c0_310], %299 {strides = array<i32>} : memref<88x512xf32, #tpu.memory_space<vmem>>, vector<8x512xf32>,
    %301 = vector.extract_strided_slice %282 {offsets = [0, 9], sizes = [8, 512], strides = [1, 1]} : vector<8x522xf32> to vector<8x512xf32>
    %c72_311 = arith.constant 72 : index
    %c0_312 = arith.constant 0 : index
    %302 = vector.load %arg5[%c72_311, %c0_312] : memref<88x512xf32, #tpu.memory_space<vmem>>, vector<8x512xf32>
    tpu.vector_store %arg5[%c72_311, %c0_312], %301 {strides = array<i32>} : memref<88x512xf32, #tpu.memory_space<vmem>>, vector<8x512xf32>,
    %303 = vector.extract_strided_slice %282 {offsets = [0, 10], sizes = [8, 512], strides = [1, 1]} : vector<8x522xf32> to vector<8x512xf32>
    %c80_313 = arith.constant 80 : index
    %c0_314 = arith.constant 0 : index
    %304 = vector.load %arg5[%c80_313, %c0_314] : memref<88x512xf32, #tpu.memory_space<vmem>>, vector<8x512xf32>
    tpu.vector_store %arg5[%c80_313, %c0_314], %303 {strides = array<i32>} : memref<88x512xf32, #tpu.memory_space<vmem>>, vector<8x512xf32>,
    %c0_315 = arith.constant 0 : index
    %c0_316 = arith.constant 0 : index
    %305 = vector.load %arg6[%c0_315, %c0_316] : memref<8x512xf32, #tpu.memory_space<vmem>>, vector<8x512xf32>
    %c9 = arith.constant 9 : index
    %c0_317 = arith.constant 0 : index
    %c0_318 = arith.constant 0 : index
    %306 = vector.load %arg2[%c9, %c0_317, %c0_318] : memref<11x8x88xf32, #tpu.memory_space<vmem>>, vector<1x8x88xf32>
    %307 = vector.shape_cast %306 : vector<1x8x88xf32> to vector<8x88xf32>
    %c0_319 = arith.constant 0 : index
    %c0_320 = arith.constant 0 : index
    %308 = vector.load %arg5[%c0_319, %c0_320] : memref<88x512xf32, #tpu.memory_space<vmem>>, vector<88x512xf32>
    %cst_321 = arith.constant dense<0.000000e+00> : vector<8x512xf32>
    %309 = tpu.matmul %307, %308, %cst_321 {dimension_numbers = #tpu.dot_dimension_numbers<[1], [0], [0], [1], [0, 0, 1, 1], [], []>} : vector<8x88xf32>, vector<88x512xf32>, vector<8x512xf32> -> vector<8x512xf32>
    %310 = arith.addf %305, %309 : vector<8x512xf32>
    %c0_322 = arith.constant 0 : index
    %c0_323 = arith.constant 0 : index
    %311 = vector.load %arg6[%c0_322, %c0_323] : memref<8x512xf32, #tpu.memory_space<vmem>>, vector<8x512xf32>
    tpu.vector_store %arg6[%c0_322, %c0_323], %310 {strides = array<i32>} : memref<8x512xf32, #tpu.memory_space<vmem>>, vector<8x512xf32>,
    %c0_324 = arith.constant 0 : index
    %c0_325 = arith.constant 0 : index
    %c260 = arith.constant 260 : index
    %312 = vector.load %arg1[%c0_324, %c0_325, %c260] : memref<1x8x896xf32, #tpu.memory_space<vmem>>, vector<1x8x522xf32>
    %313 = vector.shape_cast %312 : vector<1x8x522xf32> to vector<8x522xf32>
    %314 = vector.extract_strided_slice %313 {offsets = [0, 0], sizes = [8, 512], strides = [1, 1]} : vector<8x522xf32> to vector<8x512xf32>
    %c0_326 = arith.constant 0 : index
    %c0_327 = arith.constant 0 : index
    %315 = vector.load %arg5[%c0_326, %c0_327] : memref<88x512xf32, #tpu.memory_space<vmem>>, vector<8x512xf32>
    tpu.vector_store %arg5[%c0_326, %c0_327], %314 {strides = array<i32>} : memref<88x512xf32, #tpu.memory_space<vmem>>, vector<8x512xf32>,
    %316 = vector.extract_strided_slice %313 {offsets = [0, 1], sizes = [8, 512], strides = [1, 1]} : vector<8x522xf32> to vector<8x512xf32>
    %c8_328 = arith.constant 8 : index
    %c0_329 = arith.constant 0 : index
    %317 = vector.load %arg5[%c8_328, %c0_329] : memref<88x512xf32, #tpu.memory_space<vmem>>, vector<8x512xf32>
    tpu.vector_store %arg5[%c8_328, %c0_329], %316 {strides = array<i32>} : memref<88x512xf32, #tpu.memory_space<vmem>>, vector<8x512xf32>,
    %318 = vector.extract_strided_slice %313 {offsets = [0, 2], sizes = [8, 512], strides = [1, 1]} : vector<8x522xf32> to vector<8x512xf32>
    %c16_330 = arith.constant 16 : index
    %c0_331 = arith.constant 0 : index
    %319 = vector.load %arg5[%c16_330, %c0_331] : memref<88x512xf32, #tpu.memory_space<vmem>>, vector<8x512xf32>
    tpu.vector_store %arg5[%c16_330, %c0_331], %318 {strides = array<i32>} : memref<88x512xf32, #tpu.memory_space<vmem>>, vector<8x512xf32>,
    %320 = vector.extract_strided_slice %313 {offsets = [0, 3], sizes = [8, 512], strides = [1, 1]} : vector<8x522xf32> to vector<8x512xf32>
    %c24_332 = arith.constant 24 : index
    %c0_333 = arith.constant 0 : index
    %321 = vector.load %arg5[%c24_332, %c0_333] : memref<88x512xf32, #tpu.memory_space<vmem>>, vector<8x512xf32>
    tpu.vector_store %arg5[%c24_332, %c0_333], %320 {strides = array<i32>} : memref<88x512xf32, #tpu.memory_space<vmem>>, vector<8x512xf32>,
    %322 = vector.extract_strided_slice %313 {offsets = [0, 4], sizes = [8, 512], strides = [1, 1]} : vector<8x522xf32> to vector<8x512xf32>
    %c32_334 = arith.constant 32 : index
    %c0_335 = arith.constant 0 : index
    %323 = vector.load %arg5[%c32_334, %c0_335] : memref<88x512xf32, #tpu.memory_space<vmem>>, vector<8x512xf32>
    tpu.vector_store %arg5[%c32_334, %c0_335], %322 {strides = array<i32>} : memref<88x512xf32, #tpu.memory_space<vmem>>, vector<8x512xf32>,
    %324 = vector.extract_strided_slice %313 {offsets = [0, 5], sizes = [8, 512], strides = [1, 1]} : vector<8x522xf32> to vector<8x512xf32>
    %c40_336 = arith.constant 40 : index
    %c0_337 = arith.constant 0 : index
    %325 = vector.load %arg5[%c40_336, %c0_337] : memref<88x512xf32, #tpu.memory_space<vmem>>, vector<8x512xf32>
    tpu.vector_store %arg5[%c40_336, %c0_337], %324 {strides = array<i32>} : memref<88x512xf32, #tpu.memory_space<vmem>>, vector<8x512xf32>,
    %326 = vector.extract_strided_slice %313 {offsets = [0, 6], sizes = [8, 512], strides = [1, 1]} : vector<8x522xf32> to vector<8x512xf32>
    %c48_338 = arith.constant 48 : index
    %c0_339 = arith.constant 0 : index
    %327 = vector.load %arg5[%c48_338, %c0_339] : memref<88x512xf32, #tpu.memory_space<vmem>>, vector<8x512xf32>
    tpu.vector_store %arg5[%c48_338, %c0_339], %326 {strides = array<i32>} : memref<88x512xf32, #tpu.memory_space<vmem>>, vector<8x512xf32>,
    %328 = vector.extract_strided_slice %313 {offsets = [0, 7], sizes = [8, 512], strides = [1, 1]} : vector<8x522xf32> to vector<8x512xf32>
    %c56_340 = arith.constant 56 : index
    %c0_341 = arith.constant 0 : index
    %329 = vector.load %arg5[%c56_340, %c0_341] : memref<88x512xf32, #tpu.memory_space<vmem>>, vector<8x512xf32>
    tpu.vector_store %arg5[%c56_340, %c0_341], %328 {strides = array<i32>} : memref<88x512xf32, #tpu.memory_space<vmem>>, vector<8x512xf32>,
    %330 = vector.extract_strided_slice %313 {offsets = [0, 8], sizes = [8, 512], strides = [1, 1]} : vector<8x522xf32> to vector<8x512xf32>
    %c64_342 = arith.constant 64 : index
    %c0_343 = arith.constant 0 : index
    %331 = vector.load %arg5[%c64_342, %c0_343] : memref<88x512xf32, #tpu.memory_space<vmem>>, vector<8x512xf32>
    tpu.vector_store %arg5[%c64_342, %c0_343], %330 {strides = array<i32>} : memref<88x512xf32, #tpu.memory_space<vmem>>, vector<8x512xf32>,
    %332 = vector.extract_strided_slice %313 {offsets = [0, 9], sizes = [8, 512], strides = [1, 1]} : vector<8x522xf32> to vector<8x512xf32>
    %c72_344 = arith.constant 72 : index
    %c0_345 = arith.constant 0 : index
    %333 = vector.load %arg5[%c72_344, %c0_345] : memref<88x512xf32, #tpu.memory_space<vmem>>, vector<8x512xf32>
    tpu.vector_store %arg5[%c72_344, %c0_345], %332 {strides = array<i32>} : memref<88x512xf32, #tpu.memory_space<vmem>>, vector<8x512xf32>,
    %334 = vector.extract_strided_slice %313 {offsets = [0, 10], sizes = [8, 512], strides = [1, 1]} : vector<8x522xf32> to vector<8x512xf32>
    %c80_346 = arith.constant 80 : index
    %c0_347 = arith.constant 0 : index
    %335 = vector.load %arg5[%c80_346, %c0_347] : memref<88x512xf32, #tpu.memory_space<vmem>>, vector<8x512xf32>
    tpu.vector_store %arg5[%c80_346, %c0_347], %334 {strides = array<i32>} : memref<88x512xf32, #tpu.memory_space<vmem>>, vector<8x512xf32>,
    %c0_348 = arith.constant 0 : index
    %c0_349 = arith.constant 0 : index
    %336 = vector.load %arg6[%c0_348, %c0_349] : memref<8x512xf32, #tpu.memory_space<vmem>>, vector<8x512xf32>
    %c10 = arith.constant 10 : index
    %c0_350 = arith.constant 0 : index
    %c0_351 = arith.constant 0 : index
    %337 = vector.load %arg2[%c10, %c0_350, %c0_351] : memref<11x8x88xf32, #tpu.memory_space<vmem>>, vector<1x8x88xf32>
    %338 = vector.shape_cast %337 : vector<1x8x88xf32> to vector<8x88xf32>
    %c0_352 = arith.constant 0 : index
    %c0_353 = arith.constant 0 : index
    %339 = vector.load %arg5[%c0_352, %c0_353] : memref<88x512xf32, #tpu.memory_space<vmem>>, vector<88x512xf32>
    %cst_354 = arith.constant dense<0.000000e+00> : vector<8x512xf32>
    %340 = tpu.matmul %338, %339, %cst_354 {dimension_numbers = #tpu.dot_dimension_numbers<[1], [0], [0], [1], [0, 0, 1, 1], [], []>} : vector<8x88xf32>, vector<88x512xf32>, vector<8x512xf32> -> vector<8x512xf32>
    %341 = arith.addf %336, %340 : vector<8x512xf32>
    %c0_355 = arith.constant 0 : index
    %c0_356 = arith.constant 0 : index
    %342 = vector.load %arg6[%c0_355, %c0_356] : memref<8x512xf32, #tpu.memory_space<vmem>>, vector<8x512xf32>
    tpu.vector_store %arg6[%c0_355, %c0_356], %341 {strides = array<i32>} : memref<8x512xf32, #tpu.memory_space<vmem>>, vector<8x512xf32>,
    %c0_357 = arith.constant 0 : index
    %c0_358 = arith.constant 0 : index
    %343 = vector.load %arg3[%c0_357, %c0_358] : memref<8x1xf32, #tpu.memory_space<vmem>>, vector<8x1xf32>
    %c0_359 = arith.constant 0 : index
    %c0_360 = arith.constant 0 : index
    %344 = vector.load %arg6[%c0_359, %c0_360] : memref<8x512xf32, #tpu.memory_space<vmem>>, vector<8x512xf32>
    %345 = vector.broadcast %343 : vector<8x1xf32> to vector<8x512xf32>
    %346 = arith.addf %344, %345 : vector<8x512xf32>
    %c0_361 = arith.constant 0 : index
    %c0_362 = arith.constant 0 : index
    %c0_363 = arith.constant 0 : index
    %347 = vector.load %arg4[%c0_361, %c0_362, %c0_363] : memref<1x8x512xf32, #tpu.memory_space<vmem>>, vector<1x8x512xf32>
    %348 = vector.shape_cast %347 : vector<1x8x512xf32> to vector<8x512xf32>
    %349 = vector.shape_cast %346 : vector<8x512xf32> to vector<1x8x512xf32>
    tpu.vector_store %arg4[%c0_361, %c0_362, %c0_363], %349 {strides = array<i32>} : memref<1x8x512xf32, #tpu.memory_space<vmem>>, vector<1x8x512xf32>,
    return
  }
  func.func @transform_0(%arg0: i32) -> (i32, i32, i32) {
    %c0_i32 = arith.constant 0 : i32
    %c0_i32_0 = arith.constant 0 : i32
    %c0_i32_1 = arith.constant 0 : i32
    return %arg0, %c0_i32, %c0_i32_0 : i32, i32, i32
  }
  func.func @transform_1(%arg0: i32) -> (i32, i32, i32) {
    %c0_i32 = arith.constant 0 : i32
    %c0_i32_0 = arith.constant 0 : i32
    %c0_i32_1 = arith.constant 0 : i32
    %c0_i32_2 = arith.constant 0 : i32
    return %c0_i32, %c0_i32_0, %c0_i32_1 : i32, i32, i32
  }
  func.func @transform_2(%arg0: i32) -> (i32, i32) {
    %c0_i32 = arith.constant 0 : i32
    %c0_i32_0 = arith.constant 0 : i32
    %c0_i32_1 = arith.constant 0 : i32
    return %c0_i32, %c0_i32_0 : i32, i32
  }
  func.func @transform_3(%arg0: i32) -> (i32, i32, i32) {
    %c0_i32 = arith.constant 0 : i32
    %c0_i32_0 = arith.constant 0 : i32
    %c0_i32_1 = arith.constant 0 : i32
    return %arg0, %c0_i32, %c0_i32_0 : i32, i32, i32
  }
}

</mosaic_0001>

<llo_original>
// kernel: tpu_custom_call.1
$region0: #{tpu_custom_call.1}
  #allocation0 [shape = 'u32[]', space=smem, size = 0x4, offset = 0x4, fixed_abs, tag = 'smem constant byte address 0x4 - core index']
  #allocation1 [shape = 'u32[144,128]{1,0:T(1,128)}', space=vmem, size = 0x12000, scoped, tag = 'internal scratch']
  #allocation2 [shape = 'f32[88,512]{1,0:T(8,128)}', space=vmem, size = 0x2c000, scoped, tag = 'scratch operand']
  #allocation3 [shape = 'f32[8,512]{1,0:T(8,128)}', space=vmem, size = 0x4000, scoped, tag = 'scratch operand']
  %s0 = inlined_call_operand.hbm [shape: f32[2,8,896], index: 0, kind: input, shape index: {}]
  %s1 = inlined_call_operand.hbm [shape: f32[11,8,88], index: 1, kind: input, shape index: {}]
  %s2 = inlined_call_operand.vmem [shape: f32[8,1], index: 2, kind: input, shape index: {}]
  %s3 = inlined_call_operand.hbm [shape: f32[2,8,512], index: 3, kind: output, shape index: {}]
  %s4 = sld [smem:[#allocation0]]
  $region53: #{tpu_custom_call.1} parent=0
    _
  %s6 = ssub.s32 1, %s4
  %s7 = scalar_select 0, %s6, %s4
  $region1: #{tpu_custom_call.1} parent=0
    #allocation4 [shape = 'u8[57344]{0}', space=vmem, size = 0xe000, scoped, tag = 'input window, operand 0']
    #allocation5 [shape = 's32[2]{0}', space=sflag, size = 0x8, scoped, tag = 'scoped memory for tpu_custom_call.1']
    #allocation6 [shape = 's32[2]{0}', space=sflag, size = 0x8, scoped, tag = 'scoped memory for tpu_custom_call.1']
    #allocation7 [shape = 'u8[45056]{0}', space=vmem, size = 0xb000, scoped, tag = 'input window, operand 1, single buffered']
    #allocation8 [shape = 's32[1]{0}', space=sflag, size = 0x4, scoped, tag = 'scoped memory for tpu_custom_call.1']
    #allocation9 [shape = 'u8[32768]{0}', space=vmem, size = 0x8000, scoped, tag = 'output window, operand 0']
    %8 = vsyncpa [#allocation5], 0
    %s9 = scalar_lea.sflag [#allocation5], 1
    %10 = vsyncpa %s9, 0
    %11 = vsyncpa [#allocation8], 0
    %12 = vsyncpa [#allocation6], 0
    %s13 = scalar_lea.sflag [#allocation6], 1
    %14 = vsyncpa %s13, 0
    loop: start=0, step=1, limit=4
    $region2: #{tpu_custom_call.1} parent=1 // loop_pre_header
      _
    $region3: #{tpu_custom_call.1} parent=1 // loop_header
      %s16 = sphi 0, %s20
      %p17 = scmp.ge.s32.totalorder %s16, 4
      %s26 = sphi 0, %s28
      %s29 = sphi 0, %s26
      %s30 = sphi 0, %s29
      %s46 = sphi 0, %s30
      %s50 = sphi 0, %s50
      %s52 = sphi 0, %s50
      %s53 = sphi 0, %s52
      %s67 = sphi 0, %s53
      %s71 = sphi 0, %s71
      %s73 = sphi 0, %s71
      %s74 = sphi 0, %s73
      %s88 = sphi 0, %s74
      %s94 = sphi 0, %s96
      %s97 = sphi 0, %s94
      %s98 = sphi 0, %s97
      %s114 = sphi 0, %s98
    $region4: #{tpu_custom_call.1} parent=1 // loop_header_branch
      %19 = sbr.rel (%p17) target = $region8
    $region5: #{tpu_custom_call.1} parent=1 // loop_body
      %s21 = ssub.s32 %s16, 1
      %s22 = ssub.s32 %s16, 2
      %s23 = sadd.s32 %s16, 1
      %s24 = ssub.s32 %s16, %s23
      %p25 = scmp.eq.s32.totalorder %s24, 0
      %s27 = sadd.s32 %s26, 1
      %s28 = scalar_select %p25, %s26, %s27
      %p31 = pneg %p25
      %p32 = scmp.eq.s32.totalorder %s16, 1
      %p33 = por %p31, %p32
      %p34 = scmp.ne.s32.totalorder %s26, %s29
      %p35 = scmp.eq.s32.totalorder %s16, 0
      %p36 = por %p34, %p35
      %p37 = scmp.ne.s32.totalorder %s26, %s29
      %p38 = scmp.eq.s32.totalorder %s21, 1
      %p39 = por %p37, %p38
      %p40 = scmp.ne.s32.totalorder %s29, %s30
      %p41 = scmp.eq.s32.totalorder %s21, 0
      %p42 = por %p40, %p41
      %p43 = scmp.ne.s32.totalorder %s29, %s30
      %p44 = scmp.eq.s32.totalorder %s22, 1
      %p45 = por %p43, %p44
      %p47 = scmp.ne.s32.totalorder %s30, %s46
      %p48 = scmp.eq.s32.totalorder %s22, 0
      %p49 = por %p47, %p48
      %s51 = sadd.s32 %s50, 1
      %p54 = scmp.eq.s32.totalorder %s16, 1
      %p55 = scmp.ne.s32.totalorder %s50, %s52
      %p56 = scmp.eq.s32.totalorder %s16, 0
      %p57 = por %p55, %p56
      %p58 = scmp.ne.s32.totalorder %s50, %s52
      %p59 = scmp.eq.s32.totalorder %s21, 1
      %p60 = por %p58, %p59
      %p61 = scmp.ne.s32.totalorder %s52, %s53
      %p62 = scmp.eq.s32.totalorder %s21, 0
      %p63 = por %p61, %p62
      %p64 = scmp.ne.s32.totalorder %s52, %s53
      %p65 = scmp.eq.s32.totalorder %s22, 1
      %p66 = por %p64, %p65
      %p68 = scmp.ne.s32.totalorder %s53, %s67
      %p69 = scmp.eq.s32.totalorder %s22, 0
      %p70 = por %p68, %p69
      %s72 = sadd.s32 %s71, 1
      %p75 = scmp.eq.s32.totalorder %s16, 1
      %p76 = scmp.ne.s32.totalorder %s71, %s73
      %p77 = scmp.eq.s32.totalorder %s16, 0
      %p78 = por %p76, %p77
      %p79 = scmp.ne.s32.totalorder %s71, %s73
      %p80 = scmp.eq.s32.totalorder %s21, 1
      %p81 = por %p79, %p80
      %p82 = scmp.ne.s32.totalorder %s73, %s74
      %p83 = scmp.eq.s32.totalorder %s21, 0
      %p84 = por %p82, %p83
      %p85 = scmp.ne.s32.totalorder %s73, %s74
      %p86 = scmp.eq.s32.totalorder %s22, 1
      %p87 = por %p85, %p86
      %p89 = scmp.ne.s32.totalorder %s74, %s88
      %p90 = scmp.eq.s32.totalorder %s22, 0
      %p91 = por %p89, %p90
      %s92 = ssub.s32 %s16, %s23
      %p93 = scmp.eq.s32.totalorder %s92, 0
      %s95 = sadd.s32 %s94, 1
      %s96 = scalar_select %p93, %s94, %s95
      %p99 = pneg %p93
      %p100 = scmp.eq.s32.totalorder %s16, 1
      %p101 = por %p99, %p100
      %p102 = scmp.ne.s32.totalorder %s94, %s97
      %p103 = scmp.eq.s32.totalorder %s16, 0
      %p104 = por %p102, %p103
      %p105 = scmp.ne.s32.totalorder %s94, %s97
      %p106 = scmp.eq.s32.totalorder %s21, 1
      %p107 = por %p105, %p106
      %p108 = scmp.ne.s32.totalorder %s97, %s98
      %p109 = scmp.eq.s32.totalorder %s21, 0
      %p110 = por %p108, %p109
      %p111 = scmp.ne.s32.totalorder %s97, %s98
      %p112 = scmp.eq.s32.totalorder %s22, 1
      %p113 = por %p111, %p112
      %p115 = scmp.ne.s32.totalorder %s98, %s114
      %p116 = scmp.eq.s32.totalorder %s22, 0
      %p117 = por %p115, %p116
      %p118 = scmp.le.s32.totalorder 1, %s16
      %p119 = scmp.lt.s32.totalorder %s16, 3
      %p120 = pnand %p118, %p119
      %p121 = pneg %p120
      // Predicated region
      $region9: #{tpu_custom_call.1} parent=5 // pred_check
        _
      $region10: #{tpu_custom_call.1} parent=5 // pred_check_branch
        %123 = sbr.rel (%p120) target = $region12
      $region11: #{tpu_custom_call.1} parent=5 // pred_region
        %s124 = ssub.s32 %s16, 1
        // Predicated region
        $region13: #{tpu_custom_call.1} parent=11 // pred_check
          %p125 = pneg %p63
        $region14: #{tpu_custom_call.1} parent=11 // pred_check_branch
          %127 = sbr.rel (%p125) target = $region16
        $region15: #{tpu_custom_call.1} parent=11 // pred_region
          %s129 = ssub.s32 1408, 1408
          %130 = vsyncadd [#allocation8], %s129
          %s131 = sshll.u32 [#allocation7], 4
          %s132 = int_to_ptr.vmem [resolvable:$true] %s131
          %137 = dma.hbm_to_vmem [thread:$0]  %s1, 1408, %s132, [#allocation8], 128, 128, 8
        $region16: #{tpu_custom_call.1} parent=11 // pred_fallthru
          _
        // Predicated region
        $region17: #{tpu_custom_call.1} parent=11 // pred_check
          %p138 = pneg %p84
        $region18: #{tpu_custom_call.1} parent=11 // pred_check_branch
          %140 = sbr.rel (%p138) target = $region20
        $region19: #{tpu_custom_call.1} parent=11 // pred_region
          _
        $region20: #{tpu_custom_call.1} parent=11 // pred_fallthru
          _
      $region12: #{tpu_custom_call.1} parent=5 // pred_fallthru
        _
      %p141 = scmp.lt.s32.totalorder %s16, 2
      // Predicated region
      $region21: #{tpu_custom_call.1} parent=5 // pred_check
        %p142 = pneg %p141
      $region22: #{tpu_custom_call.1} parent=5 // pred_check_branch
        %144 = sbr.rel (%p142) target = $region24
      $region23: #{tpu_custom_call.1} parent=5 // pred_region
        // Predicated region
        $region25: #{tpu_custom_call.1} parent=23 // pred_check
          %p145 = pneg %p36
        $region26: #{tpu_custom_call.1} parent=23 // pred_check_branch
          %147 = sbr.rel (%p145) target = $region28
        $region27: #{tpu_custom_call.1} parent=23 // pred_region
          %s148 = sand.u32 %s26, 1
          %s149 = scalar_lea.sflag [#allocation5], %s148
          %s150 = sand.u32 %s26, 1
          %s151 = smul.addr %s150, 56
          %s152 = scalar_lea.vmem [#allocation4], %s151
          %s154 = ssub.s32 896, 896
          %155 = vsyncadd %s149, %s154
          %s156 = smul.addr %s16, 7
          %s157 = smul.addr %s156, 128
          %s158 = scalar_lea.hbm %s0, %s157
          %s160 = sshll.u32 %s152, 4
          %s161 = int_to_ptr.vmem [resolvable:$true] %s160
          %163 = dma.hbm_to_vmem [thread:$0]  %s158, 896, %s161, %s149
        $region28: #{tpu_custom_call.1} parent=23 // pred_fallthru
          _
      $region24: #{tpu_custom_call.1} parent=5 // pred_fallthru
        _
      %p164 = scmp.le.s32.totalorder 1, %s16
      %p165 = scmp.lt.s32.totalorder %s16, 3
      %p166 = pnand %p164, %p165
      %p167 = pneg %p166
      // Predicated region
      $region29: #{tpu_custom_call.1} parent=5 // pred_check
        _
      $region30: #{tpu_custom_call.1} parent=5 // pred_check_branch
        %169 = sbr.rel (%p166) target = $region32
      $region31: #{tpu_custom_call.1} parent=5 // pred_region
        %s170 = ssub.s32 %s16, 1
        %s171 = sand.u32 %s29, 1
        %s172 = scalar_lea.sflag [#allocation5], %s171
        %s173 = sand.u32 %s29, 1
        %s174 = smul.addr %s173, 56
        %s175 = scalar_lea.vmem [#allocation4], %s174
        // Predicated region
        $region33: #{tpu_custom_call.1} parent=31 // pred_check
          %p176 = pneg %p42
        $region34: #{tpu_custom_call.1} parent=31 // pred_check_branch
          %178 = sbr.rel (%p176) target = $region36
        $region35: #{tpu_custom_call.1} parent=31 // pred_region
          %179 = dma.done %s172, 896
        $region36: #{tpu_custom_call.1} parent=31 // pred_fallthru
          _
        // Predicated region
        $region37: #{tpu_custom_call.1} parent=31 // pred_check
          %p180 = pneg %p63
        $region38: #{tpu_custom_call.1} parent=31 // pred_check_branch
          %182 = sbr.rel (%p180) target = $region40
        $region39: #{tpu_custom_call.1} parent=31 // pred_region
          %183 = dma.done [#allocation8], 1408
        $region40: #{tpu_custom_call.1} parent=31 // pred_fallthru
          _
        %s184 = sand.u32 %s29, 1
        %s185 = scalar_lea.sflag [#allocation5], %s184
        %s186 = sand.u32 %s29, 1
        %s187 = smul.addr %s186, 56
        %s188 = scalar_lea.vmem [#allocation4], %s187
        %p189 = pneg %p42
        %p190 = pneg %p39
        %p191 = pneg %p63
        %p192 = pneg %p60
        %p193 = pneg %p84
        %p194 = pneg %p81
        %p195 = pneg %p110
        %p196 = pneg %p107
        %s197 = sand.u32 %s97, 1
        %s198 = scalar_lea.sflag [#allocation6], %s197
        %s199 = sand.u32 %s97, 1
        %s200 = smul.addr %s199, 32
        %s201 = scalar_lea.vmem [#allocation9], %s200
        %202 = vst [vmem:[#allocation3] sm:$0xff] 0.0
        %203 = vst [vmem:[#allocation3 + $0x8] sm:$0xff] 0.0
        %204 = vst [vmem:[#allocation3 + $0x10] sm:$0xff] 0.0
        %205 = vst [vmem:[#allocation3 + $0x18] sm:$0xff] 0.0
        %v206 = vld [vmem:[%s175] sm:$0xff]
        %v207 = vld [vmem:[%s175 + $0x8] sm:$0xff]
        %v208 = vld [vmem:[%s175 + $0x10] sm:$0xff]
        %v209 = vld [vmem:[%s175 + $0x18] sm:$0xff]
        %v210 = vld [vmem:[%s175 + $0x20] sm:$0xff]
        %211 = vst [vmem:[#allocation2] sm:$0xff] %v206
        %212 = vst [vmem:[#allocation2 + $0x8] sm:$0xff] %v207
        %213 = vst [vmem:[#allocation2 + $0x10] sm:$0xff] %v208
        %214 = vst [vmem:[#allocation2 + $0x18] sm:$0xff] %v209
        %220 = vrot.lane.b32.xlu0 %v206, 127
        %v221 = vpop.permute.xlu0 %220
        %222 = vrot.lane.b32.xlu0 %v207, 127
        %v223 = vpop.permute.xlu0 %222
        %224 = vrot.lane.b32.xlu0 %v208, 127
        %v225 = vpop.permute.xlu0 %224
        %226 = vrot.lane.b32.xlu0 %v209, 127
        %v227 = vpop.permute.xlu0 %226
        %228 = vrot.lane.b32.xlu0 %v210, 127
        %v229 = vpop.permute.xlu0 %228
        %vm230 = vcmask 1039360
        %v231 = vsel %vm230, %v221, %v223
        %v232 = vsel %vm230, %v223, %v225
        %v233 = vsel %vm230, %v225, %v227
        %v234 = vsel %vm230, %v227, %v229
        %239 = vst [vmem:[#allocation2 + $0x20] sm:$0xff] %v231
        %240 = vst [vmem:[#allocation2 + $0x28] sm:$0xff] %v232
        %241 = vst [vmem:[#allocation2 + $0x30] sm:$0xff] %v233
        %242 = vst [vmem:[#allocation2 + $0x38] sm:$0xff] %v234
        %243 = vrot.lane.b32.xlu0 %v206, 126
        %v244 = vpop.permute.xlu0 %243
        %245 = vrot.lane.b32.xlu0 %v207, 126
        %v246 = vpop.permute.xlu0 %245
        %247 = vrot.lane.b32.xlu0 %v208, 126
        %v248 = vpop.permute.xlu0 %247
        %249 = vrot.lane.b32.xlu0 %v209, 126
        %v250 = vpop.permute.xlu0 %249
        %251 = vrot.lane.b32.xlu0 %v210, 126
        %v252 = vpop.permute.xlu0 %251
        %vm253 = vcmask 1031168
        %v254 = vsel %vm253, %v244, %v246
        %v255 = vsel %vm253, %v246, %v248
        %v256 = vsel %vm253, %v248, %v250
        %v257 = vsel %vm253, %v250, %v252
        %262 = vst [vmem:[#allocation2 + $0x40] sm:$0xff] %v254
        %263 = vst [vmem:[#allocation2 + $0x48] sm:$0xff] %v255
        %264 = vst [vmem:[#allocation2 + $0x50] sm:$0xff] %v256
        %265 = vst [vmem:[#allocation2 + $0x58] sm:$0xff] %v257
        %266 = vrot.lane.b32.xlu0 %v206, 125
        %v267 = vpop.permute.xlu0 %266
        %268 = vrot.lane.b32.xlu0 %v207, 125
        %v269 = vpop.permute.xlu0 %268
        %270 = vrot.lane.b32.xlu0 %v208, 125
        %v271 = vpop.permute.xlu0 %270
        %272 = vrot.lane.b32.xlu0 %v209, 125
        %v273 = vpop.permute.xlu0 %272
        %274 = vrot.lane.b32.xlu0 %v210, 125
        %v275 = vpop.permute.xlu0 %274
        %vm276 = vcmask 1022976
        %v277 = vsel %vm276, %v267, %v269
        %v278 = vsel %vm276, %v269, %v271
        %v279 = vsel %vm276, %v271, %v273
        %v280 = vsel %vm276, %v273, %v275
        %285 = vst [vmem:[#allocation2 + $0x60] sm:$0xff] %v277
        %286 = vst [vmem:[#allocation2 + $0x68] sm:$0xff] %v278
        %287 = vst [vmem:[#allocation2 + $0x70] sm:$0xff] %v279
        %288 = vst [vmem:[#allocation2 + $0x78] sm:$0xff] %v280
        %289 = vrot.lane.b32.xlu0 %v206, 124
        %v290 = vpop.permute.xlu0 %289
        %291 = vrot.lane.b32.xlu0 %v207, 124
        %v292 = vpop.permute.xlu0 %291
        %293 = vrot.lane.b32.xlu0 %v208, 124
        %v294 = vpop.permute.xlu0 %293
        %295 = vrot.lane.b32.xlu0 %v209, 124
        %v296 = vpop.permute.xlu0 %295
        %297 = vrot.lane.b32.xlu0 %v210, 124
        %v298 = vpop.permute.xlu0 %297
        %vm299 = vcmask 1014784
        %v300 = vsel %vm299, %v290, %v292
        %v301 = vsel %vm299, %v292, %v294
        %v302 = vsel %vm299, %v294, %v296
        %v303 = vsel %vm299, %v296, %v298
        %308 = vst [vmem:[#allocation2 + $0x80] sm:$0xff] %v300
        %309 = vst [vmem:[#allocation2 + $0x88] sm:$0xff] %v301
        %310 = vst [vmem:[#allocation2 + $0x90] sm:$0xff] %v302
        %311 = vst [vmem:[#allocation2 + $0x98] sm:$0xff] %v303
        %312 = vrot.lane.b32.xlu0 %v206, 123
        %v313 = vpop.permute.xlu0 %312
        %314 = vrot.lane.b32.xlu0 %v207, 123
        %v315 = vpop.permute.xlu0 %314
        %316 = vrot.lane.b32.xlu0 %v208, 123
        %v317 = vpop.permute.xlu0 %316
        %318 = vrot.lane.b32.xlu0 %v209, 123
        %v319 = vpop.permute.xlu0 %318
        %320 = vrot.lane.b32.xlu0 %v210, 123
        %v321 = vpop.permute.xlu0 %320
        %vm322 = vcmask 1006592
        %v323 = vsel %vm322, %v313, %v315
        %v324 = vsel %vm322, %v315, %v317
        %v325 = vsel %vm322, %v317, %v319
        %v326 = vsel %vm322, %v319, %v321
        %331 = vst [vmem:[#allocation2 + $0xa0] sm:$0xff] %v323
        %332 = vst [vmem:[#allocation2 + $0xa8] sm:$0xff] %v324
        %333 = vst [vmem:[#allocation2 + $0xb0] sm:$0xff] %v325
        %334 = vst [vmem:[#allocation2 + $0xb8] sm:$0xff] %v326
        %335 = vrot.lane.b32.xlu0 %v206, 122
        %v336 = vpop.permute.xlu0 %335
        %337 = vrot.lane.b32.xlu0 %v207, 122
        %v338 = vpop.permute.xlu0 %337
        %339 = vrot.lane.b32.xlu0 %v208, 122
        %v340 = vpop.permute.xlu0 %339
        %341 = vrot.lane.b32.xlu0 %v209, 122
        %v342 = vpop.permute.xlu0 %341
        %343 = vrot.lane.b32.xlu0 %v210, 122
        %v344 = vpop.permute.xlu0 %343
        %vm345 = vcmask 998400
        %v346 = vsel %vm345, %v336, %v338
        %v347 = vsel %vm345, %v338, %v340
        %v348 = vsel %vm345, %v340, %v342
        %v349 = vsel %vm345, %v342, %v344
        %354 = vst [vmem:[#allocation2 + $0xc0] sm:$0xff] %v346
        %355 = vst [vmem:[#allocation2 + $0xc8] sm:$0xff] %v347
        %356 = vst [vmem:[#allocation2 + $0xd0] sm:$0xff] %v348
        %357 = vst [vmem:[#allocation2 + $0xd8] sm:$0xff] %v349
        %358 = vrot.lane.b32.xlu0 %v206, 121
        %v359 = vpop.permute.xlu0 %358
        %360 = vrot.lane.b32.xlu0 %v207, 121
        %v361 = vpop.permute.xlu0 %360
        %362 = vrot.lane.b32.xlu0 %v208, 121
        %v363 = vpop.permute.xlu0 %362
        %364 = vrot.lane.b32.xlu0 %v209, 121
        %v365 = vpop.permute.xlu0 %364
        %366 = vrot.lane.b32.xlu0 %v210, 121
        %v367 = vpop.permute.xlu0 %366
        %vm368 = vcmask 990208
        %v369 = vsel %vm368, %v359, %v361
        %v370 = vsel %vm368, %v361, %v363
        %v371 = vsel %vm368, %v363, %v365
        %v372 = vsel %vm368, %v365, %v367
        %377 = vst [vmem:[#allocation2 + $0xe0] sm:$0xff] %v369
        %378 = vst [vmem:[#allocation2 + $0xe8] sm:$0xff] %v370
        %379 = vst [vmem:[#allocation2 + $0xf0] sm:$0xff] %v371
        %380 = vst [vmem:[#allocation2 + $0xf8] sm:$0xff] %v372
        %381 = vrot.lane.b32.xlu0 %v206, 120
        %v382 = vpop.permute.xlu0 %381
        %383 = vrot.lane.b32.xlu0 %v207, 120
        %v384 = vpop.permute.xlu0 %383
        %385 = vrot.lane.b32.xlu0 %v208, 120
        %v386 = vpop.permute.xlu0 %385
        %387 = vrot.lane.b32.xlu0 %v209, 120
        %v388 = vpop.permute.xlu0 %387
        %389 = vrot.lane.b32.xlu0 %v210, 120
        %v390 = vpop.permute.xlu0 %389
        %vm391 = vcmask 982016
        %v392 = vsel %vm391, %v382, %v384
        %v393 = vsel %vm391, %v384, %v386
        %v394 = vsel %vm391, %v386, %v388
        %v395 = vsel %vm391, %v388, %v390
        %400 = vst [vmem:[#allocation2 + $0x100] sm:$0xff] %v392
        %401 = vst [vmem:[#allocation2 + $0x108] sm:$0xff] %v393
        %402 = vst [vmem:[#allocation2 + $0x110] sm:$0xff] %v394
        %403 = vst [vmem:[#allocation2 + $0x118] sm:$0xff] %v395
        %404 = vrot.lane.b32.xlu0 %v206, 119
        %v405 = vpop.permute.xlu0 %404
        %406 = vrot.lane.b32.xlu0 %v207, 119
        %v407 = vpop.permute.xlu0 %406
        %408 = vrot.lane.b32.xlu0 %v208, 119
        %v409 = vpop.permute.xlu0 %408
        %410 = vrot.lane.b32.xlu0 %v209, 119
        %v411 = vpop.permute.xlu0 %410
        %412 = vrot.lane.b32.xlu0 %v210, 119
        %v413 = vpop.permute.xlu0 %412
        %vm414 = vcmask 973824
        %v415 = vsel %vm414, %v405, %v407
        %v416 = vsel %vm414, %v407, %v409
        %v417 = vsel %vm414, %v409, %v411
        %v418 = vsel %vm414, %v411, %v413
        %423 = vst [vmem:[#allocation2 + $0x120] sm:$0xff] %v415
        %424 = vst [vmem:[#allocation2 + $0x128] sm:$0xff] %v416
        %425 = vst [vmem:[#allocation2 + $0x130] sm:$0xff] %v417
        %426 = vst [vmem:[#allocation2 + $0x138] sm:$0xff] %v418
        %427 = vrot.lane.b32.xlu0 %v206, 118
        %v428 = vpop.permute.xlu0 %427
        %429 = vrot.lane.b32.xlu0 %v207, 118
        %v430 = vpop.permute.xlu0 %429
        %431 = vrot.lane.b32.xlu0 %v208, 118
        %v432 = vpop.permute.xlu0 %431
        %433 = vrot.lane.b32.xlu0 %v209, 118
        %v434 = vpop.permute.xlu0 %433
        %435 = vrot.lane.b32.xlu0 %v210, 118
        %v436 = vpop.permute.xlu0 %435
        %vm437 = vcmask 965632
        %v438 = vsel %vm437, %v428, %v430
        %v439 = vsel %vm437, %v430, %v432
        %v440 = vsel %vm437, %v432, %v434
        %v441 = vsel %vm437, %v434, %v436
        %446 = vst [vmem:[#allocation2 + $0x140] sm:$0xff] %v438
        %447 = vst [vmem:[#allocation2 + $0x148] sm:$0xff] %v439
        %448 = vst [vmem:[#allocation2 + $0x150] sm:$0xff] %v440
        %449 = vst [vmem:[#allocation2 + $0x158] sm:$0xff] %v441
        %v450 = vld [vmem:[#allocation3] sm:$0xff]
        %v451 = vld [vmem:[#allocation3 + $0x8] sm:$0xff]
        %v452 = vld [vmem:[#allocation3 + $0x10] sm:$0xff]
        %v453 = vld [vmem:[#allocation3 + $0x18] sm:$0xff]
        %v454 = vld [vmem:[#allocation7] sm:$0xff]
        %v455 = vld [vmem:[#allocation2] sm:$0xff]
        %v456 = vld [vmem:[#allocation2 + $0x8] sm:$0xff]
        %v457 = vld [vmem:[#allocation2 + $0x10] sm:$0xff]
        %v458 = vld [vmem:[#allocation2 + $0x18] sm:$0xff]
        %v459 = vld [vmem:[#allocation2 + $0x20] sm:$0xff]
        %v460 = vld [vmem:[#allocation2 + $0x28] sm:$0xff]
        %v461 = vld [vmem:[#allocation2 + $0x30] sm:$0xff]
        %v462 = vld [vmem:[#allocation2 + $0x38] sm:$0xff]
        %v463 = vld [vmem:[#allocation2 + $0x40] sm:$0xff]
        %v464 = vld [vmem:[#allocation2 + $0x48] sm:$0xff]
        %v465 = vld [vmem:[#allocation2 + $0x50] sm:$0xff]
        %v466 = vld [vmem:[#allocation2 + $0x58] sm:$0xff]
        %v467 = vld [vmem:[#allocation2 + $0x60] sm:$0xff]
        %v468 = vld [vmem:[#allocation2 + $0x68] sm:$0xff]
        %v469 = vld [vmem:[#allocation2 + $0x70] sm:$0xff]
        %v470 = vld [vmem:[#allocation2 + $0x78] sm:$0xff]
        %v471 = vld [vmem:[#allocation2 + $0x80] sm:$0xff]
        %v472 = vld [vmem:[#allocation2 + $0x88] sm:$0xff]
        %v473 = vld [vmem:[#allocation2 + $0x90] sm:$0xff]
        %v474 = vld [vmem:[#allocation2 + $0x98] sm:$0xff]
        %v475 = vld [vmem:[#allocation2 + $0xa0] sm:$0xff]
        %v476 = vld [vmem:[#allocation2 + $0xa8] sm:$0xff]
        %v477 = vld [vmem:[#allocation2 + $0xb0] sm:$0xff]
        %v478 = vld [vmem:[#allocation2 + $0xb8] sm:$0xff]
        %v479 = vld [vmem:[#allocation2 + $0xc0] sm:$0xff]
        %v480 = vld [vmem:[#allocation2 + $0xc8] sm:$0xff]
        %v481 = vld [vmem:[#allocation2 + $0xd0] sm:$0xff]
        %v482 = vld [vmem:[#allocation2 + $0xd8] sm:$0xff]
        %v483 = vld [vmem:[#allocation2 + $0xe0] sm:$0xff]
        %v484 = vld [vmem:[#allocation2 + $0xe8] sm:$0xff]
        %v485 = vld [vmem:[#allocation2 + $0xf0] sm:$0xff]
        %v486 = vld [vmem:[#allocation2 + $0xf8] sm:$0xff]
        %v487 = vld [vmem:[#allocation2 + $0x100] sm:$0xff]
        %v488 = vld [vmem:[#allocation2 + $0x108] sm:$0xff]
        %v489 = vld [vmem:[#allocation2 + $0x110] sm:$0xff]
        %v490 = vld [vmem:[#allocation2 + $0x118] sm:$0xff]
        %v491 = vld [vmem:[#allocation2 + $0x120] sm:$0xff]
        %v492 = vld [vmem:[#allocation2 + $0x128] sm:$0xff]
        %v493 = vld [vmem:[#allocation2 + $0x130] sm:$0xff]
        %v494 = vld [vmem:[#allocation2 + $0x138] sm:$0xff]
        %v495 = vld [vmem:[#allocation2 + $0x140] sm:$0xff]
        %v496 = vld [vmem:[#allocation2 + $0x148] sm:$0xff]
        %v497 = vld [vmem:[#allocation2 + $0x150] sm:$0xff]
        %v498 = vld [vmem:[#allocation2 + $0x158] sm:$0xff]
        %vm499 = vcmask 719872
        %v501 = vsel %vm499, %v454, 0
        %503 = vmatprep.subr.mxu0 %v456
        %504 = vmatpush1.msra.mxu0 %v455
        %505 = vmatprep.subr.mxu0 %v460
        %506 = vmatpush1.msra.mxu0 %v459
        %507 = vmatprep.subr.mxu0 %v464
        %508 = vmatpush1.msra.mxu0 %v463
        %509 = vmatprep.subr.mxu0 %v468
        %510 = vmatpush1.msra.mxu0 %v467
        %511 = vmatprep.subr.mxu0 %v472
        %512 = vmatpush1.msra.mxu0 %v471
        %513 = vmatprep.subr.mxu0 %v476
        %514 = vmatpush1.msra.mxu0 %v475
        %515 = vmatprep.subr.mxu0 %v480
        %516 = vmatpush1.msra.mxu0 %v479
        %517 = vmatprep.subr.mxu0 %v484
        %518 = vmatpush1.msra.mxu0 %v483
        %519 = vmatprep.subr.mxu0 %v488
        %520 = vmatpush1.msra.mxu0 %v487
        %521 = vmatprep.subr.mxu0 %v492
        %522 = vmatpush1.msra.mxu0 %v491
        %523 = vmatprep.subr.mxu0 %v496
        %524 = vmatpush1.msra.mxu0 %v495
        %525 = vmatprep.subr.mxu0 0.0
        %526 = vmatpush1.msra.mxu0 0.0
        %527 = vmatprep.subr.mxu0 0.0
        %528 = vmatpush1.msra.mxu0 0.0
        %529 = vmatprep.subr.mxu0 0.0
        %530 = vmatpush1.msra.mxu0 0.0
        %531 = vmatprep.subr.mxu0 0.0
        %532 = vmatpush1.msra.mxu0 0.0
        %533 = vmatprep.subr.mxu0 0.0
        %534 = vmatpush1.msra.mxu0 0.0
        %535 = vmatprep.subr.mxu0 0.0
        %536 = vmatpush1.msra.mxu0 0.0
        %537 = vmatprep.subr.mxu0 0.0
        %538 = vmatpush1.msra.mxu0 0.0
        %539 = vmatprep.subr.mxu0 0.0
        %540 = vmatpush1.msra.mxu0 0.0
        %541 = vmatprep.subr.mxu0 0.0
        %542 = vmatpush1.msra.mxu0 0.0
        %543 = vmatprep.subr.mxu0 0.0
        %544 = vmatpush1.msra.mxu0 0.0
        %545 = vmatprep.subr.mxu0 0.0
        %546 = vmatpush1.msra.mxu0 0.0
        %547 = vmatprep.subr.mxu0 0.0
        %548 = vmatpush1.msra.mxu0 0.0
        %549 = vmatprep.subr.mxu0 0.0
        %550 = vmatpush1.msra.mxu0 0.0
        %551 = vmatprep.subr.mxu0 0.0
        %552 = vmatpush1.msra.mxu0 0.0
        %553 = vmatprep.subr.mxu0 0.0
        %554 = vmatpush1.msra.mxu0 0.0
        %555 = vmatprep.subr.mxu0 0.0
        %556 = vmatpush1.msra.mxu0 0.0
        %557 = vmatprep.subr.mxu0 0.0
        %558 = vmatpush1.msra.mxu0 0.0
        %559 = vmatprep.subr.mxu0 0.0
        %560 = vmatpush1.msra.mxu0 0.0
        %561 = vmatprep.subr.mxu0 0.0
        %562 = vmatpush1.msra.mxu0 0.0
        %563 = vmatprep.subr.mxu0 0.0
        %564 = vmatpush1.msra.mxu0 0.0
        %565 = vmatprep.subr.mxu0 0.0
        %566 = vmatpush1.msra.mxu0 0.0
        %567 = vmatprep.mubr.f32.mxu0 0.0
        %568 = vmatmul.mubr.f32.gmra.mrb[0].mxu0 %v501
        %v569 = vpop.f32.mrb[0].mxu0
        %v570 = vadd.f32 0.0, %v569
        %v571 = vpop.f32.mrb[0].mxu0
        %v572 = vadd.f32 0.0, %v571
        %573 = vdwg.mxu0
        %574 = vmatprep.subr.mxu0 %v458
        %575 = vmatpush1.msra.mxu0 %v457
        %576 = vmatprep.subr.mxu0 %v462
        %577 = vmatpush1.msra.mxu0 %v461
        %578 = vmatprep.subr.mxu0 %v466
        %579 = vmatpush1.msra.mxu0 %v465
        %580 = vmatprep.subr.mxu0 %v470
        %581 = vmatpush1.msra.mxu0 %v469
        %582 = vmatprep.subr.mxu0 %v474
        %583 = vmatpush1.msra.mxu0 %v473
        %584 = vmatprep.subr.mxu0 %v478
        %585 = vmatpush1.msra.mxu0 %v477
        %586 = vmatprep.subr.mxu0 %v482
        %587 = vmatpush1.msra.mxu0 %v481
        %588 = vmatprep.subr.mxu0 %v486
        %589 = vmatpush1.msra.mxu0 %v485
        %590 = vmatprep.subr.mxu0 %v490
        %591 = vmatpush1.msra.mxu0 %v489
        %592 = vmatprep.subr.mxu0 %v494
        %593 = vmatpush1.msra.mxu0 %v493
        %594 = vmatprep.subr.mxu0 %v498
        %595 = vmatpush1.msra.mxu0 %v497
        %596 = vmatprep.subr.mxu0 0.0
        %597 = vmatpush1.msra.mxu0 0.0
        %598 = vmatprep.subr.mxu0 0.0
        %599 = vmatpush1.msra.mxu0 0.0
        %600 = vmatprep.subr.mxu0 0.0
        %601 = vmatpush1.msra.mxu0 0.0
        %602 = vmatprep.subr.mxu0 0.0
        %603 = vmatpush1.msra.mxu0 0.0
        %604 = vmatprep.subr.mxu0 0.0
        %605 = vmatpush1.msra.mxu0 0.0
        %606 = vmatprep.subr.mxu0 0.0
        %607 = vmatpush1.msra.mxu0 0.0
        %608 = vmatprep.subr.mxu0 0.0
        %609 = vmatpush1.msra.mxu0 0.0
        %610 = vmatprep.subr.mxu0 0.0
        %611 = vmatpush1.msra.mxu0 0.0
        %612 = vmatprep.subr.mxu0 0.0
        %613 = vmatpush1.msra.mxu0 0.0
        %614 = vmatprep.subr.mxu0 0.0
        %615 = vmatpush1.msra.mxu0 0.0
        %616 = vmatprep.subr.mxu0 0.0
        %617 = vmatpush1.msra.mxu0 0.0
        %618 = vmatprep.subr.mxu0 0.0
        %619 = vmatpush1.msra.mxu0 0.0
        %620 = vmatprep.subr.mxu0 0.0
        %621 = vmatpush1.msra.mxu0 0.0
        %622 = vmatprep.subr.mxu0 0.0
        %623 = vmatpush1.msra.mxu0 0.0
        %624 = vmatprep.subr.mxu0 0.0
        %625 = vmatpush1.msra.mxu0 0.0
        %626 = vmatprep.subr.mxu0 0.0
        %627 = vmatpush1.msra.mxu0 0.0
        %628 = vmatprep.subr.mxu0 0.0
        %629 = vmatpush1.msra.mxu0 0.0
        %630 = vmatprep.subr.mxu0 0.0
        %631 = vmatpush1.msra.mxu0 0.0
        %632 = vmatprep.subr.mxu0 0.0
        %633 = vmatpush1.msra.mxu0 0.0
        %634 = vmatprep.subr.mxu0 0.0
        %635 = vmatpush1.msra.mxu0 0.0
        %636 = vmatprep.subr.mxu0 0.0
        %637 = vmatpush1.msra.mxu0 0.0
        %638 = vmatprep.mubr.f32.mxu0 0.0
        %639 = vmatmul.mubr.f32.gmra.mrb[0].mxu0 %v501
        %v640 = vpop.f32.mrb[0].mxu0
        %v641 = vadd.f32 0.0, %v640
        %v642 = vpop.f32.mrb[0].mxu0
        %v643 = vadd.f32 0.0, %v642
        %644 = vdwg.mxu0
        %v645 = vadd.f32 %v450, %v570
        %v646 = vadd.f32 %v451, %v572
        %v647 = vadd.f32 %v452, %v641
        %v648 = vadd.f32 %v453, %v643
        %649 = vst [vmem:[#allocation3] sm:$0xff] %v645
        %650 = vst [vmem:[#allocation3 + $0x8] sm:$0xff] %v646
        %651 = vst [vmem:[#allocation3 + $0x10] sm:$0xff] %v647
        %652 = vst [vmem:[#allocation3 + $0x18] sm:$0xff] %v648
        %v653 = vld [vmem:[%s175] sm:$0xff]
        %v654 = vld [vmem:[%s175 + $0x8] sm:$0xff]
        %v655 = vld [vmem:[%s175 + $0x10] sm:$0xff]
        %v656 = vld [vmem:[%s175 + $0x18] sm:$0xff]
        %v657 = vld [vmem:[%s175 + $0x20] sm:$0xff]
        %663 = vrot.lane.b32.xlu0 %v653, 102
        %v664 = vpop.permute.xlu0 %663
        %665 = vrot.lane.b32.xlu0 %v654, 102
        %v666 = vpop.permute.xlu0 %665
        %667 = vrot.lane.b32.xlu0 %v655, 102
        %v668 = vpop.permute.xlu0 %667
        %669 = vrot.lane.b32.xlu0 %v656, 102
        %v670 = vpop.permute.xlu0 %669
        %671 = vrot.lane.b32.xlu0 %v657, 102
        %v672 = vpop.permute.xlu0 %671
        %vm673 = vcmask 834560
        %v674 = vsel %vm673, %v664, %v666
        %v675 = vsel %vm673, %v666, %v668
        %v676 = vsel %vm673, %v668, %v670
        %v677 = vsel %vm673, %v670, %v672
        %682 = vst [vmem:[#allocation2] sm:$0xff] %v674
        %683 = vst [vmem:[#allocation2 + $0x8] sm:$0xff] %v675
        %684 = vst [vmem:[#allocation2 + $0x10] sm:$0xff] %v676
        %685 = vst [vmem:[#allocation2 + $0x18] sm:$0xff] %v677
        %686 = vrot.lane.b32.xlu0 %v653, 101
        %v687 = vpop.permute.xlu0 %686
        %688 = vrot.lane.b32.xlu0 %v654, 101
        %v689 = vpop.permute.xlu0 %688
        %690 = vrot.lane.b32.xlu0 %v655, 101
        %v691 = vpop.permute.xlu0 %690
        %692 = vrot.lane.b32.xlu0 %v656, 101
        %v693 = vpop.permute.xlu0 %692
        %694 = vrot.lane.b32.xlu0 %v657, 101
        %v695 = vpop.permute.xlu0 %694
        %vm696 = vcmask 826368
        %v697 = vsel %vm696, %v687, %v689
        %v698 = vsel %vm696, %v689, %v691
        %v699 = vsel %vm696, %v691, %v693
        %v700 = vsel %vm696, %v693, %v695
        %705 = vst [vmem:[#allocation2 + $0x20] sm:$0xff] %v697
        %706 = vst [vmem:[#allocation2 + $0x28] sm:$0xff] %v698
        %707 = vst [vmem:[#allocation2 + $0x30] sm:$0xff] %v699
        %708 = vst [vmem:[#allocation2 + $0x38] sm:$0xff] %v700
        %709 = vrot.lane.b32.xlu0 %v653, 100
        %v710 = vpop.permute.xlu0 %709
        %711 = vrot.lane.b32.xlu0 %v654, 100
        %v712 = vpop.permute.xlu0 %711
        %713 = vrot.lane.b32.xlu0 %v655, 100
        %v714 = vpop.permute.xlu0 %713
        %715 = vrot.lane.b32.xlu0 %v656, 100
        %v716 = vpop.permute.xlu0 %715
        %717 = vrot.lane.b32.xlu0 %v657, 100
        %v718 = vpop.permute.xlu0 %717
        %vm719 = vcmask 818176
        %v720 = vsel %vm719, %v710, %v712
        %v721 = vsel %vm719, %v712, %v714
        %v722 = vsel %vm719, %v714, %v716
        %v723 = vsel %vm719, %v716, %v718
        %728 = vst [vmem:[#allocation2 + $0x40] sm:$0xff] %v720
        %729 = vst [vmem:[#allocation2 + $0x48] sm:$0xff] %v721
        %730 = vst [vmem:[#allocation2 + $0x50] sm:$0xff] %v722
        %731 = vst [vmem:[#allocation2 + $0x58] sm:$0xff] %v723
        %732 = vrot.lane.b32.xlu0 %v653, 99
        %v733 = vpop.permute.xlu0 %732
        %734 = vrot.lane.b32.xlu0 %v654, 99
        %v735 = vpop.permute.xlu0 %734
        %736 = vrot.lane.b32.xlu0 %v655, 99
        %v737 = vpop.permute.xlu0 %736
        %738 = vrot.lane.b32.xlu0 %v656, 99
        %v739 = vpop.permute.xlu0 %738
        %740 = vrot.lane.b32.xlu0 %v657, 99
        %v741 = vpop.permute.xlu0 %740
        %vm742 = vcmask 809984
        %v743 = vsel %vm742, %v733, %v735
        %v744 = vsel %vm742, %v735, %v737
        %v745 = vsel %vm742, %v737, %v739
        %v746 = vsel %vm742, %v739, %v741
        %751 = vst [vmem:[#allocation2 + $0x60] sm:$0xff] %v743
        %752 = vst [vmem:[#allocation2 + $0x68] sm:$0xff] %v744
        %753 = vst [vmem:[#allocation2 + $0x70] sm:$0xff] %v745
        %754 = vst [vmem:[#allocation2 + $0x78] sm:$0xff] %v746
        %755 = vrot.lane.b32.xlu0 %v653, 98
        %v756 = vpop.permute.xlu0 %755
        %757 = vrot.lane.b32.xlu0 %v654, 98
        %v758 = vpop.permute.xlu0 %757
        %759 = vrot.lane.b32.xlu0 %v655, 98
        %v760 = vpop.permute.xlu0 %759
        %761 = vrot.lane.b32.xlu0 %v656, 98
        %v762 = vpop.permute.xlu0 %761
        %763 = vrot.lane.b32.xlu0 %v657, 98
        %v764 = vpop.permute.xlu0 %763
        %vm765 = vcmask 801792
        %v766 = vsel %vm765, %v756, %v758
        %v767 = vsel %vm765, %v758, %v760
        %v768 = vsel %vm765, %v760, %v762
        %v769 = vsel %vm765, %v762, %v764
        %774 = vst [vmem:[#allocation2 + $0x80] sm:$0xff] %v766
        %775 = vst [vmem:[#allocation2 + $0x88] sm:$0xff] %v767
        %776 = vst [vmem:[#allocation2 + $0x90] sm:$0xff] %v768
        %777 = vst [vmem:[#allocation2 + $0x98] sm:$0xff] %v769
        %778 = vrot.lane.b32.xlu0 %v653, 97
        %v779 = vpop.permute.xlu0 %778
        %780 = vrot.lane.b32.xlu0 %v654, 97
        %v781 = vpop.permute.xlu0 %780
        %782 = vrot.lane.b32.xlu0 %v655, 97
        %v783 = vpop.permute.xlu0 %782
        %784 = vrot.lane.b32.xlu0 %v656, 97
        %v785 = vpop.permute.xlu0 %784
        %786 = vrot.lane.b32.xlu0 %v657, 97
        %v787 = vpop.permute.xlu0 %786
        %vm788 = vcmask 793600
        %v789 = vsel %vm788, %v779, %v781
        %v790 = vsel %vm788, %v781, %v783
        %v791 = vsel %vm788, %v783, %v785
        %v792 = vsel %vm788, %v785, %v787
        %797 = vst [vmem:[#allocation2 + $0xa0] sm:$0xff] %v789
        %798 = vst [vmem:[#allocation2 + $0xa8] sm:$0xff] %v790
        %799 = vst [vmem:[#allocation2 + $0xb0] sm:$0xff] %v791
        %800 = vst [vmem:[#allocation2 + $0xb8] sm:$0xff] %v792
        %801 = vrot.lane.b32.xlu0 %v653, 96
        %v802 = vpop.permute.xlu0 %801
        %803 = vrot.lane.b32.xlu0 %v654, 96
        %v804 = vpop.permute.xlu0 %803
        %805 = vrot.lane.b32.xlu0 %v655, 96
        %v806 = vpop.permute.xlu0 %805
        %807 = vrot.lane.b32.xlu0 %v656, 96
        %v808 = vpop.permute.xlu0 %807
        %809 = vrot.lane.b32.xlu0 %v657, 96
        %v810 = vpop.permute.xlu0 %809
        %vm811 = vcmask 785408
        %v812 = vsel %vm811, %v802, %v804
        %v813 = vsel %vm811, %v804, %v806
        %v814 = vsel %vm811, %v806, %v808
        %v815 = vsel %vm811, %v808, %v810
        %820 = vst [vmem:[#allocation2 + $0xc0] sm:$0xff] %v812
        %821 = vst [vmem:[#allocation2 + $0xc8] sm:$0xff] %v813
        %822 = vst [vmem:[#allocation2 + $0xd0] sm:$0xff] %v814
        %823 = vst [vmem:[#allocation2 + $0xd8] sm:$0xff] %v815
        %824 = vrot.lane.b32.xlu0 %v653, 95
        %v825 = vpop.permute.xlu0 %824
        %826 = vrot.lane.b32.xlu0 %v654, 95
        %v827 = vpop.permute.xlu0 %826
        %828 = vrot.lane.b32.xlu0 %v655, 95
        %v829 = vpop.permute.xlu0 %828
        %830 = vrot.lane.b32.xlu0 %v656, 95
        %v831 = vpop.permute.xlu0 %830
        %832 = vrot.lane.b32.xlu0 %v657, 95
        %v833 = vpop.permute.xlu0 %832
        %vm834 = vcmask 777216
        %v835 = vsel %vm834, %v825, %v827
        %v836 = vsel %vm834, %v827, %v829
        %v837 = vsel %vm834, %v829, %v831
        %v838 = vsel %vm834, %v831, %v833
        %843 = vst [vmem:[#allocation2 + $0xe0] sm:$0xff] %v835
        %844 = vst [vmem:[#allocation2 + $0xe8] sm:$0xff] %v836
        %845 = vst [vmem:[#allocation2 + $0xf0] sm:$0xff] %v837
        %846 = vst [vmem:[#allocation2 + $0xf8] sm:$0xff] %v838
        %847 = vrot.lane.b32.xlu0 %v653, 94
        %v848 = vpop.permute.xlu0 %847
        %849 = vrot.lane.b32.xlu0 %v654, 94
        %v850 = vpop.permute.xlu0 %849
        %851 = vrot.lane.b32.xlu0 %v655, 94
        %v852 = vpop.permute.xlu0 %851
        %853 = vrot.lane.b32.xlu0 %v656, 94
        %v854 = vpop.permute.xlu0 %853
        %855 = vrot.lane.b32.xlu0 %v657, 94
        %v856 = vpop.permute.xlu0 %855
        %vm857 = vcmask 769024
        %v858 = vsel %vm857, %v848, %v850
        %v859 = vsel %vm857, %v850, %v852
        %v860 = vsel %vm857, %v852, %v854
        %v861 = vsel %vm857, %v854, %v856
        %866 = vst [vmem:[#allocation2 + $0x100] sm:$0xff] %v858
        %867 = vst [vmem:[#allocation2 + $0x108] sm:$0xff] %v859
        %868 = vst [vmem:[#allocation2 + $0x110] sm:$0xff] %v860
        %869 = vst [vmem:[#allocation2 + $0x118] sm:$0xff] %v861
        %870 = vrot.lane.b32.xlu0 %v653, 93
        %v871 = vpop.permute.xlu0 %870
        %872 = vrot.lane.b32.xlu0 %v654, 93
        %v873 = vpop.permute.xlu0 %872
        %874 = vrot.lane.b32.xlu0 %v655, 93
        %v875 = vpop.permute.xlu0 %874
        %876 = vrot.lane.b32.xlu0 %v656, 93
        %v877 = vpop.permute.xlu0 %876
        %878 = vrot.lane.b32.xlu0 %v657, 93
        %v879 = vpop.permute.xlu0 %878
        %vm880 = vcmask 760832
        %v881 = vsel %vm880, %v871, %v873
        %v882 = vsel %vm880, %v873, %v875
        %v883 = vsel %vm880, %v875, %v877
        %v884 = vsel %vm880, %v877, %v879
        %889 = vst [vmem:[#allocation2 + $0x120] sm:$0xff] %v881
        %890 = vst [vmem:[#allocation2 + $0x128] sm:$0xff] %v882
        %891 = vst [vmem:[#allocation2 + $0x130] sm:$0xff] %v883
        %892 = vst [vmem:[#allocation2 + $0x138] sm:$0xff] %v884
        %893 = vrot.lane.b32.xlu0 %v653, 92
        %v894 = vpop.permute.xlu0 %893
        %895 = vrot.lane.b32.xlu0 %v654, 92
        %v896 = vpop.permute.xlu0 %895
        %897 = vrot.lane.b32.xlu0 %v655, 92
        %v898 = vpop.permute.xlu0 %897
        %899 = vrot.lane.b32.xlu0 %v656, 92
        %v900 = vpop.permute.xlu0 %899
        %901 = vrot.lane.b32.xlu0 %v657, 92
        %v902 = vpop.permute.xlu0 %901
        %vm903 = vcmask 752640
        %v904 = vsel %vm903, %v894, %v896
        %v905 = vsel %vm903, %v896, %v898
        %v906 = vsel %vm903, %v898, %v900
        %v907 = vsel %vm903, %v900, %v902
        %912 = vst [vmem:[#allocation2 + $0x140] sm:$0xff] %v904
        %913 = vst [vmem:[#allocation2 + $0x148] sm:$0xff] %v905
        %914 = vst [vmem:[#allocation2 + $0x150] sm:$0xff] %v906
        %915 = vst [vmem:[#allocation2 + $0x158] sm:$0xff] %v907
        %v916 = vld [vmem:[#allocation3] sm:$0xff]
        %v917 = vld [vmem:[#allocation3 + $0x8] sm:$0xff]
        %v918 = vld [vmem:[#allocation3 + $0x10] sm:$0xff]
        %v919 = vld [vmem:[#allocation3 + $0x18] sm:$0xff]
        %s920 = scalar_lea.vmem [#allocation7], 8
        %v921 = vld [vmem:[%s920] sm:$0xff]
        %v922 = vld [vmem:[#allocation2] sm:$0xff]
        %v923 = vld [vmem:[#allocation2 + $0x8] sm:$0xff]
        %v924 = vld [vmem:[#allocation2 + $0x10] sm:$0xff]
        %v925 = vld [vmem:[#allocation2 + $0x18] sm:$0xff]
        %v926 = vld [vmem:[#allocation2 + $0x20] sm:$0xff]
        %v927 = vld [vmem:[#allocation2 + $0x28] sm:$0xff]
        %v928 = vld [vmem:[#allocation2 + $0x30] sm:$0xff]
        %v929 = vld [vmem:[#allocation2 + $0x38] sm:$0xff]
        %v930 = vld [vmem:[#allocation2 + $0x40] sm:$0xff]
        %v931 = vld [vmem:[#allocation2 + $0x48] sm:$0xff]
        %v932 = vld [vmem:[#allocation2 + $0x50] sm:$0xff]
        %v933 = vld [vmem:[#allocation2 + $0x58] sm:$0xff]
        %v934 = vld [vmem:[#allocation2 + $0x60] sm:$0xff]
        %v935 = vld [vmem:[#allocation2 + $0x68] sm:$0xff]
        %v936 = vld [vmem:[#allocation2 + $0x70] sm:$0xff]
        %v937 = vld [vmem:[#allocation2 + $0x78] sm:$0xff]
        %v938 = vld [vmem:[#allocation2 + $0x80] sm:$0xff]
        %v939 = vld [vmem:[#allocation2 + $0x88] sm:$0xff]
        %v940 = vld [vmem:[#allocation2 + $0x90] sm:$0xff]
        %v941 = vld [vmem:[#allocation2 + $0x98] sm:$0xff]
        %v942 = vld [vmem:[#allocation2 + $0xa0] sm:$0xff]
        %v943 = vld [vmem:[#allocation2 + $0xa8] sm:$0xff]
        %v944 = vld [vmem:[#allocation2 + $0xb0] sm:$0xff]
        %v945 = vld [vmem:[#allocation2 + $0xb8] sm:$0xff]
        %v946 = vld [vmem:[#allocation2 + $0xc0] sm:$0xff]
        %v947 = vld [vmem:[#allocation2 + $0xc8] sm:$0xff]
        %v948 = vld [vmem:[#allocation2 + $0xd0] sm:$0xff]
        %v949 = vld [vmem:[#allocation2 + $0xd8] sm:$0xff]
        %v950 = vld [vmem:[#allocation2 + $0xe0] sm:$0xff]
        %v951 = vld [vmem:[#allocation2 + $0xe8] sm:$0xff]
        %v952 = vld [vmem:[#allocation2 + $0xf0] sm:$0xff]
        %v953 = vld [vmem:[#allocation2 + $0xf8] sm:$0xff]
        %v954 = vld [vmem:[#allocation2 + $0x100] sm:$0xff]
        %v955 = vld [vmem:[#allocation2 + $0x108] sm:$0xff]
        %v956 = vld [vmem:[#allocation2 + $0x110] sm:$0xff]
        %v957 = vld [vmem:[#allocation2 + $0x118] sm:$0xff]
        %v958 = vld [vmem:[#allocation2 + $0x120] sm:$0xff]
        %v959 = vld [vmem:[#allocation2 + $0x128] sm:$0xff]
        %v960 = vld [vmem:[#allocation2 + $0x130] sm:$0xff]
        %v961 = vld [vmem:[#allocation2 + $0x138] sm:$0xff]
        %v962 = vld [vmem:[#allocation2 + $0x140] sm:$0xff]
        %v963 = vld [vmem:[#allocation2 + $0x148] sm:$0xff]
        %v964 = vld [vmem:[#allocation2 + $0x150] sm:$0xff]
        %v965 = vld [vmem:[#allocation2 + $0x158] sm:$0xff]
        %v967 = vsel %vm499, %v921, 0
        %969 = vmatprep.subr.mxu0 %v923
        %970 = vmatpush1.msra.mxu0 %v922
        %971 = vmatprep.subr.mxu0 %v927
        %972 = vmatpush1.msra.mxu0 %v926
        %973 = vmatprep.subr.mxu0 %v931
        %974 = vmatpush1.msra.mxu0 %v930
        %975 = vmatprep.subr.mxu0 %v935
        %976 = vmatpush1.msra.mxu0 %v934
        %977 = vmatprep.subr.mxu0 %v939
        %978 = vmatpush1.msra.mxu0 %v938
        %979 = vmatprep.subr.mxu0 %v943
        %980 = vmatpush1.msra.mxu0 %v942
        %981 = vmatprep.subr.mxu0 %v947
        %982 = vmatpush1.msra.mxu0 %v946
        %983 = vmatprep.subr.mxu0 %v951
        %984 = vmatpush1.msra.mxu0 %v950
        %985 = vmatprep.subr.mxu0 %v955
        %986 = vmatpush1.msra.mxu0 %v954
        %987 = vmatprep.subr.mxu0 %v959
        %988 = vmatpush1.msra.mxu0 %v958
        %989 = vmatprep.subr.mxu0 %v963
        %990 = vmatpush1.msra.mxu0 %v962
        %991 = vmatprep.subr.mxu0 0.0
        %992 = vmatpush1.msra.mxu0 0.0
        %993 = vmatprep.subr.mxu0 0.0
        %994 = vmatpush1.msra.mxu0 0.0
        %995 = vmatprep.subr.mxu0 0.0
        %996 = vmatpush1.msra.mxu0 0.0
        %997 = vmatprep.subr.mxu0 0.0
        %998 = vmatpush1.msra.mxu0 0.0
        %999 = vmatprep.subr.mxu0 0.0
        %1000 = vmatpush1.msra.mxu0 0.0
        %1001 = vmatprep.subr.mxu0 0.0
        %1002 = vmatpush1.msra.mxu0 0.0
        %1003 = vmatprep.subr.mxu0 0.0
        %1004 = vmatpush1.msra.mxu0 0.0
        %1005 = vmatprep.subr.mxu0 0.0
        %1006 = vmatpush1.msra.mxu0 0.0
        %1007 = vmatprep.subr.mxu0 0.0
        %1008 = vmatpush1.msra.mxu0 0.0
        %1009 = vmatprep.subr.mxu0 0.0
        %1010 = vmatpush1.msra.mxu0 0.0
        %1011 = vmatprep.subr.mxu0 0.0
        %1012 = vmatpush1.msra.mxu0 0.0
        %1013 = vmatprep.subr.mxu0 0.0
        %1014 = vmatpush1.msra.mxu0 0.0
        %1015 = vmatprep.subr.mxu0 0.0
        %1016 = vmatpush1.msra.mxu0 0.0
        %1017 = vmatprep.subr.mxu0 0.0
        %1018 = vmatpush1.msra.mxu0 0.0
        %1019 = vmatprep.subr.mxu0 0.0
        %1020 = vmatpush1.msra.mxu0 0.0
        %1021 = vmatprep.subr.mxu0 0.0
        %1022 = vmatpush1.msra.mxu0 0.0
        %1023 = vmatprep.subr.mxu0 0.0
        %1024 = vmatpush1.msra.mxu0 0.0
        %1025 = vmatprep.subr.mxu0 0.0
        %1026 = vmatpush1.msra.mxu0 0.0
        %1027 = vmatprep.subr.mxu0 0.0
        %1028 = vmatpush1.msra.mxu0 0.0
        %1029 = vmatprep.subr.mxu0 0.0
        %1030 = vmatpush1.msra.mxu0 0.0
        %1031 = vmatprep.subr.mxu0 0.0
        %1032 = vmatpush1.msra.mxu0 0.0
        %1033 = vmatprep.mubr.f32.mxu0 0.0
        %1034 = vmatmul.mubr.f32.gmra.mrb[0].mxu0 %v967
        %v1035 = vpop.f32.mrb[0].mxu0
        %v1036 = vadd.f32 0.0, %v1035
        %v1037 = vpop.f32.mrb[0].mxu0
        %v1038 = vadd.f32 0.0, %v1037
        %1039 = vdwg.mxu0
        %1040 = vmatprep.subr.mxu0 %v925
        %1041 = vmatpush1.msra.mxu0 %v924
        %1042 = vmatprep.subr.mxu0 %v929
        %1043 = vmatpush1.msra.mxu0 %v928
        %1044 = vmatprep.subr.mxu0 %v933
        %1045 = vmatpush1.msra.mxu0 %v932
        %1046 = vmatprep.subr.mxu0 %v937
        %1047 = vmatpush1.msra.mxu0 %v936
        %1048 = vmatprep.subr.mxu0 %v941
        %1049 = vmatpush1.msra.mxu0 %v940
        %1050 = vmatprep.subr.mxu0 %v945
        %1051 = vmatpush1.msra.mxu0 %v944
        %1052 = vmatprep.subr.mxu0 %v949
        %1053 = vmatpush1.msra.mxu0 %v948
        %1054 = vmatprep.subr.mxu0 %v953
        %1055 = vmatpush1.msra.mxu0 %v952
        %1056 = vmatprep.subr.mxu0 %v957
        %1057 = vmatpush1.msra.mxu0 %v956
        %1058 = vmatprep.subr.mxu0 %v961
        %1059 = vmatpush1.msra.mxu0 %v960
        %1060 = vmatprep.subr.mxu0 %v965
        %1061 = vmatpush1.msra.mxu0 %v964
        %1062 = vmatprep.subr.mxu0 0.0
        %1063 = vmatpush1.msra.mxu0 0.0
        %1064 = vmatprep.subr.mxu0 0.0
        %1065 = vmatpush1.msra.mxu0 0.0
        %1066 = vmatprep.subr.mxu0 0.0
        %1067 = vmatpush1.msra.mxu0 0.0
        %1068 = vmatprep.subr.mxu0 0.0
        %1069 = vmatpush1.msra.mxu0 0.0
        %1070 = vmatprep.subr.mxu0 0.0
        %1071 = vmatpush1.msra.mxu0 0.0
        %1072 = vmatprep.subr.mxu0 0.0
        %1073 = vmatpush1.msra.mxu0 0.0
        %1074 = vmatprep.subr.mxu0 0.0
        %1075 = vmatpush1.msra.mxu0 0.0
        %1076 = vmatprep.subr.mxu0 0.0
        %1077 = vmatpush1.msra.mxu0 0.0
        %1078 = vmatprep.subr.mxu0 0.0
        %1079 = vmatpush1.msra.mxu0 0.0
        %1080 = vmatprep.subr.mxu0 0.0
        %1081 = vmatpush1.msra.mxu0 0.0
        %1082 = vmatprep.subr.mxu0 0.0
        %1083 = vmatpush1.msra.mxu0 0.0
        %1084 = vmatprep.subr.mxu0 0.0
        %1085 = vmatpush1.msra.mxu0 0.0
        %1086 = vmatprep.subr.mxu0 0.0
        %1087 = vmatpush1.msra.mxu0 0.0
        %1088 = vmatprep.subr.mxu0 0.0
        %1089 = vmatpush1.msra.mxu0 0.0
        %1090 = vmatprep.subr.mxu0 0.0
        %1091 = vmatpush1.msra.mxu0 0.0
        %1092 = vmatprep.subr.mxu0 0.0
        %1093 = vmatpush1.msra.mxu0 0.0
        %1094 = vmatprep.subr.mxu0 0.0
        %1095 = vmatpush1.msra.mxu0 0.0
        %1096 = vmatprep.subr.mxu0 0.0
        %1097 = vmatpush1.msra.mxu0 0.0
        %1098 = vmatprep.subr.mxu0 0.0
        %1099 = vmatpush1.msra.mxu0 0.0
        %1100 = vmatprep.subr.mxu0 0.0
        %1101 = vmatpush1.msra.mxu0 0.0
        %1102 = vmatprep.subr.mxu0 0.0
        %1103 = vmatpush1.msra.mxu0 0.0
        %1104 = vmatprep.mubr.f32.mxu0 0.0
        %1105 = vmatmul.mubr.f32.gmra.mrb[0].mxu0 %v967
        %v1106 = vpop.f32.mrb[0].mxu0
        %v1107 = vadd.f32 0.0, %v1106
        %v1108 = vpop.f32.mrb[0].mxu0
        %v1109 = vadd.f32 0.0, %v1108
        %1110 = vdwg.mxu0
        %v1111 = vadd.f32 %v916, %v1036
        %v1112 = vadd.f32 %v917, %v1038
        %v1113 = vadd.f32 %v918, %v1107
        %v1114 = vadd.f32 %v919, %v1109
        %1115 = vst [vmem:[#allocation3] sm:$0xff] %v1111
        %1116 = vst [vmem:[#allocation3 + $0x8] sm:$0xff] %v1112
        %1117 = vst [vmem:[#allocation3 + $0x10] sm:$0xff] %v1113
        %1118 = vst [vmem:[#allocation3 + $0x18] sm:$0xff] %v1114
        %v1119 = vld [vmem:[%s175] sm:$0xff]
        %v1120 = vld [vmem:[%s175 + $0x8] sm:$0xff]
        %v1121 = vld [vmem:[%s175 + $0x10] sm:$0xff]
        %v1122 = vld [vmem:[%s175 + $0x18] sm:$0xff]
        %v1123 = vld [vmem:[%s175 + $0x20] sm:$0xff]
        %1129 = vrot.lane.b32.xlu0 %v1119, 76
        %v1130 = vpop.permute.xlu0 %1129
        %1131 = vrot.lane.b32.xlu0 %v1120, 76
        %v1132 = vpop.permute.xlu0 %1131
        %1133 = vrot.lane.b32.xlu0 %v1121, 76
        %v1134 = vpop.permute.xlu0 %1133
        %1135 = vrot.lane.b32.xlu0 %v1122, 76
        %v1136 = vpop.permute.xlu0 %1135
        %1137 = vrot.lane.b32.xlu0 %v1123, 76
        %v1138 = vpop.permute.xlu0 %1137
        %vm1139 = vcmask 621568
        %v1140 = vsel %vm1139, %v1130, %v1132
        %v1141 = vsel %vm1139, %v1132, %v1134
        %v1142 = vsel %vm1139, %v1134, %v1136
        %v1143 = vsel %vm1139, %v1136, %v1138
        %1148 = vst [vmem:[#allocation2] sm:$0xff] %v1140
        %1149 = vst [vmem:[#allocation2 + $0x8] sm:$0xff] %v1141
        %1150 = vst [vmem:[#allocation2 + $0x10] sm:$0xff] %v1142
        %1151 = vst [vmem:[#allocation2 + $0x18] sm:$0xff] %v1143
        %1152 = vrot.lane.b32.xlu0 %v1119, 75
        %v1153 = vpop.permute.xlu0 %1152
        %1154 = vrot.lane.b32.xlu0 %v1120, 75
        %v1155 = vpop.permute.xlu0 %1154
        %1156 = vrot.lane.b32.xlu0 %v1121, 75
        %v1157 = vpop.permute.xlu0 %1156
        %1158 = vrot.lane.b32.xlu0 %v1122, 75
        %v1159 = vpop.permute.xlu0 %1158
        %1160 = vrot.lane.b32.xlu0 %v1123, 75
        %v1161 = vpop.permute.xlu0 %1160
        %vm1162 = vcmask 613376
        %v1163 = vsel %vm1162, %v1153, %v1155
        %v1164 = vsel %vm1162, %v1155, %v1157
        %v1165 = vsel %vm1162, %v1157, %v1159
        %v1166 = vsel %vm1162, %v1159, %v1161
        %1171 = vst [vmem:[#allocation2 + $0x20] sm:$0xff] %v1163
        %1172 = vst [vmem:[#allocation2 + $0x28] sm:$0xff] %v1164
        %1173 = vst [vmem:[#allocation2 + $0x30] sm:$0xff] %v1165
        %1174 = vst [vmem:[#allocation2 + $0x38] sm:$0xff] %v1166
        %1175 = vrot.lane.b32.xlu0 %v1119, 74
        %v1176 = vpop.permute.xlu0 %1175
        %1177 = vrot.lane.b32.xlu0 %v1120, 74
        %v1178 = vpop.permute.xlu0 %1177
        %1179 = vrot.lane.b32.xlu0 %v1121, 74
        %v1180 = vpop.permute.xlu0 %1179
        %1181 = vrot.lane.b32.xlu0 %v1122, 74
        %v1182 = vpop.permute.xlu0 %1181
        %1183 = vrot.lane.b32.xlu0 %v1123, 74
        %v1184 = vpop.permute.xlu0 %1183
        %vm1185 = vcmask 605184
        %v1186 = vsel %vm1185, %v1176, %v1178
        %v1187 = vsel %vm1185, %v1178, %v1180
        %v1188 = vsel %vm1185, %v1180, %v1182
        %v1189 = vsel %vm1185, %v1182, %v1184
        %1194 = vst [vmem:[#allocation2 + $0x40] sm:$0xff] %v1186
        %1195 = vst [vmem:[#allocation2 + $0x48] sm:$0xff] %v1187
        %1196 = vst [vmem:[#allocation2 + $0x50] sm:$0xff] %v1188
        %1197 = vst [vmem:[#allocation2 + $0x58] sm:$0xff] %v1189
        %1198 = vrot.lane.b32.xlu0 %v1119, 73
        %v1199 = vpop.permute.xlu0 %1198
        %1200 = vrot.lane.b32.xlu0 %v1120, 73
        %v1201 = vpop.permute.xlu0 %1200
        %1202 = vrot.lane.b32.xlu0 %v1121, 73
        %v1203 = vpop.permute.xlu0 %1202
        %1204 = vrot.lane.b32.xlu0 %v1122, 73
        %v1205 = vpop.permute.xlu0 %1204
        %1206 = vrot.lane.b32.xlu0 %v1123, 73
        %v1207 = vpop.permute.xlu0 %1206
        %vm1208 = vcmask 596992
        %v1209 = vsel %vm1208, %v1199, %v1201
        %v1210 = vsel %vm1208, %v1201, %v1203
        %v1211 = vsel %vm1208, %v1203, %v1205
        %v1212 = vsel %vm1208, %v1205, %v1207
        %1217 = vst [vmem:[#allocation2 + $0x60] sm:$0xff] %v1209
        %1218 = vst [vmem:[#allocation2 + $0x68] sm:$0xff] %v1210
        %1219 = vst [vmem:[#allocation2 + $0x70] sm:$0xff] %v1211
        %1220 = vst [vmem:[#allocation2 + $0x78] sm:$0xff] %v1212
        %1221 = vrot.lane.b32.xlu0 %v1119, 72
        %v1222 = vpop.permute.xlu0 %1221
        %1223 = vrot.lane.b32.xlu0 %v1120, 72
        %v1224 = vpop.permute.xlu0 %1223
        %1225 = vrot.lane.b32.xlu0 %v1121, 72
        %v1226 = vpop.permute.xlu0 %1225
        %1227 = vrot.lane.b32.xlu0 %v1122, 72
        %v1228 = vpop.permute.xlu0 %1227
        %1229 = vrot.lane.b32.xlu0 %v1123, 72
        %v1230 = vpop.permute.xlu0 %1229
        %vm1231 = vcmask 588800
        %v1232 = vsel %vm1231, %v1222, %v1224
        %v1233 = vsel %vm1231, %v1224, %v1226
        %v1234 = vsel %vm1231, %v1226, %v1228
        %v1235 = vsel %vm1231, %v1228, %v1230
        %1240 = vst [vmem:[#allocation2 + $0x80] sm:$0xff] %v1232
        %1241 = vst [vmem:[#allocation2 + $0x88] sm:$0xff] %v1233
        %1242 = vst [vmem:[#allocation2 + $0x90] sm:$0xff] %v1234
        %1243 = vst [vmem:[#allocation2 + $0x98] sm:$0xff] %v1235
        %1244 = vrot.lane.b32.xlu0 %v1119, 71
        %v1245 = vpop.permute.xlu0 %1244
        %1246 = vrot.lane.b32.xlu0 %v1120, 71
        %v1247 = vpop.permute.xlu0 %1246
        %1248 = vrot.lane.b32.xlu0 %v1121, 71
        %v1249 = vpop.permute.xlu0 %1248
        %1250 = vrot.lane.b32.xlu0 %v1122, 71
        %v1251 = vpop.permute.xlu0 %1250
        %1252 = vrot.lane.b32.xlu0 %v1123, 71
        %v1253 = vpop.permute.xlu0 %1252
        %vm1254 = vcmask 580608
        %v1255 = vsel %vm1254, %v1245, %v1247
        %v1256 = vsel %vm1254, %v1247, %v1249
        %v1257 = vsel %vm1254, %v1249, %v1251
        %v1258 = vsel %vm1254, %v1251, %v1253
        %1263 = vst [vmem:[#allocation2 + $0xa0] sm:$0xff] %v1255
        %1264 = vst [vmem:[#allocation2 + $0xa8] sm:$0xff] %v1256
        %1265 = vst [vmem:[#allocation2 + $0xb0] sm:$0xff] %v1257
        %1266 = vst [vmem:[#allocation2 + $0xb8] sm:$0xff] %v1258
        %1267 = vrot.lane.b32.xlu0 %v1119, 70
        %v1268 = vpop.permute.xlu0 %1267
        %1269 = vrot.lane.b32.xlu0 %v1120, 70
        %v1270 = vpop.permute.xlu0 %1269
        %1271 = vrot.lane.b32.xlu0 %v1121, 70
        %v1272 = vpop.permute.xlu0 %1271
        %1273 = vrot.lane.b32.xlu0 %v1122, 70
        %v1274 = vpop.permute.xlu0 %1273
        %1275 = vrot.lane.b32.xlu0 %v1123, 70
        %v1276 = vpop.permute.xlu0 %1275
        %vm1277 = vcmask 572416
        %v1278 = vsel %vm1277, %v1268, %v1270
        %v1279 = vsel %vm1277, %v1270, %v1272
        %v1280 = vsel %vm1277, %v1272, %v1274
        %v1281 = vsel %vm1277, %v1274, %v1276
        %1286 = vst [vmem:[#allocation2 + $0xc0] sm:$0xff] %v1278
        %1287 = vst [vmem:[#allocation2 + $0xc8] sm:$0xff] %v1279
        %1288 = vst [vmem:[#allocation2 + $0xd0] sm:$0xff] %v1280
        %1289 = vst [vmem:[#allocation2 + $0xd8] sm:$0xff] %v1281
        %1290 = vrot.lane.b32.xlu0 %v1119, 69
        %v1291 = vpop.permute.xlu0 %1290
        %1292 = vrot.lane.b32.xlu0 %v1120, 69
        %v1293 = vpop.permute.xlu0 %1292
        %1294 = vrot.lane.b32.xlu0 %v1121, 69
        %v1295 = vpop.permute.xlu0 %1294
        %1296 = vrot.lane.b32.xlu0 %v1122, 69
        %v1297 = vpop.permute.xlu0 %1296
        %1298 = vrot.lane.b32.xlu0 %v1123, 69
        %v1299 = vpop.permute.xlu0 %1298
        %vm1300 = vcmask 564224
        %v1301 = vsel %vm1300, %v1291, %v1293
        %v1302 = vsel %vm1300, %v1293, %v1295
        %v1303 = vsel %vm1300, %v1295, %v1297
        %v1304 = vsel %vm1300, %v1297, %v1299
        %1309 = vst [vmem:[#allocation2 + $0xe0] sm:$0xff] %v1301
        %1310 = vst [vmem:[#allocation2 + $0xe8] sm:$0xff] %v1302
        %1311 = vst [vmem:[#allocation2 + $0xf0] sm:$0xff] %v1303
        %1312 = vst [vmem:[#allocation2 + $0xf8] sm:$0xff] %v1304
        %1313 = vrot.lane.b32.xlu0 %v1119, 68
        %v1314 = vpop.permute.xlu0 %1313
        %1315 = vrot.lane.b32.xlu0 %v1120, 68
        %v1316 = vpop.permute.xlu0 %1315
        %1317 = vrot.lane.b32.xlu0 %v1121, 68
        %v1318 = vpop.permute.xlu0 %1317
        %1319 = vrot.lane.b32.xlu0 %v1122, 68
        %v1320 = vpop.permute.xlu0 %1319
        %1321 = vrot.lane.b32.xlu0 %v1123, 68
        %v1322 = vpop.permute.xlu0 %1321
        %vm1323 = vcmask 556032
        %v1324 = vsel %vm1323, %v1314, %v1316
        %v1325 = vsel %vm1323, %v1316, %v1318
        %v1326 = vsel %vm1323, %v1318, %v1320
        %v1327 = vsel %vm1323, %v1320, %v1322
        %1332 = vst [vmem:[#allocation2 + $0x100] sm:$0xff] %v1324
        %1333 = vst [vmem:[#allocation2 + $0x108] sm:$0xff] %v1325
        %1334 = vst [vmem:[#allocation2 + $0x110] sm:$0xff] %v1326
        %1335 = vst [vmem:[#allocation2 + $0x118] sm:$0xff] %v1327
        %1336 = vrot.lane.b32.xlu0 %v1119, 67
        %v1337 = vpop.permute.xlu0 %1336
        %1338 = vrot.lane.b32.xlu0 %v1120, 67
        %v1339 = vpop.permute.xlu0 %1338
        %1340 = vrot.lane.b32.xlu0 %v1121, 67
        %v1341 = vpop.permute.xlu0 %1340
        %1342 = vrot.lane.b32.xlu0 %v1122, 67
        %v1343 = vpop.permute.xlu0 %1342
        %1344 = vrot.lane.b32.xlu0 %v1123, 67
        %v1345 = vpop.permute.xlu0 %1344
        %vm1346 = vcmask 547840
        %v1347 = vsel %vm1346, %v1337, %v1339
        %v1348 = vsel %vm1346, %v1339, %v1341
        %v1349 = vsel %vm1346, %v1341, %v1343
        %v1350 = vsel %vm1346, %v1343, %v1345
        %1355 = vst [vmem:[#allocation2 + $0x120] sm:$0xff] %v1347
        %1356 = vst [vmem:[#allocation2 + $0x128] sm:$0xff] %v1348
        %1357 = vst [vmem:[#allocation2 + $0x130] sm:$0xff] %v1349
        %1358 = vst [vmem:[#allocation2 + $0x138] sm:$0xff] %v1350
        %1359 = vrot.lane.b32.xlu0 %v1119, 66
        %v1360 = vpop.permute.xlu0 %1359
        %1361 = vrot.lane.b32.xlu0 %v1120, 66
        %v1362 = vpop.permute.xlu0 %1361
        %1363 = vrot.lane.b32.xlu0 %v1121, 66
        %v1364 = vpop.permute.xlu0 %1363
        %1365 = vrot.lane.b32.xlu0 %v1122, 66
        %v1366 = vpop.permute.xlu0 %1365
        %1367 = vrot.lane.b32.xlu0 %v1123, 66
        %v1368 = vpop.permute.xlu0 %1367
        %vm1369 = vcmask 539648
        %v1370 = vsel %vm1369, %v1360, %v1362
        %v1371 = vsel %vm1369, %v1362, %v1364
        %v1372 = vsel %vm1369, %v1364, %v1366
        %v1373 = vsel %vm1369, %v1366, %v1368
        %1378 = vst [vmem:[#allocation2 + $0x140] sm:$0xff] %v1370
        %1379 = vst [vmem:[#allocation2 + $0x148] sm:$0xff] %v1371
        %1380 = vst [vmem:[#allocation2 + $0x150] sm:$0xff] %v1372
        %1381 = vst [vmem:[#allocation2 + $0x158] sm:$0xff] %v1373
        %v1382 = vld [vmem:[#allocation3] sm:$0xff]
        %v1383 = vld [vmem:[#allocation3 + $0x8] sm:$0xff]
        %v1384 = vld [vmem:[#allocation3 + $0x10] sm:$0xff]
        %v1385 = vld [vmem:[#allocation3 + $0x18] sm:$0xff]
        %s1386 = scalar_lea.vmem [#allocation7], 16
        %v1387 = vld [vmem:[%s1386] sm:$0xff]
        %v1388 = vld [vmem:[#allocation2] sm:$0xff]
        %v1389 = vld [vmem:[#allocation2 + $0x8] sm:$0xff]
        %v1390 = vld [vmem:[#allocation2 + $0x10] sm:$0xff]
        %v1391 = vld [vmem:[#allocation2 + $0x18] sm:$0xff]
        %v1392 = vld [vmem:[#allocation2 + $0x20] sm:$0xff]
        %v1393 = vld [vmem:[#allocation2 + $0x28] sm:$0xff]
        %v1394 = vld [vmem:[#allocation2 + $0x30] sm:$0xff]
        %v1395 = vld [vmem:[#allocation2 + $0x38] sm:$0xff]
        %v1396 = vld [vmem:[#allocation2 + $0x40] sm:$0xff]
        %v1397 = vld [vmem:[#allocation2 + $0x48] sm:$0xff]
        %v1398 = vld [vmem:[#allocation2 + $0x50] sm:$0xff]
        %v1399 = vld [vmem:[#allocation2 + $0x58] sm:$0xff]
        %v1400 = vld [vmem:[#allocation2 + $0x60] sm:$0xff]
        %v1401 = vld [vmem:[#allocation2 + $0x68] sm:$0xff]
        %v1402 = vld [vmem:[#allocation2 + $0x70] sm:$0xff]
        %v1403 = vld [vmem:[#allocation2 + $0x78] sm:$0xff]
        %v1404 = vld [vmem:[#allocation2 + $0x80] sm:$0xff]
        %v1405 = vld [vmem:[#allocation2 + $0x88] sm:$0xff]
        %v1406 = vld [vmem:[#allocation2 + $0x90] sm:$0xff]
        %v1407 = vld [vmem:[#allocation2 + $0x98] sm:$0xff]
        %v1408 = vld [vmem:[#allocation2 + $0xa0] sm:$0xff]
        %v1409 = vld [vmem:[#allocation2 + $0xa8] sm:$0xff]
        %v1410 = vld [vmem:[#allocation2 + $0xb0] sm:$0xff]
        %v1411 = vld [vmem:[#allocation2 + $0xb8] sm:$0xff]
        %v1412 = vld [vmem:[#allocation2 + $0xc0] sm:$0xff]
        %v1413 = vld [vmem:[#allocation2 + $0xc8] sm:$0xff]
        %v1414 = vld [vmem:[#allocation2 + $0xd0] sm:$0xff]
        %v1415 = vld [vmem:[#allocation2 + $0xd8] sm:$0xff]
        %v1416 = vld [vmem:[#allocation2 + $0xe0] sm:$0xff]
        %v1417 = vld [vmem:[#allocation2 + $0xe8] sm:$0xff]
        %v1418 = vld [vmem:[#allocation2 + $0xf0] sm:$0xff]
        %v1419 = vld [vmem:[#allocation2 + $0xf8] sm:$0xff]
        %v1420 = vld [vmem:[#allocation2 + $0x100] sm:$0xff]
        %v1421 = vld [vmem:[#allocation2 + $0x108] sm:$0xff]
        %v1422 = vld [vmem:[#allocation2 + $0x110] sm:$0xff]
        %v1423 = vld [vmem:[#allocation2 + $0x118] sm:$0xff]
        %v1424 = vld [vmem:[#allocation2 + $0x120] sm:$0xff]
        %v1425 = vld [vmem:[#allocation2 + $0x128] sm:$0xff]
        %v1426 = vld [vmem:[#allocation2 + $0x130] sm:$0xff]
        %v1427 = vld [vmem:[#allocation2 + $0x138] sm:$0xff]
        %v1428 = vld [vmem:[#allocation2 + $0x140] sm:$0xff]
        %v1429 = vld [vmem:[#allocation2 + $0x148] sm:$0xff]
        %v1430 = vld [vmem:[#allocation2 + $0x150] sm:$0xff]
        %v1431 = vld [vmem:[#allocation2 + $0x158] sm:$0xff]
        %v1433 = vsel %vm499, %v1387, 0
        %1435 = vmatprep.subr.mxu0 %v1389
        %1436 = vmatpush1.msra.mxu0 %v1388
        %1437 = vmatprep.subr.mxu0 %v1393
        %1438 = vmatpush1.msra.mxu0 %v1392
        %1439 = vmatprep.subr.mxu0 %v1397
        %1440 = vmatpush1.msra.mxu0 %v1396
        %1441 = vmatprep.subr.mxu0 %v1401
        %1442 = vmatpush1.msra.mxu0 %v1400
        %1443 = vmatprep.subr.mxu0 %v1405
        %1444 = vmatpush1.msra.mxu0 %v1404
        %1445 = vmatprep.subr.mxu0 %v1409
        %1446 = vmatpush1.msra.mxu0 %v1408
        %1447 = vmatprep.subr.mxu0 %v1413
        %1448 = vmatpush1.msra.mxu0 %v1412
        %1449 = vmatprep.subr.mxu0 %v1417
        %1450 = vmatpush1.msra.mxu0 %v1416
        %1451 = vmatprep.subr.mxu0 %v1421
        %1452 = vmatpush1.msra.mxu0 %v1420
        %1453 = vmatprep.subr.mxu0 %v1425
        %1454 = vmatpush1.msra.mxu0 %v1424
        %1455 = vmatprep.subr.mxu0 %v1429
        %1456 = vmatpush1.msra.mxu0 %v1428
        %1457 = vmatprep.subr.mxu0 0.0
        %1458 = vmatpush1.msra.mxu0 0.0
        %1459 = vmatprep.subr.mxu0 0.0
        %1460 = vmatpush1.msra.mxu0 0.0
        %1461 = vmatprep.subr.mxu0 0.0
        %1462 = vmatpush1.msra.mxu0 0.0
        %1463 = vmatprep.subr.mxu0 0.0
        %1464 = vmatpush1.msra.mxu0 0.0
        %1465 = vmatprep.subr.mxu0 0.0
        %1466 = vmatpush1.msra.mxu0 0.0
        %1467 = vmatprep.subr.mxu0 0.0
        %1468 = vmatpush1.msra.mxu0 0.0
        %1469 = vmatprep.subr.mxu0 0.0
        %1470 = vmatpush1.msra.mxu0 0.0
        %1471 = vmatprep.subr.mxu0 0.0
        %1472 = vmatpush1.msra.mxu0 0.0
        %1473 = vmatprep.subr.mxu0 0.0
        %1474 = vmatpush1.msra.mxu0 0.0
        %1475 = vmatprep.subr.mxu0 0.0
        %1476 = vmatpush1.msra.mxu0 0.0
        %1477 = vmatprep.subr.mxu0 0.0
        %1478 = vmatpush1.msra.mxu0 0.0
        %1479 = vmatprep.subr.mxu0 0.0
        %1480 = vmatpush1.msra.mxu0 0.0
        %1481 = vmatprep.subr.mxu0 0.0
        %1482 = vmatpush1.msra.mxu0 0.0
        %1483 = vmatprep.subr.mxu0 0.0
        %1484 = vmatpush1.msra.mxu0 0.0
        %1485 = vmatprep.subr.mxu0 0.0
        %1486 = vmatpush1.msra.mxu0 0.0
        %1487 = vmatprep.subr.mxu0 0.0
        %1488 = vmatpush1.msra.mxu0 0.0
        %1489 = vmatprep.subr.mxu0 0.0
        %1490 = vmatpush1.msra.mxu0 0.0
        %1491 = vmatprep.subr.mxu0 0.0
        %1492 = vmatpush1.msra.mxu0 0.0
        %1493 = vmatprep.subr.mxu0 0.0
        %1494 = vmatpush1.msra.mxu0 0.0
        %1495 = vmatprep.subr.mxu0 0.0
        %1496 = vmatpush1.msra.mxu0 0.0
        %1497 = vmatprep.subr.mxu0 0.0
        %1498 = vmatpush1.msra.mxu0 0.0
        %1499 = vmatprep.mubr.f32.mxu0 0.0
        %1500 = vmatmul.mubr.f32.gmra.mrb[0].mxu0 %v1433
        %v1501 = vpop.f32.mrb[0].mxu0
        %v1502 = vadd.f32 0.0, %v1501
        %v1503 = vpop.f32.mrb[0].mxu0
        %v1504 = vadd.f32 0.0, %v1503
        %1505 = vdwg.mxu0
        %1506 = vmatprep.subr.mxu0 %v1391
        %1507 = vmatpush1.msra.mxu0 %v1390
        %1508 = vmatprep.subr.mxu0 %v1395
        %1509 = vmatpush1.msra.mxu0 %v1394
        %1510 = vmatprep.subr.mxu0 %v1399
        %1511 = vmatpush1.msra.mxu0 %v1398
        %1512 = vmatprep.subr.mxu0 %v1403
        %1513 = vmatpush1.msra.mxu0 %v1402
        %1514 = vmatprep.subr.mxu0 %v1407
        %1515 = vmatpush1.msra.mxu0 %v1406
        %1516 = vmatprep.subr.mxu0 %v1411
        %1517 = vmatpush1.msra.mxu0 %v1410
        %1518 = vmatprep.subr.mxu0 %v1415
        %1519 = vmatpush1.msra.mxu0 %v1414
        %1520 = vmatprep.subr.mxu0 %v1419
        %1521 = vmatpush1.msra.mxu0 %v1418
        %1522 = vmatprep.subr.mxu0 %v1423
        %1523 = vmatpush1.msra.mxu0 %v1422
        %1524 = vmatprep.subr.mxu0 %v1427
        %1525 = vmatpush1.msra.mxu0 %v1426
        %1526 = vmatprep.subr.mxu0 %v1431
        %1527 = vmatpush1.msra.mxu0 %v1430
        %1528 = vmatprep.subr.mxu0 0.0
        %1529 = vmatpush1.msra.mxu0 0.0
        %1530 = vmatprep.subr.mxu0 0.0
        %1531 = vmatpush1.msra.mxu0 0.0
        %1532 = vmatprep.subr.mxu0 0.0
        %1533 = vmatpush1.msra.mxu0 0.0
        %1534 = vmatprep.subr.mxu0 0.0
        %1535 = vmatpush1.msra.mxu0 0.0
        %1536 = vmatprep.subr.mxu0 0.0
        %1537 = vmatpush1.msra.mxu0 0.0
        %1538 = vmatprep.subr.mxu0 0.0
        %1539 = vmatpush1.msra.mxu0 0.0
        %1540 = vmatprep.subr.mxu0 0.0
        %1541 = vmatpush1.msra.mxu0 0.0
        %1542 = vmatprep.subr.mxu0 0.0
        %1543 = vmatpush1.msra.mxu0 0.0
        %1544 = vmatprep.subr.mxu0 0.0
        %1545 = vmatpush1.msra.mxu0 0.0
        %1546 = vmatprep.subr.mxu0 0.0
        %1547 = vmatpush1.msra.mxu0 0.0
        %1548 = vmatprep.subr.mxu0 0.0
        %1549 = vmatpush1.msra.mxu0 0.0
        %1550 = vmatprep.subr.mxu0 0.0
        %1551 = vmatpush1.msra.mxu0 0.0
        %1552 = vmatprep.subr.mxu0 0.0
        %1553 = vmatpush1.msra.mxu0 0.0
        %1554 = vmatprep.subr.mxu0 0.0
        %1555 = vmatpush1.msra.mxu0 0.0
        %1556 = vmatprep.subr.mxu0 0.0
        %1557 = vmatpush1.msra.mxu0 0.0
        %1558 = vmatprep.subr.mxu0 0.0
        %1559 = vmatpush1.msra.mxu0 0.0
        %1560 = vmatprep.subr.mxu0 0.0
        %1561 = vmatpush1.msra.mxu0 0.0
        %1562 = vmatprep.subr.mxu0 0.0
        %1563 = vmatpush1.msra.mxu0 0.0
        %1564 = vmatprep.subr.mxu0 0.0
        %1565 = vmatpush1.msra.mxu0 0.0
        %1566 = vmatprep.subr.mxu0 0.0
        %1567 = vmatpush1.msra.mxu0 0.0
        %1568 = vmatprep.subr.mxu0 0.0
        %1569 = vmatpush1.msra.mxu0 0.0
        %1570 = vmatprep.mubr.f32.mxu0 0.0
        %1571 = vmatmul.mubr.f32.gmra.mrb[0].mxu0 %v1433
        %v1572 = vpop.f32.mrb[0].mxu0
        %v1573 = vadd.f32 0.0, %v1572
        %v1574 = vpop.f32.mrb[0].mxu0
        %v1575 = vadd.f32 0.0, %v1574
        %1576 = vdwg.mxu0
        %v1577 = vadd.f32 %v1382, %v1502
        %v1578 = vadd.f32 %v1383, %v1504
        %v1579 = vadd.f32 %v1384, %v1573
        %v1580 = vadd.f32 %v1385, %v1575
        %1581 = vst [vmem:[#allocation3] sm:$0xff] %v1577
        %1582 = vst [vmem:[#allocation3 + $0x8] sm:$0xff] %v1578
        %1583 = vst [vmem:[#allocation3 + $0x10] sm:$0xff] %v1579
        %1584 = vst [vmem:[#allocation3 + $0x18] sm:$0xff] %v1580
        %v1585 = vld [vmem:[%s175] sm:$0xff]
        %v1586 = vld [vmem:[%s175 + $0x8] sm:$0xff]
        %v1587 = vld [vmem:[%s175 + $0x10] sm:$0xff]
        %v1588 = vld [vmem:[%s175 + $0x18] sm:$0xff]
        %v1589 = vld [vmem:[%s175 + $0x20] sm:$0xff]
        %1595 = vrot.lane.b32.xlu0 %v1585, 50
        %v1596 = vpop.permute.xlu0 %1595
        %1597 = vrot.lane.b32.xlu0 %v1586, 50
        %v1598 = vpop.permute.xlu0 %1597
        %1599 = vrot.lane.b32.xlu0 %v1587, 50
        %v1600 = vpop.permute.xlu0 %1599
        %1601 = vrot.lane.b32.xlu0 %v1588, 50
        %v1602 = vpop.permute.xlu0 %1601
        %1603 = vrot.lane.b32.xlu0 %v1589, 50
        %v1604 = vpop.permute.xlu0 %1603
        %vm1605 = vcmask 408576
        %v1606 = vsel %vm1605, %v1596, %v1598
        %v1607 = vsel %vm1605, %v1598, %v1600
        %v1608 = vsel %vm1605, %v1600, %v1602
        %v1609 = vsel %vm1605, %v1602, %v1604
        %1614 = vst [vmem:[#allocation2] sm:$0xff] %v1606
        %1615 = vst [vmem:[#allocation2 + $0x8] sm:$0xff] %v1607
        %1616 = vst [vmem:[#allocation2 + $0x10] sm:$0xff] %v1608
        %1617 = vst [vmem:[#allocation2 + $0x18] sm:$0xff] %v1609
        %1618 = vrot.lane.b32.xlu0 %v1585, 49
        %v1619 = vpop.permute.xlu0 %1618
        %1620 = vrot.lane.b32.xlu0 %v1586, 49
        %v1621 = vpop.permute.xlu0 %1620
        %1622 = vrot.lane.b32.xlu0 %v1587, 49
        %v1623 = vpop.permute.xlu0 %1622
        %1624 = vrot.lane.b32.xlu0 %v1588, 49
        %v1625 = vpop.permute.xlu0 %1624
        %1626 = vrot.lane.b32.xlu0 %v1589, 49
        %v1627 = vpop.permute.xlu0 %1626
        %vm1628 = vcmask 400384
        %v1629 = vsel %vm1628, %v1619, %v1621
        %v1630 = vsel %vm1628, %v1621, %v1623
        %v1631 = vsel %vm1628, %v1623, %v1625
        %v1632 = vsel %vm1628, %v1625, %v1627
        %1637 = vst [vmem:[#allocation2 + $0x20] sm:$0xff] %v1629
        %1638 = vst [vmem:[#allocation2 + $0x28] sm:$0xff] %v1630
        %1639 = vst [vmem:[#allocation2 + $0x30] sm:$0xff] %v1631
        %1640 = vst [vmem:[#allocation2 + $0x38] sm:$0xff] %v1632
        %1641 = vrot.lane.b32.xlu0 %v1585, 48
        %v1642 = vpop.permute.xlu0 %1641
        %1643 = vrot.lane.b32.xlu0 %v1586, 48
        %v1644 = vpop.permute.xlu0 %1643
        %1645 = vrot.lane.b32.xlu0 %v1587, 48
        %v1646 = vpop.permute.xlu0 %1645
        %1647 = vrot.lane.b32.xlu0 %v1588, 48
        %v1648 = vpop.permute.xlu0 %1647
        %1649 = vrot.lane.b32.xlu0 %v1589, 48
        %v1650 = vpop.permute.xlu0 %1649
        %vm1651 = vcmask 392192
        %v1652 = vsel %vm1651, %v1642, %v1644
        %v1653 = vsel %vm1651, %v1644, %v1646
        %v1654 = vsel %vm1651, %v1646, %v1648
        %v1655 = vsel %vm1651, %v1648, %v1650
        %1660 = vst [vmem:[#allocation2 + $0x40] sm:$0xff] %v1652
        %1661 = vst [vmem:[#allocation2 + $0x48] sm:$0xff] %v1653
        %1662 = vst [vmem:[#allocation2 + $0x50] sm:$0xff] %v1654
        %1663 = vst [vmem:[#allocation2 + $0x58] sm:$0xff] %v1655
        %1664 = vrot.lane.b32.xlu0 %v1585, 47
        %v1665 = vpop.permute.xlu0 %1664
        %1666 = vrot.lane.b32.xlu0 %v1586, 47
        %v1667 = vpop.permute.xlu0 %1666
        %1668 = vrot.lane.b32.xlu0 %v1587, 47
        %v1669 = vpop.permute.xlu0 %1668
        %1670 = vrot.lane.b32.xlu0 %v1588, 47
        %v1671 = vpop.permute.xlu0 %1670
        %1672 = vrot.lane.b32.xlu0 %v1589, 47
        %v1673 = vpop.permute.xlu0 %1672
        %vm1674 = vcmask 384000
        %v1675 = vsel %vm1674, %v1665, %v1667
        %v1676 = vsel %vm1674, %v1667, %v1669
        %v1677 = vsel %vm1674, %v1669, %v1671
        %v1678 = vsel %vm1674, %v1671, %v1673
        %1683 = vst [vmem:[#allocation2 + $0x60] sm:$0xff] %v1675
        %1684 = vst [vmem:[#allocation2 + $0x68] sm:$0xff] %v1676
        %1685 = vst [vmem:[#allocation2 + $0x70] sm:$0xff] %v1677
        %1686 = vst [vmem:[#allocation2 + $0x78] sm:$0xff] %v1678
        %1687 = vrot.lane.b32.xlu0 %v1585, 46
        %v1688 = vpop.permute.xlu0 %1687
        %1689 = vrot.lane.b32.xlu0 %v1586, 46
        %v1690 = vpop.permute.xlu0 %1689
        %1691 = vrot.lane.b32.xlu0 %v1587, 46
        %v1692 = vpop.permute.xlu0 %1691
        %1693 = vrot.lane.b32.xlu0 %v1588, 46
        %v1694 = vpop.permute.xlu0 %1693
        %1695 = vrot.lane.b32.xlu0 %v1589, 46
        %v1696 = vpop.permute.xlu0 %1695
        %vm1697 = vcmask 375808
        %v1698 = vsel %vm1697, %v1688, %v1690
        %v1699 = vsel %vm1697, %v1690, %v1692
        %v1700 = vsel %vm1697, %v1692, %v1694
        %v1701 = vsel %vm1697, %v1694, %v1696
        %1706 = vst [vmem:[#allocation2 + $0x80] sm:$0xff] %v1698
        %1707 = vst [vmem:[#allocation2 + $0x88] sm:$0xff] %v1699
        %1708 = vst [vmem:[#allocation2 + $0x90] sm:$0xff] %v1700
        %1709 = vst [vmem:[#allocation2 + $0x98] sm:$0xff] %v1701
        %1710 = vrot.lane.b32.xlu0 %v1585, 45
        %v1711 = vpop.permute.xlu0 %1710
        %1712 = vrot.lane.b32.xlu0 %v1586, 45
        %v1713 = vpop.permute.xlu0 %1712
        %1714 = vrot.lane.b32.xlu0 %v1587, 45
        %v1715 = vpop.permute.xlu0 %1714
        %1716 = vrot.lane.b32.xlu0 %v1588, 45
        %v1717 = vpop.permute.xlu0 %1716
        %1718 = vrot.lane.b32.xlu0 %v1589, 45
        %v1719 = vpop.permute.xlu0 %1718
        %vm1720 = vcmask 367616
        %v1721 = vsel %vm1720, %v1711, %v1713
        %v1722 = vsel %vm1720, %v1713, %v1715
        %v1723 = vsel %vm1720, %v1715, %v1717
        %v1724 = vsel %vm1720, %v1717, %v1719
        %1729 = vst [vmem:[#allocation2 + $0xa0] sm:$0xff] %v1721
        %1730 = vst [vmem:[#allocation2 + $0xa8] sm:$0xff] %v1722
        %1731 = vst [vmem:[#allocation2 + $0xb0] sm:$0xff] %v1723
        %1732 = vst [vmem:[#allocation2 + $0xb8] sm:$0xff] %v1724
        %1733 = vrot.lane.b32.xlu0 %v1585, 44
        %v1734 = vpop.permute.xlu0 %1733
        %1735 = vrot.lane.b32.xlu0 %v1586, 44
        %v1736 = vpop.permute.xlu0 %1735
        %1737 = vrot.lane.b32.xlu0 %v1587, 44
        %v1738 = vpop.permute.xlu0 %1737
        %1739 = vrot.lane.b32.xlu0 %v1588, 44
        %v1740 = vpop.permute.xlu0 %1739
        %1741 = vrot.lane.b32.xlu0 %v1589, 44
        %v1742 = vpop.permute.xlu0 %1741
        %vm1743 = vcmask 359424
        %v1744 = vsel %vm1743, %v1734, %v1736
        %v1745 = vsel %vm1743, %v1736, %v1738
        %v1746 = vsel %vm1743, %v1738, %v1740
        %v1747 = vsel %vm1743, %v1740, %v1742
        %1752 = vst [vmem:[#allocation2 + $0xc0] sm:$0xff] %v1744
        %1753 = vst [vmem:[#allocation2 + $0xc8] sm:$0xff] %v1745
        %1754 = vst [vmem:[#allocation2 + $0xd0] sm:$0xff] %v1746
        %1755 = vst [vmem:[#allocation2 + $0xd8] sm:$0xff] %v1747
        %1756 = vrot.lane.b32.xlu0 %v1585, 43
        %v1757 = vpop.permute.xlu0 %1756
        %1758 = vrot.lane.b32.xlu0 %v1586, 43
        %v1759 = vpop.permute.xlu0 %1758
        %1760 = vrot.lane.b32.xlu0 %v1587, 43
        %v1761 = vpop.permute.xlu0 %1760
        %1762 = vrot.lane.b32.xlu0 %v1588, 43
        %v1763 = vpop.permute.xlu0 %1762
        %1764 = vrot.lane.b32.xlu0 %v1589, 43
        %v1765 = vpop.permute.xlu0 %1764
        %vm1766 = vcmask 351232
        %v1767 = vsel %vm1766, %v1757, %v1759
        %v1768 = vsel %vm1766, %v1759, %v1761
        %v1769 = vsel %vm1766, %v1761, %v1763
        %v1770 = vsel %vm1766, %v1763, %v1765
        %1775 = vst [vmem:[#allocation2 + $0xe0] sm:$0xff] %v1767
        %1776 = vst [vmem:[#allocation2 + $0xe8] sm:$0xff] %v1768
        %1777 = vst [vmem:[#allocation2 + $0xf0] sm:$0xff] %v1769
        %1778 = vst [vmem:[#allocation2 + $0xf8] sm:$0xff] %v1770
        %1779 = vrot.lane.b32.xlu0 %v1585, 42
        %v1780 = vpop.permute.xlu0 %1779
        %1781 = vrot.lane.b32.xlu0 %v1586, 42
        %v1782 = vpop.permute.xlu0 %1781
        %1783 = vrot.lane.b32.xlu0 %v1587, 42
        %v1784 = vpop.permute.xlu0 %1783
        %1785 = vrot.lane.b32.xlu0 %v1588, 42
        %v1786 = vpop.permute.xlu0 %1785
        %1787 = vrot.lane.b32.xlu0 %v1589, 42
        %v1788 = vpop.permute.xlu0 %1787
        %vm1789 = vcmask 343040
        %v1790 = vsel %vm1789, %v1780, %v1782
        %v1791 = vsel %vm1789, %v1782, %v1784
        %v1792 = vsel %vm1789, %v1784, %v1786
        %v1793 = vsel %vm1789, %v1786, %v1788
        %1798 = vst [vmem:[#allocation2 + $0x100] sm:$0xff] %v1790
        %1799 = vst [vmem:[#allocation2 + $0x108] sm:$0xff] %v1791
        %1800 = vst [vmem:[#allocation2 + $0x110] sm:$0xff] %v1792
        %1801 = vst [vmem:[#allocation2 + $0x118] sm:$0xff] %v1793
        %1802 = vrot.lane.b32.xlu0 %v1585, 41
        %v1803 = vpop.permute.xlu0 %1802
        %1804 = vrot.lane.b32.xlu0 %v1586, 41
        %v1805 = vpop.permute.xlu0 %1804
        %1806 = vrot.lane.b32.xlu0 %v1587, 41
        %v1807 = vpop.permute.xlu0 %1806
        %1808 = vrot.lane.b32.xlu0 %v1588, 41
        %v1809 = vpop.permute.xlu0 %1808
        %1810 = vrot.lane.b32.xlu0 %v1589, 41
        %v1811 = vpop.permute.xlu0 %1810
        %vm1812 = vcmask 334848
        %v1813 = vsel %vm1812, %v1803, %v1805
        %v1814 = vsel %vm1812, %v1805, %v1807
        %v1815 = vsel %vm1812, %v1807, %v1809
        %v1816 = vsel %vm1812, %v1809, %v1811
        %1821 = vst [vmem:[#allocation2 + $0x120] sm:$0xff] %v1813
        %1822 = vst [vmem:[#allocation2 + $0x128] sm:$0xff] %v1814
        %1823 = vst [vmem:[#allocation2 + $0x130] sm:$0xff] %v1815
        %1824 = vst [vmem:[#allocation2 + $0x138] sm:$0xff] %v1816
        %1825 = vrot.lane.b32.xlu0 %v1585, 40
        %v1826 = vpop.permute.xlu0 %1825
        %1827 = vrot.lane.b32.xlu0 %v1586, 40
        %v1828 = vpop.permute.xlu0 %1827
        %1829 = vrot.lane.b32.xlu0 %v1587, 40
        %v1830 = vpop.permute.xlu0 %1829
        %1831 = vrot.lane.b32.xlu0 %v1588, 40
        %v1832 = vpop.permute.xlu0 %1831
        %1833 = vrot.lane.b32.xlu0 %v1589, 40
        %v1834 = vpop.permute.xlu0 %1833
        %vm1835 = vcmask 326656
        %v1836 = vsel %vm1835, %v1826, %v1828
        %v1837 = vsel %vm1835, %v1828, %v1830
        %v1838 = vsel %vm1835, %v1830, %v1832
        %v1839 = vsel %vm1835, %v1832, %v1834
        %1844 = vst [vmem:[#allocation2 + $0x140] sm:$0xff] %v1836
        %1845 = vst [vmem:[#allocation2 + $0x148] sm:$0xff] %v1837
        %1846 = vst [vmem:[#allocation2 + $0x150] sm:$0xff] %v1838
        %1847 = vst [vmem:[#allocation2 + $0x158] sm:$0xff] %v1839
        %v1848 = vld [vmem:[#allocation3] sm:$0xff]
        %v1849 = vld [vmem:[#allocation3 + $0x8] sm:$0xff]
        %v1850 = vld [vmem:[#allocation3 + $0x10] sm:$0xff]
        %v1851 = vld [vmem:[#allocation3 + $0x18] sm:$0xff]
        %s1852 = scalar_lea.vmem [#allocation7], 24
        %v1853 = vld [vmem:[%s1852] sm:$0xff]
        %v1854 = vld [vmem:[#allocation2] sm:$0xff]
        %v1855 = vld [vmem:[#allocation2 + $0x8] sm:$0xff]
        %v1856 = vld [vmem:[#allocation2 + $0x10] sm:$0xff]
        %v1857 = vld [vmem:[#allocation2 + $0x18] sm:$0xff]
        %v1858 = vld [vmem:[#allocation2 + $0x20] sm:$0xff]
        %v1859 = vld [vmem:[#allocation2 + $0x28] sm:$0xff]
        %v1860 = vld [vmem:[#allocation2 + $0x30] sm:$0xff]
        %v1861 = vld [vmem:[#allocation2 + $0x38] sm:$0xff]
        %v1862 = vld [vmem:[#allocation2 + $0x40] sm:$0xff]
        %v1863 = vld [vmem:[#allocation2 + $0x48] sm:$0xff]
        %v1864 = vld [vmem:[#allocation2 + $0x50] sm:$0xff]
        %v1865 = vld [vmem:[#allocation2 + $0x58] sm:$0xff]
        %v1866 = vld [vmem:[#allocation2 + $0x60] sm:$0xff]
        %v1867 = vld [vmem:[#allocation2 + $0x68] sm:$0xff]
        %v1868 = vld [vmem:[#allocation2 + $0x70] sm:$0xff]
        %v1869 = vld [vmem:[#allocation2 + $0x78] sm:$0xff]
        %v1870 = vld [vmem:[#allocation2 + $0x80] sm:$0xff]
        %v1871 = vld [vmem:[#allocation2 + $0x88] sm:$0xff]
        %v1872 = vld [vmem:[#allocation2 + $0x90] sm:$0xff]
        %v1873 = vld [vmem:[#allocation2 + $0x98] sm:$0xff]
        %v1874 = vld [vmem:[#allocation2 + $0xa0] sm:$0xff]
        %v1875 = vld [vmem:[#allocation2 + $0xa8] sm:$0xff]
        %v1876 = vld [vmem:[#allocation2 + $0xb0] sm:$0xff]
        %v1877 = vld [vmem:[#allocation2 + $0xb8] sm:$0xff]
        %v1878 = vld [vmem:[#allocation2 + $0xc0] sm:$0xff]
        %v1879 = vld [vmem:[#allocation2 + $0xc8] sm:$0xff]
        %v1880 = vld [vmem:[#allocation2 + $0xd0] sm:$0xff]
        %v1881 = vld [vmem:[#allocation2 + $0xd8] sm:$0xff]
        %v1882 = vld [vmem:[#allocation2 + $0xe0] sm:$0xff]
        %v1883 = vld [vmem:[#allocation2 + $0xe8] sm:$0xff]
        %v1884 = vld [vmem:[#allocation2 + $0xf0] sm:$0xff]
        %v1885 = vld [vmem:[#allocation2 + $0xf8] sm:$0xff]
        %v1886 = vld [vmem:[#allocation2 + $0x100] sm:$0xff]
        %v1887 = vld [vmem:[#allocation2 + $0x108] sm:$0xff]
        %v1888 = vld [vmem:[#allocation2 + $0x110] sm:$0xff]
        %v1889 = vld [vmem:[#allocation2 + $0x118] sm:$0xff]
        %v1890 = vld [vmem:[#allocation2 + $0x120] sm:$0xff]
        %v1891 = vld [vmem:[#allocation2 + $0x128] sm:$0xff]
        %v1892 = vld [vmem:[#allocation2 + $0x130] sm:$0xff]
        %v1893 = vld [vmem:[#allocation2 + $0x138] sm:$0xff]
        %v1894 = vld [vmem:[#allocation2 + $0x140] sm:$0xff]
        %v1895 = vld [vmem:[#allocation2 + $0x148] sm:$0xff]
        %v1896 = vld [vmem:[#allocation2 + $0x150] sm:$0xff]
        %v1897 = vld [vmem:[#allocation2 + $0x158] sm:$0xff]
        %v1899 = vsel %vm499, %v1853, 0
        %1901 = vmatprep.subr.mxu0 %v1855
        %1902 = vmatpush1.msra.mxu0 %v1854
        %1903 = vmatprep.subr.mxu0 %v1859
        %1904 = vmatpush1.msra.mxu0 %v1858
        %1905 = vmatprep.subr.mxu0 %v1863
        %1906 = vmatpush1.msra.mxu0 %v1862
        %1907 = vmatprep.subr.mxu0 %v1867
        %1908 = vmatpush1.msra.mxu0 %v1866
        %1909 = vmatprep.subr.mxu0 %v1871
        %1910 = vmatpush1.msra.mxu0 %v1870
        %1911 = vmatprep.subr.mxu0 %v1875
        %1912 = vmatpush1.msra.mxu0 %v1874
        %1913 = vmatprep.subr.mxu0 %v1879
        %1914 = vmatpush1.msra.mxu0 %v1878
        %1915 = vmatprep.subr.mxu0 %v1883
        %1916 = vmatpush1.msra.mxu0 %v1882
        %1917 = vmatprep.subr.mxu0 %v1887
        %1918 = vmatpush1.msra.mxu0 %v1886
        %1919 = vmatprep.subr.mxu0 %v1891
        %1920 = vmatpush1.msra.mxu0 %v1890
        %1921 = vmatprep.subr.mxu0 %v1895
        %1922 = vmatpush1.msra.mxu0 %v1894
        %1923 = vmatprep.subr.mxu0 0.0
        %1924 = vmatpush1.msra.mxu0 0.0
        %1925 = vmatprep.subr.mxu0 0.0
        %1926 = vmatpush1.msra.mxu0 0.0
        %1927 = vmatprep.subr.mxu0 0.0
        %1928 = vmatpush1.msra.mxu0 0.0
        %1929 = vmatprep.subr.mxu0 0.0
        %1930 = vmatpush1.msra.mxu0 0.0
        %1931 = vmatprep.subr.mxu0 0.0
        %1932 = vmatpush1.msra.mxu0 0.0
        %1933 = vmatprep.subr.mxu0 0.0
        %1934 = vmatpush1.msra.mxu0 0.0
        %1935 = vmatprep.subr.mxu0 0.0
        %1936 = vmatpush1.msra.mxu0 0.0
        %1937 = vmatprep.subr.mxu0 0.0
        %1938 = vmatpush1.msra.mxu0 0.0
        %1939 = vmatprep.subr.mxu0 0.0
        %1940 = vmatpush1.msra.mxu0 0.0
        %1941 = vmatprep.subr.mxu0 0.0
        %1942 = vmatpush1.msra.mxu0 0.0
        %1943 = vmatprep.subr.mxu0 0.0
        %1944 = vmatpush1.msra.mxu0 0.0
        %1945 = vmatprep.subr.mxu0 0.0
        %1946 = vmatpush1.msra.mxu0 0.0
        %1947 = vmatprep.subr.mxu0 0.0
        %1948 = vmatpush1.msra.mxu0 0.0
        %1949 = vmatprep.subr.mxu0 0.0
        %1950 = vmatpush1.msra.mxu0 0.0
        %1951 = vmatprep.subr.mxu0 0.0
        %1952 = vmatpush1.msra.mxu0 0.0
        %1953 = vmatprep.subr.mxu0 0.0
        %1954 = vmatpush1.msra.mxu0 0.0
        %1955 = vmatprep.subr.mxu0 0.0
        %1956 = vmatpush1.msra.mxu0 0.0
        %1957 = vmatprep.subr.mxu0 0.0
        %1958 = vmatpush1.msra.mxu0 0.0
        %1959 = vmatprep.subr.mxu0 0.0
        %1960 = vmatpush1.msra.mxu0 0.0
        %1961 = vmatprep.subr.mxu0 0.0
        %1962 = vmatpush1.msra.mxu0 0.0
        %1963 = vmatprep.subr.mxu0 0.0
        %1964 = vmatpush1.msra.mxu0 0.0
        %1965 = vmatprep.mubr.f32.mxu0 0.0
        %1966 = vmatmul.mubr.f32.gmra.mrb[0].mxu0 %v1899
        %v1967 = vpop.f32.mrb[0].mxu0
        %v1968 = vadd.f32 0.0, %v1967
        %v1969 = vpop.f32.mrb[0].mxu0
        %v1970 = vadd.f32 0.0, %v1969
        %1971 = vdwg.mxu0
        %1972 = vmatprep.subr.mxu0 %v1857
        %1973 = vmatpush1.msra.mxu0 %v1856
        %1974 = vmatprep.subr.mxu0 %v1861
        %1975 = vmatpush1.msra.mxu0 %v1860
        %1976 = vmatprep.subr.mxu0 %v1865
        %1977 = vmatpush1.msra.mxu0 %v1864
        %1978 = vmatprep.subr.mxu0 %v1869
        %1979 = vmatpush1.msra.mxu0 %v1868
        %1980 = vmatprep.subr.mxu0 %v1873
        %1981 = vmatpush1.msra.mxu0 %v1872
        %1982 = vmatprep.subr.mxu0 %v1877
        %1983 = vmatpush1.msra.mxu0 %v1876
        %1984 = vmatprep.subr.mxu0 %v1881
        %1985 = vmatpush1.msra.mxu0 %v1880
        %1986 = vmatprep.subr.mxu0 %v1885
        %1987 = vmatpush1.msra.mxu0 %v1884
        %1988 = vmatprep.subr.mxu0 %v1889
        %1989 = vmatpush1.msra.mxu0 %v1888
        %1990 = vmatprep.subr.mxu0 %v1893
        %1991 = vmatpush1.msra.mxu0 %v1892
        %1992 = vmatprep.subr.mxu0 %v1897
        %1993 = vmatpush1.msra.mxu0 %v1896
        %1994 = vmatprep.subr.mxu0 0.0
        %1995 = vmatpush1.msra.mxu0 0.0
        %1996 = vmatprep.subr.mxu0 0.0
        %1997 = vmatpush1.msra.mxu0 0.0
        %1998 = vmatprep.subr.mxu0 0.0
        %1999 = vmatpush1.msra.mxu0 0.0
        %2000 = vmatprep.subr.mxu0 0.0
        %2001 = vmatpush1.msra.mxu0 0.0
        %2002 = vmatprep.subr.mxu0 0.0
        %2003 = vmatpush1.msra.mxu0 0.0
        %2004 = vmatprep.subr.mxu0 0.0
        %2005 = vmatpush1.msra.mxu0 0.0
        %2006 = vmatprep.subr.mxu0 0.0
        %2007 = vmatpush1.msra.mxu0 0.0
        %2008 = vmatprep.subr.mxu0 0.0
        %2009 = vmatpush1.msra.mxu0 0.0
        %2010 = vmatprep.subr.mxu0 0.0
        %2011 = vmatpush1.msra.mxu0 0.0
        %2012 = vmatprep.subr.mxu0 0.0
        %2013 = vmatpush1.msra.mxu0 0.0
        %2014 = vmatprep.subr.mxu0 0.0
        %2015 = vmatpush1.msra.mxu0 0.0
        %2016 = vmatprep.subr.mxu0 0.0
        %2017 = vmatpush1.msra.mxu0 0.0
        %2018 = vmatprep.subr.mxu0 0.0
        %2019 = vmatpush1.msra.mxu0 0.0
        %2020 = vmatprep.subr.mxu0 0.0
        %2021 = vmatpush1.msra.mxu0 0.0
        %2022 = vmatprep.subr.mxu0 0.0
        %2023 = vmatpush1.msra.mxu0 0.0
        %2024 = vmatprep.subr.mxu0 0.0
        %2025 = vmatpush1.msra.mxu0 0.0
        %2026 = vmatprep.subr.mxu0 0.0
        %2027 = vmatpush1.msra.mxu0 0.0
        %2028 = vmatprep.subr.mxu0 0.0
        %2029 = vmatpush1.msra.mxu0 0.0
        %2030 = vmatprep.subr.mxu0 0.0
        %2031 = vmatpush1.msra.mxu0 0.0
        %2032 = vmatprep.subr.mxu0 0.0
        %2033 = vmatpush1.msra.mxu0 0.0
        %2034 = vmatprep.subr.mxu0 0.0
        %2035 = vmatpush1.msra.mxu0 0.0
        %2036 = vmatprep.mubr.f32.mxu0 0.0
        %2037 = vmatmul.mubr.f32.gmra.mrb[0].mxu0 %v1899
        %v2038 = vpop.f32.mrb[0].mxu0
        %v2039 = vadd.f32 0.0, %v2038
        %v2040 = vpop.f32.mrb[0].mxu0
        %v2041 = vadd.f32 0.0, %v2040
        %2042 = vdwg.mxu0
        %v2043 = vadd.f32 %v1848, %v1968
        %v2044 = vadd.f32 %v1849, %v1970
        %v2045 = vadd.f32 %v1850, %v2039
        %v2046 = vadd.f32 %v1851, %v2041
        %2047 = vst [vmem:[#allocation3] sm:$0xff] %v2043
        %2048 = vst [vmem:[#allocation3 + $0x8] sm:$0xff] %v2044
        %2049 = vst [vmem:[#allocation3 + $0x10] sm:$0xff] %v2045
        %2050 = vst [vmem:[#allocation3 + $0x18] sm:$0xff] %v2046
        %v2051 = vld [vmem:[%s175] sm:$0xff]
        %v2052 = vld [vmem:[%s175 + $0x8] sm:$0xff]
        %v2053 = vld [vmem:[%s175 + $0x10] sm:$0xff]
        %v2054 = vld [vmem:[%s175 + $0x18] sm:$0xff]
        %v2055 = vld [vmem:[%s175 + $0x20] sm:$0xff]
        %2061 = vrot.lane.b32.xlu0 %v2051, 24
        %v2062 = vpop.permute.xlu0 %2061
        %2063 = vrot.lane.b32.xlu0 %v2052, 24
        %v2064 = vpop.permute.xlu0 %2063
        %2065 = vrot.lane.b32.xlu0 %v2053, 24
        %v2066 = vpop.permute.xlu0 %2065
        %2067 = vrot.lane.b32.xlu0 %v2054, 24
        %v2068 = vpop.permute.xlu0 %2067
        %2069 = vrot.lane.b32.xlu0 %v2055, 24
        %v2070 = vpop.permute.xlu0 %2069
        %vm2071 = vcmask 195584
        %v2072 = vsel %vm2071, %v2062, %v2064
        %v2073 = vsel %vm2071, %v2064, %v2066
        %v2074 = vsel %vm2071, %v2066, %v2068
        %v2075 = vsel %vm2071, %v2068, %v2070
        %2080 = vst [vmem:[#allocation2] sm:$0xff] %v2072
        %2081 = vst [vmem:[#allocation2 + $0x8] sm:$0xff] %v2073
        %2082 = vst [vmem:[#allocation2 + $0x10] sm:$0xff] %v2074
        %2083 = vst [vmem:[#allocation2 + $0x18] sm:$0xff] %v2075
        %2084 = vrot.lane.b32.xlu0 %v2051, 23
        %v2085 = vpop.permute.xlu0 %2084
        %2086 = vrot.lane.b32.xlu0 %v2052, 23
        %v2087 = vpop.permute.xlu0 %2086
        %2088 = vrot.lane.b32.xlu0 %v2053, 23
        %v2089 = vpop.permute.xlu0 %2088
        %2090 = vrot.lane.b32.xlu0 %v2054, 23
        %v2091 = vpop.permute.xlu0 %2090
        %2092 = vrot.lane.b32.xlu0 %v2055, 23
        %v2093 = vpop.permute.xlu0 %2092
        %vm2094 = vcmask 187392
        %v2095 = vsel %vm2094, %v2085, %v2087
        %v2096 = vsel %vm2094, %v2087, %v2089
        %v2097 = vsel %vm2094, %v2089, %v2091
        %v2098 = vsel %vm2094, %v2091, %v2093
        %2103 = vst [vmem:[#allocation2 + $0x20] sm:$0xff] %v2095
        %2104 = vst [vmem:[#allocation2 + $0x28] sm:$0xff] %v2096
        %2105 = vst [vmem:[#allocation2 + $0x30] sm:$0xff] %v2097
        %2106 = vst [vmem:[#allocation2 + $0x38] sm:$0xff] %v2098
        %2107 = vrot.lane.b32.xlu0 %v2051, 22
        %v2108 = vpop.permute.xlu0 %2107
        %2109 = vrot.lane.b32.xlu0 %v2052, 22
        %v2110 = vpop.permute.xlu0 %2109
        %2111 = vrot.lane.b32.xlu0 %v2053, 22
        %v2112 = vpop.permute.xlu0 %2111
        %2113 = vrot.lane.b32.xlu0 %v2054, 22
        %v2114 = vpop.permute.xlu0 %2113
        %2115 = vrot.lane.b32.xlu0 %v2055, 22
        %v2116 = vpop.permute.xlu0 %2115
        %vm2117 = vcmask 179200
        %v2118 = vsel %vm2117, %v2108, %v2110
        %v2119 = vsel %vm2117, %v2110, %v2112
        %v2120 = vsel %vm2117, %v2112, %v2114
        %v2121 = vsel %vm2117, %v2114, %v2116
        %2126 = vst [vmem:[#allocation2 + $0x40] sm:$0xff] %v2118
        %2127 = vst [vmem:[#allocation2 + $0x48] sm:$0xff] %v2119
        %2128 = vst [vmem:[#allocation2 + $0x50] sm:$0xff] %v2120
        %2129 = vst [vmem:[#allocation2 + $0x58] sm:$0xff] %v2121
        %2130 = vrot.lane.b32.xlu0 %v2051, 21
        %v2131 = vpop.permute.xlu0 %2130
        %2132 = vrot.lane.b32.xlu0 %v2052, 21
        %v2133 = vpop.permute.xlu0 %2132
        %2134 = vrot.lane.b32.xlu0 %v2053, 21
        %v2135 = vpop.permute.xlu0 %2134
        %2136 = vrot.lane.b32.xlu0 %v2054, 21
        %v2137 = vpop.permute.xlu0 %2136
        %2138 = vrot.lane.b32.xlu0 %v2055, 21
        %v2139 = vpop.permute.xlu0 %2138
        %vm2140 = vcmask 171008
        %v2141 = vsel %vm2140, %v2131, %v2133
        %v2142 = vsel %vm2140, %v2133, %v2135
        %v2143 = vsel %vm2140, %v2135, %v2137
        %v2144 = vsel %vm2140, %v2137, %v2139
        %2149 = vst [vmem:[#allocation2 + $0x60] sm:$0xff] %v2141
        %2150 = vst [vmem:[#allocation2 + $0x68] sm:$0xff] %v2142
        %2151 = vst [vmem:[#allocation2 + $0x70] sm:$0xff] %v2143
        %2152 = vst [vmem:[#allocation2 + $0x78] sm:$0xff] %v2144
        %2153 = vrot.lane.b32.xlu0 %v2051, 20
        %v2154 = vpop.permute.xlu0 %2153
        %2155 = vrot.lane.b32.xlu0 %v2052, 20
        %v2156 = vpop.permute.xlu0 %2155
        %2157 = vrot.lane.b32.xlu0 %v2053, 20
        %v2158 = vpop.permute.xlu0 %2157
        %2159 = vrot.lane.b32.xlu0 %v2054, 20
        %v2160 = vpop.permute.xlu0 %2159
        %2161 = vrot.lane.b32.xlu0 %v2055, 20
        %v2162 = vpop.permute.xlu0 %2161
        %vm2163 = vcmask 162816
        %v2164 = vsel %vm2163, %v2154, %v2156
        %v2165 = vsel %vm2163, %v2156, %v2158
        %v2166 = vsel %vm2163, %v2158, %v2160
        %v2167 = vsel %vm2163, %v2160, %v2162
        %2172 = vst [vmem:[#allocation2 + $0x80] sm:$0xff] %v2164
        %2173 = vst [vmem:[#allocation2 + $0x88] sm:$0xff] %v2165
        %2174 = vst [vmem:[#allocation2 + $0x90] sm:$0xff] %v2166
        %2175 = vst [vmem:[#allocation2 + $0x98] sm:$0xff] %v2167
        %2176 = vrot.lane.b32.xlu0 %v2051, 19
        %v2177 = vpop.permute.xlu0 %2176
        %2178 = vrot.lane.b32.xlu0 %v2052, 19
        %v2179 = vpop.permute.xlu0 %2178
        %2180 = vrot.lane.b32.xlu0 %v2053, 19
        %v2181 = vpop.permute.xlu0 %2180
        %2182 = vrot.lane.b32.xlu0 %v2054, 19
        %v2183 = vpop.permute.xlu0 %2182
        %2184 = vrot.lane.b32.xlu0 %v2055, 19
        %v2185 = vpop.permute.xlu0 %2184
        %vm2186 = vcmask 154624
        %v2187 = vsel %vm2186, %v2177, %v2179
        %v2188 = vsel %vm2186, %v2179, %v2181
        %v2189 = vsel %vm2186, %v2181, %v2183
        %v2190 = vsel %vm2186, %v2183, %v2185
        %2195 = vst [vmem:[#allocation2 + $0xa0] sm:$0xff] %v2187
        %2196 = vst [vmem:[#allocation2 + $0xa8] sm:$0xff] %v2188
        %2197 = vst [vmem:[#allocation2 + $0xb0] sm:$0xff] %v2189
        %2198 = vst [vmem:[#allocation2 + $0xb8] sm:$0xff] %v2190
        %2199 = vrot.lane.b32.xlu0 %v2051, 18
        %v2200 = vpop.permute.xlu0 %2199
        %2201 = vrot.lane.b32.xlu0 %v2052, 18
        %v2202 = vpop.permute.xlu0 %2201
        %2203 = vrot.lane.b32.xlu0 %v2053, 18
        %v2204 = vpop.permute.xlu0 %2203
        %2205 = vrot.lane.b32.xlu0 %v2054, 18
        %v2206 = vpop.permute.xlu0 %2205
        %2207 = vrot.lane.b32.xlu0 %v2055, 18
        %v2208 = vpop.permute.xlu0 %2207
        %vm2209 = vcmask 146432
        %v2210 = vsel %vm2209, %v2200, %v2202
        %v2211 = vsel %vm2209, %v2202, %v2204
        %v2212 = vsel %vm2209, %v2204, %v2206
        %v2213 = vsel %vm2209, %v2206, %v2208
        %2218 = vst [vmem:[#allocation2 + $0xc0] sm:$0xff] %v2210
        %2219 = vst [vmem:[#allocation2 + $0xc8] sm:$0xff] %v2211
        %2220 = vst [vmem:[#allocation2 + $0xd0] sm:$0xff] %v2212
        %2221 = vst [vmem:[#allocation2 + $0xd8] sm:$0xff] %v2213
        %2222 = vrot.lane.b32.xlu0 %v2051, 17
        %v2223 = vpop.permute.xlu0 %2222
        %2224 = vrot.lane.b32.xlu0 %v2052, 17
        %v2225 = vpop.permute.xlu0 %2224
        %2226 = vrot.lane.b32.xlu0 %v2053, 17
        %v2227 = vpop.permute.xlu0 %2226
        %2228 = vrot.lane.b32.xlu0 %v2054, 17
        %v2229 = vpop.permute.xlu0 %2228
        %2230 = vrot.lane.b32.xlu0 %v2055, 17
        %v2231 = vpop.permute.xlu0 %2230
        %vm2232 = vcmask 138240
        %v2233 = vsel %vm2232, %v2223, %v2225
        %v2234 = vsel %vm2232, %v2225, %v2227
        %v2235 = vsel %vm2232, %v2227, %v2229
        %v2236 = vsel %vm2232, %v2229, %v2231
        %2241 = vst [vmem:[#allocation2 + $0xe0] sm:$0xff] %v2233
        %2242 = vst [vmem:[#allocation2 + $0xe8] sm:$0xff] %v2234
        %2243 = vst [vmem:[#allocation2 + $0xf0] sm:$0xff] %v2235
        %2244 = vst [vmem:[#allocation2 + $0xf8] sm:$0xff] %v2236
        %2245 = vrot.lane.b32.xlu0 %v2051, 16
        %v2246 = vpop.permute.xlu0 %2245
        %2247 = vrot.lane.b32.xlu0 %v2052, 16
        %v2248 = vpop.permute.xlu0 %2247
        %2249 = vrot.lane.b32.xlu0 %v2053, 16
        %v2250 = vpop.permute.xlu0 %2249
        %2251 = vrot.lane.b32.xlu0 %v2054, 16
        %v2252 = vpop.permute.xlu0 %2251
        %2253 = vrot.lane.b32.xlu0 %v2055, 16
        %v2254 = vpop.permute.xlu0 %2253
        %vm2255 = vcmask 130048
        %v2256 = vsel %vm2255, %v2246, %v2248
        %v2257 = vsel %vm2255, %v2248, %v2250
        %v2258 = vsel %vm2255, %v2250, %v2252
        %v2259 = vsel %vm2255, %v2252, %v2254
        %2264 = vst [vmem:[#allocation2 + $0x100] sm:$0xff] %v2256
        %2265 = vst [vmem:[#allocation2 + $0x108] sm:$0xff] %v2257
        %2266 = vst [vmem:[#allocation2 + $0x110] sm:$0xff] %v2258
        %2267 = vst [vmem:[#allocation2 + $0x118] sm:$0xff] %v2259
        %2268 = vrot.lane.b32.xlu0 %v2051, 15
        %v2269 = vpop.permute.xlu0 %2268
        %2270 = vrot.lane.b32.xlu0 %v2052, 15
        %v2271 = vpop.permute.xlu0 %2270
        %2272 = vrot.lane.b32.xlu0 %v2053, 15
        %v2273 = vpop.permute.xlu0 %2272
        %2274 = vrot.lane.b32.xlu0 %v2054, 15
        %v2275 = vpop.permute.xlu0 %2274
        %2276 = vrot.lane.b32.xlu0 %v2055, 15
        %v2277 = vpop.permute.xlu0 %2276
        %vm2278 = vcmask 121856
        %v2279 = vsel %vm2278, %v2269, %v2271
        %v2280 = vsel %vm2278, %v2271, %v2273
        %v2281 = vsel %vm2278, %v2273, %v2275
        %v2282 = vsel %vm2278, %v2275, %v2277
        %2287 = vst [vmem:[#allocation2 + $0x120] sm:$0xff] %v2279
        %2288 = vst [vmem:[#allocation2 + $0x128] sm:$0xff] %v2280
        %2289 = vst [vmem:[#allocation2 + $0x130] sm:$0xff] %v2281
        %2290 = vst [vmem:[#allocation2 + $0x138] sm:$0xff] %v2282
        %2291 = vrot.lane.b32.xlu0 %v2051, 14
        %v2292 = vpop.permute.xlu0 %2291
        %2293 = vrot.lane.b32.xlu0 %v2052, 14
        %v2294 = vpop.permute.xlu0 %2293
        %2295 = vrot.lane.b32.xlu0 %v2053, 14
        %v2296 = vpop.permute.xlu0 %2295
        %2297 = vrot.lane.b32.xlu0 %v2054, 14
        %v2298 = vpop.permute.xlu0 %2297
        %2299 = vrot.lane.b32.xlu0 %v2055, 14
        %v2300 = vpop.permute.xlu0 %2299
        %vm2301 = vcmask 113664
        %v2302 = vsel %vm2301, %v2292, %v2294
        %v2303 = vsel %vm2301, %v2294, %v2296
        %v2304 = vsel %vm2301, %v2296, %v2298
        %v2305 = vsel %vm2301, %v2298, %v2300
        %2310 = vst [vmem:[#allocation2 + $0x140] sm:$0xff] %v2302
        %2311 = vst [vmem:[#allocation2 + $0x148] sm:$0xff] %v2303
        %2312 = vst [vmem:[#allocation2 + $0x150] sm:$0xff] %v2304
        %2313 = vst [vmem:[#allocation2 + $0x158] sm:$0xff] %v2305
        %v2314 = vld [vmem:[#allocation3] sm:$0xff]
        %v2315 = vld [vmem:[#allocation3 + $0x8] sm:$0xff]
        %v2316 = vld [vmem:[#allocation3 + $0x10] sm:$0xff]
        %v2317 = vld [vmem:[#allocation3 + $0x18] sm:$0xff]
        %s2318 = scalar_lea.vmem [#allocation7], 32
        %v2319 = vld [vmem:[%s2318] sm:$0xff]
        %v2320 = vld [vmem:[#allocation2] sm:$0xff]
        %v2321 = vld [vmem:[#allocation2 + $0x8] sm:$0xff]
        %v2322 = vld [vmem:[#allocation2 + $0x10] sm:$0xff]
        %v2323 = vld [vmem:[#allocation2 + $0x18] sm:$0xff]
        %v2324 = vld [vmem:[#allocation2 + $0x20] sm:$0xff]
        %v2325 = vld [vmem:[#allocation2 + $0x28] sm:$0xff]
        %v2326 = vld [vmem:[#allocation2 + $0x30] sm:$0xff]
        %v2327 = vld [vmem:[#allocation2 + $0x38] sm:$0xff]
        %v2328 = vld [vmem:[#allocation2 + $0x40] sm:$0xff]
        %v2329 = vld [vmem:[#allocation2 + $0x48] sm:$0xff]
        %v2330 = vld [vmem:[#allocation2 + $0x50] sm:$0xff]
        %v2331 = vld [vmem:[#allocation2 + $0x58] sm:$0xff]
        %v2332 = vld [vmem:[#allocation2 + $0x60] sm:$0xff]
        %v2333 = vld [vmem:[#allocation2 + $0x68] sm:$0xff]
        %v2334 = vld [vmem:[#allocation2 + $0x70] sm:$0xff]
        %v2335 = vld [vmem:[#allocation2 + $0x78] sm:$0xff]
        %v2336 = vld [vmem:[#allocation2 + $0x80] sm:$0xff]
        %v2337 = vld [vmem:[#allocation2 + $0x88] sm:$0xff]
        %v2338 = vld [vmem:[#allocation2 + $0x90] sm:$0xff]
        %v2339 = vld [vmem:[#allocation2 + $0x98] sm:$0xff]
        %v2340 = vld [vmem:[#allocation2 + $0xa0] sm:$0xff]
        %v2341 = vld [vmem:[#allocation2 + $0xa8] sm:$0xff]
        %v2342 = vld [vmem:[#allocation2 + $0xb0] sm:$0xff]
        %v2343 = vld [vmem:[#allocation2 + $0xb8] sm:$0xff]
        %v2344 = vld [vmem:[#allocation2 + $0xc0] sm:$0xff]
        %v2345 = vld [vmem:[#allocation2 + $0xc8] sm:$0xff]
        %v2346 = vld [vmem:[#allocation2 + $0xd0] sm:$0xff]
        %v2347 = vld [vmem:[#allocation2 + $0xd8] sm:$0xff]
        %v2348 = vld [vmem:[#allocation2 + $0xe0] sm:$0xff]
        %v2349 = vld [vmem:[#allocation2 + $0xe8] sm:$0xff]
        %v2350 = vld [vmem:[#allocation2 + $0xf0] sm:$0xff]
        %v2351 = vld [vmem:[#allocation2 + $0xf8] sm:$0xff]
        %v2352 = vld [vmem:[#allocation2 + $0x100] sm:$0xff]
        %v2353 = vld [vmem:[#allocation2 + $0x108] sm:$0xff]
        %v2354 = vld [vmem:[#allocation2 + $0x110] sm:$0xff]
        %v2355 = vld [vmem:[#allocation2 + $0x118] sm:$0xff]
        %v2356 = vld [vmem:[#allocation2 + $0x120] sm:$0xff]
        %v2357 = vld [vmem:[#allocation2 + $0x128] sm:$0xff]
        %v2358 = vld [vmem:[#allocation2 + $0x130] sm:$0xff]
        %v2359 = vld [vmem:[#allocation2 + $0x138] sm:$0xff]
        %v2360 = vld [vmem:[#allocation2 + $0x140] sm:$0xff]
        %v2361 = vld [vmem:[#allocation2 + $0x148] sm:$0xff]
        %v2362 = vld [vmem:[#allocation2 + $0x150] sm:$0xff]
        %v2363 = vld [vmem:[#allocation2 + $0x158] sm:$0xff]
        %v2365 = vsel %vm499, %v2319, 0
        %2367 = vmatprep.subr.mxu0 %v2321
        %2368 = vmatpush1.msra.mxu0 %v2320
        %2369 = vmatprep.subr.mxu0 %v2325
        %2370 = vmatpush1.msra.mxu0 %v2324
        %2371 = vmatprep.subr.mxu0 %v2329
        %2372 = vmatpush1.msra.mxu0 %v2328
        %2373 = vmatprep.subr.mxu0 %v2333
        %2374 = vmatpush1.msra.mxu0 %v2332
        %2375 = vmatprep.subr.mxu0 %v2337
        %2376 = vmatpush1.msra.mxu0 %v2336
        %2377 = vmatprep.subr.mxu0 %v2341
        %2378 = vmatpush1.msra.mxu0 %v2340
        %2379 = vmatprep.subr.mxu0 %v2345
        %2380 = vmatpush1.msra.mxu0 %v2344
        %2381 = vmatprep.subr.mxu0 %v2349
        %2382 = vmatpush1.msra.mxu0 %v2348
        %2383 = vmatprep.subr.mxu0 %v2353
        %2384 = vmatpush1.msra.mxu0 %v2352
        %2385 = vmatprep.subr.mxu0 %v2357
        %2386 = vmatpush1.msra.mxu0 %v2356
        %2387 = vmatprep.subr.mxu0 %v2361
        %2388 = vmatpush1.msra.mxu0 %v2360
        %2389 = vmatprep.subr.mxu0 0.0
        %2390 = vmatpush1.msra.mxu0 0.0
        %2391 = vmatprep.subr.mxu0 0.0
        %2392 = vmatpush1.msra.mxu0 0.0
        %2393 = vmatprep.subr.mxu0 0.0
        %2394 = vmatpush1.msra.mxu0 0.0
        %2395 = vmatprep.subr.mxu0 0.0
        %2396 = vmatpush1.msra.mxu0 0.0
        %2397 = vmatprep.subr.mxu0 0.0
        %2398 = vmatpush1.msra.mxu0 0.0
        %2399 = vmatprep.subr.mxu0 0.0
        %2400 = vmatpush1.msra.mxu0 0.0
        %2401 = vmatprep.subr.mxu0 0.0
        %2402 = vmatpush1.msra.mxu0 0.0
        %2403 = vmatprep.subr.mxu0 0.0
        %2404 = vmatpush1.msra.mxu0 0.0
        %2405 = vmatprep.subr.mxu0 0.0
        %2406 = vmatpush1.msra.mxu0 0.0
        %2407 = vmatprep.subr.mxu0 0.0
        %2408 = vmatpush1.msra.mxu0 0.0
        %2409 = vmatprep.subr.mxu0 0.0
        %2410 = vmatpush1.msra.mxu0 0.0
        %2411 = vmatprep.subr.mxu0 0.0
        %2412 = vmatpush1.msra.mxu0 0.0
        %2413 = vmatprep.subr.mxu0 0.0
        %2414 = vmatpush1.msra.mxu0 0.0
        %2415 = vmatprep.subr.mxu0 0.0
        %2416 = vmatpush1.msra.mxu0 0.0
        %2417 = vmatprep.subr.mxu0 0.0
        %2418 = vmatpush1.msra.mxu0 0.0
        %2419 = vmatprep.subr.mxu0 0.0
        %2420 = vmatpush1.msra.mxu0 0.0
        %2421 = vmatprep.subr.mxu0 0.0
        %2422 = vmatpush1.msra.mxu0 0.0
        %2423 = vmatprep.subr.mxu0 0.0
        %2424 = vmatpush1.msra.mxu0 0.0
        %2425 = vmatprep.subr.mxu0 0.0
        %2426 = vmatpush1.msra.mxu0 0.0
        %2427 = vmatprep.subr.mxu0 0.0
        %2428 = vmatpush1.msra.mxu0 0.0
        %2429 = vmatprep.subr.mxu0 0.0
        %2430 = vmatpush1.msra.mxu0 0.0
        %2431 = vmatprep.mubr.f32.mxu0 0.0
        %2432 = vmatmul.mubr.f32.gmra.mrb[0].mxu0 %v2365
        %v2433 = vpop.f32.mrb[0].mxu0
        %v2434 = vadd.f32 0.0, %v2433
        %v2435 = vpop.f32.mrb[0].mxu0
        %v2436 = vadd.f32 0.0, %v2435
        %2437 = vdwg.mxu0
        %2438 = vmatprep.subr.mxu0 %v2323
        %2439 = vmatpush1.msra.mxu0 %v2322
        %2440 = vmatprep.subr.mxu0 %v2327
        %2441 = vmatpush1.msra.mxu0 %v2326
        %2442 = vmatprep.subr.mxu0 %v2331
        %2443 = vmatpush1.msra.mxu0 %v2330
        %2444 = vmatprep.subr.mxu0 %v2335
        %2445 = vmatpush1.msra.mxu0 %v2334
        %2446 = vmatprep.subr.mxu0 %v2339
        %2447 = vmatpush1.msra.mxu0 %v2338
        %2448 = vmatprep.subr.mxu0 %v2343
        %2449 = vmatpush1.msra.mxu0 %v2342
        %2450 = vmatprep.subr.mxu0 %v2347
        %2451 = vmatpush1.msra.mxu0 %v2346
        %2452 = vmatprep.subr.mxu0 %v2351
        %2453 = vmatpush1.msra.mxu0 %v2350
        %2454 = vmatprep.subr.mxu0 %v2355
        %2455 = vmatpush1.msra.mxu0 %v2354
        %2456 = vmatprep.subr.mxu0 %v2359
        %2457 = vmatpush1.msra.mxu0 %v2358
        %2458 = vmatprep.subr.mxu0 %v2363
        %2459 = vmatpush1.msra.mxu0 %v2362
        %2460 = vmatprep.subr.mxu0 0.0
        %2461 = vmatpush1.msra.mxu0 0.0
        %2462 = vmatprep.subr.mxu0 0.0
        %2463 = vmatpush1.msra.mxu0 0.0
        %2464 = vmatprep.subr.mxu0 0.0
        %2465 = vmatpush1.msra.mxu0 0.0
        %2466 = vmatprep.subr.mxu0 0.0
        %2467 = vmatpush1.msra.mxu0 0.0
        %2468 = vmatprep.subr.mxu0 0.0
        %2469 = vmatpush1.msra.mxu0 0.0
        %2470 = vmatprep.subr.mxu0 0.0
        %2471 = vmatpush1.msra.mxu0 0.0
        %2472 = vmatprep.subr.mxu0 0.0
        %2473 = vmatpush1.msra.mxu0 0.0
        %2474 = vmatprep.subr.mxu0 0.0
        %2475 = vmatpush1.msra.mxu0 0.0
        %2476 = vmatprep.subr.mxu0 0.0
        %2477 = vmatpush1.msra.mxu0 0.0
        %2478 = vmatprep.subr.mxu0 0.0
        %2479 = vmatpush1.msra.mxu0 0.0
        %2480 = vmatprep.subr.mxu0 0.0
        %2481 = vmatpush1.msra.mxu0 0.0
        %2482 = vmatprep.subr.mxu0 0.0
        %2483 = vmatpush1.msra.mxu0 0.0
        %2484 = vmatprep.subr.mxu0 0.0
        %2485 = vmatpush1.msra.mxu0 0.0
        %2486 = vmatprep.subr.mxu0 0.0
        %2487 = vmatpush1.msra.mxu0 0.0
        %2488 = vmatprep.subr.mxu0 0.0
        %2489 = vmatpush1.msra.mxu0 0.0
        %2490 = vmatprep.subr.mxu0 0.0
        %2491 = vmatpush1.msra.mxu0 0.0
        %2492 = vmatprep.subr.mxu0 0.0
        %2493 = vmatpush1.msra.mxu0 0.0
        %2494 = vmatprep.subr.mxu0 0.0
        %2495 = vmatpush1.msra.mxu0 0.0
        %2496 = vmatprep.subr.mxu0 0.0
        %2497 = vmatpush1.msra.mxu0 0.0
        %2498 = vmatprep.subr.mxu0 0.0
        %2499 = vmatpush1.msra.mxu0 0.0
        %2500 = vmatprep.subr.mxu0 0.0
        %2501 = vmatpush1.msra.mxu0 0.0
        %2502 = vmatprep.mubr.f32.mxu0 0.0
        %2503 = vmatmul.mubr.f32.gmra.mrb[0].mxu0 %v2365
        %v2504 = vpop.f32.mrb[0].mxu0
        %v2505 = vadd.f32 0.0, %v2504
        %v2506 = vpop.f32.mrb[0].mxu0
        %v2507 = vadd.f32 0.0, %v2506
        %2508 = vdwg.mxu0
        %v2509 = vadd.f32 %v2314, %v2434
        %v2510 = vadd.f32 %v2315, %v2436
        %v2511 = vadd.f32 %v2316, %v2505
        %v2512 = vadd.f32 %v2317, %v2507
        %2513 = vst [vmem:[#allocation3] sm:$0xff] %v2509
        %2514 = vst [vmem:[#allocation3 + $0x8] sm:$0xff] %v2510
        %2515 = vst [vmem:[#allocation3 + $0x10] sm:$0xff] %v2511
        %2516 = vst [vmem:[#allocation3 + $0x18] sm:$0xff] %v2512
        %v2517 = vld [vmem:[%s175 + $0x8] sm:$0xff]
        %v2518 = vld [vmem:[%s175 + $0x10] sm:$0xff]
        %v2519 = vld [vmem:[%s175 + $0x18] sm:$0xff]
        %v2520 = vld [vmem:[%s175 + $0x20] sm:$0xff]
        %v2521 = vld [vmem:[%s175 + $0x28] sm:$0xff]
        %2527 = vrot.lane.b32.xlu0 %v2517, 126
        %v2528 = vpop.permute.xlu0 %2527
        %2529 = vrot.lane.b32.xlu0 %v2518, 126
        %v2530 = vpop.permute.xlu0 %2529
        %2531 = vrot.lane.b32.xlu0 %v2519, 126
        %v2532 = vpop.permute.xlu0 %2531
        %2533 = vrot.lane.b32.xlu0 %v2520, 126
        %v2534 = vpop.permute.xlu0 %2533
        %2535 = vrot.lane.b32.xlu0 %v2521, 126
        %v2536 = vpop.permute.xlu0 %2535
        %v2537 = vsel %vm253, %v2528, %v2530
        %v2538 = vsel %vm253, %v2530, %v2532
        %v2539 = vsel %vm253, %v2532, %v2534
        %v2540 = vsel %vm253, %v2534, %v2536
        %2545 = vst [vmem:[#allocation2] sm:$0xff] %v2537
        %2546 = vst [vmem:[#allocation2 + $0x8] sm:$0xff] %v2538
        %2547 = vst [vmem:[#allocation2 + $0x10] sm:$0xff] %v2539
        %2548 = vst [vmem:[#allocation2 + $0x18] sm:$0xff] %v2540
        %2549 = vrot.lane.b32.xlu0 %v2517, 125
        %v2550 = vpop.permute.xlu0 %2549
        %2551 = vrot.lane.b32.xlu0 %v2518, 125
        %v2552 = vpop.permute.xlu0 %2551
        %2553 = vrot.lane.b32.xlu0 %v2519, 125
        %v2554 = vpop.permute.xlu0 %2553
        %2555 = vrot.lane.b32.xlu0 %v2520, 125
        %v2556 = vpop.permute.xlu0 %2555
        %2557 = vrot.lane.b32.xlu0 %v2521, 125
        %v2558 = vpop.permute.xlu0 %2557
        %v2559 = vsel %vm276, %v2550, %v2552
        %v2560 = vsel %vm276, %v2552, %v2554
        %v2561 = vsel %vm276, %v2554, %v2556
        %v2562 = vsel %vm276, %v2556, %v2558
        %2567 = vst [vmem:[#allocation2 + $0x20] sm:$0xff] %v2559
        %2568 = vst [vmem:[#allocation2 + $0x28] sm:$0xff] %v2560
        %2569 = vst [vmem:[#allocation2 + $0x30] sm:$0xff] %v2561
        %2570 = vst [vmem:[#allocation2 + $0x38] sm:$0xff] %v2562
        %2571 = vrot.lane.b32.xlu0 %v2517, 124
        %v2572 = vpop.permute.xlu0 %2571
        %2573 = vrot.lane.b32.xlu0 %v2518, 124
        %v2574 = vpop.permute.xlu0 %2573
        %2575 = vrot.lane.b32.xlu0 %v2519, 124
        %v2576 = vpop.permute.xlu0 %2575
        %2577 = vrot.lane.b32.xlu0 %v2520, 124
        %v2578 = vpop.permute.xlu0 %2577
        %2579 = vrot.lane.b32.xlu0 %v2521, 124
        %v2580 = vpop.permute.xlu0 %2579
        %v2581 = vsel %vm299, %v2572, %v2574
        %v2582 = vsel %vm299, %v2574, %v2576
        %v2583 = vsel %vm299, %v2576, %v2578
        %v2584 = vsel %vm299, %v2578, %v2580
        %2589 = vst [vmem:[#allocation2 + $0x40] sm:$0xff] %v2581
        %2590 = vst [vmem:[#allocation2 + $0x48] sm:$0xff] %v2582
        %2591 = vst [vmem:[#allocation2 + $0x50] sm:$0xff] %v2583
        %2592 = vst [vmem:[#allocation2 + $0x58] sm:$0xff] %v2584
        %2593 = vrot.lane.b32.xlu0 %v2517, 123
        %v2594 = vpop.permute.xlu0 %2593
        %2595 = vrot.lane.b32.xlu0 %v2518, 123
        %v2596 = vpop.permute.xlu0 %2595
        %2597 = vrot.lane.b32.xlu0 %v2519, 123
        %v2598 = vpop.permute.xlu0 %2597
        %2599 = vrot.lane.b32.xlu0 %v2520, 123
        %v2600 = vpop.permute.xlu0 %2599
        %2601 = vrot.lane.b32.xlu0 %v2521, 123
        %v2602 = vpop.permute.xlu0 %2601
        %v2603 = vsel %vm322, %v2594, %v2596
        %v2604 = vsel %vm322, %v2596, %v2598
        %v2605 = vsel %vm322, %v2598, %v2600
        %v2606 = vsel %vm322, %v2600, %v2602
        %2611 = vst [vmem:[#allocation2 + $0x60] sm:$0xff] %v2603
        %2612 = vst [vmem:[#allocation2 + $0x68] sm:$0xff] %v2604
        %2613 = vst [vmem:[#allocation2 + $0x70] sm:$0xff] %v2605
        %2614 = vst [vmem:[#allocation2 + $0x78] sm:$0xff] %v2606
        %2615 = vrot.lane.b32.xlu0 %v2517, 122
        %v2616 = vpop.permute.xlu0 %2615
        %2617 = vrot.lane.b32.xlu0 %v2518, 122
        %v2618 = vpop.permute.xlu0 %2617
        %2619 = vrot.lane.b32.xlu0 %v2519, 122
        %v2620 = vpop.permute.xlu0 %2619
        %2621 = vrot.lane.b32.xlu0 %v2520, 122
        %v2622 = vpop.permute.xlu0 %2621
        %2623 = vrot.lane.b32.xlu0 %v2521, 122
        %v2624 = vpop.permute.xlu0 %2623
        %v2625 = vsel %vm345, %v2616, %v2618
        %v2626 = vsel %vm345, %v2618, %v2620
        %v2627 = vsel %vm345, %v2620, %v2622
        %v2628 = vsel %vm345, %v2622, %v2624
        %2633 = vst [vmem:[#allocation2 + $0x80] sm:$0xff] %v2625
        %2634 = vst [vmem:[#allocation2 + $0x88] sm:$0xff] %v2626
        %2635 = vst [vmem:[#allocation2 + $0x90] sm:$0xff] %v2627
        %2636 = vst [vmem:[#allocation2 + $0x98] sm:$0xff] %v2628
        %2637 = vrot.lane.b32.xlu0 %v2517, 121
        %v2638 = vpop.permute.xlu0 %2637
        %2639 = vrot.lane.b32.xlu0 %v2518, 121
        %v2640 = vpop.permute.xlu0 %2639
        %2641 = vrot.lane.b32.xlu0 %v2519, 121
        %v2642 = vpop.permute.xlu0 %2641
        %2643 = vrot.lane.b32.xlu0 %v2520, 121
        %v2644 = vpop.permute.xlu0 %2643
        %2645 = vrot.lane.b32.xlu0 %v2521, 121
        %v2646 = vpop.permute.xlu0 %2645
        %v2647 = vsel %vm368, %v2638, %v2640
        %v2648 = vsel %vm368, %v2640, %v2642
        %v2649 = vsel %vm368, %v2642, %v2644
        %v2650 = vsel %vm368, %v2644, %v2646
        %2655 = vst [vmem:[#allocation2 + $0xa0] sm:$0xff] %v2647
        %2656 = vst [vmem:[#allocation2 + $0xa8] sm:$0xff] %v2648
        %2657 = vst [vmem:[#allocation2 + $0xb0] sm:$0xff] %v2649
        %2658 = vst [vmem:[#allocation2 + $0xb8] sm:$0xff] %v2650
        %2659 = vrot.lane.b32.xlu0 %v2517, 120
        %v2660 = vpop.permute.xlu0 %2659
        %2661 = vrot.lane.b32.xlu0 %v2518, 120
        %v2662 = vpop.permute.xlu0 %2661
        %2663 = vrot.lane.b32.xlu0 %v2519, 120
        %v2664 = vpop.permute.xlu0 %2663
        %2665 = vrot.lane.b32.xlu0 %v2520, 120
        %v2666 = vpop.permute.xlu0 %2665
        %2667 = vrot.lane.b32.xlu0 %v2521, 120
        %v2668 = vpop.permute.xlu0 %2667
        %v2669 = vsel %vm391, %v2660, %v2662
        %v2670 = vsel %vm391, %v2662, %v2664
        %v2671 = vsel %vm391, %v2664, %v2666
        %v2672 = vsel %vm391, %v2666, %v2668
        %2677 = vst [vmem:[#allocation2 + $0xc0] sm:$0xff] %v2669
        %2678 = vst [vmem:[#allocation2 + $0xc8] sm:$0xff] %v2670
        %2679 = vst [vmem:[#allocation2 + $0xd0] sm:$0xff] %v2671
        %2680 = vst [vmem:[#allocation2 + $0xd8] sm:$0xff] %v2672
        %2681 = vrot.lane.b32.xlu0 %v2517, 119
        %v2682 = vpop.permute.xlu0 %2681
        %2683 = vrot.lane.b32.xlu0 %v2518, 119
        %v2684 = vpop.permute.xlu0 %2683
        %2685 = vrot.lane.b32.xlu0 %v2519, 119
        %v2686 = vpop.permute.xlu0 %2685
        %2687 = vrot.lane.b32.xlu0 %v2520, 119
        %v2688 = vpop.permute.xlu0 %2687
        %2689 = vrot.lane.b32.xlu0 %v2521, 119
        %v2690 = vpop.permute.xlu0 %2689
        %v2691 = vsel %vm414, %v2682, %v2684
        %v2692 = vsel %vm414, %v2684, %v2686
        %v2693 = vsel %vm414, %v2686, %v2688
        %v2694 = vsel %vm414, %v2688, %v2690
        %2699 = vst [vmem:[#allocation2 + $0xe0] sm:$0xff] %v2691
        %2700 = vst [vmem:[#allocation2 + $0xe8] sm:$0xff] %v2692
        %2701 = vst [vmem:[#allocation2 + $0xf0] sm:$0xff] %v2693
        %2702 = vst [vmem:[#allocation2 + $0xf8] sm:$0xff] %v2694
        %2703 = vrot.lane.b32.xlu0 %v2517, 118
        %v2704 = vpop.permute.xlu0 %2703
        %2705 = vrot.lane.b32.xlu0 %v2518, 118
        %v2706 = vpop.permute.xlu0 %2705
        %2707 = vrot.lane.b32.xlu0 %v2519, 118
        %v2708 = vpop.permute.xlu0 %2707
        %2709 = vrot.lane.b32.xlu0 %v2520, 118
        %v2710 = vpop.permute.xlu0 %2709
        %2711 = vrot.lane.b32.xlu0 %v2521, 118
        %v2712 = vpop.permute.xlu0 %2711
        %v2713 = vsel %vm437, %v2704, %v2706
        %v2714 = vsel %vm437, %v2706, %v2708
        %v2715 = vsel %vm437, %v2708, %v2710
        %v2716 = vsel %vm437, %v2710, %v2712
        %2721 = vst [vmem:[#allocation2 + $0x100] sm:$0xff] %v2713
        %2722 = vst [vmem:[#allocation2 + $0x108] sm:$0xff] %v2714
        %2723 = vst [vmem:[#allocation2 + $0x110] sm:$0xff] %v2715
        %2724 = vst [vmem:[#allocation2 + $0x118] sm:$0xff] %v2716
        %2725 = vrot.lane.b32.xlu0 %v2517, 117
        %v2726 = vpop.permute.xlu0 %2725
        %2727 = vrot.lane.b32.xlu0 %v2518, 117
        %v2728 = vpop.permute.xlu0 %2727
        %2729 = vrot.lane.b32.xlu0 %v2519, 117
        %v2730 = vpop.permute.xlu0 %2729
        %2731 = vrot.lane.b32.xlu0 %v2520, 117
        %v2732 = vpop.permute.xlu0 %2731
        %2733 = vrot.lane.b32.xlu0 %v2521, 117
        %v2734 = vpop.permute.xlu0 %2733
        %vm2735 = vcmask 957440
        %v2736 = vsel %vm2735, %v2726, %v2728
        %v2737 = vsel %vm2735, %v2728, %v2730
        %v2738 = vsel %vm2735, %v2730, %v2732
        %v2739 = vsel %vm2735, %v2732, %v2734
        %2744 = vst [vmem:[#allocation2 + $0x120] sm:$0xff] %v2736
        %2745 = vst [vmem:[#allocation2 + $0x128] sm:$0xff] %v2737
        %2746 = vst [vmem:[#allocation2 + $0x130] sm:$0xff] %v2738
        %2747 = vst [vmem:[#allocation2 + $0x138] sm:$0xff] %v2739
        %2748 = vrot.lane.b32.xlu0 %v2517, 116
        %v2749 = vpop.permute.xlu0 %2748
        %2750 = vrot.lane.b32.xlu0 %v2518, 116
        %v2751 = vpop.permute.xlu0 %2750
        %2752 = vrot.lane.b32.xlu0 %v2519, 116
        %v2753 = vpop.permute.xlu0 %2752
        %2754 = vrot.lane.b32.xlu0 %v2520, 116
        %v2755 = vpop.permute.xlu0 %2754
        %2756 = vrot.lane.b32.xlu0 %v2521, 116
        %v2757 = vpop.permute.xlu0 %2756
        %vm2758 = vcmask 949248
        %v2759 = vsel %vm2758, %v2749, %v2751
        %v2760 = vsel %vm2758, %v2751, %v2753
        %v2761 = vsel %vm2758, %v2753, %v2755
        %v2762 = vsel %vm2758, %v2755, %v2757
        %2767 = vst [vmem:[#allocation2 + $0x140] sm:$0xff] %v2759
        %2768 = vst [vmem:[#allocation2 + $0x148] sm:$0xff] %v2760
        %2769 = vst [vmem:[#allocation2 + $0x150] sm:$0xff] %v2761
        %2770 = vst [vmem:[#allocation2 + $0x158] sm:$0xff] %v2762
        %v2771 = vld [vmem:[#allocation3] sm:$0xff]
        %v2772 = vld [vmem:[#allocation3 + $0x8] sm:$0xff]
        %v2773 = vld [vmem:[#allocation3 + $0x10] sm:$0xff]
        %v2774 = vld [vmem:[#allocation3 + $0x18] sm:$0xff]
        %s2775 = scalar_lea.vmem [#allocation7], 40
        %v2776 = vld [vmem:[%s2775] sm:$0xff]
        %v2777 = vld [vmem:[#allocation2] sm:$0xff]
        %v2778 = vld [vmem:[#allocation2 + $0x8] sm:$0xff]
        %v2779 = vld [vmem:[#allocation2 + $0x10] sm:$0xff]
        %v2780 = vld [vmem:[#allocation2 + $0x18] sm:$0xff]
        %v2781 = vld [vmem:[#allocation2 + $0x20] sm:$0xff]
        %v2782 = vld [vmem:[#allocation2 + $0x28] sm:$0xff]
        %v2783 = vld [vmem:[#allocation2 + $0x30] sm:$0xff]
        %v2784 = vld [vmem:[#allocation2 + $0x38] sm:$0xff]
        %v2785 = vld [vmem:[#allocation2 + $0x40] sm:$0xff]
        %v2786 = vld [vmem:[#allocation2 + $0x48] sm:$0xff]
        %v2787 = vld [vmem:[#allocation2 + $0x50] sm:$0xff]
        %v2788 = vld [vmem:[#allocation2 + $0x58] sm:$0xff]
        %v2789 = vld [vmem:[#allocation2 + $0x60] sm:$0xff]
        %v2790 = vld [vmem:[#allocation2 + $0x68] sm:$0xff]
        %v2791 = vld [vmem:[#allocation2 + $0x70] sm:$0xff]
        %v2792 = vld [vmem:[#allocation2 + $0x78] sm:$0xff]
        %v2793 = vld [vmem:[#allocation2 + $0x80] sm:$0xff]
        %v2794 = vld [vmem:[#allocation2 + $0x88] sm:$0xff]
        %v2795 = vld [vmem:[#allocation2 + $0x90] sm:$0xff]
        %v2796 = vld [vmem:[#allocation2 + $0x98] sm:$0xff]
        %v2797 = vld [vmem:[#allocation2 + $0xa0] sm:$0xff]
        %v2798 = vld [vmem:[#allocation2 + $0xa8] sm:$0xff]
        %v2799 = vld [vmem:[#allocation2 + $0xb0] sm:$0xff]
        %v2800 = vld [vmem:[#allocation2 + $0xb8] sm:$0xff]
        %v2801 = vld [vmem:[#allocation2 + $0xc0] sm:$0xff]
        %v2802 = vld [vmem:[#allocation2 + $0xc8] sm:$0xff]
        %v2803 = vld [vmem:[#allocation2 + $0xd0] sm:$0xff]
        %v2804 = vld [vmem:[#allocation2 + $0xd8] sm:$0xff]
        %v2805 = vld [vmem:[#allocation2 + $0xe0] sm:$0xff]
        %v2806 = vld [vmem:[#allocation2 + $0xe8] sm:$0xff]
        %v2807 = vld [vmem:[#allocation2 + $0xf0] sm:$0xff]
        %v2808 = vld [vmem:[#allocation2 + $0xf8] sm:$0xff]
        %v2809 = vld [vmem:[#allocation2 + $0x100] sm:$0xff]
        %v2810 = vld [vmem:[#allocation2 + $0x108] sm:$0xff]
        %v2811 = vld [vmem:[#allocation2 + $0x110] sm:$0xff]
        %v2812 = vld [vmem:[#allocation2 + $0x118] sm:$0xff]
        %v2813 = vld [vmem:[#allocation2 + $0x120] sm:$0xff]
        %v2814 = vld [vmem:[#allocation2 + $0x128] sm:$0xff]
        %v2815 = vld [vmem:[#allocation2 + $0x130] sm:$0xff]
        %v2816 = vld [vmem:[#allocation2 + $0x138] sm:$0xff]
        %v2817 = vld [vmem:[#allocation2 + $0x140] sm:$0xff]
        %v2818 = vld [vmem:[#allocation2 + $0x148] sm:$0xff]
        %v2819 = vld [vmem:[#allocation2 + $0x150] sm:$0xff]
        %v2820 = vld [vmem:[#allocation2 + $0x158] sm:$0xff]
        %v2822 = vsel %vm499, %v2776, 0
        %2824 = vmatprep.subr.mxu0 %v2778
        %2825 = vmatpush1.msra.mxu0 %v2777
        %2826 = vmatprep.subr.mxu0 %v2782
        %2827 = vmatpush1.msra.mxu0 %v2781
        %2828 = vmatprep.subr.mxu0 %v2786
        %2829 = vmatpush1.msra.mxu0 %v2785
        %2830 = vmatprep.subr.mxu0 %v2790
        %2831 = vmatpush1.msra.mxu0 %v2789
        %2832 = vmatprep.subr.mxu0 %v2794
        %2833 = vmatpush1.msra.mxu0 %v2793
        %2834 = vmatprep.subr.mxu0 %v2798
        %2835 = vmatpush1.msra.mxu0 %v2797
        %2836 = vmatprep.subr.mxu0 %v2802
        %2837 = vmatpush1.msra.mxu0 %v2801
        %2838 = vmatprep.subr.mxu0 %v2806
        %2839 = vmatpush1.msra.mxu0 %v2805
        %2840 = vmatprep.subr.mxu0 %v2810
        %2841 = vmatpush1.msra.mxu0 %v2809
        %2842 = vmatprep.subr.mxu0 %v2814
        %2843 = vmatpush1.msra.mxu0 %v2813
        %2844 = vmatprep.subr.mxu0 %v2818
        %2845 = vmatpush1.msra.mxu0 %v2817
        %2846 = vmatprep.subr.mxu0 0.0
        %2847 = vmatpush1.msra.mxu0 0.0
        %2848 = vmatprep.subr.mxu0 0.0
        %2849 = vmatpush1.msra.mxu0 0.0
        %2850 = vmatprep.subr.mxu0 0.0
        %2851 = vmatpush1.msra.mxu0 0.0
        %2852 = vmatprep.subr.mxu0 0.0
        %2853 = vmatpush1.msra.mxu0 0.0
        %2854 = vmatprep.subr.mxu0 0.0
        %2855 = vmatpush1.msra.mxu0 0.0
        %2856 = vmatprep.subr.mxu0 0.0
        %2857 = vmatpush1.msra.mxu0 0.0
        %2858 = vmatprep.subr.mxu0 0.0
        %2859 = vmatpush1.msra.mxu0 0.0
        %2860 = vmatprep.subr.mxu0 0.0
        %2861 = vmatpush1.msra.mxu0 0.0
        %2862 = vmatprep.subr.mxu0 0.0
        %2863 = vmatpush1.msra.mxu0 0.0
        %2864 = vmatprep.subr.mxu0 0.0
        %2865 = vmatpush1.msra.mxu0 0.0
        %2866 = vmatprep.subr.mxu0 0.0
        %2867 = vmatpush1.msra.mxu0 0.0
        %2868 = vmatprep.subr.mxu0 0.0
        %2869 = vmatpush1.msra.mxu0 0.0
        %2870 = vmatprep.subr.mxu0 0.0
        %2871 = vmatpush1.msra.mxu0 0.0
        %2872 = vmatprep.subr.mxu0 0.0
        %2873 = vmatpush1.msra.mxu0 0.0
        %2874 = vmatprep.subr.mxu0 0.0
        %2875 = vmatpush1.msra.mxu0 0.0
        %2876 = vmatprep.subr.mxu0 0.0
        %2877 = vmatpush1.msra.mxu0 0.0
        %2878 = vmatprep.subr.mxu0 0.0
        %2879 = vmatpush1.msra.mxu0 0.0
        %2880 = vmatprep.subr.mxu0 0.0
        %2881 = vmatpush1.msra.mxu0 0.0
        %2882 = vmatprep.subr.mxu0 0.0
        %2883 = vmatpush1.msra.mxu0 0.0
        %2884 = vmatprep.subr.mxu0 0.0
        %2885 = vmatpush1.msra.mxu0 0.0
        %2886 = vmatprep.subr.mxu0 0.0
        %2887 = vmatpush1.msra.mxu0 0.0
        %2888 = vmatprep.mubr.f32.mxu0 0.0
        %2889 = vmatmul.mubr.f32.gmra.mrb[0].mxu0 %v2822
        %v2890 = vpop.f32.mrb[0].mxu0
        %v2891 = vadd.f32 0.0, %v2890
        %v2892 = vpop.f32.mrb[0].mxu0
        %v2893 = vadd.f32 0.0, %v2892
        %2894 = vdwg.mxu0
        %2895 = vmatprep.subr.mxu0 %v2780
        %2896 = vmatpush1.msra.mxu0 %v2779
        %2897 = vmatprep.subr.mxu0 %v2784
        %2898 = vmatpush1.msra.mxu0 %v2783
        %2899 = vmatprep.subr.mxu0 %v2788
        %2900 = vmatpush1.msra.mxu0 %v2787
        %2901 = vmatprep.subr.mxu0 %v2792
        %2902 = vmatpush1.msra.mxu0 %v2791
        %2903 = vmatprep.subr.mxu0 %v2796
        %2904 = vmatpush1.msra.mxu0 %v2795
        %2905 = vmatprep.subr.mxu0 %v2800
        %2906 = vmatpush1.msra.mxu0 %v2799
        %2907 = vmatprep.subr.mxu0 %v2804
        %2908 = vmatpush1.msra.mxu0 %v2803
        %2909 = vmatprep.subr.mxu0 %v2808
        %2910 = vmatpush1.msra.mxu0 %v2807
        %2911 = vmatprep.subr.mxu0 %v2812
        %2912 = vmatpush1.msra.mxu0 %v2811
        %2913 = vmatprep.subr.mxu0 %v2816
        %2914 = vmatpush1.msra.mxu0 %v2815
        %2915 = vmatprep.subr.mxu0 %v2820
        %2916 = vmatpush1.msra.mxu0 %v2819
        %2917 = vmatprep.subr.mxu0 0.0
        %2918 = vmatpush1.msra.mxu0 0.0
        %2919 = vmatprep.subr.mxu0 0.0
        %2920 = vmatpush1.msra.mxu0 0.0
        %2921 = vmatprep.subr.mxu0 0.0
        %2922 = vmatpush1.msra.mxu0 0.0
        %2923 = vmatprep.subr.mxu0 0.0
        %2924 = vmatpush1.msra.mxu0 0.0
        %2925 = vmatprep.subr.mxu0 0.0
        %2926 = vmatpush1.msra.mxu0 0.0
        %2927 = vmatprep.subr.mxu0 0.0
        %2928 = vmatpush1.msra.mxu0 0.0
        %2929 = vmatprep.subr.mxu0 0.0
        %2930 = vmatpush1.msra.mxu0 0.0
        %2931 = vmatprep.subr.mxu0 0.0
        %2932 = vmatpush1.msra.mxu0 0.0
        %2933 = vmatprep.subr.mxu0 0.0
        %2934 = vmatpush1.msra.mxu0 0.0
        %2935 = vmatprep.subr.mxu0 0.0
        %2936 = vmatpush1.msra.mxu0 0.0
        %2937 = vmatprep.subr.mxu0 0.0
        %2938 = vmatpush1.msra.mxu0 0.0
        %2939 = vmatprep.subr.mxu0 0.0
        %2940 = vmatpush1.msra.mxu0 0.0
        %2941 = vmatprep.subr.mxu0 0.0
        %2942 = vmatpush1.msra.mxu0 0.0
        %2943 = vmatprep.subr.mxu0 0.0
        %2944 = vmatpush1.msra.mxu0 0.0
        %2945 = vmatprep.subr.mxu0 0.0
        %2946 = vmatpush1.msra.mxu0 0.0
        %2947 = vmatprep.subr.mxu0 0.0
        %2948 = vmatpush1.msra.mxu0 0.0
        %2949 = vmatprep.subr.mxu0 0.0
        %2950 = vmatpush1.msra.mxu0 0.0
        %2951 = vmatprep.subr.mxu0 0.0
        %2952 = vmatpush1.msra.mxu0 0.0
        %2953 = vmatprep.subr.mxu0 0.0
        %2954 = vmatpush1.msra.mxu0 0.0
        %2955 = vmatprep.subr.mxu0 0.0
        %2956 = vmatpush1.msra.mxu0 0.0
        %2957 = vmatprep.subr.mxu0 0.0
        %2958 = vmatpush1.msra.mxu0 0.0
        %2959 = vmatprep.mubr.f32.mxu0 0.0
        %2960 = vmatmul.mubr.f32.gmra.mrb[0].mxu0 %v2822
        %v2961 = vpop.f32.mrb[0].mxu0
        %v2962 = vadd.f32 0.0, %v2961
        %v2963 = vpop.f32.mrb[0].mxu0
        %v2964 = vadd.f32 0.0, %v2963
        %2965 = vdwg.mxu0
        %v2966 = vadd.f32 %v2771, %v2891
        %v2967 = vadd.f32 %v2772, %v2893
        %v2968 = vadd.f32 %v2773, %v2962
        %v2969 = vadd.f32 %v2774, %v2964
        %2970 = vst [vmem:[#allocation3] sm:$0xff] %v2966
        %2971 = vst [vmem:[#allocation3 + $0x8] sm:$0xff] %v2967
        %2972 = vst [vmem:[#allocation3 + $0x10] sm:$0xff] %v2968
        %2973 = vst [vmem:[#allocation3 + $0x18] sm:$0xff] %v2969
        %v2974 = vld [vmem:[%s175 + $0x8] sm:$0xff]
        %v2975 = vld [vmem:[%s175 + $0x10] sm:$0xff]
        %v2976 = vld [vmem:[%s175 + $0x18] sm:$0xff]
        %v2977 = vld [vmem:[%s175 + $0x20] sm:$0xff]
        %v2978 = vld [vmem:[%s175 + $0x28] sm:$0xff]
        %2984 = vrot.lane.b32.xlu0 %v2974, 100
        %v2985 = vpop.permute.xlu0 %2984
        %2986 = vrot.lane.b32.xlu0 %v2975, 100
        %v2987 = vpop.permute.xlu0 %2986
        %2988 = vrot.lane.b32.xlu0 %v2976, 100
        %v2989 = vpop.permute.xlu0 %2988
        %2990 = vrot.lane.b32.xlu0 %v2977, 100
        %v2991 = vpop.permute.xlu0 %2990
        %2992 = vrot.lane.b32.xlu0 %v2978, 100
        %v2993 = vpop.permute.xlu0 %2992
        %v2994 = vsel %vm719, %v2985, %v2987
        %v2995 = vsel %vm719, %v2987, %v2989
        %v2996 = vsel %vm719, %v2989, %v2991
        %v2997 = vsel %vm719, %v2991, %v2993
        %3002 = vst [vmem:[#allocation2] sm:$0xff] %v2994
        %3003 = vst [vmem:[#allocation2 + $0x8] sm:$0xff] %v2995
        %3004 = vst [vmem:[#allocation2 + $0x10] sm:$0xff] %v2996
        %3005 = vst [vmem:[#allocation2 + $0x18] sm:$0xff] %v2997
        %3006 = vrot.lane.b32.xlu0 %v2974, 99
        %v3007 = vpop.permute.xlu0 %3006
        %3008 = vrot.lane.b32.xlu0 %v2975, 99
        %v3009 = vpop.permute.xlu0 %3008
        %3010 = vrot.lane.b32.xlu0 %v2976, 99
        %v3011 = vpop.permute.xlu0 %3010
        %3012 = vrot.lane.b32.xlu0 %v2977, 99
        %v3013 = vpop.permute.xlu0 %3012
        %3014 = vrot.lane.b32.xlu0 %v2978, 99
        %v3015 = vpop.permute.xlu0 %3014
        %v3016 = vsel %vm742, %v3007, %v3009
        %v3017 = vsel %vm742, %v3009, %v3011
        %v3018 = vsel %vm742, %v3011, %v3013
        %v3019 = vsel %vm742, %v3013, %v3015
        %3024 = vst [vmem:[#allocation2 + $0x20] sm:$0xff] %v3016
        %3025 = vst [vmem:[#allocation2 + $0x28] sm:$0xff] %v3017
        %3026 = vst [vmem:[#allocation2 + $0x30] sm:$0xff] %v3018
        %3027 = vst [vmem:[#allocation2 + $0x38] sm:$0xff] %v3019
        %3028 = vrot.lane.b32.xlu0 %v2974, 98
        %v3029 = vpop.permute.xlu0 %3028
        %3030 = vrot.lane.b32.xlu0 %v2975, 98
        %v3031 = vpop.permute.xlu0 %3030
        %3032 = vrot.lane.b32.xlu0 %v2976, 98
        %v3033 = vpop.permute.xlu0 %3032
        %3034 = vrot.lane.b32.xlu0 %v2977, 98
        %v3035 = vpop.permute.xlu0 %3034
        %3036 = vrot.lane.b32.xlu0 %v2978, 98
        %v3037 = vpop.permute.xlu0 %3036
        %v3038 = vsel %vm765, %v3029, %v3031
        %v3039 = vsel %vm765, %v3031, %v3033
        %v3040 = vsel %vm765, %v3033, %v3035
        %v3041 = vsel %vm765, %v3035, %v3037
        %3046 = vst [vmem:[#allocation2 + $0x40] sm:$0xff] %v3038
        %3047 = vst [vmem:[#allocation2 + $0x48] sm:$0xff] %v3039
        %3048 = vst [vmem:[#allocation2 + $0x50] sm:$0xff] %v3040
        %3049 = vst [vmem:[#allocation2 + $0x58] sm:$0xff] %v3041
        %3050 = vrot.lane.b32.xlu0 %v2974, 97
        %v3051 = vpop.permute.xlu0 %3050
        %3052 = vrot.lane.b32.xlu0 %v2975, 97
        %v3053 = vpop.permute.xlu0 %3052
        %3054 = vrot.lane.b32.xlu0 %v2976, 97
        %v3055 = vpop.permute.xlu0 %3054
        %3056 = vrot.lane.b32.xlu0 %v2977, 97
        %v3057 = vpop.permute.xlu0 %3056
        %3058 = vrot.lane.b32.xlu0 %v2978, 97
        %v3059 = vpop.permute.xlu0 %3058
        %v3060 = vsel %vm788, %v3051, %v3053
        %v3061 = vsel %vm788, %v3053, %v3055
        %v3062 = vsel %vm788, %v3055, %v3057
        %v3063 = vsel %vm788, %v3057, %v3059
        %3068 = vst [vmem:[#allocation2 + $0x60] sm:$0xff] %v3060
        %3069 = vst [vmem:[#allocation2 + $0x68] sm:$0xff] %v3061
        %3070 = vst [vmem:[#allocation2 + $0x70] sm:$0xff] %v3062
        %3071 = vst [vmem:[#allocation2 + $0x78] sm:$0xff] %v3063
        %3072 = vrot.lane.b32.xlu0 %v2974, 96
        %v3073 = vpop.permute.xlu0 %3072
        %3074 = vrot.lane.b32.xlu0 %v2975, 96
        %v3075 = vpop.permute.xlu0 %3074
        %3076 = vrot.lane.b32.xlu0 %v2976, 96
        %v3077 = vpop.permute.xlu0 %3076
        %3078 = vrot.lane.b32.xlu0 %v2977, 96
        %v3079 = vpop.permute.xlu0 %3078
        %3080 = vrot.lane.b32.xlu0 %v2978, 96
        %v3081 = vpop.permute.xlu0 %3080
        %v3082 = vsel %vm811, %v3073, %v3075
        %v3083 = vsel %vm811, %v3075, %v3077
        %v3084 = vsel %vm811, %v3077, %v3079
        %v3085 = vsel %vm811, %v3079, %v3081
        %3090 = vst [vmem:[#allocation2 + $0x80] sm:$0xff] %v3082
        %3091 = vst [vmem:[#allocation2 + $0x88] sm:$0xff] %v3083
        %3092 = vst [vmem:[#allocation2 + $0x90] sm:$0xff] %v3084
        %3093 = vst [vmem:[#allocation2 + $0x98] sm:$0xff] %v3085
        %3094 = vrot.lane.b32.xlu0 %v2974, 95
        %v3095 = vpop.permute.xlu0 %3094
        %3096 = vrot.lane.b32.xlu0 %v2975, 95
        %v3097 = vpop.permute.xlu0 %3096
        %3098 = vrot.lane.b32.xlu0 %v2976, 95
        %v3099 = vpop.permute.xlu0 %3098
        %3100 = vrot.lane.b32.xlu0 %v2977, 95
        %v3101 = vpop.permute.xlu0 %3100
        %3102 = vrot.lane.b32.xlu0 %v2978, 95
        %v3103 = vpop.permute.xlu0 %3102
        %v3104 = vsel %vm834, %v3095, %v3097
        %v3105 = vsel %vm834, %v3097, %v3099
        %v3106 = vsel %vm834, %v3099, %v3101
        %v3107 = vsel %vm834, %v3101, %v3103
        %3112 = vst [vmem:[#allocation2 + $0xa0] sm:$0xff] %v3104
        %3113 = vst [vmem:[#allocation2 + $0xa8] sm:$0xff] %v3105
        %3114 = vst [vmem:[#allocation2 + $0xb0] sm:$0xff] %v3106
        %3115 = vst [vmem:[#allocation2 + $0xb8] sm:$0xff] %v3107
        %3116 = vrot.lane.b32.xlu0 %v2974, 94
        %v3117 = vpop.permute.xlu0 %3116
        %3118 = vrot.lane.b32.xlu0 %v2975, 94
        %v3119 = vpop.permute.xlu0 %3118
        %3120 = vrot.lane.b32.xlu0 %v2976, 94
        %v3121 = vpop.permute.xlu0 %3120
        %3122 = vrot.lane.b32.xlu0 %v2977, 94
        %v3123 = vpop.permute.xlu0 %3122
        %3124 = vrot.lane.b32.xlu0 %v2978, 94
        %v3125 = vpop.permute.xlu0 %3124
        %v3126 = vsel %vm857, %v3117, %v3119
        %v3127 = vsel %vm857, %v3119, %v3121
        %v3128 = vsel %vm857, %v3121, %v3123
        %v3129 = vsel %vm857, %v3123, %v3125
        %3134 = vst [vmem:[#allocation2 + $0xc0] sm:$0xff] %v3126
        %3135 = vst [vmem:[#allocation2 + $0xc8] sm:$0xff] %v3127
        %3136 = vst [vmem:[#allocation2 + $0xd0] sm:$0xff] %v3128
        %3137 = vst [vmem:[#allocation2 + $0xd8] sm:$0xff] %v3129
        %3138 = vrot.lane.b32.xlu0 %v2974, 93
        %v3139 = vpop.permute.xlu0 %3138
        %3140 = vrot.lane.b32.xlu0 %v2975, 93
        %v3141 = vpop.permute.xlu0 %3140
        %3142 = vrot.lane.b32.xlu0 %v2976, 93
        %v3143 = vpop.permute.xlu0 %3142
        %3144 = vrot.lane.b32.xlu0 %v2977, 93
        %v3145 = vpop.permute.xlu0 %3144
        %3146 = vrot.lane.b32.xlu0 %v2978, 93
        %v3147 = vpop.permute.xlu0 %3146
        %v3148 = vsel %vm880, %v3139, %v3141
        %v3149 = vsel %vm880, %v3141, %v3143
        %v3150 = vsel %vm880, %v3143, %v3145
        %v3151 = vsel %vm880, %v3145, %v3147
        %3156 = vst [vmem:[#allocation2 + $0xe0] sm:$0xff] %v3148
        %3157 = vst [vmem:[#allocation2 + $0xe8] sm:$0xff] %v3149
        %3158 = vst [vmem:[#allocation2 + $0xf0] sm:$0xff] %v3150
        %3159 = vst [vmem:[#allocation2 + $0xf8] sm:$0xff] %v3151
        %3160 = vrot.lane.b32.xlu0 %v2974, 92
        %v3161 = vpop.permute.xlu0 %3160
        %3162 = vrot.lane.b32.xlu0 %v2975, 92
        %v3163 = vpop.permute.xlu0 %3162
        %3164 = vrot.lane.b32.xlu0 %v2976, 92
        %v3165 = vpop.permute.xlu0 %3164
        %3166 = vrot.lane.b32.xlu0 %v2977, 92
        %v3167 = vpop.permute.xlu0 %3166
        %3168 = vrot.lane.b32.xlu0 %v2978, 92
        %v3169 = vpop.permute.xlu0 %3168
        %v3170 = vsel %vm903, %v3161, %v3163
        %v3171 = vsel %vm903, %v3163, %v3165
        %v3172 = vsel %vm903, %v3165, %v3167
        %v3173 = vsel %vm903, %v3167, %v3169
        %3178 = vst [vmem:[#allocation2 + $0x100] sm:$0xff] %v3170
        %3179 = vst [vmem:[#allocation2 + $0x108] sm:$0xff] %v3171
        %3180 = vst [vmem:[#allocation2 + $0x110] sm:$0xff] %v3172
        %3181 = vst [vmem:[#allocation2 + $0x118] sm:$0xff] %v3173
        %3182 = vrot.lane.b32.xlu0 %v2974, 91
        %v3183 = vpop.permute.xlu0 %3182
        %3184 = vrot.lane.b32.xlu0 %v2975, 91
        %v3185 = vpop.permute.xlu0 %3184
        %3186 = vrot.lane.b32.xlu0 %v2976, 91
        %v3187 = vpop.permute.xlu0 %3186
        %3188 = vrot.lane.b32.xlu0 %v2977, 91
        %v3189 = vpop.permute.xlu0 %3188
        %3190 = vrot.lane.b32.xlu0 %v2978, 91
        %v3191 = vpop.permute.xlu0 %3190
        %vm3192 = vcmask 744448
        %v3193 = vsel %vm3192, %v3183, %v3185
        %v3194 = vsel %vm3192, %v3185, %v3187
        %v3195 = vsel %vm3192, %v3187, %v3189
        %v3196 = vsel %vm3192, %v3189, %v3191
        %3201 = vst [vmem:[#allocation2 + $0x120] sm:$0xff] %v3193
        %3202 = vst [vmem:[#allocation2 + $0x128] sm:$0xff] %v3194
        %3203 = vst [vmem:[#allocation2 + $0x130] sm:$0xff] %v3195
        %3204 = vst [vmem:[#allocation2 + $0x138] sm:$0xff] %v3196
        %3205 = vrot.lane.b32.xlu0 %v2974, 90
        %v3206 = vpop.permute.xlu0 %3205
        %3207 = vrot.lane.b32.xlu0 %v2975, 90
        %v3208 = vpop.permute.xlu0 %3207
        %3209 = vrot.lane.b32.xlu0 %v2976, 90
        %v3210 = vpop.permute.xlu0 %3209
        %3211 = vrot.lane.b32.xlu0 %v2977, 90
        %v3212 = vpop.permute.xlu0 %3211
        %3213 = vrot.lane.b32.xlu0 %v2978, 90
        %v3214 = vpop.permute.xlu0 %3213
        %vm3215 = vcmask 736256
        %v3216 = vsel %vm3215, %v3206, %v3208
        %v3217 = vsel %vm3215, %v3208, %v3210
        %v3218 = vsel %vm3215, %v3210, %v3212
        %v3219 = vsel %vm3215, %v3212, %v3214
        %3224 = vst [vmem:[#allocation2 + $0x140] sm:$0xff] %v3216
        %3225 = vst [vmem:[#allocation2 + $0x148] sm:$0xff] %v3217
        %3226 = vst [vmem:[#allocation2 + $0x150] sm:$0xff] %v3218
        %3227 = vst [vmem:[#allocation2 + $0x158] sm:$0xff] %v3219
        %v3228 = vld [vmem:[#allocation3] sm:$0xff]
        %v3229 = vld [vmem:[#allocation3 + $0x8] sm:$0xff]
        %v3230 = vld [vmem:[#allocation3 + $0x10] sm:$0xff]
        %v3231 = vld [vmem:[#allocation3 + $0x18] sm:$0xff]
        %s3232 = scalar_lea.vmem [#allocation7], 48
        %v3233 = vld [vmem:[%s3232] sm:$0xff]
        %v3234 = vld [vmem:[#allocation2] sm:$0xff]
        %v3235 = vld [vmem:[#allocation2 + $0x8] sm:$0xff]
        %v3236 = vld [vmem:[#allocation2 + $0x10] sm:$0xff]
        %v3237 = vld [vmem:[#allocation2 + $0x18] sm:$0xff]
        %v3238 = vld [vmem:[#allocation2 + $0x20] sm:$0xff]
        %v3239 = vld [vmem:[#allocation2 + $0x28] sm:$0xff]
        %v3240 = vld [vmem:[#allocation2 + $0x30] sm:$0xff]
        %v3241 = vld [vmem:[#allocation2 + $0x38] sm:$0xff]
        %v3242 = vld [vmem:[#allocation2 + $0x40] sm:$0xff]
        %v3243 = vld [vmem:[#allocation2 + $0x48] sm:$0xff]
        %v3244 = vld [vmem:[#allocation2 + $0x50] sm:$0xff]
        %v3245 = vld [vmem:[#allocation2 + $0x58] sm:$0xff]
        %v3246 = vld [vmem:[#allocation2 + $0x60] sm:$0xff]
        %v3247 = vld [vmem:[#allocation2 + $0x68] sm:$0xff]
        %v3248 = vld [vmem:[#allocation2 + $0x70] sm:$0xff]
        %v3249 = vld [vmem:[#allocation2 + $0x78] sm:$0xff]
        %v3250 = vld [vmem:[#allocation2 + $0x80] sm:$0xff]
        %v3251 = vld [vmem:[#allocation2 + $0x88] sm:$0xff]
        %v3252 = vld [vmem:[#allocation2 + $0x90] sm:$0xff]
        %v3253 = vld [vmem:[#allocation2 + $0x98] sm:$0xff]
        %v3254 = vld [vmem:[#allocation2 + $0xa0] sm:$0xff]
        %v3255 = vld [vmem:[#allocation2 + $0xa8] sm:$0xff]
        %v3256 = vld [vmem:[#allocation2 + $0xb0] sm:$0xff]
        %v3257 = vld [vmem:[#allocation2 + $0xb8] sm:$0xff]
        %v3258 = vld [vmem:[#allocation2 + $0xc0] sm:$0xff]
        %v3259 = vld [vmem:[#allocation2 + $0xc8] sm:$0xff]
        %v3260 = vld [vmem:[#allocation2 + $0xd0] sm:$0xff]
        %v3261 = vld [vmem:[#allocation2 + $0xd8] sm:$0xff]
        %v3262 = vld [vmem:[#allocation2 + $0xe0] sm:$0xff]
        %v3263 = vld [vmem:[#allocation2 + $0xe8] sm:$0xff]
        %v3264 = vld [vmem:[#allocation2 + $0xf0] sm:$0xff]
        %v3265 = vld [vmem:[#allocation2 + $0xf8] sm:$0xff]
        %v3266 = vld [vmem:[#allocation2 + $0x100] sm:$0xff]
        %v3267 = vld [vmem:[#allocation2 + $0x108] sm:$0xff]
        %v3268 = vld [vmem:[#allocation2 + $0x110] sm:$0xff]
        %v3269 = vld [vmem:[#allocation2 + $0x118] sm:$0xff]
        %v3270 = vld [vmem:[#allocation2 + $0x120] sm:$0xff]
        %v3271 = vld [vmem:[#allocation2 + $0x128] sm:$0xff]
        %v3272 = vld [vmem:[#allocation2 + $0x130] sm:$0xff]
        %v3273 = vld [vmem:[#allocation2 + $0x138] sm:$0xff]
        %v3274 = vld [vmem:[#allocation2 + $0x140] sm:$0xff]
        %v3275 = vld [vmem:[#allocation2 + $0x148] sm:$0xff]
        %v3276 = vld [vmem:[#allocation2 + $0x150] sm:$0xff]
        %v3277 = vld [vmem:[#allocation2 + $0x158] sm:$0xff]
        %v3279 = vsel %vm499, %v3233, 0
        %3281 = vmatprep.subr.mxu0 %v3235
        %3282 = vmatpush1.msra.mxu0 %v3234
        %3283 = vmatprep.subr.mxu0 %v3239
        %3284 = vmatpush1.msra.mxu0 %v3238
        %3285 = vmatprep.subr.mxu0 %v3243
        %3286 = vmatpush1.msra.mxu0 %v3242
        %3287 = vmatprep.subr.mxu0 %v3247
        %3288 = vmatpush1.msra.mxu0 %v3246
        %3289 = vmatprep.subr.mxu0 %v3251
        %3290 = vmatpush1.msra.mxu0 %v3250
        %3291 = vmatprep.subr.mxu0 %v3255
        %3292 = vmatpush1.msra.mxu0 %v3254
        %3293 = vmatprep.subr.mxu0 %v3259
        %3294 = vmatpush1.msra.mxu0 %v3258
        %3295 = vmatprep.subr.mxu0 %v3263
        %3296 = vmatpush1.msra.mxu0 %v3262
        %3297 = vmatprep.subr.mxu0 %v3267
        %3298 = vmatpush1.msra.mxu0 %v3266
        %3299 = vmatprep.subr.mxu0 %v3271
        %3300 = vmatpush1.msra.mxu0 %v3270
        %3301 = vmatprep.subr.mxu0 %v3275
        %3302 = vmatpush1.msra.mxu0 %v3274
        %3303 = vmatprep.subr.mxu0 0.0
        %3304 = vmatpush1.msra.mxu0 0.0
        %3305 = vmatprep.subr.mxu0 0.0
        %3306 = vmatpush1.msra.mxu0 0.0
        %3307 = vmatprep.subr.mxu0 0.0
        %3308 = vmatpush1.msra.mxu0 0.0
        %3309 = vmatprep.subr.mxu0 0.0
        %3310 = vmatpush1.msra.mxu0 0.0
        %3311 = vmatprep.subr.mxu0 0.0
        %3312 = vmatpush1.msra.mxu0 0.0
        %3313 = vmatprep.subr.mxu0 0.0
        %3314 = vmatpush1.msra.mxu0 0.0
        %3315 = vmatprep.subr.mxu0 0.0
        %3316 = vmatpush1.msra.mxu0 0.0
        %3317 = vmatprep.subr.mxu0 0.0
        %3318 = vmatpush1.msra.mxu0 0.0
        %3319 = vmatprep.subr.mxu0 0.0
        %3320 = vmatpush1.msra.mxu0 0.0
        %3321 = vmatprep.subr.mxu0 0.0
        %3322 = vmatpush1.msra.mxu0 0.0
        %3323 = vmatprep.subr.mxu0 0.0
        %3324 = vmatpush1.msra.mxu0 0.0
        %3325 = vmatprep.subr.mxu0 0.0
        %3326 = vmatpush1.msra.mxu0 0.0
        %3327 = vmatprep.subr.mxu0 0.0
        %3328 = vmatpush1.msra.mxu0 0.0
        %3329 = vmatprep.subr.mxu0 0.0
        %3330 = vmatpush1.msra.mxu0 0.0
        %3331 = vmatprep.subr.mxu0 0.0
        %3332 = vmatpush1.msra.mxu0 0.0
        %3333 = vmatprep.subr.mxu0 0.0
        %3334 = vmatpush1.msra.mxu0 0.0
        %3335 = vmatprep.subr.mxu0 0.0
        %3336 = vmatpush1.msra.mxu0 0.0
        %3337 = vmatprep.subr.mxu0 0.0
        %3338 = vmatpush1.msra.mxu0 0.0
        %3339 = vmatprep.subr.mxu0 0.0
        %3340 = vmatpush1.msra.mxu0 0.0
        %3341 = vmatprep.subr.mxu0 0.0
        %3342 = vmatpush1.msra.mxu0 0.0
        %3343 = vmatprep.subr.mxu0 0.0
        %3344 = vmatpush1.msra.mxu0 0.0
        %3345 = vmatprep.mubr.f32.mxu0 0.0
        %3346 = vmatmul.mubr.f32.gmra.mrb[0].mxu0 %v3279
        %v3347 = vpop.f32.mrb[0].mxu0
        %v3348 = vadd.f32 0.0, %v3347
        %v3349 = vpop.f32.mrb[0].mxu0
        %v3350 = vadd.f32 0.0, %v3349
        %3351 = vdwg.mxu0
        %3352 = vmatprep.subr.mxu0 %v3237
        %3353 = vmatpush1.msra.mxu0 %v3236
        %3354 = vmatprep.subr.mxu0 %v3241
        %3355 = vmatpush1.msra.mxu0 %v3240
        %3356 = vmatprep.subr.mxu0 %v3245
        %3357 = vmatpush1.msra.mxu0 %v3244
        %3358 = vmatprep.subr.mxu0 %v3249
        %3359 = vmatpush1.msra.mxu0 %v3248
        %3360 = vmatprep.subr.mxu0 %v3253
        %3361 = vmatpush1.msra.mxu0 %v3252
        %3362 = vmatprep.subr.mxu0 %v3257
        %3363 = vmatpush1.msra.mxu0 %v3256
        %3364 = vmatprep.subr.mxu0 %v3261
        %3365 = vmatpush1.msra.mxu0 %v3260
        %3366 = vmatprep.subr.mxu0 %v3265
        %3367 = vmatpush1.msra.mxu0 %v3264
        %3368 = vmatprep.subr.mxu0 %v3269
        %3369 = vmatpush1.msra.mxu0 %v3268
        %3370 = vmatprep.subr.mxu0 %v3273
        %3371 = vmatpush1.msra.mxu0 %v3272
        %3372 = vmatprep.subr.mxu0 %v3277
        %3373 = vmatpush1.msra.mxu0 %v3276
        %3374 = vmatprep.subr.mxu0 0.0
        %3375 = vmatpush1.msra.mxu0 0.0
        %3376 = vmatprep.subr.mxu0 0.0
        %3377 = vmatpush1.msra.mxu0 0.0
        %3378 = vmatprep.subr.mxu0 0.0
        %3379 = vmatpush1.msra.mxu0 0.0
        %3380 = vmatprep.subr.mxu0 0.0
        %3381 = vmatpush1.msra.mxu0 0.0
        %3382 = vmatprep.subr.mxu0 0.0
        %3383 = vmatpush1.msra.mxu0 0.0
        %3384 = vmatprep.subr.mxu0 0.0
        %3385 = vmatpush1.msra.mxu0 0.0
        %3386 = vmatprep.subr.mxu0 0.0
        %3387 = vmatpush1.msra.mxu0 0.0
        %3388 = vmatprep.subr.mxu0 0.0
        %3389 = vmatpush1.msra.mxu0 0.0
        %3390 = vmatprep.subr.mxu0 0.0
        %3391 = vmatpush1.msra.mxu0 0.0
        %3392 = vmatprep.subr.mxu0 0.0
        %3393 = vmatpush1.msra.mxu0 0.0
        %3394 = vmatprep.subr.mxu0 0.0
        %3395 = vmatpush1.msra.mxu0 0.0
        %3396 = vmatprep.subr.mxu0 0.0
        %3397 = vmatpush1.msra.mxu0 0.0
        %3398 = vmatprep.subr.mxu0 0.0
        %3399 = vmatpush1.msra.mxu0 0.0
        %3400 = vmatprep.subr.mxu0 0.0
        %3401 = vmatpush1.msra.mxu0 0.0
        %3402 = vmatprep.subr.mxu0 0.0
        %3403 = vmatpush1.msra.mxu0 0.0
        %3404 = vmatprep.subr.mxu0 0.0
        %3405 = vmatpush1.msra.mxu0 0.0
        %3406 = vmatprep.subr.mxu0 0.0
        %3407 = vmatpush1.msra.mxu0 0.0
        %3408 = vmatprep.subr.mxu0 0.0
        %3409 = vmatpush1.msra.mxu0 0.0
        %3410 = vmatprep.subr.mxu0 0.0
        %3411 = vmatpush1.msra.mxu0 0.0
        %3412 = vmatprep.subr.mxu0 0.0
        %3413 = vmatpush1.msra.mxu0 0.0
        %3414 = vmatprep.subr.mxu0 0.0
        %3415 = vmatpush1.msra.mxu0 0.0
        %3416 = vmatprep.mubr.f32.mxu0 0.0
        %3417 = vmatmul.mubr.f32.gmra.mrb[0].mxu0 %v3279
        %v3418 = vpop.f32.mrb[0].mxu0
        %v3419 = vadd.f32 0.0, %v3418
        %v3420 = vpop.f32.mrb[0].mxu0
        %v3421 = vadd.f32 0.0, %v3420
        %3422 = vdwg.mxu0
        %v3423 = vadd.f32 %v3228, %v3348
        %v3424 = vadd.f32 %v3229, %v3350
        %v3425 = vadd.f32 %v3230, %v3419
        %v3426 = vadd.f32 %v3231, %v3421
        %3427 = vst [vmem:[#allocation3] sm:$0xff] %v3423
        %3428 = vst [vmem:[#allocation3 + $0x8] sm:$0xff] %v3424
        %3429 = vst [vmem:[#allocation3 + $0x10] sm:$0xff] %v3425
        %3430 = vst [vmem:[#allocation3 + $0x18] sm:$0xff] %v3426
        %v3431 = vld [vmem:[%s175 + $0x8] sm:$0xff]
        %v3432 = vld [vmem:[%s175 + $0x10] sm:$0xff]
        %v3433 = vld [vmem:[%s175 + $0x18] sm:$0xff]
        %v3434 = vld [vmem:[%s175 + $0x20] sm:$0xff]
        %v3435 = vld [vmem:[%s175 + $0x28] sm:$0xff]
        %3441 = vrot.lane.b32.xlu0 %v3431, 74
        %v3442 = vpop.permute.xlu0 %3441
        %3443 = vrot.lane.b32.xlu0 %v3432, 74
        %v3444 = vpop.permute.xlu0 %3443
        %3445 = vrot.lane.b32.xlu0 %v3433, 74
        %v3446 = vpop.permute.xlu0 %3445
        %3447 = vrot.lane.b32.xlu0 %v3434, 74
        %v3448 = vpop.permute.xlu0 %3447
        %3449 = vrot.lane.b32.xlu0 %v3435, 74
        %v3450 = vpop.permute.xlu0 %3449
        %v3451 = vsel %vm1185, %v3442, %v3444
        %v3452 = vsel %vm1185, %v3444, %v3446
        %v3453 = vsel %vm1185, %v3446, %v3448
        %v3454 = vsel %vm1185, %v3448, %v3450
        %3459 = vst [vmem:[#allocation2] sm:$0xff] %v3451
        %3460 = vst [vmem:[#allocation2 + $0x8] sm:$0xff] %v3452
        %3461 = vst [vmem:[#allocation2 + $0x10] sm:$0xff] %v3453
        %3462 = vst [vmem:[#allocation2 + $0x18] sm:$0xff] %v3454
        %3463 = vrot.lane.b32.xlu0 %v3431, 73
        %v3464 = vpop.permute.xlu0 %3463
        %3465 = vrot.lane.b32.xlu0 %v3432, 73
        %v3466 = vpop.permute.xlu0 %3465
        %3467 = vrot.lane.b32.xlu0 %v3433, 73
        %v3468 = vpop.permute.xlu0 %3467
        %3469 = vrot.lane.b32.xlu0 %v3434, 73
        %v3470 = vpop.permute.xlu0 %3469
        %3471 = vrot.lane.b32.xlu0 %v3435, 73
        %v3472 = vpop.permute.xlu0 %3471
        %v3473 = vsel %vm1208, %v3464, %v3466
        %v3474 = vsel %vm1208, %v3466, %v3468
        %v3475 = vsel %vm1208, %v3468, %v3470
        %v3476 = vsel %vm1208, %v3470, %v3472
        %3481 = vst [vmem:[#allocation2 + $0x20] sm:$0xff] %v3473
        %3482 = vst [vmem:[#allocation2 + $0x28] sm:$0xff] %v3474
        %3483 = vst [vmem:[#allocation2 + $0x30] sm:$0xff] %v3475
        %3484 = vst [vmem:[#allocation2 + $0x38] sm:$0xff] %v3476
        %3485 = vrot.lane.b32.xlu0 %v3431, 72
        %v3486 = vpop.permute.xlu0 %3485
        %3487 = vrot.lane.b32.xlu0 %v3432, 72
        %v3488 = vpop.permute.xlu0 %3487
        %3489 = vrot.lane.b32.xlu0 %v3433, 72
        %v3490 = vpop.permute.xlu0 %3489
        %3491 = vrot.lane.b32.xlu0 %v3434, 72
        %v3492 = vpop.permute.xlu0 %3491
        %3493 = vrot.lane.b32.xlu0 %v3435, 72
        %v3494 = vpop.permute.xlu0 %3493
        %v3495 = vsel %vm1231, %v3486, %v3488
        %v3496 = vsel %vm1231, %v3488, %v3490
        %v3497 = vsel %vm1231, %v3490, %v3492
        %v3498 = vsel %vm1231, %v3492, %v3494
        %3503 = vst [vmem:[#allocation2 + $0x40] sm:$0xff] %v3495
        %3504 = vst [vmem:[#allocation2 + $0x48] sm:$0xff] %v3496
        %3505 = vst [vmem:[#allocation2 + $0x50] sm:$0xff] %v3497
        %3506 = vst [vmem:[#allocation2 + $0x58] sm:$0xff] %v3498
        %3507 = vrot.lane.b32.xlu0 %v3431, 71
        %v3508 = vpop.permute.xlu0 %3507
        %3509 = vrot.lane.b32.xlu0 %v3432, 71
        %v3510 = vpop.permute.xlu0 %3509
        %3511 = vrot.lane.b32.xlu0 %v3433, 71
        %v3512 = vpop.permute.xlu0 %3511
        %3513 = vrot.lane.b32.xlu0 %v3434, 71
        %v3514 = vpop.permute.xlu0 %3513
        %3515 = vrot.lane.b32.xlu0 %v3435, 71
        %v3516 = vpop.permute.xlu0 %3515
        %v3517 = vsel %vm1254, %v3508, %v3510
        %v3518 = vsel %vm1254, %v3510, %v3512
        %v3519 = vsel %vm1254, %v3512, %v3514
        %v3520 = vsel %vm1254, %v3514, %v3516
        %3525 = vst [vmem:[#allocation2 + $0x60] sm:$0xff] %v3517
        %3526 = vst [vmem:[#allocation2 + $0x68] sm:$0xff] %v3518
        %3527 = vst [vmem:[#allocation2 + $0x70] sm:$0xff] %v3519
        %3528 = vst [vmem:[#allocation2 + $0x78] sm:$0xff] %v3520
        %3529 = vrot.lane.b32.xlu0 %v3431, 70
        %v3530 = vpop.permute.xlu0 %3529
        %3531 = vrot.lane.b32.xlu0 %v3432, 70
        %v3532 = vpop.permute.xlu0 %3531
        %3533 = vrot.lane.b32.xlu0 %v3433, 70
        %v3534 = vpop.permute.xlu0 %3533
        %3535 = vrot.lane.b32.xlu0 %v3434, 70
        %v3536 = vpop.permute.xlu0 %3535
        %3537 = vrot.lane.b32.xlu0 %v3435, 70
        %v3538 = vpop.permute.xlu0 %3537
        %v3539 = vsel %vm1277, %v3530, %v3532
        %v3540 = vsel %vm1277, %v3532, %v3534
        %v3541 = vsel %vm1277, %v3534, %v3536
        %v3542 = vsel %vm1277, %v3536, %v3538
        %3547 = vst [vmem:[#allocation2 + $0x80] sm:$0xff] %v3539
        %3548 = vst [vmem:[#allocation2 + $0x88] sm:$0xff] %v3540
        %3549 = vst [vmem:[#allocation2 + $0x90] sm:$0xff] %v3541
        %3550 = vst [vmem:[#allocation2 + $0x98] sm:$0xff] %v3542
        %3551 = vrot.lane.b32.xlu0 %v3431, 69
        %v3552 = vpop.permute.xlu0 %3551
        %3553 = vrot.lane.b32.xlu0 %v3432, 69
        %v3554 = vpop.permute.xlu0 %3553
        %3555 = vrot.lane.b32.xlu0 %v3433, 69
        %v3556 = vpop.permute.xlu0 %3555
        %3557 = vrot.lane.b32.xlu0 %v3434, 69
        %v3558 = vpop.permute.xlu0 %3557
        %3559 = vrot.lane.b32.xlu0 %v3435, 69
        %v3560 = vpop.permute.xlu0 %3559
        %v3561 = vsel %vm1300, %v3552, %v3554
        %v3562 = vsel %vm1300, %v3554, %v3556
        %v3563 = vsel %vm1300, %v3556, %v3558
        %v3564 = vsel %vm1300, %v3558, %v3560
        %3569 = vst [vmem:[#allocation2 + $0xa0] sm:$0xff] %v3561
        %3570 = vst [vmem:[#allocation2 + $0xa8] sm:$0xff] %v3562
        %3571 = vst [vmem:[#allocation2 + $0xb0] sm:$0xff] %v3563
        %3572 = vst [vmem:[#allocation2 + $0xb8] sm:$0xff] %v3564
        %3573 = vrot.lane.b32.xlu0 %v3431, 68
        %v3574 = vpop.permute.xlu0 %3573
        %3575 = vrot.lane.b32.xlu0 %v3432, 68
        %v3576 = vpop.permute.xlu0 %3575
        %3577 = vrot.lane.b32.xlu0 %v3433, 68
        %v3578 = vpop.permute.xlu0 %3577
        %3579 = vrot.lane.b32.xlu0 %v3434, 68
        %v3580 = vpop.permute.xlu0 %3579
        %3581 = vrot.lane.b32.xlu0 %v3435, 68
        %v3582 = vpop.permute.xlu0 %3581
        %v3583 = vsel %vm1323, %v3574, %v3576
        %v3584 = vsel %vm1323, %v3576, %v3578
        %v3585 = vsel %vm1323, %v3578, %v3580
        %v3586 = vsel %vm1323, %v3580, %v3582
        %3591 = vst [vmem:[#allocation2 + $0xc0] sm:$0xff] %v3583
        %3592 = vst [vmem:[#allocation2 + $0xc8] sm:$0xff] %v3584
        %3593 = vst [vmem:[#allocation2 + $0xd0] sm:$0xff] %v3585
        %3594 = vst [vmem:[#allocation2 + $0xd8] sm:$0xff] %v3586
        %3595 = vrot.lane.b32.xlu0 %v3431, 67
        %v3596 = vpop.permute.xlu0 %3595
        %3597 = vrot.lane.b32.xlu0 %v3432, 67
        %v3598 = vpop.permute.xlu0 %3597
        %3599 = vrot.lane.b32.xlu0 %v3433, 67
        %v3600 = vpop.permute.xlu0 %3599
        %3601 = vrot.lane.b32.xlu0 %v3434, 67
        %v3602 = vpop.permute.xlu0 %3601
        %3603 = vrot.lane.b32.xlu0 %v3435, 67
        %v3604 = vpop.permute.xlu0 %3603
        %v3605 = vsel %vm1346, %v3596, %v3598
        %v3606 = vsel %vm1346, %v3598, %v3600
        %v3607 = vsel %vm1346, %v3600, %v3602
        %v3608 = vsel %vm1346, %v3602, %v3604
        %3613 = vst [vmem:[#allocation2 + $0xe0] sm:$0xff] %v3605
        %3614 = vst [vmem:[#allocation2 + $0xe8] sm:$0xff] %v3606
        %3615 = vst [vmem:[#allocation2 + $0xf0] sm:$0xff] %v3607
        %3616 = vst [vmem:[#allocation2 + $0xf8] sm:$0xff] %v3608
        %3617 = vrot.lane.b32.xlu0 %v3431, 66
        %v3618 = vpop.permute.xlu0 %3617
        %3619 = vrot.lane.b32.xlu0 %v3432, 66
        %v3620 = vpop.permute.xlu0 %3619
        %3621 = vrot.lane.b32.xlu0 %v3433, 66
        %v3622 = vpop.permute.xlu0 %3621
        %3623 = vrot.lane.b32.xlu0 %v3434, 66
        %v3624 = vpop.permute.xlu0 %3623
        %3625 = vrot.lane.b32.xlu0 %v3435, 66
        %v3626 = vpop.permute.xlu0 %3625
        %v3627 = vsel %vm1369, %v3618, %v3620
        %v3628 = vsel %vm1369, %v3620, %v3622
        %v3629 = vsel %vm1369, %v3622, %v3624
        %v3630 = vsel %vm1369, %v3624, %v3626
        %3635 = vst [vmem:[#allocation2 + $0x100] sm:$0xff] %v3627
        %3636 = vst [vmem:[#allocation2 + $0x108] sm:$0xff] %v3628
        %3637 = vst [vmem:[#allocation2 + $0x110] sm:$0xff] %v3629
        %3638 = vst [vmem:[#allocation2 + $0x118] sm:$0xff] %v3630
        %3639 = vrot.lane.b32.xlu0 %v3431, 65
        %v3640 = vpop.permute.xlu0 %3639
        %3641 = vrot.lane.b32.xlu0 %v3432, 65
        %v3642 = vpop.permute.xlu0 %3641
        %3643 = vrot.lane.b32.xlu0 %v3433, 65
        %v3644 = vpop.permute.xlu0 %3643
        %3645 = vrot.lane.b32.xlu0 %v3434, 65
        %v3646 = vpop.permute.xlu0 %3645
        %3647 = vrot.lane.b32.xlu0 %v3435, 65
        %v3648 = vpop.permute.xlu0 %3647
        %vm3649 = vcmask 531456
        %v3650 = vsel %vm3649, %v3640, %v3642
        %v3651 = vsel %vm3649, %v3642, %v3644
        %v3652 = vsel %vm3649, %v3644, %v3646
        %v3653 = vsel %vm3649, %v3646, %v3648
        %3658 = vst [vmem:[#allocation2 + $0x120] sm:$0xff] %v3650
        %3659 = vst [vmem:[#allocation2 + $0x128] sm:$0xff] %v3651
        %3660 = vst [vmem:[#allocation2 + $0x130] sm:$0xff] %v3652
        %3661 = vst [vmem:[#allocation2 + $0x138] sm:$0xff] %v3653
        %3662 = vrot.lane.b32.xlu0 %v3431, 64
        %v3663 = vpop.permute.xlu0 %3662
        %3664 = vrot.lane.b32.xlu0 %v3432, 64
        %v3665 = vpop.permute.xlu0 %3664
        %3666 = vrot.lane.b32.xlu0 %v3433, 64
        %v3667 = vpop.permute.xlu0 %3666
        %3668 = vrot.lane.b32.xlu0 %v3434, 64
        %v3669 = vpop.permute.xlu0 %3668
        %3670 = vrot.lane.b32.xlu0 %v3435, 64
        %v3671 = vpop.permute.xlu0 %3670
        %vm3672 = vcmask 523264
        %v3673 = vsel %vm3672, %v3663, %v3665
        %v3674 = vsel %vm3672, %v3665, %v3667
        %v3675 = vsel %vm3672, %v3667, %v3669
        %v3676 = vsel %vm3672, %v3669, %v3671
        %3681 = vst [vmem:[#allocation2 + $0x140] sm:$0xff] %v3673
        %3682 = vst [vmem:[#allocation2 + $0x148] sm:$0xff] %v3674
        %3683 = vst [vmem:[#allocation2 + $0x150] sm:$0xff] %v3675
        %3684 = vst [vmem:[#allocation2 + $0x158] sm:$0xff] %v3676
        %v3685 = vld [vmem:[#allocation3] sm:$0xff]
        %v3686 = vld [vmem:[#allocation3 + $0x8] sm:$0xff]
        %v3687 = vld [vmem:[#allocation3 + $0x10] sm:$0xff]
        %v3688 = vld [vmem:[#allocation3 + $0x18] sm:$0xff]
        %s3689 = scalar_lea.vmem [#allocation7], 56
        %v3690 = vld [vmem:[%s3689] sm:$0xff]
        %v3691 = vld [vmem:[#allocation2] sm:$0xff]
        %v3692 = vld [vmem:[#allocation2 + $0x8] sm:$0xff]
        %v3693 = vld [vmem:[#allocation2 + $0x10] sm:$0xff]
        %v3694 = vld [vmem:[#allocation2 + $0x18] sm:$0xff]
        %v3695 = vld [vmem:[#allocation2 + $0x20] sm:$0xff]
        %v3696 = vld [vmem:[#allocation2 + $0x28] sm:$0xff]
        %v3697 = vld [vmem:[#allocation2 + $0x30] sm:$0xff]
        %v3698 = vld [vmem:[#allocation2 + $0x38] sm:$0xff]
        %v3699 = vld [vmem:[#allocation2 + $0x40] sm:$0xff]
        %v3700 = vld [vmem:[#allocation2 + $0x48] sm:$0xff]
        %v3701 = vld [vmem:[#allocation2 + $0x50] sm:$0xff]
        %v3702 = vld [vmem:[#allocation2 + $0x58] sm:$0xff]
        %v3703 = vld [vmem:[#allocation2 + $0x60] sm:$0xff]
        %v3704 = vld [vmem:[#allocation2 + $0x68] sm:$0xff]
        %v3705 = vld [vmem:[#allocation2 + $0x70] sm:$0xff]
        %v3706 = vld [vmem:[#allocation2 + $0x78] sm:$0xff]
        %v3707 = vld [vmem:[#allocation2 + $0x80] sm:$0xff]
        %v3708 = vld [vmem:[#allocation2 + $0x88] sm:$0xff]
        %v3709 = vld [vmem:[#allocation2 + $0x90] sm:$0xff]
        %v3710 = vld [vmem:[#allocation2 + $0x98] sm:$0xff]
        %v3711 = vld [vmem:[#allocation2 + $0xa0] sm:$0xff]
        %v3712 = vld [vmem:[#allocation2 + $0xa8] sm:$0xff]
        %v3713 = vld [vmem:[#allocation2 + $0xb0] sm:$0xff]
        %v3714 = vld [vmem:[#allocation2 + $0xb8] sm:$0xff]
        %v3715 = vld [vmem:[#allocation2 + $0xc0] sm:$0xff]
        %v3716 = vld [vmem:[#allocation2 + $0xc8] sm:$0xff]
        %v3717 = vld [vmem:[#allocation2 + $0xd0] sm:$0xff]
        %v3718 = vld [vmem:[#allocation2 + $0xd8] sm:$0xff]
        %v3719 = vld [vmem:[#allocation2 + $0xe0] sm:$0xff]
        %v3720 = vld [vmem:[#allocation2 + $0xe8] sm:$0xff]
        %v3721 = vld [vmem:[#allocation2 + $0xf0] sm:$0xff]
        %v3722 = vld [vmem:[#allocation2 + $0xf8] sm:$0xff]
        %v3723 = vld [vmem:[#allocation2 + $0x100] sm:$0xff]
        %v3724 = vld [vmem:[#allocation2 + $0x108] sm:$0xff]
        %v3725 = vld [vmem:[#allocation2 + $0x110] sm:$0xff]
        %v3726 = vld [vmem:[#allocation2 + $0x118] sm:$0xff]
        %v3727 = vld [vmem:[#allocation2 + $0x120] sm:$0xff]
        %v3728 = vld [vmem:[#allocation2 + $0x128] sm:$0xff]
        %v3729 = vld [vmem:[#allocation2 + $0x130] sm:$0xff]
        %v3730 = vld [vmem:[#allocation2 + $0x138] sm:$0xff]
        %v3731 = vld [vmem:[#allocation2 + $0x140] sm:$0xff]
        %v3732 = vld [vmem:[#allocation2 + $0x148] sm:$0xff]
        %v3733 = vld [vmem:[#allocation2 + $0x150] sm:$0xff]
        %v3734 = vld [vmem:[#allocation2 + $0x158] sm:$0xff]
        %v3736 = vsel %vm499, %v3690, 0
        %3738 = vmatprep.subr.mxu0 %v3692
        %3739 = vmatpush1.msra.mxu0 %v3691
        %3740 = vmatprep.subr.mxu0 %v3696
        %3741 = vmatpush1.msra.mxu0 %v3695
        %3742 = vmatprep.subr.mxu0 %v3700
        %3743 = vmatpush1.msra.mxu0 %v3699
        %3744 = vmatprep.subr.mxu0 %v3704
        %3745 = vmatpush1.msra.mxu0 %v3703
        %3746 = vmatprep.subr.mxu0 %v3708
        %3747 = vmatpush1.msra.mxu0 %v3707
        %3748 = vmatprep.subr.mxu0 %v3712
        %3749 = vmatpush1.msra.mxu0 %v3711
        %3750 = vmatprep.subr.mxu0 %v3716
        %3751 = vmatpush1.msra.mxu0 %v3715
        %3752 = vmatprep.subr.mxu0 %v3720
        %3753 = vmatpush1.msra.mxu0 %v3719
        %3754 = vmatprep.subr.mxu0 %v3724
        %3755 = vmatpush1.msra.mxu0 %v3723
        %3756 = vmatprep.subr.mxu0 %v3728
        %3757 = vmatpush1.msra.mxu0 %v3727
        %3758 = vmatprep.subr.mxu0 %v3732
        %3759 = vmatpush1.msra.mxu0 %v3731
        %3760 = vmatprep.subr.mxu0 0.0
        %3761 = vmatpush1.msra.mxu0 0.0
        %3762 = vmatprep.subr.mxu0 0.0
        %3763 = vmatpush1.msra.mxu0 0.0
        %3764 = vmatprep.subr.mxu0 0.0
        %3765 = vmatpush1.msra.mxu0 0.0
        %3766 = vmatprep.subr.mxu0 0.0
        %3767 = vmatpush1.msra.mxu0 0.0
        %3768 = vmatprep.subr.mxu0 0.0
        %3769 = vmatpush1.msra.mxu0 0.0
        %3770 = vmatprep.subr.mxu0 0.0
        %3771 = vmatpush1.msra.mxu0 0.0
        %3772 = vmatprep.subr.mxu0 0.0
        %3773 = vmatpush1.msra.mxu0 0.0
        %3774 = vmatprep.subr.mxu0 0.0
        %3775 = vmatpush1.msra.mxu0 0.0
        %3776 = vmatprep.subr.mxu0 0.0
        %3777 = vmatpush1.msra.mxu0 0.0
        %3778 = vmatprep.subr.mxu0 0.0
        %3779 = vmatpush1.msra.mxu0 0.0
        %3780 = vmatprep.subr.mxu0 0.0
        %3781 = vmatpush1.msra.mxu0 0.0
        %3782 = vmatprep.subr.mxu0 0.0
        %3783 = vmatpush1.msra.mxu0 0.0
        %3784 = vmatprep.subr.mxu0 0.0
        %3785 = vmatpush1.msra.mxu0 0.0
        %3786 = vmatprep.subr.mxu0 0.0
        %3787 = vmatpush1.msra.mxu0 0.0
        %3788 = vmatprep.subr.mxu0 0.0
        %3789 = vmatpush1.msra.mxu0 0.0
        %3790 = vmatprep.subr.mxu0 0.0
        %3791 = vmatpush1.msra.mxu0 0.0
        %3792 = vmatprep.subr.mxu0 0.0
        %3793 = vmatpush1.msra.mxu0 0.0
        %3794 = vmatprep.subr.mxu0 0.0
        %3795 = vmatpush1.msra.mxu0 0.0
        %3796 = vmatprep.subr.mxu0 0.0
        %3797 = vmatpush1.msra.mxu0 0.0
        %3798 = vmatprep.subr.mxu0 0.0
        %3799 = vmatpush1.msra.mxu0 0.0
        %3800 = vmatprep.subr.mxu0 0.0
        %3801 = vmatpush1.msra.mxu0 0.0
        %3802 = vmatprep.mubr.f32.mxu0 0.0
        %3803 = vmatmul.mubr.f32.gmra.mrb[0].mxu0 %v3736
        %v3804 = vpop.f32.mrb[0].mxu0
        %v3805 = vadd.f32 0.0, %v3804
        %v3806 = vpop.f32.mrb[0].mxu0
        %v3807 = vadd.f32 0.0, %v3806
        %3808 = vdwg.mxu0
        %3809 = vmatprep.subr.mxu0 %v3694
        %3810 = vmatpush1.msra.mxu0 %v3693
        %3811 = vmatprep.subr.mxu0 %v3698
        %3812 = vmatpush1.msra.mxu0 %v3697
        %3813 = vmatprep.subr.mxu0 %v3702
        %3814 = vmatpush1.msra.mxu0 %v3701
        %3815 = vmatprep.subr.mxu0 %v3706
        %3816 = vmatpush1.msra.mxu0 %v3705
        %3817 = vmatprep.subr.mxu0 %v3710
        %3818 = vmatpush1.msra.mxu0 %v3709
        %3819 = vmatprep.subr.mxu0 %v3714
        %3820 = vmatpush1.msra.mxu0 %v3713
        %3821 = vmatprep.subr.mxu0 %v3718
        %3822 = vmatpush1.msra.mxu0 %v3717
        %3823 = vmatprep.subr.mxu0 %v3722
        %3824 = vmatpush1.msra.mxu0 %v3721
        %3825 = vmatprep.subr.mxu0 %v3726
        %3826 = vmatpush1.msra.mxu0 %v3725
        %3827 = vmatprep.subr.mxu0 %v3730
        %3828 = vmatpush1.msra.mxu0 %v3729
        %3829 = vmatprep.subr.mxu0 %v3734
        %3830 = vmatpush1.msra.mxu0 %v3733
        %3831 = vmatprep.subr.mxu0 0.0
        %3832 = vmatpush1.msra.mxu0 0.0
        %3833 = vmatprep.subr.mxu0 0.0
        %3834 = vmatpush1.msra.mxu0 0.0
        %3835 = vmatprep.subr.mxu0 0.0
        %3836 = vmatpush1.msra.mxu0 0.0
        %3837 = vmatprep.subr.mxu0 0.0
        %3838 = vmatpush1.msra.mxu0 0.0
        %3839 = vmatprep.subr.mxu0 0.0
        %3840 = vmatpush1.msra.mxu0 0.0
        %3841 = vmatprep.subr.mxu0 0.0
        %3842 = vmatpush1.msra.mxu0 0.0
        %3843 = vmatprep.subr.mxu0 0.0
        %3844 = vmatpush1.msra.mxu0 0.0
        %3845 = vmatprep.subr.mxu0 0.0
        %3846 = vmatpush1.msra.mxu0 0.0
        %3847 = vmatprep.subr.mxu0 0.0
        %3848 = vmatpush1.msra.mxu0 0.0
        %3849 = vmatprep.subr.mxu0 0.0
        %3850 = vmatpush1.msra.mxu0 0.0
        %3851 = vmatprep.subr.mxu0 0.0
        %3852 = vmatpush1.msra.mxu0 0.0
        %3853 = vmatprep.subr.mxu0 0.0
        %3854 = vmatpush1.msra.mxu0 0.0
        %3855 = vmatprep.subr.mxu0 0.0
        %3856 = vmatpush1.msra.mxu0 0.0
        %3857 = vmatprep.subr.mxu0 0.0
        %3858 = vmatpush1.msra.mxu0 0.0
        %3859 = vmatprep.subr.mxu0 0.0
        %3860 = vmatpush1.msra.mxu0 0.0
        %3861 = vmatprep.subr.mxu0 0.0
        %3862 = vmatpush1.msra.mxu0 0.0
        %3863 = vmatprep.subr.mxu0 0.0
        %3864 = vmatpush1.msra.mxu0 0.0
        %3865 = vmatprep.subr.mxu0 0.0
        %3866 = vmatpush1.msra.mxu0 0.0
        %3867 = vmatprep.subr.mxu0 0.0
        %3868 = vmatpush1.msra.mxu0 0.0
        %3869 = vmatprep.subr.mxu0 0.0
        %3870 = vmatpush1.msra.mxu0 0.0
        %3871 = vmatprep.subr.mxu0 0.0
        %3872 = vmatpush1.msra.mxu0 0.0
        %3873 = vmatprep.mubr.f32.mxu0 0.0
        %3874 = vmatmul.mubr.f32.gmra.mrb[0].mxu0 %v3736
        %v3875 = vpop.f32.mrb[0].mxu0
        %v3876 = vadd.f32 0.0, %v3875
        %v3877 = vpop.f32.mrb[0].mxu0
        %v3878 = vadd.f32 0.0, %v3877
        %3879 = vdwg.mxu0
        %v3880 = vadd.f32 %v3685, %v3805
        %v3881 = vadd.f32 %v3686, %v3807
        %v3882 = vadd.f32 %v3687, %v3876
        %v3883 = vadd.f32 %v3688, %v3878
        %3884 = vst [vmem:[#allocation3] sm:$0xff] %v3880
        %3885 = vst [vmem:[#allocation3 + $0x8] sm:$0xff] %v3881
        %3886 = vst [vmem:[#allocation3 + $0x10] sm:$0xff] %v3882
        %3887 = vst [vmem:[#allocation3 + $0x18] sm:$0xff] %v3883
        %v3888 = vld [vmem:[%s175 + $0x8] sm:$0xff]
        %v3889 = vld [vmem:[%s175 + $0x10] sm:$0xff]
        %v3890 = vld [vmem:[%s175 + $0x18] sm:$0xff]
        %v3891 = vld [vmem:[%s175 + $0x20] sm:$0xff]
        %v3892 = vld [vmem:[%s175 + $0x28] sm:$0xff]
        %3898 = vrot.lane.b32.xlu0 %v3888, 48
        %v3899 = vpop.permute.xlu0 %3898
        %3900 = vrot.lane.b32.xlu0 %v3889, 48
        %v3901 = vpop.permute.xlu0 %3900
        %3902 = vrot.lane.b32.xlu0 %v3890, 48
        %v3903 = vpop.permute.xlu0 %3902
        %3904 = vrot.lane.b32.xlu0 %v3891, 48
        %v3905 = vpop.permute.xlu0 %3904
        %3906 = vrot.lane.b32.xlu0 %v3892, 48
        %v3907 = vpop.permute.xlu0 %3906
        %v3908 = vsel %vm1651, %v3899, %v3901
        %v3909 = vsel %vm1651, %v3901, %v3903
        %v3910 = vsel %vm1651, %v3903, %v3905
        %v3911 = vsel %vm1651, %v3905, %v3907
        %3916 = vst [vmem:[#allocation2] sm:$0xff] %v3908
        %3917 = vst [vmem:[#allocation2 + $0x8] sm:$0xff] %v3909
        %3918 = vst [vmem:[#allocation2 + $0x10] sm:$0xff] %v3910
        %3919 = vst [vmem:[#allocation2 + $0x18] sm:$0xff] %v3911
        %3920 = vrot.lane.b32.xlu0 %v3888, 47
        %v3921 = vpop.permute.xlu0 %3920
        %3922 = vrot.lane.b32.xlu0 %v3889, 47
        %v3923 = vpop.permute.xlu0 %3922
        %3924 = vrot.lane.b32.xlu0 %v3890, 47
        %v3925 = vpop.permute.xlu0 %3924
        %3926 = vrot.lane.b32.xlu0 %v3891, 47
        %v3927 = vpop.permute.xlu0 %3926
        %3928 = vrot.lane.b32.xlu0 %v3892, 47
        %v3929 = vpop.permute.xlu0 %3928
        %v3930 = vsel %vm1674, %v3921, %v3923
        %v3931 = vsel %vm1674, %v3923, %v3925
        %v3932 = vsel %vm1674, %v3925, %v3927
        %v3933 = vsel %vm1674, %v3927, %v3929
        %3938 = vst [vmem:[#allocation2 + $0x20] sm:$0xff] %v3930
        %3939 = vst [vmem:[#allocation2 + $0x28] sm:$0xff] %v3931
        %3940 = vst [vmem:[#allocation2 + $0x30] sm:$0xff] %v3932
        %3941 = vst [vmem:[#allocation2 + $0x38] sm:$0xff] %v3933
        %3942 = vrot.lane.b32.xlu0 %v3888, 46
        %v3943 = vpop.permute.xlu0 %3942
        %3944 = vrot.lane.b32.xlu0 %v3889, 46
        %v3945 = vpop.permute.xlu0 %3944
        %3946 = vrot.lane.b32.xlu0 %v3890, 46
        %v3947 = vpop.permute.xlu0 %3946
        %3948 = vrot.lane.b32.xlu0 %v3891, 46
        %v3949 = vpop.permute.xlu0 %3948
        %3950 = vrot.lane.b32.xlu0 %v3892, 46
        %v3951 = vpop.permute.xlu0 %3950
        %v3952 = vsel %vm1697, %v3943, %v3945
        %v3953 = vsel %vm1697, %v3945, %v3947
        %v3954 = vsel %vm1697, %v3947, %v3949
        %v3955 = vsel %vm1697, %v3949, %v3951
        %3960 = vst [vmem:[#allocation2 + $0x40] sm:$0xff] %v3952
        %3961 = vst [vmem:[#allocation2 + $0x48] sm:$0xff] %v3953
        %3962 = vst [vmem:[#allocation2 + $0x50] sm:$0xff] %v3954
        %3963 = vst [vmem:[#allocation2 + $0x58] sm:$0xff] %v3955
        %3964 = vrot.lane.b32.xlu0 %v3888, 45
        %v3965 = vpop.permute.xlu0 %3964
        %3966 = vrot.lane.b32.xlu0 %v3889, 45
        %v3967 = vpop.permute.xlu0 %3966
        %3968 = vrot.lane.b32.xlu0 %v3890, 45
        %v3969 = vpop.permute.xlu0 %3968
        %3970 = vrot.lane.b32.xlu0 %v3891, 45
        %v3971 = vpop.permute.xlu0 %3970
        %3972 = vrot.lane.b32.xlu0 %v3892, 45
        %v3973 = vpop.permute.xlu0 %3972
        %v3974 = vsel %vm1720, %v3965, %v3967
        %v3975 = vsel %vm1720, %v3967, %v3969
        %v3976 = vsel %vm1720, %v3969, %v3971
        %v3977 = vsel %vm1720, %v3971, %v3973
        %3982 = vst [vmem:[#allocation2 + $0x60] sm:$0xff] %v3974
        %3983 = vst [vmem:[#allocation2 + $0x68] sm:$0xff] %v3975
        %3984 = vst [vmem:[#allocation2 + $0x70] sm:$0xff] %v3976
        %3985 = vst [vmem:[#allocation2 + $0x78] sm:$0xff] %v3977
        %3986 = vrot.lane.b32.xlu0 %v3888, 44
        %v3987 = vpop.permute.xlu0 %3986
        %3988 = vrot.lane.b32.xlu0 %v3889, 44
        %v3989 = vpop.permute.xlu0 %3988
        %3990 = vrot.lane.b32.xlu0 %v3890, 44
        %v3991 = vpop.permute.xlu0 %3990
        %3992 = vrot.lane.b32.xlu0 %v3891, 44
        %v3993 = vpop.permute.xlu0 %3992
        %3994 = vrot.lane.b32.xlu0 %v3892, 44
        %v3995 = vpop.permute.xlu0 %3994
        %v3996 = vsel %vm1743, %v3987, %v3989
        %v3997 = vsel %vm1743, %v3989, %v3991
        %v3998 = vsel %vm1743, %v3991, %v3993
        %v3999 = vsel %vm1743, %v3993, %v3995
        %4004 = vst [vmem:[#allocation2 + $0x80] sm:$0xff] %v3996
        %4005 = vst [vmem:[#allocation2 + $0x88] sm:$0xff] %v3997
        %4006 = vst [vmem:[#allocation2 + $0x90] sm:$0xff] %v3998
        %4007 = vst [vmem:[#allocation2 + $0x98] sm:$0xff] %v3999
        %4008 = vrot.lane.b32.xlu0 %v3888, 43
        %v4009 = vpop.permute.xlu0 %4008
        %4010 = vrot.lane.b32.xlu0 %v3889, 43
        %v4011 = vpop.permute.xlu0 %4010
        %4012 = vrot.lane.b32.xlu0 %v3890, 43
        %v4013 = vpop.permute.xlu0 %4012
        %4014 = vrot.lane.b32.xlu0 %v3891, 43
        %v4015 = vpop.permute.xlu0 %4014
        %4016 = vrot.lane.b32.xlu0 %v3892, 43
        %v4017 = vpop.permute.xlu0 %4016
        %v4018 = vsel %vm1766, %v4009, %v4011
        %v4019 = vsel %vm1766, %v4011, %v4013
        %v4020 = vsel %vm1766, %v4013, %v4015
        %v4021 = vsel %vm1766, %v4015, %v4017
        %4026 = vst [vmem:[#allocation2 + $0xa0] sm:$0xff] %v4018
        %4027 = vst [vmem:[#allocation2 + $0xa8] sm:$0xff] %v4019
        %4028 = vst [vmem:[#allocation2 + $0xb0] sm:$0xff] %v4020
        %4029 = vst [vmem:[#allocation2 + $0xb8] sm:$0xff] %v4021
        %4030 = vrot.lane.b32.xlu0 %v3888, 42
        %v4031 = vpop.permute.xlu0 %4030
        %4032 = vrot.lane.b32.xlu0 %v3889, 42
        %v4033 = vpop.permute.xlu0 %4032
        %4034 = vrot.lane.b32.xlu0 %v3890, 42
        %v4035 = vpop.permute.xlu0 %4034
        %4036 = vrot.lane.b32.xlu0 %v3891, 42
        %v4037 = vpop.permute.xlu0 %4036
        %4038 = vrot.lane.b32.xlu0 %v3892, 42
        %v4039 = vpop.permute.xlu0 %4038
        %v4040 = vsel %vm1789, %v4031, %v4033
        %v4041 = vsel %vm1789, %v4033, %v4035
        %v4042 = vsel %vm1789, %v4035, %v4037
        %v4043 = vsel %vm1789, %v4037, %v4039
        %4048 = vst [vmem:[#allocation2 + $0xc0] sm:$0xff] %v4040
        %4049 = vst [vmem:[#allocation2 + $0xc8] sm:$0xff] %v4041
        %4050 = vst [vmem:[#allocation2 + $0xd0] sm:$0xff] %v4042
        %4051 = vst [vmem:[#allocation2 + $0xd8] sm:$0xff] %v4043
        %4052 = vrot.lane.b32.xlu0 %v3888, 41
        %v4053 = vpop.permute.xlu0 %4052
        %4054 = vrot.lane.b32.xlu0 %v3889, 41
        %v4055 = vpop.permute.xlu0 %4054
        %4056 = vrot.lane.b32.xlu0 %v3890, 41
        %v4057 = vpop.permute.xlu0 %4056
        %4058 = vrot.lane.b32.xlu0 %v3891, 41
        %v4059 = vpop.permute.xlu0 %4058
        %4060 = vrot.lane.b32.xlu0 %v3892, 41
        %v4061 = vpop.permute.xlu0 %4060
        %v4062 = vsel %vm1812, %v4053, %v4055
        %v4063 = vsel %vm1812, %v4055, %v4057
        %v4064 = vsel %vm1812, %v4057, %v4059
        %v4065 = vsel %vm1812, %v4059, %v4061
        %4070 = vst [vmem:[#allocation2 + $0xe0] sm:$0xff] %v4062
        %4071 = vst [vmem:[#allocation2 + $0xe8] sm:$0xff] %v4063
        %4072 = vst [vmem:[#allocation2 + $0xf0] sm:$0xff] %v4064
        %4073 = vst [vmem:[#allocation2 + $0xf8] sm:$0xff] %v4065
        %4074 = vrot.lane.b32.xlu0 %v3888, 40
        %v4075 = vpop.permute.xlu0 %4074
        %4076 = vrot.lane.b32.xlu0 %v3889, 40
        %v4077 = vpop.permute.xlu0 %4076
        %4078 = vrot.lane.b32.xlu0 %v3890, 40
        %v4079 = vpop.permute.xlu0 %4078
        %4080 = vrot.lane.b32.xlu0 %v3891, 40
        %v4081 = vpop.permute.xlu0 %4080
        %4082 = vrot.lane.b32.xlu0 %v3892, 40
        %v4083 = vpop.permute.xlu0 %4082
        %v4084 = vsel %vm1835, %v4075, %v4077
        %v4085 = vsel %vm1835, %v4077, %v4079
        %v4086 = vsel %vm1835, %v4079, %v4081
        %v4087 = vsel %vm1835, %v4081, %v4083
        %4092 = vst [vmem:[#allocation2 + $0x100] sm:$0xff] %v4084
        %4093 = vst [vmem:[#allocation2 + $0x108] sm:$0xff] %v4085
        %4094 = vst [vmem:[#allocation2 + $0x110] sm:$0xff] %v4086
        %4095 = vst [vmem:[#allocation2 + $0x118] sm:$0xff] %v4087
        %4096 = vrot.lane.b32.xlu0 %v3888, 39
        %v4097 = vpop.permute.xlu0 %4096
        %4098 = vrot.lane.b32.xlu0 %v3889, 39
        %v4099 = vpop.permute.xlu0 %4098
        %4100 = vrot.lane.b32.xlu0 %v3890, 39
        %v4101 = vpop.permute.xlu0 %4100
        %4102 = vrot.lane.b32.xlu0 %v3891, 39
        %v4103 = vpop.permute.xlu0 %4102
        %4104 = vrot.lane.b32.xlu0 %v3892, 39
        %v4105 = vpop.permute.xlu0 %4104
        %vm4106 = vcmask 318464
        %v4107 = vsel %vm4106, %v4097, %v4099
        %v4108 = vsel %vm4106, %v4099, %v4101
        %v4109 = vsel %vm4106, %v4101, %v4103
        %v4110 = vsel %vm4106, %v4103, %v4105
        %4115 = vst [vmem:[#allocation2 + $0x120] sm:$0xff] %v4107
        %4116 = vst [vmem:[#allocation2 + $0x128] sm:$0xff] %v4108
        %4117 = vst [vmem:[#allocation2 + $0x130] sm:$0xff] %v4109
        %4118 = vst [vmem:[#allocation2 + $0x138] sm:$0xff] %v4110
        %4119 = vrot.lane.b32.xlu0 %v3888, 38
        %v4120 = vpop.permute.xlu0 %4119
        %4121 = vrot.lane.b32.xlu0 %v3889, 38
        %v4122 = vpop.permute.xlu0 %4121
        %4123 = vrot.lane.b32.xlu0 %v3890, 38
        %v4124 = vpop.permute.xlu0 %4123
        %4125 = vrot.lane.b32.xlu0 %v3891, 38
        %v4126 = vpop.permute.xlu0 %4125
        %4127 = vrot.lane.b32.xlu0 %v3892, 38
        %v4128 = vpop.permute.xlu0 %4127
        %vm4129 = vcmask 310272
        %v4130 = vsel %vm4129, %v4120, %v4122
        %v4131 = vsel %vm4129, %v4122, %v4124
        %v4132 = vsel %vm4129, %v4124, %v4126
        %v4133 = vsel %vm4129, %v4126, %v4128
        %4138 = vst [vmem:[#allocation2 + $0x140] sm:$0xff] %v4130
        %4139 = vst [vmem:[#allocation2 + $0x148] sm:$0xff] %v4131
        %4140 = vst [vmem:[#allocation2 + $0x150] sm:$0xff] %v4132
        %4141 = vst [vmem:[#allocation2 + $0x158] sm:$0xff] %v4133
        %v4142 = vld [vmem:[#allocation3] sm:$0xff]
        %v4143 = vld [vmem:[#allocation3 + $0x8] sm:$0xff]
        %v4144 = vld [vmem:[#allocation3 + $0x10] sm:$0xff]
        %v4145 = vld [vmem:[#allocation3 + $0x18] sm:$0xff]
        %s4146 = scalar_lea.vmem [#allocation7], 64
        %v4147 = vld [vmem:[%s4146] sm:$0xff]
        %v4148 = vld [vmem:[#allocation2] sm:$0xff]
        %v4149 = vld [vmem:[#allocation2 + $0x8] sm:$0xff]
        %v4150 = vld [vmem:[#allocation2 + $0x10] sm:$0xff]
        %v4151 = vld [vmem:[#allocation2 + $0x18] sm:$0xff]
        %v4152 = vld [vmem:[#allocation2 + $0x20] sm:$0xff]
        %v4153 = vld [vmem:[#allocation2 + $0x28] sm:$0xff]
        %v4154 = vld [vmem:[#allocation2 + $0x30] sm:$0xff]
        %v4155 = vld [vmem:[#allocation2 + $0x38] sm:$0xff]
        %v4156 = vld [vmem:[#allocation2 + $0x40] sm:$0xff]
        %v4157 = vld [vmem:[#allocation2 + $0x48] sm:$0xff]
        %v4158 = vld [vmem:[#allocation2 + $0x50] sm:$0xff]
        %v4159 = vld [vmem:[#allocation2 + $0x58] sm:$0xff]
        %v4160 = vld [vmem:[#allocation2 + $0x60] sm:$0xff]
        %v4161 = vld [vmem:[#allocation2 + $0x68] sm:$0xff]
        %v4162 = vld [vmem:[#allocation2 + $0x70] sm:$0xff]
        %v4163 = vld [vmem:[#allocation2 + $0x78] sm:$0xff]
        %v4164 = vld [vmem:[#allocation2 + $0x80] sm:$0xff]
        %v4165 = vld [vmem:[#allocation2 + $0x88] sm:$0xff]
        %v4166 = vld [vmem:[#allocation2 + $0x90] sm:$0xff]
        %v4167 = vld [vmem:[#allocation2 + $0x98] sm:$0xff]
        %v4168 = vld [vmem:[#allocation2 + $0xa0] sm:$0xff]
        %v4169 = vld [vmem:[#allocation2 + $0xa8] sm:$0xff]
        %v4170 = vld [vmem:[#allocation2 + $0xb0] sm:$0xff]
        %v4171 = vld [vmem:[#allocation2 + $0xb8] sm:$0xff]
        %v4172 = vld [vmem:[#allocation2 + $0xc0] sm:$0xff]
        %v4173 = vld [vmem:[#allocation2 + $0xc8] sm:$0xff]
        %v4174 = vld [vmem:[#allocation2 + $0xd0] sm:$0xff]
        %v4175 = vld [vmem:[#allocation2 + $0xd8] sm:$0xff]
        %v4176 = vld [vmem:[#allocation2 + $0xe0] sm:$0xff]
        %v4177 = vld [vmem:[#allocation2 + $0xe8] sm:$0xff]
        %v4178 = vld [vmem:[#allocation2 + $0xf0] sm:$0xff]
        %v4179 = vld [vmem:[#allocation2 + $0xf8] sm:$0xff]
        %v4180 = vld [vmem:[#allocation2 + $0x100] sm:$0xff]
        %v4181 = vld [vmem:[#allocation2 + $0x108] sm:$0xff]
        %v4182 = vld [vmem:[#allocation2 + $0x110] sm:$0xff]
        %v4183 = vld [vmem:[#allocation2 + $0x118] sm:$0xff]
        %v4184 = vld [vmem:[#allocation2 + $0x120] sm:$0xff]
        %v4185 = vld [vmem:[#allocation2 + $0x128] sm:$0xff]
        %v4186 = vld [vmem:[#allocation2 + $0x130] sm:$0xff]
        %v4187 = vld [vmem:[#allocation2 + $0x138] sm:$0xff]
        %v4188 = vld [vmem:[#allocation2 + $0x140] sm:$0xff]
        %v4189 = vld [vmem:[#allocation2 + $0x148] sm:$0xff]
        %v4190 = vld [vmem:[#allocation2 + $0x150] sm:$0xff]
        %v4191 = vld [vmem:[#allocation2 + $0x158] sm:$0xff]
        %v4193 = vsel %vm499, %v4147, 0
        %4195 = vmatprep.subr.mxu0 %v4149
        %4196 = vmatpush1.msra.mxu0 %v4148
        %4197 = vmatprep.subr.mxu0 %v4153
        %4198 = vmatpush1.msra.mxu0 %v4152
        %4199 = vmatprep.subr.mxu0 %v4157
        %4200 = vmatpush1.msra.mxu0 %v4156
        %4201 = vmatprep.subr.mxu0 %v4161
        %4202 = vmatpush1.msra.mxu0 %v4160
        %4203 = vmatprep.subr.mxu0 %v4165
        %4204 = vmatpush1.msra.mxu0 %v4164
        %4205 = vmatprep.subr.mxu0 %v4169
        %4206 = vmatpush1.msra.mxu0 %v4168
        %4207 = vmatprep.subr.mxu0 %v4173
        %4208 = vmatpush1.msra.mxu0 %v4172
        %4209 = vmatprep.subr.mxu0 %v4177
        %4210 = vmatpush1.msra.mxu0 %v4176
        %4211 = vmatprep.subr.mxu0 %v4181
        %4212 = vmatpush1.msra.mxu0 %v4180
        %4213 = vmatprep.subr.mxu0 %v4185
        %4214 = vmatpush1.msra.mxu0 %v4184
        %4215 = vmatprep.subr.mxu0 %v4189
        %4216 = vmatpush1.msra.mxu0 %v4188
        %4217 = vmatprep.subr.mxu0 0.0
        %4218 = vmatpush1.msra.mxu0 0.0
        %4219 = vmatprep.subr.mxu0 0.0
        %4220 = vmatpush1.msra.mxu0 0.0
        %4221 = vmatprep.subr.mxu0 0.0
        %4222 = vmatpush1.msra.mxu0 0.0
        %4223 = vmatprep.subr.mxu0 0.0
        %4224 = vmatpush1.msra.mxu0 0.0
        %4225 = vmatprep.subr.mxu0 0.0
        %4226 = vmatpush1.msra.mxu0 0.0
        %4227 = vmatprep.subr.mxu0 0.0
        %4228 = vmatpush1.msra.mxu0 0.0
        %4229 = vmatprep.subr.mxu0 0.0
        %4230 = vmatpush1.msra.mxu0 0.0
        %4231 = vmatprep.subr.mxu0 0.0
        %4232 = vmatpush1.msra.mxu0 0.0
        %4233 = vmatprep.subr.mxu0 0.0
        %4234 = vmatpush1.msra.mxu0 0.0
        %4235 = vmatprep.subr.mxu0 0.0
        %4236 = vmatpush1.msra.mxu0 0.0
        %4237 = vmatprep.subr.mxu0 0.0
        %4238 = vmatpush1.msra.mxu0 0.0
        %4239 = vmatprep.subr.mxu0 0.0
        %4240 = vmatpush1.msra.mxu0 0.0
        %4241 = vmatprep.subr.mxu0 0.0
        %4242 = vmatpush1.msra.mxu0 0.0
        %4243 = vmatprep.subr.mxu0 0.0
        %4244 = vmatpush1.msra.mxu0 0.0
        %4245 = vmatprep.subr.mxu0 0.0
        %4246 = vmatpush1.msra.mxu0 0.0
        %4247 = vmatprep.subr.mxu0 0.0
        %4248 = vmatpush1.msra.mxu0 0.0
        %4249 = vmatprep.subr.mxu0 0.0
        %4250 = vmatpush1.msra.mxu0 0.0
        %4251 = vmatprep.subr.mxu0 0.0
        %4252 = vmatpush1.msra.mxu0 0.0
        %4253 = vmatprep.subr.mxu0 0.0
        %4254 = vmatpush1.msra.mxu0 0.0
        %4255 = vmatprep.subr.mxu0 0.0
        %4256 = vmatpush1.msra.mxu0 0.0
        %4257 = vmatprep.subr.mxu0 0.0
        %4258 = vmatpush1.msra.mxu0 0.0
        %4259 = vmatprep.mubr.f32.mxu0 0.0
        %4260 = vmatmul.mubr.f32.gmra.mrb[0].mxu0 %v4193
        %v4261 = vpop.f32.mrb[0].mxu0
        %v4262 = vadd.f32 0.0, %v4261
        %v4263 = vpop.f32.mrb[0].mxu0
        %v4264 = vadd.f32 0.0, %v4263
        %4265 = vdwg.mxu0
        %4266 = vmatprep.subr.mxu0 %v4151
        %4267 = vmatpush1.msra.mxu0 %v4150
        %4268 = vmatprep.subr.mxu0 %v4155
        %4269 = vmatpush1.msra.mxu0 %v4154
        %4270 = vmatprep.subr.mxu0 %v4159
        %4271 = vmatpush1.msra.mxu0 %v4158
        %4272 = vmatprep.subr.mxu0 %v4163
        %4273 = vmatpush1.msra.mxu0 %v4162
        %4274 = vmatprep.subr.mxu0 %v4167
        %4275 = vmatpush1.msra.mxu0 %v4166
        %4276 = vmatprep.subr.mxu0 %v4171
        %4277 = vmatpush1.msra.mxu0 %v4170
        %4278 = vmatprep.subr.mxu0 %v4175
        %4279 = vmatpush1.msra.mxu0 %v4174
        %4280 = vmatprep.subr.mxu0 %v4179
        %4281 = vmatpush1.msra.mxu0 %v4178
        %4282 = vmatprep.subr.mxu0 %v4183
        %4283 = vmatpush1.msra.mxu0 %v4182
        %4284 = vmatprep.subr.mxu0 %v4187
        %4285 = vmatpush1.msra.mxu0 %v4186
        %4286 = vmatprep.subr.mxu0 %v4191
        %4287 = vmatpush1.msra.mxu0 %v4190
        %4288 = vmatprep.subr.mxu0 0.0
        %4289 = vmatpush1.msra.mxu0 0.0
        %4290 = vmatprep.subr.mxu0 0.0
        %4291 = vmatpush1.msra.mxu0 0.0
        %4292 = vmatprep.subr.mxu0 0.0
        %4293 = vmatpush1.msra.mxu0 0.0
        %4294 = vmatprep.subr.mxu0 0.0
        %4295 = vmatpush1.msra.mxu0 0.0
        %4296 = vmatprep.subr.mxu0 0.0
        %4297 = vmatpush1.msra.mxu0 0.0
        %4298 = vmatprep.subr.mxu0 0.0
        %4299 = vmatpush1.msra.mxu0 0.0
        %4300 = vmatprep.subr.mxu0 0.0
        %4301 = vmatpush1.msra.mxu0 0.0
        %4302 = vmatprep.subr.mxu0 0.0
        %4303 = vmatpush1.msra.mxu0 0.0
        %4304 = vmatprep.subr.mxu0 0.0
        %4305 = vmatpush1.msra.mxu0 0.0
        %4306 = vmatprep.subr.mxu0 0.0
        %4307 = vmatpush1.msra.mxu0 0.0
        %4308 = vmatprep.subr.mxu0 0.0
        %4309 = vmatpush1.msra.mxu0 0.0
        %4310 = vmatprep.subr.mxu0 0.0
        %4311 = vmatpush1.msra.mxu0 0.0
        %4312 = vmatprep.subr.mxu0 0.0
        %4313 = vmatpush1.msra.mxu0 0.0
        %4314 = vmatprep.subr.mxu0 0.0
        %4315 = vmatpush1.msra.mxu0 0.0
        %4316 = vmatprep.subr.mxu0 0.0
        %4317 = vmatpush1.msra.mxu0 0.0
        %4318 = vmatprep.subr.mxu0 0.0
        %4319 = vmatpush1.msra.mxu0 0.0
        %4320 = vmatprep.subr.mxu0 0.0
        %4321 = vmatpush1.msra.mxu0 0.0
        %4322 = vmatprep.subr.mxu0 0.0
        %4323 = vmatpush1.msra.mxu0 0.0
        %4324 = vmatprep.subr.mxu0 0.0
        %4325 = vmatpush1.msra.mxu0 0.0
        %4326 = vmatprep.subr.mxu0 0.0
        %4327 = vmatpush1.msra.mxu0 0.0
        %4328 = vmatprep.subr.mxu0 0.0
        %4329 = vmatpush1.msra.mxu0 0.0
        %4330 = vmatprep.mubr.f32.mxu0 0.0
        %4331 = vmatmul.mubr.f32.gmra.mrb[0].mxu0 %v4193
        %v4332 = vpop.f32.mrb[0].mxu0
        %v4333 = vadd.f32 0.0, %v4332
        %v4334 = vpop.f32.mrb[0].mxu0
        %v4335 = vadd.f32 0.0, %v4334
        %4336 = vdwg.mxu0
        %v4337 = vadd.f32 %v4142, %v4262
        %v4338 = vadd.f32 %v4143, %v4264
        %v4339 = vadd.f32 %v4144, %v4333
        %v4340 = vadd.f32 %v4145, %v4335
        %4341 = vst [vmem:[#allocation3] sm:$0xff] %v4337
        %4342 = vst [vmem:[#allocation3 + $0x8] sm:$0xff] %v4338
        %4343 = vst [vmem:[#allocation3 + $0x10] sm:$0xff] %v4339
        %4344 = vst [vmem:[#allocation3 + $0x18] sm:$0xff] %v4340
        %v4345 = vld [vmem:[%s175 + $0x8] sm:$0xff]
        %v4346 = vld [vmem:[%s175 + $0x10] sm:$0xff]
        %v4347 = vld [vmem:[%s175 + $0x18] sm:$0xff]
        %v4348 = vld [vmem:[%s175 + $0x20] sm:$0xff]
        %v4349 = vld [vmem:[%s175 + $0x28] sm:$0xff]
        %4355 = vrot.lane.b32.xlu0 %v4345, 22
        %v4356 = vpop.permute.xlu0 %4355
        %4357 = vrot.lane.b32.xlu0 %v4346, 22
        %v4358 = vpop.permute.xlu0 %4357
        %4359 = vrot.lane.b32.xlu0 %v4347, 22
        %v4360 = vpop.permute.xlu0 %4359
        %4361 = vrot.lane.b32.xlu0 %v4348, 22
        %v4362 = vpop.permute.xlu0 %4361
        %4363 = vrot.lane.b32.xlu0 %v4349, 22
        %v4364 = vpop.permute.xlu0 %4363
        %v4365 = vsel %vm2117, %v4356, %v4358
        %v4366 = vsel %vm2117, %v4358, %v4360
        %v4367 = vsel %vm2117, %v4360, %v4362
        %v4368 = vsel %vm2117, %v4362, %v4364
        %4373 = vst [vmem:[#allocation2] sm:$0xff] %v4365
        %4374 = vst [vmem:[#allocation2 + $0x8] sm:$0xff] %v4366
        %4375 = vst [vmem:[#allocation2 + $0x10] sm:$0xff] %v4367
        %4376 = vst [vmem:[#allocation2 + $0x18] sm:$0xff] %v4368
        %4377 = vrot.lane.b32.xlu0 %v4345, 21
        %v4378 = vpop.permute.xlu0 %4377
        %4379 = vrot.lane.b32.xlu0 %v4346, 21
        %v4380 = vpop.permute.xlu0 %4379
        %4381 = vrot.lane.b32.xlu0 %v4347, 21
        %v4382 = vpop.permute.xlu0 %4381
        %4383 = vrot.lane.b32.xlu0 %v4348, 21
        %v4384 = vpop.permute.xlu0 %4383
        %4385 = vrot.lane.b32.xlu0 %v4349, 21
        %v4386 = vpop.permute.xlu0 %4385
        %v4387 = vsel %vm2140, %v4378, %v4380
        %v4388 = vsel %vm2140, %v4380, %v4382
        %v4389 = vsel %vm2140, %v4382, %v4384
        %v4390 = vsel %vm2140, %v4384, %v4386
        %4395 = vst [vmem:[#allocation2 + $0x20] sm:$0xff] %v4387
        %4396 = vst [vmem:[#allocation2 + $0x28] sm:$0xff] %v4388
        %4397 = vst [vmem:[#allocation2 + $0x30] sm:$0xff] %v4389
        %4398 = vst [vmem:[#allocation2 + $0x38] sm:$0xff] %v4390
        %4399 = vrot.lane.b32.xlu0 %v4345, 20
        %v4400 = vpop.permute.xlu0 %4399
        %4401 = vrot.lane.b32.xlu0 %v4346, 20
        %v4402 = vpop.permute.xlu0 %4401
        %4403 = vrot.lane.b32.xlu0 %v4347, 20
        %v4404 = vpop.permute.xlu0 %4403
        %4405 = vrot.lane.b32.xlu0 %v4348, 20
        %v4406 = vpop.permute.xlu0 %4405
        %4407 = vrot.lane.b32.xlu0 %v4349, 20
        %v4408 = vpop.permute.xlu0 %4407
        %v4409 = vsel %vm2163, %v4400, %v4402
        %v4410 = vsel %vm2163, %v4402, %v4404
        %v4411 = vsel %vm2163, %v4404, %v4406
        %v4412 = vsel %vm2163, %v4406, %v4408
        %4417 = vst [vmem:[#allocation2 + $0x40] sm:$0xff] %v4409
        %4418 = vst [vmem:[#allocation2 + $0x48] sm:$0xff] %v4410
        %4419 = vst [vmem:[#allocation2 + $0x50] sm:$0xff] %v4411
        %4420 = vst [vmem:[#allocation2 + $0x58] sm:$0xff] %v4412
        %4421 = vrot.lane.b32.xlu0 %v4345, 19
        %v4422 = vpop.permute.xlu0 %4421
        %4423 = vrot.lane.b32.xlu0 %v4346, 19
        %v4424 = vpop.permute.xlu0 %4423
        %4425 = vrot.lane.b32.xlu0 %v4347, 19
        %v4426 = vpop.permute.xlu0 %4425
        %4427 = vrot.lane.b32.xlu0 %v4348, 19
        %v4428 = vpop.permute.xlu0 %4427
        %4429 = vrot.lane.b32.xlu0 %v4349, 19
        %v4430 = vpop.permute.xlu0 %4429
        %v4431 = vsel %vm2186, %v4422, %v4424
        %v4432 = vsel %vm2186, %v4424, %v4426
        %v4433 = vsel %vm2186, %v4426, %v4428
        %v4434 = vsel %vm2186, %v4428, %v4430
        %4439 = vst [vmem:[#allocation2 + $0x60] sm:$0xff] %v4431
        %4440 = vst [vmem:[#allocation2 + $0x68] sm:$0xff] %v4432
        %4441 = vst [vmem:[#allocation2 + $0x70] sm:$0xff] %v4433
        %4442 = vst [vmem:[#allocation2 + $0x78] sm:$0xff] %v4434
        %4443 = vrot.lane.b32.xlu0 %v4345, 18
        %v4444 = vpop.permute.xlu0 %4443
        %4445 = vrot.lane.b32.xlu0 %v4346, 18
        %v4446 = vpop.permute.xlu0 %4445
        %4447 = vrot.lane.b32.xlu0 %v4347, 18
        %v4448 = vpop.permute.xlu0 %4447
        %4449 = vrot.lane.b32.xlu0 %v4348, 18
        %v4450 = vpop.permute.xlu0 %4449
        %4451 = vrot.lane.b32.xlu0 %v4349, 18
        %v4452 = vpop.permute.xlu0 %4451
        %v4453 = vsel %vm2209, %v4444, %v4446
        %v4454 = vsel %vm2209, %v4446, %v4448
        %v4455 = vsel %vm2209, %v4448, %v4450
        %v4456 = vsel %vm2209, %v4450, %v4452
        %4461 = vst [vmem:[#allocation2 + $0x80] sm:$0xff] %v4453
        %4462 = vst [vmem:[#allocation2 + $0x88] sm:$0xff] %v4454
        %4463 = vst [vmem:[#allocation2 + $0x90] sm:$0xff] %v4455
        %4464 = vst [vmem:[#allocation2 + $0x98] sm:$0xff] %v4456
        %4465 = vrot.lane.b32.xlu0 %v4345, 17
        %v4466 = vpop.permute.xlu0 %4465
        %4467 = vrot.lane.b32.xlu0 %v4346, 17
        %v4468 = vpop.permute.xlu0 %4467
        %4469 = vrot.lane.b32.xlu0 %v4347, 17
        %v4470 = vpop.permute.xlu0 %4469
        %4471 = vrot.lane.b32.xlu0 %v4348, 17
        %v4472 = vpop.permute.xlu0 %4471
        %4473 = vrot.lane.b32.xlu0 %v4349, 17
        %v4474 = vpop.permute.xlu0 %4473
        %v4475 = vsel %vm2232, %v4466, %v4468
        %v4476 = vsel %vm2232, %v4468, %v4470
        %v4477 = vsel %vm2232, %v4470, %v4472
        %v4478 = vsel %vm2232, %v4472, %v4474
        %4483 = vst [vmem:[#allocation2 + $0xa0] sm:$0xff] %v4475
        %4484 = vst [vmem:[#allocation2 + $0xa8] sm:$0xff] %v4476
        %4485 = vst [vmem:[#allocation2 + $0xb0] sm:$0xff] %v4477
        %4486 = vst [vmem:[#allocation2 + $0xb8] sm:$0xff] %v4478
        %4487 = vrot.lane.b32.xlu0 %v4345, 16
        %v4488 = vpop.permute.xlu0 %4487
        %4489 = vrot.lane.b32.xlu0 %v4346, 16
        %v4490 = vpop.permute.xlu0 %4489
        %4491 = vrot.lane.b32.xlu0 %v4347, 16
        %v4492 = vpop.permute.xlu0 %4491
        %4493 = vrot.lane.b32.xlu0 %v4348, 16
        %v4494 = vpop.permute.xlu0 %4493
        %4495 = vrot.lane.b32.xlu0 %v4349, 16
        %v4496 = vpop.permute.xlu0 %4495
        %v4497 = vsel %vm2255, %v4488, %v4490
        %v4498 = vsel %vm2255, %v4490, %v4492
        %v4499 = vsel %vm2255, %v4492, %v4494
        %v4500 = vsel %vm2255, %v4494, %v4496
        %4505 = vst [vmem:[#allocation2 + $0xc0] sm:$0xff] %v4497
        %4506 = vst [vmem:[#allocation2 + $0xc8] sm:$0xff] %v4498
        %4507 = vst [vmem:[#allocation2 + $0xd0] sm:$0xff] %v4499
        %4508 = vst [vmem:[#allocation2 + $0xd8] sm:$0xff] %v4500
        %4509 = vrot.lane.b32.xlu0 %v4345, 15
        %v4510 = vpop.permute.xlu0 %4509
        %4511 = vrot.lane.b32.xlu0 %v4346, 15
        %v4512 = vpop.permute.xlu0 %4511
        %4513 = vrot.lane.b32.xlu0 %v4347, 15
        %v4514 = vpop.permute.xlu0 %4513
        %4515 = vrot.lane.b32.xlu0 %v4348, 15
        %v4516 = vpop.permute.xlu0 %4515
        %4517 = vrot.lane.b32.xlu0 %v4349, 15
        %v4518 = vpop.permute.xlu0 %4517
        %v4519 = vsel %vm2278, %v4510, %v4512
        %v4520 = vsel %vm2278, %v4512, %v4514
        %v4521 = vsel %vm2278, %v4514, %v4516
        %v4522 = vsel %vm2278, %v4516, %v4518
        %4527 = vst [vmem:[#allocation2 + $0xe0] sm:$0xff] %v4519
        %4528 = vst [vmem:[#allocation2 + $0xe8] sm:$0xff] %v4520
        %4529 = vst [vmem:[#allocation2 + $0xf0] sm:$0xff] %v4521
        %4530 = vst [vmem:[#allocation2 + $0xf8] sm:$0xff] %v4522
        %4531 = vrot.lane.b32.xlu0 %v4345, 14
        %v4532 = vpop.permute.xlu0 %4531
        %4533 = vrot.lane.b32.xlu0 %v4346, 14
        %v4534 = vpop.permute.xlu0 %4533
        %4535 = vrot.lane.b32.xlu0 %v4347, 14
        %v4536 = vpop.permute.xlu0 %4535
        %4537 = vrot.lane.b32.xlu0 %v4348, 14
        %v4538 = vpop.permute.xlu0 %4537
        %4539 = vrot.lane.b32.xlu0 %v4349, 14
        %v4540 = vpop.permute.xlu0 %4539
        %v4541 = vsel %vm2301, %v4532, %v4534
        %v4542 = vsel %vm2301, %v4534, %v4536
        %v4543 = vsel %vm2301, %v4536, %v4538
        %v4544 = vsel %vm2301, %v4538, %v4540
        %4549 = vst [vmem:[#allocation2 + $0x100] sm:$0xff] %v4541
        %4550 = vst [vmem:[#allocation2 + $0x108] sm:$0xff] %v4542
        %4551 = vst [vmem:[#allocation2 + $0x110] sm:$0xff] %v4543
        %4552 = vst [vmem:[#allocation2 + $0x118] sm:$0xff] %v4544
        %4553 = vrot.lane.b32.xlu0 %v4345, 13
        %v4554 = vpop.permute.xlu0 %4553
        %4555 = vrot.lane.b32.xlu0 %v4346, 13
        %v4556 = vpop.permute.xlu0 %4555
        %4557 = vrot.lane.b32.xlu0 %v4347, 13
        %v4558 = vpop.permute.xlu0 %4557
        %4559 = vrot.lane.b32.xlu0 %v4348, 13
        %v4560 = vpop.permute.xlu0 %4559
        %4561 = vrot.lane.b32.xlu0 %v4349, 13
        %v4562 = vpop.permute.xlu0 %4561
        %vm4563 = vcmask 105472
        %v4564 = vsel %vm4563, %v4554, %v4556
        %v4565 = vsel %vm4563, %v4556, %v4558
        %v4566 = vsel %vm4563, %v4558, %v4560
        %v4567 = vsel %vm4563, %v4560, %v4562
        %4572 = vst [vmem:[#allocation2 + $0x120] sm:$0xff] %v4564
        %4573 = vst [vmem:[#allocation2 + $0x128] sm:$0xff] %v4565
        %4574 = vst [vmem:[#allocation2 + $0x130] sm:$0xff] %v4566
        %4575 = vst [vmem:[#allocation2 + $0x138] sm:$0xff] %v4567
        %4576 = vrot.lane.b32.xlu0 %v4345, 12
        %v4577 = vpop.permute.xlu0 %4576
        %4578 = vrot.lane.b32.xlu0 %v4346, 12
        %v4579 = vpop.permute.xlu0 %4578
        %4580 = vrot.lane.b32.xlu0 %v4347, 12
        %v4581 = vpop.permute.xlu0 %4580
        %4582 = vrot.lane.b32.xlu0 %v4348, 12
        %v4583 = vpop.permute.xlu0 %4582
        %4584 = vrot.lane.b32.xlu0 %v4349, 12
        %v4585 = vpop.permute.xlu0 %4584
        %vm4586 = vcmask 97280
        %v4587 = vsel %vm4586, %v4577, %v4579
        %v4588 = vsel %vm4586, %v4579, %v4581
        %v4589 = vsel %vm4586, %v4581, %v4583
        %v4590 = vsel %vm4586, %v4583, %v4585
        %4595 = vst [vmem:[#allocation2 + $0x140] sm:$0xff] %v4587
        %4596 = vst [vmem:[#allocation2 + $0x148] sm:$0xff] %v4588
        %4597 = vst [vmem:[#allocation2 + $0x150] sm:$0xff] %v4589
        %4598 = vst [vmem:[#allocation2 + $0x158] sm:$0xff] %v4590
        %v4599 = vld [vmem:[#allocation3] sm:$0xff]
        %v4600 = vld [vmem:[#allocation3 + $0x8] sm:$0xff]
        %v4601 = vld [vmem:[#allocation3 + $0x10] sm:$0xff]
        %v4602 = vld [vmem:[#allocation3 + $0x18] sm:$0xff]
        %s4603 = scalar_lea.vmem [#allocation7], 72
        %v4604 = vld [vmem:[%s4603] sm:$0xff]
        %v4605 = vld [vmem:[#allocation2] sm:$0xff]
        %v4606 = vld [vmem:[#allocation2 + $0x8] sm:$0xff]
        %v4607 = vld [vmem:[#allocation2 + $0x10] sm:$0xff]
        %v4608 = vld [vmem:[#allocation2 + $0x18] sm:$0xff]
        %v4609 = vld [vmem:[#allocation2 + $0x20] sm:$0xff]
        %v4610 = vld [vmem:[#allocation2 + $0x28] sm:$0xff]
        %v4611 = vld [vmem:[#allocation2 + $0x30] sm:$0xff]
        %v4612 = vld [vmem:[#allocation2 + $0x38] sm:$0xff]
        %v4613 = vld [vmem:[#allocation2 + $0x40] sm:$0xff]
        %v4614 = vld [vmem:[#allocation2 + $0x48] sm:$0xff]
        %v4615 = vld [vmem:[#allocation2 + $0x50] sm:$0xff]
        %v4616 = vld [vmem:[#allocation2 + $0x58] sm:$0xff]
        %v4617 = vld [vmem:[#allocation2 + $0x60] sm:$0xff]
        %v4618 = vld [vmem:[#allocation2 + $0x68] sm:$0xff]
        %v4619 = vld [vmem:[#allocation2 + $0x70] sm:$0xff]
        %v4620 = vld [vmem:[#allocation2 + $0x78] sm:$0xff]
        %v4621 = vld [vmem:[#allocation2 + $0x80] sm:$0xff]
        %v4622 = vld [vmem:[#allocation2 + $0x88] sm:$0xff]
        %v4623 = vld [vmem:[#allocation2 + $0x90] sm:$0xff]
        %v4624 = vld [vmem:[#allocation2 + $0x98] sm:$0xff]
        %v4625 = vld [vmem:[#allocation2 + $0xa0] sm:$0xff]
        %v4626 = vld [vmem:[#allocation2 + $0xa8] sm:$0xff]
        %v4627 = vld [vmem:[#allocation2 + $0xb0] sm:$0xff]
        %v4628 = vld [vmem:[#allocation2 + $0xb8] sm:$0xff]
        %v4629 = vld [vmem:[#allocation2 + $0xc0] sm:$0xff]
        %v4630 = vld [vmem:[#allocation2 + $0xc8] sm:$0xff]
        %v4631 = vld [vmem:[#allocation2 + $0xd0] sm:$0xff]
        %v4632 = vld [vmem:[#allocation2 + $0xd8] sm:$0xff]
        %v4633 = vld [vmem:[#allocation2 + $0xe0] sm:$0xff]
        %v4634 = vld [vmem:[#allocation2 + $0xe8] sm:$0xff]
        %v4635 = vld [vmem:[#allocation2 + $0xf0] sm:$0xff]
        %v4636 = vld [vmem:[#allocation2 + $0xf8] sm:$0xff]
        %v4637 = vld [vmem:[#allocation2 + $0x100] sm:$0xff]
        %v4638 = vld [vmem:[#allocation2 + $0x108] sm:$0xff]
        %v4639 = vld [vmem:[#allocation2 + $0x110] sm:$0xff]
        %v4640 = vld [vmem:[#allocation2 + $0x118] sm:$0xff]
        %v4641 = vld [vmem:[#allocation2 + $0x120] sm:$0xff]
        %v4642 = vld [vmem:[#allocation2 + $0x128] sm:$0xff]
        %v4643 = vld [vmem:[#allocation2 + $0x130] sm:$0xff]
        %v4644 = vld [vmem:[#allocation2 + $0x138] sm:$0xff]
        %v4645 = vld [vmem:[#allocation2 + $0x140] sm:$0xff]
        %v4646 = vld [vmem:[#allocation2 + $0x148] sm:$0xff]
        %v4647 = vld [vmem:[#allocation2 + $0x150] sm:$0xff]
        %v4648 = vld [vmem:[#allocation2 + $0x158] sm:$0xff]
        %v4650 = vsel %vm499, %v4604, 0
        %4652 = vmatprep.subr.mxu0 %v4606
        %4653 = vmatpush1.msra.mxu0 %v4605
        %4654 = vmatprep.subr.mxu0 %v4610
        %4655 = vmatpush1.msra.mxu0 %v4609
        %4656 = vmatprep.subr.mxu0 %v4614
        %4657 = vmatpush1.msra.mxu0 %v4613
        %4658 = vmatprep.subr.mxu0 %v4618
        %4659 = vmatpush1.msra.mxu0 %v4617
        %4660 = vmatprep.subr.mxu0 %v4622
        %4661 = vmatpush1.msra.mxu0 %v4621
        %4662 = vmatprep.subr.mxu0 %v4626
        %4663 = vmatpush1.msra.mxu0 %v4625
        %4664 = vmatprep.subr.mxu0 %v4630
        %4665 = vmatpush1.msra.mxu0 %v4629
        %4666 = vmatprep.subr.mxu0 %v4634
        %4667 = vmatpush1.msra.mxu0 %v4633
        %4668 = vmatprep.subr.mxu0 %v4638
        %4669 = vmatpush1.msra.mxu0 %v4637
        %4670 = vmatprep.subr.mxu0 %v4642
        %4671 = vmatpush1.msra.mxu0 %v4641
        %4672 = vmatprep.subr.mxu0 %v4646
        %4673 = vmatpush1.msra.mxu0 %v4645
        %4674 = vmatprep.subr.mxu0 0.0
        %4675 = vmatpush1.msra.mxu0 0.0
        %4676 = vmatprep.subr.mxu0 0.0
        %4677 = vmatpush1.msra.mxu0 0.0
        %4678 = vmatprep.subr.mxu0 0.0
        %4679 = vmatpush1.msra.mxu0 0.0
        %4680 = vmatprep.subr.mxu0 0.0
        %4681 = vmatpush1.msra.mxu0 0.0
        %4682 = vmatprep.subr.mxu0 0.0
        %4683 = vmatpush1.msra.mxu0 0.0
        %4684 = vmatprep.subr.mxu0 0.0
        %4685 = vmatpush1.msra.mxu0 0.0
        %4686 = vmatprep.subr.mxu0 0.0
        %4687 = vmatpush1.msra.mxu0 0.0
        %4688 = vmatprep.subr.mxu0 0.0
        %4689 = vmatpush1.msra.mxu0 0.0
        %4690 = vmatprep.subr.mxu0 0.0
        %4691 = vmatpush1.msra.mxu0 0.0
        %4692 = vmatprep.subr.mxu0 0.0
        %4693 = vmatpush1.msra.mxu0 0.0
        %4694 = vmatprep.subr.mxu0 0.0
        %4695 = vmatpush1.msra.mxu0 0.0
        %4696 = vmatprep.subr.mxu0 0.0
        %4697 = vmatpush1.msra.mxu0 0.0
        %4698 = vmatprep.subr.mxu0 0.0
        %4699 = vmatpush1.msra.mxu0 0.0
        %4700 = vmatprep.subr.mxu0 0.0
        %4701 = vmatpush1.msra.mxu0 0.0
        %4702 = vmatprep.subr.mxu0 0.0
        %4703 = vmatpush1.msra.mxu0 0.0
        %4704 = vmatprep.subr.mxu0 0.0
        %4705 = vmatpush1.msra.mxu0 0.0
        %4706 = vmatprep.subr.mxu0 0.0
        %4707 = vmatpush1.msra.mxu0 0.0
        %4708 = vmatprep.subr.mxu0 0.0
        %4709 = vmatpush1.msra.mxu0 0.0
        %4710 = vmatprep.subr.mxu0 0.0
        %4711 = vmatpush1.msra.mxu0 0.0
        %4712 = vmatprep.subr.mxu0 0.0
        %4713 = vmatpush1.msra.mxu0 0.0
        %4714 = vmatprep.subr.mxu0 0.0
        %4715 = vmatpush1.msra.mxu0 0.0
        %4716 = vmatprep.mubr.f32.mxu0 0.0
        %4717 = vmatmul.mubr.f32.gmra.mrb[0].mxu0 %v4650
        %v4718 = vpop.f32.mrb[0].mxu0
        %v4719 = vadd.f32 0.0, %v4718
        %v4720 = vpop.f32.mrb[0].mxu0
        %v4721 = vadd.f32 0.0, %v4720
        %4722 = vdwg.mxu0
        %4723 = vmatprep.subr.mxu0 %v4608
        %4724 = vmatpush1.msra.mxu0 %v4607
        %4725 = vmatprep.subr.mxu0 %v4612
        %4726 = vmatpush1.msra.mxu0 %v4611
        %4727 = vmatprep.subr.mxu0 %v4616
        %4728 = vmatpush1.msra.mxu0 %v4615
        %4729 = vmatprep.subr.mxu0 %v4620
        %4730 = vmatpush1.msra.mxu0 %v4619
        %4731 = vmatprep.subr.mxu0 %v4624
        %4732 = vmatpush1.msra.mxu0 %v4623
        %4733 = vmatprep.subr.mxu0 %v4628
        %4734 = vmatpush1.msra.mxu0 %v4627
        %4735 = vmatprep.subr.mxu0 %v4632
        %4736 = vmatpush1.msra.mxu0 %v4631
        %4737 = vmatprep.subr.mxu0 %v4636
        %4738 = vmatpush1.msra.mxu0 %v4635
        %4739 = vmatprep.subr.mxu0 %v4640
        %4740 = vmatpush1.msra.mxu0 %v4639
        %4741 = vmatprep.subr.mxu0 %v4644
        %4742 = vmatpush1.msra.mxu0 %v4643
        %4743 = vmatprep.subr.mxu0 %v4648
        %4744 = vmatpush1.msra.mxu0 %v4647
        %4745 = vmatprep.subr.mxu0 0.0
        %4746 = vmatpush1.msra.mxu0 0.0
        %4747 = vmatprep.subr.mxu0 0.0
        %4748 = vmatpush1.msra.mxu0 0.0
        %4749 = vmatprep.subr.mxu0 0.0
        %4750 = vmatpush1.msra.mxu0 0.0
        %4751 = vmatprep.subr.mxu0 0.0
        %4752 = vmatpush1.msra.mxu0 0.0
        %4753 = vmatprep.subr.mxu0 0.0
        %4754 = vmatpush1.msra.mxu0 0.0
        %4755 = vmatprep.subr.mxu0 0.0
        %4756 = vmatpush1.msra.mxu0 0.0
        %4757 = vmatprep.subr.mxu0 0.0
        %4758 = vmatpush1.msra.mxu0 0.0
        %4759 = vmatprep.subr.mxu0 0.0
        %4760 = vmatpush1.msra.mxu0 0.0
        %4761 = vmatprep.subr.mxu0 0.0
        %4762 = vmatpush1.msra.mxu0 0.0
        %4763 = vmatprep.subr.mxu0 0.0
        %4764 = vmatpush1.msra.mxu0 0.0
        %4765 = vmatprep.subr.mxu0 0.0
        %4766 = vmatpush1.msra.mxu0 0.0
        %4767 = vmatprep.subr.mxu0 0.0
        %4768 = vmatpush1.msra.mxu0 0.0
        %4769 = vmatprep.subr.mxu0 0.0
        %4770 = vmatpush1.msra.mxu0 0.0
        %4771 = vmatprep.subr.mxu0 0.0
        %4772 = vmatpush1.msra.mxu0 0.0
        %4773 = vmatprep.subr.mxu0 0.0
        %4774 = vmatpush1.msra.mxu0 0.0
        %4775 = vmatprep.subr.mxu0 0.0
        %4776 = vmatpush1.msra.mxu0 0.0
        %4777 = vmatprep.subr.mxu0 0.0
        %4778 = vmatpush1.msra.mxu0 0.0
        %4779 = vmatprep.subr.mxu0 0.0
        %4780 = vmatpush1.msra.mxu0 0.0
        %4781 = vmatprep.subr.mxu0 0.0
        %4782 = vmatpush1.msra.mxu0 0.0
        %4783 = vmatprep.subr.mxu0 0.0
        %4784 = vmatpush1.msra.mxu0 0.0
        %4785 = vmatprep.subr.mxu0 0.0
        %4786 = vmatpush1.msra.mxu0 0.0
        %4787 = vmatprep.mubr.f32.mxu0 0.0
        %4788 = vmatmul.mubr.f32.gmra.mrb[0].mxu0 %v4650
        %v4789 = vpop.f32.mrb[0].mxu0
        %v4790 = vadd.f32 0.0, %v4789
        %v4791 = vpop.f32.mrb[0].mxu0
        %v4792 = vadd.f32 0.0, %v4791
        %4793 = vdwg.mxu0
        %v4794 = vadd.f32 %v4599, %v4719
        %v4795 = vadd.f32 %v4600, %v4721
        %v4796 = vadd.f32 %v4601, %v4790
        %v4797 = vadd.f32 %v4602, %v4792
        %4798 = vst [vmem:[#allocation3] sm:$0xff] %v4794
        %4799 = vst [vmem:[#allocation3 + $0x8] sm:$0xff] %v4795
        %4800 = vst [vmem:[#allocation3 + $0x10] sm:$0xff] %v4796
        %4801 = vst [vmem:[#allocation3 + $0x18] sm:$0xff] %v4797
        %v4802 = vld [vmem:[%s175 + $0x10] sm:$0xff]
        %v4803 = vld [vmem:[%s175 + $0x18] sm:$0xff]
        %v4804 = vld [vmem:[%s175 + $0x20] sm:$0xff]
        %v4805 = vld [vmem:[%s175 + $0x28] sm:$0xff]
        %v4806 = vld [vmem:[%s175 + $0x30] sm:$0xff]
        %4812 = vrot.lane.b32.xlu0 %v4802, 124
        %v4813 = vpop.permute.xlu0 %4812
        %4814 = vrot.lane.b32.xlu0 %v4803, 124
        %v4815 = vpop.permute.xlu0 %4814
        %4816 = vrot.lane.b32.xlu0 %v4804, 124
        %v4817 = vpop.permute.xlu0 %4816
        %4818 = vrot.lane.b32.xlu0 %v4805, 124
        %v4819 = vpop.permute.xlu0 %4818
        %4820 = vrot.lane.b32.xlu0 %v4806, 124
        %v4821 = vpop.permute.xlu0 %4820
        %v4822 = vsel %vm299, %v4813, %v4815
        %v4823 = vsel %vm299, %v4815, %v4817
        %v4824 = vsel %vm299, %v4817, %v4819
        %v4825 = vsel %vm299, %v4819, %v4821
        %4830 = vst [vmem:[#allocation2] sm:$0xff] %v4822
        %4831 = vst [vmem:[#allocation2 + $0x8] sm:$0xff] %v4823
        %4832 = vst [vmem:[#allocation2 + $0x10] sm:$0xff] %v4824
        %4833 = vst [vmem:[#allocation2 + $0x18] sm:$0xff] %v4825
        %4834 = vrot.lane.b32.xlu0 %v4802, 123
        %v4835 = vpop.permute.xlu0 %4834
        %4836 = vrot.lane.b32.xlu0 %v4803, 123
        %v4837 = vpop.permute.xlu0 %4836
        %4838 = vrot.lane.b32.xlu0 %v4804, 123
        %v4839 = vpop.permute.xlu0 %4838
        %4840 = vrot.lane.b32.xlu0 %v4805, 123
        %v4841 = vpop.permute.xlu0 %4840
        %4842 = vrot.lane.b32.xlu0 %v4806, 123
        %v4843 = vpop.permute.xlu0 %4842
        %v4844 = vsel %vm322, %v4835, %v4837
        %v4845 = vsel %vm322, %v4837, %v4839
        %v4846 = vsel %vm322, %v4839, %v4841
        %v4847 = vsel %vm322, %v4841, %v4843
        %4852 = vst [vmem:[#allocation2 + $0x20] sm:$0xff] %v4844
        %4853 = vst [vmem:[#allocation2 + $0x28] sm:$0xff] %v4845
        %4854 = vst [vmem:[#allocation2 + $0x30] sm:$0xff] %v4846
        %4855 = vst [vmem:[#allocation2 + $0x38] sm:$0xff] %v4847
        %4856 = vrot.lane.b32.xlu0 %v4802, 122
        %v4857 = vpop.permute.xlu0 %4856
        %4858 = vrot.lane.b32.xlu0 %v4803, 122
        %v4859 = vpop.permute.xlu0 %4858
        %4860 = vrot.lane.b32.xlu0 %v4804, 122
        %v4861 = vpop.permute.xlu0 %4860
        %4862 = vrot.lane.b32.xlu0 %v4805, 122
        %v4863 = vpop.permute.xlu0 %4862
        %4864 = vrot.lane.b32.xlu0 %v4806, 122
        %v4865 = vpop.permute.xlu0 %4864
        %v4866 = vsel %vm345, %v4857, %v4859
        %v4867 = vsel %vm345, %v4859, %v4861
        %v4868 = vsel %vm345, %v4861, %v4863
        %v4869 = vsel %vm345, %v4863, %v4865
        %4874 = vst [vmem:[#allocation2 + $0x40] sm:$0xff] %v4866
        %4875 = vst [vmem:[#allocation2 + $0x48] sm:$0xff] %v4867
        %4876 = vst [vmem:[#allocation2 + $0x50] sm:$0xff] %v4868
        %4877 = vst [vmem:[#allocation2 + $0x58] sm:$0xff] %v4869
        %4878 = vrot.lane.b32.xlu0 %v4802, 121
        %v4879 = vpop.permute.xlu0 %4878
        %4880 = vrot.lane.b32.xlu0 %v4803, 121
        %v4881 = vpop.permute.xlu0 %4880
        %4882 = vrot.lane.b32.xlu0 %v4804, 121
        %v4883 = vpop.permute.xlu0 %4882
        %4884 = vrot.lane.b32.xlu0 %v4805, 121
        %v4885 = vpop.permute.xlu0 %4884
        %4886 = vrot.lane.b32.xlu0 %v4806, 121
        %v4887 = vpop.permute.xlu0 %4886
        %v4888 = vsel %vm368, %v4879, %v4881
        %v4889 = vsel %vm368, %v4881, %v4883
        %v4890 = vsel %vm368, %v4883, %v4885
        %v4891 = vsel %vm368, %v4885, %v4887
        %4896 = vst [vmem:[#allocation2 + $0x60] sm:$0xff] %v4888
        %4897 = vst [vmem:[#allocation2 + $0x68] sm:$0xff] %v4889
        %4898 = vst [vmem:[#allocation2 + $0x70] sm:$0xff] %v4890
        %4899 = vst [vmem:[#allocation2 + $0x78] sm:$0xff] %v4891
        %4900 = vrot.lane.b32.xlu0 %v4802, 120
        %v4901 = vpop.permute.xlu0 %4900
        %4902 = vrot.lane.b32.xlu0 %v4803, 120
        %v4903 = vpop.permute.xlu0 %4902
        %4904 = vrot.lane.b32.xlu0 %v4804, 120
        %v4905 = vpop.permute.xlu0 %4904
        %4906 = vrot.lane.b32.xlu0 %v4805, 120
        %v4907 = vpop.permute.xlu0 %4906
        %4908 = vrot.lane.b32.xlu0 %v4806, 120
        %v4909 = vpop.permute.xlu0 %4908
        %v4910 = vsel %vm391, %v4901, %v4903
        %v4911 = vsel %vm391, %v4903, %v4905
        %v4912 = vsel %vm391, %v4905, %v4907
        %v4913 = vsel %vm391, %v4907, %v4909
        %4918 = vst [vmem:[#allocation2 + $0x80] sm:$0xff] %v4910
        %4919 = vst [vmem:[#allocation2 + $0x88] sm:$0xff] %v4911
        %4920 = vst [vmem:[#allocation2 + $0x90] sm:$0xff] %v4912
        %4921 = vst [vmem:[#allocation2 + $0x98] sm:$0xff] %v4913
        %4922 = vrot.lane.b32.xlu0 %v4802, 119
        %v4923 = vpop.permute.xlu0 %4922
        %4924 = vrot.lane.b32.xlu0 %v4803, 119
        %v4925 = vpop.permute.xlu0 %4924
        %4926 = vrot.lane.b32.xlu0 %v4804, 119
        %v4927 = vpop.permute.xlu0 %4926
        %4928 = vrot.lane.b32.xlu0 %v4805, 119
        %v4929 = vpop.permute.xlu0 %4928
        %4930 = vrot.lane.b32.xlu0 %v4806, 119
        %v4931 = vpop.permute.xlu0 %4930
        %v4932 = vsel %vm414, %v4923, %v4925
        %v4933 = vsel %vm414, %v4925, %v4927
        %v4934 = vsel %vm414, %v4927, %v4929
        %v4935 = vsel %vm414, %v4929, %v4931
        %4940 = vst [vmem:[#allocation2 + $0xa0] sm:$0xff] %v4932
        %4941 = vst [vmem:[#allocation2 + $0xa8] sm:$0xff] %v4933
        %4942 = vst [vmem:[#allocation2 + $0xb0] sm:$0xff] %v4934
        %4943 = vst [vmem:[#allocation2 + $0xb8] sm:$0xff] %v4935
        %4944 = vrot.lane.b32.xlu0 %v4802, 118
        %v4945 = vpop.permute.xlu0 %4944
        %4946 = vrot.lane.b32.xlu0 %v4803, 118
        %v4947 = vpop.permute.xlu0 %4946
        %4948 = vrot.lane.b32.xlu0 %v4804, 118
        %v4949 = vpop.permute.xlu0 %4948
        %4950 = vrot.lane.b32.xlu0 %v4805, 118
        %v4951 = vpop.permute.xlu0 %4950
        %4952 = vrot.lane.b32.xlu0 %v4806, 118
        %v4953 = vpop.permute.xlu0 %4952
        %v4954 = vsel %vm437, %v4945, %v4947
        %v4955 = vsel %vm437, %v4947, %v4949
        %v4956 = vsel %vm437, %v4949, %v4951
        %v4957 = vsel %vm437, %v4951, %v4953
        %4962 = vst [vmem:[#allocation2 + $0xc0] sm:$0xff] %v4954
        %4963 = vst [vmem:[#allocation2 + $0xc8] sm:$0xff] %v4955
        %4964 = vst [vmem:[#allocation2 + $0xd0] sm:$0xff] %v4956
        %4965 = vst [vmem:[#allocation2 + $0xd8] sm:$0xff] %v4957
        %4966 = vrot.lane.b32.xlu0 %v4802, 117
        %v4967 = vpop.permute.xlu0 %4966
        %4968 = vrot.lane.b32.xlu0 %v4803, 117
        %v4969 = vpop.permute.xlu0 %4968
        %4970 = vrot.lane.b32.xlu0 %v4804, 117
        %v4971 = vpop.permute.xlu0 %4970
        %4972 = vrot.lane.b32.xlu0 %v4805, 117
        %v4973 = vpop.permute.xlu0 %4972
        %4974 = vrot.lane.b32.xlu0 %v4806, 117
        %v4975 = vpop.permute.xlu0 %4974
        %v4976 = vsel %vm2735, %v4967, %v4969
        %v4977 = vsel %vm2735, %v4969, %v4971
        %v4978 = vsel %vm2735, %v4971, %v4973
        %v4979 = vsel %vm2735, %v4973, %v4975
        %4984 = vst [vmem:[#allocation2 + $0xe0] sm:$0xff] %v4976
        %4985 = vst [vmem:[#allocation2 + $0xe8] sm:$0xff] %v4977
        %4986 = vst [vmem:[#allocation2 + $0xf0] sm:$0xff] %v4978
        %4987 = vst [vmem:[#allocation2 + $0xf8] sm:$0xff] %v4979
        %4988 = vrot.lane.b32.xlu0 %v4802, 116
        %v4989 = vpop.permute.xlu0 %4988
        %4990 = vrot.lane.b32.xlu0 %v4803, 116
        %v4991 = vpop.permute.xlu0 %4990
        %4992 = vrot.lane.b32.xlu0 %v4804, 116
        %v4993 = vpop.permute.xlu0 %4992
        %4994 = vrot.lane.b32.xlu0 %v4805, 116
        %v4995 = vpop.permute.xlu0 %4994
        %4996 = vrot.lane.b32.xlu0 %v4806, 116
        %v4997 = vpop.permute.xlu0 %4996
        %v4998 = vsel %vm2758, %v4989, %v4991
        %v4999 = vsel %vm2758, %v4991, %v4993
        %v5000 = vsel %vm2758, %v4993, %v4995
        %v5001 = vsel %vm2758, %v4995, %v4997
        %5006 = vst [vmem:[#allocation2 + $0x100] sm:$0xff] %v4998
        %5007 = vst [vmem:[#allocation2 + $0x108] sm:$0xff] %v4999
        %5008 = vst [vmem:[#allocation2 + $0x110] sm:$0xff] %v5000
        %5009 = vst [vmem:[#allocation2 + $0x118] sm:$0xff] %v5001
        %5010 = vrot.lane.b32.xlu0 %v4802, 115
        %v5011 = vpop.permute.xlu0 %5010
        %5012 = vrot.lane.b32.xlu0 %v4803, 115
        %v5013 = vpop.permute.xlu0 %5012
        %5014 = vrot.lane.b32.xlu0 %v4804, 115
        %v5015 = vpop.permute.xlu0 %5014
        %5016 = vrot.lane.b32.xlu0 %v4805, 115
        %v5017 = vpop.permute.xlu0 %5016
        %5018 = vrot.lane.b32.xlu0 %v4806, 115
        %v5019 = vpop.permute.xlu0 %5018
        %vm5020 = vcmask 941056
        %v5021 = vsel %vm5020, %v5011, %v5013
        %v5022 = vsel %vm5020, %v5013, %v5015
        %v5023 = vsel %vm5020, %v5015, %v5017
        %v5024 = vsel %vm5020, %v5017, %v5019
        %5029 = vst [vmem:[#allocation2 + $0x120] sm:$0xff] %v5021
        %5030 = vst [vmem:[#allocation2 + $0x128] sm:$0xff] %v5022
        %5031 = vst [vmem:[#allocation2 + $0x130] sm:$0xff] %v5023
        %5032 = vst [vmem:[#allocation2 + $0x138] sm:$0xff] %v5024
        %5033 = vrot.lane.b32.xlu0 %v4802, 114
        %v5034 = vpop.permute.xlu0 %5033
        %5035 = vrot.lane.b32.xlu0 %v4803, 114
        %v5036 = vpop.permute.xlu0 %5035
        %5037 = vrot.lane.b32.xlu0 %v4804, 114
        %v5038 = vpop.permute.xlu0 %5037
        %5039 = vrot.lane.b32.xlu0 %v4805, 114
        %v5040 = vpop.permute.xlu0 %5039
        %5041 = vrot.lane.b32.xlu0 %v4806, 114
        %v5042 = vpop.permute.xlu0 %5041
        %vm5043 = vcmask 932864
        %v5044 = vsel %vm5043, %v5034, %v5036
        %v5045 = vsel %vm5043, %v5036, %v5038
        %v5046 = vsel %vm5043, %v5038, %v5040
        %v5047 = vsel %vm5043, %v5040, %v5042
        %5052 = vst [vmem:[#allocation2 + $0x140] sm:$0xff] %v5044
        %5053 = vst [vmem:[#allocation2 + $0x148] sm:$0xff] %v5045
        %5054 = vst [vmem:[#allocation2 + $0x150] sm:$0xff] %v5046
        %5055 = vst [vmem:[#allocation2 + $0x158] sm:$0xff] %v5047
        %v5056 = vld [vmem:[#allocation3] sm:$0xff]
        %v5057 = vld [vmem:[#allocation3 + $0x8] sm:$0xff]
        %v5058 = vld [vmem:[#allocation3 + $0x10] sm:$0xff]
        %v5059 = vld [vmem:[#allocation3 + $0x18] sm:$0xff]
        %s5060 = scalar_lea.vmem [#allocation7], 80
        %v5061 = vld [vmem:[%s5060] sm:$0xff]
        %v5062 = vld [vmem:[#allocation2] sm:$0xff]
        %v5063 = vld [vmem:[#allocation2 + $0x8] sm:$0xff]
        %v5064 = vld [vmem:[#allocation2 + $0x10] sm:$0xff]
        %v5065 = vld [vmem:[#allocation2 + $0x18] sm:$0xff]
        %v5066 = vld [vmem:[#allocation2 + $0x20] sm:$0xff]
        %v5067 = vld [vmem:[#allocation2 + $0x28] sm:$0xff]
        %v5068 = vld [vmem:[#allocation2 + $0x30] sm:$0xff]
        %v5069 = vld [vmem:[#allocation2 + $0x38] sm:$0xff]
        %v5070 = vld [vmem:[#allocation2 + $0x40] sm:$0xff]
        %v5071 = vld [vmem:[#allocation2 + $0x48] sm:$0xff]
        %v5072 = vld [vmem:[#allocation2 + $0x50] sm:$0xff]
        %v5073 = vld [vmem:[#allocation2 + $0x58] sm:$0xff]
        %v5074 = vld [vmem:[#allocation2 + $0x60] sm:$0xff]
        %v5075 = vld [vmem:[#allocation2 + $0x68] sm:$0xff]
        %v5076 = vld [vmem:[#allocation2 + $0x70] sm:$0xff]
        %v5077 = vld [vmem:[#allocation2 + $0x78] sm:$0xff]
        %v5078 = vld [vmem:[#allocation2 + $0x80] sm:$0xff]
        %v5079 = vld [vmem:[#allocation2 + $0x88] sm:$0xff]
        %v5080 = vld [vmem:[#allocation2 + $0x90] sm:$0xff]
        %v5081 = vld [vmem:[#allocation2 + $0x98] sm:$0xff]
        %v5082 = vld [vmem:[#allocation2 + $0xa0] sm:$0xff]
        %v5083 = vld [vmem:[#allocation2 + $0xa8] sm:$0xff]
        %v5084 = vld [vmem:[#allocation2 + $0xb0] sm:$0xff]
        %v5085 = vld [vmem:[#allocation2 + $0xb8] sm:$0xff]
        %v5086 = vld [vmem:[#allocation2 + $0xc0] sm:$0xff]
        %v5087 = vld [vmem:[#allocation2 + $0xc8] sm:$0xff]
        %v5088 = vld [vmem:[#allocation2 + $0xd0] sm:$0xff]
        %v5089 = vld [vmem:[#allocation2 + $0xd8] sm:$0xff]
        %v5090 = vld [vmem:[#allocation2 + $0xe0] sm:$0xff]
        %v5091 = vld [vmem:[#allocation2 + $0xe8] sm:$0xff]
        %v5092 = vld [vmem:[#allocation2 + $0xf0] sm:$0xff]
        %v5093 = vld [vmem:[#allocation2 + $0xf8] sm:$0xff]
        %v5094 = vld [vmem:[#allocation2 + $0x100] sm:$0xff]
        %v5095 = vld [vmem:[#allocation2 + $0x108] sm:$0xff]
        %v5096 = vld [vmem:[#allocation2 + $0x110] sm:$0xff]
        %v5097 = vld [vmem:[#allocation2 + $0x118] sm:$0xff]
        %v5098 = vld [vmem:[#allocation2 + $0x120] sm:$0xff]
        %v5099 = vld [vmem:[#allocation2 + $0x128] sm:$0xff]
        %v5100 = vld [vmem:[#allocation2 + $0x130] sm:$0xff]
        %v5101 = vld [vmem:[#allocation2 + $0x138] sm:$0xff]
        %v5102 = vld [vmem:[#allocation2 + $0x140] sm:$0xff]
        %v5103 = vld [vmem:[#allocation2 + $0x148] sm:$0xff]
        %v5104 = vld [vmem:[#allocation2 + $0x150] sm:$0xff]
        %v5105 = vld [vmem:[#allocation2 + $0x158] sm:$0xff]
        %v5107 = vsel %vm499, %v5061, 0
        %5109 = vmatprep.subr.mxu0 %v5063
        %5110 = vmatpush1.msra.mxu0 %v5062
        %5111 = vmatprep.subr.mxu0 %v5067
        %5112 = vmatpush1.msra.mxu0 %v5066
        %5113 = vmatprep.subr.mxu0 %v5071
        %5114 = vmatpush1.msra.mxu0 %v5070
        %5115 = vmatprep.subr.mxu0 %v5075
        %5116 = vmatpush1.msra.mxu0 %v5074
        %5117 = vmatprep.subr.mxu0 %v5079
        %5118 = vmatpush1.msra.mxu0 %v5078
        %5119 = vmatprep.subr.mxu0 %v5083
        %5120 = vmatpush1.msra.mxu0 %v5082
        %5121 = vmatprep.subr.mxu0 %v5087
        %5122 = vmatpush1.msra.mxu0 %v5086
        %5123 = vmatprep.subr.mxu0 %v5091
        %5124 = vmatpush1.msra.mxu0 %v5090
        %5125 = vmatprep.subr.mxu0 %v5095
        %5126 = vmatpush1.msra.mxu0 %v5094
        %5127 = vmatprep.subr.mxu0 %v5099
        %5128 = vmatpush1.msra.mxu0 %v5098
        %5129 = vmatprep.subr.mxu0 %v5103
        %5130 = vmatpush1.msra.mxu0 %v5102
        %5131 = vmatprep.subr.mxu0 0.0
        %5132 = vmatpush1.msra.mxu0 0.0
        %5133 = vmatprep.subr.mxu0 0.0
        %5134 = vmatpush1.msra.mxu0 0.0
        %5135 = vmatprep.subr.mxu0 0.0
        %5136 = vmatpush1.msra.mxu0 0.0
        %5137 = vmatprep.subr.mxu0 0.0
        %5138 = vmatpush1.msra.mxu0 0.0
        %5139 = vmatprep.subr.mxu0 0.0
        %5140 = vmatpush1.msra.mxu0 0.0
        %5141 = vmatprep.subr.mxu0 0.0
        %5142 = vmatpush1.msra.mxu0 0.0
        %5143 = vmatprep.subr.mxu0 0.0
        %5144 = vmatpush1.msra.mxu0 0.0
        %5145 = vmatprep.subr.mxu0 0.0
        %5146 = vmatpush1.msra.mxu0 0.0
        %5147 = vmatprep.subr.mxu0 0.0
        %5148 = vmatpush1.msra.mxu0 0.0
        %5149 = vmatprep.subr.mxu0 0.0
        %5150 = vmatpush1.msra.mxu0 0.0
        %5151 = vmatprep.subr.mxu0 0.0
        %5152 = vmatpush1.msra.mxu0 0.0
        %5153 = vmatprep.subr.mxu0 0.0
        %5154 = vmatpush1.msra.mxu0 0.0
        %5155 = vmatprep.subr.mxu0 0.0
        %5156 = vmatpush1.msra.mxu0 0.0
        %5157 = vmatprep.subr.mxu0 0.0
        %5158 = vmatpush1.msra.mxu0 0.0
        %5159 = vmatprep.subr.mxu0 0.0
        %5160 = vmatpush1.msra.mxu0 0.0
        %5161 = vmatprep.subr.mxu0 0.0
        %5162 = vmatpush1.msra.mxu0 0.0
        %5163 = vmatprep.subr.mxu0 0.0
        %5164 = vmatpush1.msra.mxu0 0.0
        %5165 = vmatprep.subr.mxu0 0.0
        %5166 = vmatpush1.msra.mxu0 0.0
        %5167 = vmatprep.subr.mxu0 0.0
        %5168 = vmatpush1.msra.mxu0 0.0
        %5169 = vmatprep.subr.mxu0 0.0
        %5170 = vmatpush1.msra.mxu0 0.0
        %5171 = vmatprep.subr.mxu0 0.0
        %5172 = vmatpush1.msra.mxu0 0.0
        %5173 = vmatprep.mubr.f32.mxu0 0.0
        %5174 = vmatmul.mubr.f32.gmra.mrb[0].mxu0 %v5107
        %v5175 = vpop.f32.mrb[0].mxu0
        %v5176 = vadd.f32 0.0, %v5175
        %v5177 = vpop.f32.mrb[0].mxu0
        %v5178 = vadd.f32 0.0, %v5177
        %5179 = vdwg.mxu0
        %5180 = vmatprep.subr.mxu0 %v5065
        %5181 = vmatpush1.msra.mxu0 %v5064
        %5182 = vmatprep.subr.mxu0 %v5069
        %5183 = vmatpush1.msra.mxu0 %v5068
        %5184 = vmatprep.subr.mxu0 %v5073
        %5185 = vmatpush1.msra.mxu0 %v5072
        %5186 = vmatprep.subr.mxu0 %v5077
        %5187 = vmatpush1.msra.mxu0 %v5076
        %5188 = vmatprep.subr.mxu0 %v5081
        %5189 = vmatpush1.msra.mxu0 %v5080
        %5190 = vmatprep.subr.mxu0 %v5085
        %5191 = vmatpush1.msra.mxu0 %v5084
        %5192 = vmatprep.subr.mxu0 %v5089
        %5193 = vmatpush1.msra.mxu0 %v5088
        %5194 = vmatprep.subr.mxu0 %v5093
        %5195 = vmatpush1.msra.mxu0 %v5092
        %5196 = vmatprep.subr.mxu0 %v5097
        %5197 = vmatpush1.msra.mxu0 %v5096
        %5198 = vmatprep.subr.mxu0 %v5101
        %5199 = vmatpush1.msra.mxu0 %v5100
        %5200 = vmatprep.subr.mxu0 %v5105
        %5201 = vmatpush1.msra.mxu0 %v5104
        %5202 = vmatprep.subr.mxu0 0.0
        %5203 = vmatpush1.msra.mxu0 0.0
        %5204 = vmatprep.subr.mxu0 0.0
        %5205 = vmatpush1.msra.mxu0 0.0
        %5206 = vmatprep.subr.mxu0 0.0
        %5207 = vmatpush1.msra.mxu0 0.0
        %5208 = vmatprep.subr.mxu0 0.0
        %5209 = vmatpush1.msra.mxu0 0.0
        %5210 = vmatprep.subr.mxu0 0.0
        %5211 = vmatpush1.msra.mxu0 0.0
        %5212 = vmatprep.subr.mxu0 0.0
        %5213 = vmatpush1.msra.mxu0 0.0
        %5214 = vmatprep.subr.mxu0 0.0
        %5215 = vmatpush1.msra.mxu0 0.0
        %5216 = vmatprep.subr.mxu0 0.0
        %5217 = vmatpush1.msra.mxu0 0.0
        %5218 = vmatprep.subr.mxu0 0.0
        %5219 = vmatpush1.msra.mxu0 0.0
        %5220 = vmatprep.subr.mxu0 0.0
        %5221 = vmatpush1.msra.mxu0 0.0
        %5222 = vmatprep.subr.mxu0 0.0
        %5223 = vmatpush1.msra.mxu0 0.0
        %5224 = vmatprep.subr.mxu0 0.0
        %5225 = vmatpush1.msra.mxu0 0.0
        %5226 = vmatprep.subr.mxu0 0.0
        %5227 = vmatpush1.msra.mxu0 0.0
        %5228 = vmatprep.subr.mxu0 0.0
        %5229 = vmatpush1.msra.mxu0 0.0
        %5230 = vmatprep.subr.mxu0 0.0
        %5231 = vmatpush1.msra.mxu0 0.0
        %5232 = vmatprep.subr.mxu0 0.0
        %5233 = vmatpush1.msra.mxu0 0.0
        %5234 = vmatprep.subr.mxu0 0.0
        %5235 = vmatpush1.msra.mxu0 0.0
        %5236 = vmatprep.subr.mxu0 0.0
        %5237 = vmatpush1.msra.mxu0 0.0
        %5238 = vmatprep.subr.mxu0 0.0
        %5239 = vmatpush1.msra.mxu0 0.0
        %5240 = vmatprep.subr.mxu0 0.0
        %5241 = vmatpush1.msra.mxu0 0.0
        %5242 = vmatprep.subr.mxu0 0.0
        %5243 = vmatpush1.msra.mxu0 0.0
        %5244 = vmatprep.mubr.f32.mxu0 0.0
        %5245 = vmatmul.mubr.f32.gmra.mrb[0].mxu0 %v5107
        %v5246 = vpop.f32.mrb[0].mxu0
        %v5247 = vadd.f32 0.0, %v5246
        %v5248 = vpop.f32.mrb[0].mxu0
        %v5249 = vadd.f32 0.0, %v5248
        %5250 = vdwg.mxu0
        %v5251 = vadd.f32 %v5056, %v5176
        %v5252 = vadd.f32 %v5057, %v5178
        %v5253 = vadd.f32 %v5058, %v5247
        %v5254 = vadd.f32 %v5059, %v5249
        %5255 = vst [vmem:[#allocation3] sm:$0xff] %v5251
        %5256 = vst [vmem:[#allocation3 + $0x8] sm:$0xff] %v5252
        %5257 = vst [vmem:[#allocation3 + $0x10] sm:$0xff] %v5253
        %5258 = vst [vmem:[#allocation3 + $0x18] sm:$0xff] %v5254
        %v5259 = vld [vmem:[%s2] sm:$0xff]
        %v5260 = vld [vmem:[#allocation3] sm:$0xff]
        %v5261 = vld [vmem:[#allocation3 + $0x8] sm:$0xff]
        %v5262 = vld [vmem:[#allocation3 + $0x10] sm:$0xff]
        %v5263 = vld [vmem:[#allocation3 + $0x18] sm:$0xff]
        %5265 = vset.pattern.permute.xlu0 0
        %5266 = vperm.xlu0 %5265, %v5259
        %v5267 = vpop.permute.xlu0 %5266
        %v5269 = vadd.f32 %v5260, %v5267
        %v5270 = vadd.f32 %v5261, %v5267
        %v5271 = vadd.f32 %v5262, %v5267
        %v5272 = vadd.f32 %v5263, %v5267
        %5273 = vst [vmem:[%s201] sm:$0xff] %v5269
        %5274 = vst [vmem:[%s201 + $0x8] sm:$0xff] %v5270
        %5275 = vst [vmem:[%s201 + $0x10] sm:$0xff] %v5271
        %5276 = vst [vmem:[%s201 + $0x18] sm:$0xff] %v5272
        %s5277 = sand.u32 %s97, 1
        %s5278 = scalar_lea.sflag [#allocation6], %s5277
        %s5279 = sand.u32 %s97, 1
        %s5280 = smul.addr %s5279, 32
        %s5281 = scalar_lea.vmem [#allocation9], %s5280
        // Predicated region
        $region41: #{tpu_custom_call.1} parent=31 // pred_check
          %p5282 = pneg %p107
        $region42: #{tpu_custom_call.1} parent=31 // pred_check_branch
          %5284 = sbr.rel (%p5282) target = $region44
        $region43: #{tpu_custom_call.1} parent=31 // pred_region
          %s5286 = ssub.s32 512, 512
          %5287 = vsyncadd %s5278, %s5286
          %s5288 = smul.addr %s21, 4
          %s5289 = smul.addr %s5288, 128
          %s5290 = scalar_lea.hbm %s3, %s5289
          %s5292 = sshll.u32 %s5281, 4
          %s5293 = int_to_ptr.vmem [resolvable:$true] %s5292
          %5295 = dma.vmem_to_hbm [thread:$0]  %s5293, 512, %s5290, %s5278
        $region44: #{tpu_custom_call.1} parent=31 // pred_fallthru
          _
      $region32: #{tpu_custom_call.1} parent=5 // pred_fallthru
        _
      %p5296 = scmp.le.s32.totalorder 2, %s16
      // Predicated region
      $region45: #{tpu_custom_call.1} parent=5 // pred_check
        %p5297 = pneg %p5296
      $region46: #{tpu_custom_call.1} parent=5 // pred_check_branch
        %5299 = sbr.rel (%p5297) target = $region48
      $region47: #{tpu_custom_call.1} parent=5 // pred_region
        %s5300 = ssub.s32 %s16, 2
        // Predicated region
        $region49: #{tpu_custom_call.1} parent=47 // pred_check
          %p5301 = pneg %p113
        $region50: #{tpu_custom_call.1} parent=47 // pred_check_branch
          %5303 = sbr.rel (%p5301) target = $region52
        $region51: #{tpu_custom_call.1} parent=47 // pred_region
          %s5304 = sand.u32 %s98, 1
          %s5305 = scalar_lea.sflag [#allocation6], %s5304
          %s5306 = sand.u32 %s98, 1
          %s5307 = smul.addr %s5306, 32
          %s5308 = scalar_lea.vmem [#allocation9], %s5307
          %5309 = dma.done %s5305, 512
        $region52: #{tpu_custom_call.1} parent=47 // pred_fallthru
          _
      $region48: #{tpu_custom_call.1} parent=5 // pred_fallthru
        _
    $region6: #{tpu_custom_call.1} parent=1 // loop_footer
      %s20 = sadd.s32 1, %s16
    $region7: #{tpu_custom_call.1} parent=1 // loop_footer_branch
      %15 = sbr.rel target = $region3
    $region8: #{tpu_custom_call.1} parent=1 // loop_exit
      _
    %5310 = vsyncpa [#allocation5], 1
    %s5311 = scalar_lea.sflag [#allocation5], 1
    %5312 = vsyncpa %s5311, 1
    %5313 = vsyncpa [#allocation8], 1
    %5314 = vsyncpa [#allocation6], 1
    %s5315 = scalar_lea.sflag [#allocation6], 1
    %5316 = vsyncpa %s5315, 1

</llo_original>
